<compile_context>
chip_gen: v6e
topology: v6e:2x2x1
jax: 0.10.0
libtpu: 0.0.40
codegen_flags: <defaults>
</compile_context>

<pallas_src>
import jax
import jax.numpy as jnp
from jax import lax
from jax.experimental import pallas as pl
from jax.experimental.pallas import tpu as pltpu

N = 2            # batch size
EPS = 1e-5       # BatchNorm eps (PyTorch default)


def _network_kernel(x_ref, w1_ref, b1_ref, s1_ref, t1_ref,
                    w2_ref, b2_ref, s2_ref, t2_ref,
                    wfc_ref, bfc_ref, out_ref, flat_ref):
    """Whole forward pass for one sample.

    x_ref:   (1, 1, 28, 28)
    w1_ref:  (9, 4, 1, 26)   per-tap conv1 weights, pre-broadcast along lanes
    b1/s1/t1:(4, 1, 26)      conv1 bias, BN1 scale/shift (pre-broadcast)
    w2_ref:  (36, 8, 1, 11)  per-(ci,tap) conv2 weights (t = ci*9 + di*3 + dj)
    b2/s2/t2:(8, 1, 11)
    wfc_ref: (968, 10), bfc_ref: (1, 10)
    out_ref: (1, 1, 10)
    flat_ref:(1, 968) f32 VMEM scratch (lane-dense flattened features)
    """
    # ---- conv1 (1->4, 3x3), vectorized across the 4 output channels ----
    x = x_ref[0, 0]                                        # (28, 28)
    acc1 = jnp.zeros((4, 26, 26), jnp.float32)
    for di in range(3):
        for dj in range(3):
            t = di * 3 + dj
            # (4,1,26) * (1,26,26) -> (4,26,26): one broadcast FMA per tap.
            acc1 = acc1 + w1_ref[t] * x[di:di + 26, dj:dj + 26][None, :, :]
    acc1 = jnp.maximum(acc1 + b1_ref[...], 0.0)            # conv bias + ReLU
    acc1 = acc1 * s1_ref[...] + t1_ref[...]                # BN1 (inference)

    # ---- 2x2 max-pool, stride 2 -> (4, 13, 13) ----
    m1 = jnp.maximum(acc1[:, 0:25, :], acc1[:, 1:26, :])   # (4, 25, 26)
    m2 = jnp.maximum(m1[:, :, 0:25], m1[:, :, 1:26])       # (4, 25, 25)
    # stride-2 subsample via 0/1 selection matmuls (rows/cols 0,2,...,24)
    rr = lax.broadcasted_iota(jnp.int32, (13, 25), 0)
    rc = lax.broadcasted_iota(jnp.int32, (13, 25), 1)
    R = (rc == 2 * rr).astype(jnp.float32)                 # (13, 25)
    cr = lax.broadcasted_iota(jnp.int32, (25, 13), 0)
    cc = lax.broadcasted_iota(jnp.int32, (25, 13), 1)
    C = (cr == 2 * cc).astype(jnp.float32)                 # (25, 13)
    pooled = [jnp.dot(R, jnp.dot(m2[c], C, preferred_element_type=jnp.float32),
                      preferred_element_type=jnp.float32)  # (13, 13)
              for c in range(4)]

    # ---- conv2 (4->8, 3x3), vectorized across the 8 output channels ----
    acc2 = jnp.zeros((8, 11, 11), jnp.float32)
    for ci in range(4):
        pc = pooled[ci]
        for di in range(3):
            for dj in range(3):
                t = ci * 9 + di * 3 + dj
                acc2 = acc2 + w2_ref[t] * pc[di:di + 11, dj:dj + 11][None, :, :]
    acc2 = jnp.maximum(acc2 + b2_ref[...], 0.0)            # conv bias + ReLU
    acc2 = acc2 * s2_ref[...] + t2_ref[...]                # BN2 (inference)

    # ---- flatten (torch .view order: channel, row, col) into (1, 968) ----
    for c in range(8):
        for r in range(11):
            start = c * 121 + r * 11
            flat_ref[0:1, start:start + 11] = acc2[c, r:r + 1, :]

    # ---- fused fully-connected layer: (1,968) @ (968,10) + (1,10) ----
    logits = jnp.dot(flat_ref[...], wfc_ref[...],
                     preferred_element_type=jnp.float32) + bfc_ref[...]
    out_ref[0] = logits


def _full_spec(shape):
    # whole (small) array resident in VMEM, same block for every grid step
    return pl.BlockSpec(shape, lambda i, _s=shape: (0,) * len(_s))


def network_pallas(x, w1p, b1p, s1p, t1p, w2p, b2p, s2p, t2p, wfc_t, bfc_row):
    n = x.shape[0]
    return pl.pallas_call(
        _network_kernel,
        out_shape=jax.ShapeDtypeStruct((n, 1, 10), jnp.float32),
        grid=(n,),
        in_specs=[
            pl.BlockSpec((1, 1, 28, 28), lambda i: (i, 0, 0, 0)),
            _full_spec((9, 4, 1, 26)),
            _full_spec((4, 1, 26)), _full_spec((4, 1, 26)), _full_spec((4, 1, 26)),
            _full_spec((36, 8, 1, 11)),
            _full_spec((8, 1, 11)), _full_spec((8, 1, 11)), _full_spec((8, 1, 11)),
            _full_spec((968, 10)),
            _full_spec((1, 10)),
        ],
        out_specs=pl.BlockSpec((1, 1, 10), lambda i: (i, 0, 0)),
        scratch_shapes=[pltpu.VMEM((1, 968), jnp.float32)],
        compiler_params=pltpu.CompilerParams(dimension_semantics=("parallel",)),
    )(x, w1p, b1p, s1p, t1p, w2p, b2p, s2p, t2p, wfc_t, bfc_row)


@jax.jit
def network_forward(x, w1, b1, g1, be1, rm1, rv1,
                    w2, b2, g2, be2, rm2, rv2, fcw, fcb):
    n = x.shape[0]
    # Fold BN (eval mode) into per-channel scale/shift: y = x*scale + shift.
    s1 = g1 / jnp.sqrt(rv1 + EPS)
    t1 = be1 - rm1 * s1
    s2 = g2 / jnp.sqrt(rv2 + EPS)
    t2 = be2 - rm2 * s2

    # conv1 weights (4,1,3,3) -> (9 taps, 4 out-ch, 1, 26), broadcast along lanes
    w1p = jnp.broadcast_to(w1.reshape(4, 9).T[:, :, None, None], (9, 4, 1, 26))
    b1p = jnp.broadcast_to(b1[:, None, None], (4, 1, 26))
    s1p = jnp.broadcast_to(s1[:, None, None], (4, 1, 26))
    t1p = jnp.broadcast_to(t1[:, None, None], (4, 1, 26))

    # conv2 weights (8,4,3,3) -> (36 = ci*9+di*3+dj, 8 out-ch, 1, 11)
    w2p = jnp.broadcast_to(
        jnp.transpose(w2, (1, 2, 3, 0)).reshape(36, 8)[:, :, None, None],
        (36, 8, 1, 11))
    b2p = jnp.broadcast_to(b2[:, None, None], (8, 1, 11))
    s2p = jnp.broadcast_to(s2[:, None, None], (8, 1, 11))
    t2p = jnp.broadcast_to(t2[:, None, None], (8, 1, 11))

    out = network_pallas(x, w1p, b1p, s1p, t1p, w2p, b2p, s2p, t2p,
                         fcw.T, fcb.reshape(1, 10))
    return out.reshape(n, 10)


def reference_forward(x, w1, b1, g1, be1, rm1, rv1,
                      w2, b2, g2, be2, rm2, rv2, fcw, fcb):
    dn = ("NCHW", "OIHW", "NCHW")

    def bn(y, g, be, rm, rv):
        return ((y - rm[None, :, None, None]) /
                jnp.sqrt(rv + EPS)[None, :, None, None] *
                g[None, :, None, None] + be[None, :, None, None])

    y = lax.conv_general_dilated(x, w1, (1, 1), "VALID", dimension_numbers=dn)
    y = jnp.maximum(y + b1[None, :, None, None], 0.0)
    y = bn(y, g1, be1, rm1, rv1)
    y = lax.reduce_window(y, -jnp.inf, lax.max, (1, 1, 2, 2), (1, 1, 2, 2), "VALID")
    y = lax.conv_general_dilated(y, w2, (1, 1), "VALID", dimension_numbers=dn)
    y = jnp.maximum(y + b2[None, :, None, None], 0.0)
    y = bn(y, g2, be2, rm2, rv2)
    y = y.reshape(x.shape[0], -1)
    return y @ fcw.T + fcb


if __name__ == "__main__":
    key = jax.random.PRNGKey(0)
    ks = jax.random.split(key, 16)

    # MNIST-shaped input (28x28 is required by fc = Linear(8*11*11, 10))
    x = jax.random.normal(ks[0], (N, 1, 28, 28), jnp.float32)

    # conv1 / bn1
    w1 = 0.1 * jax.random.normal(ks[1], (4, 1, 3, 3), jnp.float32)
    b1 = 0.1 * jax.random.normal(ks[2], (4,), jnp.float32)
    g1 = 1.0 + 0.1 * jax.random.normal(ks[3], (4,), jnp.float32)
    be1 = 0.1 * jax.random.normal(ks[4], (4,), jnp.float32)
    rm1 = 0.1 * jax.random.normal(ks[5], (4,), jnp.float32)
    rv1 = 0.5 + jax.random.uniform(ks[6], (4,), jnp.float32)

    # conv2 / bn2
    w2 = 0.1 * jax.random.normal(ks[7], (8, 4, 3, 3), jnp.float32)
    b2 = 0.1 * jax.random.normal(ks[8], (8,), jnp.float32)
    g2 = 1.0 + 0.1 * jax.random.normal(ks[9], (8,), jnp.float32)
    be2 = 0.1 * jax.random.normal(ks[10], (8,), jnp.float32)
    rm2 = 0.1 * jax.random.normal(ks[11], (8,), jnp.float32)
    rv2 = 0.5 + jax.random.uniform(ks[12], (8,), jnp.float32)

    # fc
    fcw = 0.05 * jax.random.normal(ks[13], (10, 8 * 11 * 11), jnp.float32)
    fcb = 0.1 * jax.random.normal(ks[14], (10,), jnp.float32)

    out = network_forward(x, w1, b1, g1, be1, rm1, rv1,
                          w2, b2, g2, be2, rm2, rv2, fcw, fcb)
    out = jax.block_until_ready(out)

    ref = reference_forward(x, w1, b1, g1, be1, rm1, rv1,
                            w2, b2, g2, be2, rm2, rv2, fcw, fcb)

    assert out.shape == (N, 10)
    assert jnp.allclose(out, ref, atol=1e-3, rtol=1e-3), \
        f"max abs diff {jnp.max(jnp.abs(out - ref))}"
    print("KERNEL_OK")
</pallas_src>

<mosaic_0001>
module attributes {stable_mosaic.version = 11 : i64} {
  func.func @_network_kernel(%arg0: i32, %arg1: memref<1x1x28x28xf32, #tpu.memory_space<vmem>>, %arg2: memref<9x4x1x26xf32, #tpu.memory_space<vmem>>, %arg3: memref<4x1x26xf32, #tpu.memory_space<vmem>>, %arg4: memref<4x1x26xf32, #tpu.memory_space<vmem>>, %arg5: memref<4x1x26xf32, #tpu.memory_space<vmem>>, %arg6: memref<36x8x1x11xf32, #tpu.memory_space<vmem>>, %arg7: memref<8x1x11xf32, #tpu.memory_space<vmem>>, %arg8: memref<8x1x11xf32, #tpu.memory_space<vmem>>, %arg9: memref<8x1x11xf32, #tpu.memory_space<vmem>>, %arg10: memref<968x10xf32, #tpu.memory_space<vmem>>, %arg11: memref<1x10xf32, #tpu.memory_space<vmem>>, %arg12: memref<1x1x10xf32, #tpu.memory_space<vmem>>, %arg13: memref<1x968xf32, #tpu.memory_space<vmem>>) attributes {dimension_semantics = [#tpu.dimension_semantics<parallel>], iteration_bounds = array<i64: 2>, scalar_prefetch = 0 : i64, scratch_operands = 1 : i64, tpu.core_type = #tpu.core_type<tc>, window_params = [{transform_indices = @transform_0, window_bounds = array<i64: 1, 1, 28, 28>}, {pipeline_mode = #tpu.pipeline_mode<synchronous>, transform_indices = @transform_1, window_bounds = array<i64: 9, 4, 1, 26>}, {pipeline_mode = #tpu.pipeline_mode<synchronous>, transform_indices = @transform_2, window_bounds = array<i64: 4, 1, 26>}, {pipeline_mode = #tpu.pipeline_mode<synchronous>, transform_indices = @transform_3, window_bounds = array<i64: 4, 1, 26>}, {pipeline_mode = #tpu.pipeline_mode<synchronous>, transform_indices = @transform_4, window_bounds = array<i64: 4, 1, 26>}, {pipeline_mode = #tpu.pipeline_mode<synchronous>, transform_indices = @transform_5, window_bounds = array<i64: 36, 8, 1, 11>}, {pipeline_mode = #tpu.pipeline_mode<synchronous>, transform_indices = @transform_6, window_bounds = array<i64: 8, 1, 11>}, {pipeline_mode = #tpu.pipeline_mode<synchronous>, transform_indices = @transform_7, window_bounds = array<i64: 8, 1, 11>}, {pipeline_mode = #tpu.pipeline_mode<synchronous>, transform_indices = @transform_8, window_bounds = array<i64: 8, 1, 11>}, {pipeline_mode = #tpu.pipeline_mode<synchronous>, transform_indices = @transform_9, window_bounds = array<i64: 968, 10>}, {pipeline_mode = #tpu.pipeline_mode<synchronous>, transform_indices = @transform_10, window_bounds = array<i64: 1, 10>}, {transform_indices = @transform_11, window_bounds = array<i64: 1, 1, 10>}]} {
    %c0 = arith.constant 0 : index
    %c0_0 = arith.constant 0 : index
    %c0_1 = arith.constant 0 : index
    %c0_2 = arith.constant 0 : index
    %0 = vector.load %arg1[%c0, %c0_0, %c0_1, %c0_2] : memref<1x1x28x28xf32, #tpu.memory_space<vmem>>, vector<1x1x28x28xf32>
    %1 = vector.shape_cast %0 : vector<1x1x28x28xf32> to vector<28x28xf32>
    %cst = arith.constant 0.000000e+00 : f32
    %2 = vector.broadcast %cst : f32 to vector<4x26x26xf32>
    %c0_3 = arith.constant 0 : index
    %c0_4 = arith.constant 0 : index
    %c0_5 = arith.constant 0 : index
    %c0_6 = arith.constant 0 : index
    %3 = vector.load %arg2[%c0_3, %c0_4, %c0_5, %c0_6] : memref<9x4x1x26xf32, #tpu.memory_space<vmem>>, vector<1x4x1x26xf32>
    %4 = vector.shape_cast %3 : vector<1x4x1x26xf32> to vector<4x1x26xf32>
    %5 = vector.extract_strided_slice %1 {offsets = [0, 0], sizes = [26, 26], strides = [1, 1]} : vector<28x28xf32> to vector<26x26xf32>
    %6 = vector.shape_cast %5 : vector<26x26xf32> to vector<1x26x26xf32>
    %7 = vector.broadcast %4 : vector<4x1x26xf32> to vector<4x26x26xf32>
    %8 = vector.broadcast %6 : vector<1x26x26xf32> to vector<4x26x26xf32>
    %9 = arith.mulf %7, %8 : vector<4x26x26xf32>
    %10 = arith.addf %2, %9 : vector<4x26x26xf32>
    %c1 = arith.constant 1 : index
    %c0_7 = arith.constant 0 : index
    %c0_8 = arith.constant 0 : index
    %c0_9 = arith.constant 0 : index
    %11 = vector.load %arg2[%c1, %c0_7, %c0_8, %c0_9] : memref<9x4x1x26xf32, #tpu.memory_space<vmem>>, vector<1x4x1x26xf32>
    %12 = vector.shape_cast %11 : vector<1x4x1x26xf32> to vector<4x1x26xf32>
    %13 = vector.extract_strided_slice %1 {offsets = [0, 1], sizes = [26, 26], strides = [1, 1]} : vector<28x28xf32> to vector<26x26xf32>
    %14 = vector.shape_cast %13 : vector<26x26xf32> to vector<1x26x26xf32>
    %15 = vector.broadcast %12 : vector<4x1x26xf32> to vector<4x26x26xf32>
    %16 = vector.broadcast %14 : vector<1x26x26xf32> to vector<4x26x26xf32>
    %17 = arith.mulf %15, %16 : vector<4x26x26xf32>
    %18 = arith.addf %10, %17 : vector<4x26x26xf32>
    %c2 = arith.constant 2 : index
    %c0_10 = arith.constant 0 : index
    %c0_11 = arith.constant 0 : index
    %c0_12 = arith.constant 0 : index
    %19 = vector.load %arg2[%c2, %c0_10, %c0_11, %c0_12] : memref<9x4x1x26xf32, #tpu.memory_space<vmem>>, vector<1x4x1x26xf32>
    %20 = vector.shape_cast %19 : vector<1x4x1x26xf32> to vector<4x1x26xf32>
    %21 = vector.extract_strided_slice %1 {offsets = [0, 2], sizes = [26, 26], strides = [1, 1]} : vector<28x28xf32> to vector<26x26xf32>
    %22 = vector.shape_cast %21 : vector<26x26xf32> to vector<1x26x26xf32>
    %23 = vector.broadcast %20 : vector<4x1x26xf32> to vector<4x26x26xf32>
    %24 = vector.broadcast %22 : vector<1x26x26xf32> to vector<4x26x26xf32>
    %25 = arith.mulf %23, %24 : vector<4x26x26xf32>
    %26 = arith.addf %18, %25 : vector<4x26x26xf32>
    %c3 = arith.constant 3 : index
    %c0_13 = arith.constant 0 : index
    %c0_14 = arith.constant 0 : index
    %c0_15 = arith.constant 0 : index
    %27 = vector.load %arg2[%c3, %c0_13, %c0_14, %c0_15] : memref<9x4x1x26xf32, #tpu.memory_space<vmem>>, vector<1x4x1x26xf32>
    %28 = vector.shape_cast %27 : vector<1x4x1x26xf32> to vector<4x1x26xf32>
    %29 = vector.extract_strided_slice %1 {offsets = [1, 0], sizes = [26, 26], strides = [1, 1]} : vector<28x28xf32> to vector<26x26xf32>
    %30 = vector.shape_cast %29 : vector<26x26xf32> to vector<1x26x26xf32>
    %31 = vector.broadcast %28 : vector<4x1x26xf32> to vector<4x26x26xf32>
    %32 = vector.broadcast %30 : vector<1x26x26xf32> to vector<4x26x26xf32>
    %33 = arith.mulf %31, %32 : vector<4x26x26xf32>
    %34 = arith.addf %26, %33 : vector<4x26x26xf32>
    %c4 = arith.constant 4 : index
    %c0_16 = arith.constant 0 : index
    %c0_17 = arith.constant 0 : index
    %c0_18 = arith.constant 0 : index
    %35 = vector.load %arg2[%c4, %c0_16, %c0_17, %c0_18] : memref<9x4x1x26xf32, #tpu.memory_space<vmem>>, vector<1x4x1x26xf32>
    %36 = vector.shape_cast %35 : vector<1x4x1x26xf32> to vector<4x1x26xf32>
    %37 = vector.extract_strided_slice %1 {offsets = [1, 1], sizes = [26, 26], strides = [1, 1]} : vector<28x28xf32> to vector<26x26xf32>
    %38 = vector.shape_cast %37 : vector<26x26xf32> to vector<1x26x26xf32>
    %39 = vector.broadcast %36 : vector<4x1x26xf32> to vector<4x26x26xf32>
    %40 = vector.broadcast %38 : vector<1x26x26xf32> to vector<4x26x26xf32>
    %41 = arith.mulf %39, %40 : vector<4x26x26xf32>
    %42 = arith.addf %34, %41 : vector<4x26x26xf32>
    %c5 = arith.constant 5 : index
    %c0_19 = arith.constant 0 : index
    %c0_20 = arith.constant 0 : index
    %c0_21 = arith.constant 0 : index
    %43 = vector.load %arg2[%c5, %c0_19, %c0_20, %c0_21] : memref<9x4x1x26xf32, #tpu.memory_space<vmem>>, vector<1x4x1x26xf32>
    %44 = vector.shape_cast %43 : vector<1x4x1x26xf32> to vector<4x1x26xf32>
    %45 = vector.extract_strided_slice %1 {offsets = [1, 2], sizes = [26, 26], strides = [1, 1]} : vector<28x28xf32> to vector<26x26xf32>
    %46 = vector.shape_cast %45 : vector<26x26xf32> to vector<1x26x26xf32>
    %47 = vector.broadcast %44 : vector<4x1x26xf32> to vector<4x26x26xf32>
    %48 = vector.broadcast %46 : vector<1x26x26xf32> to vector<4x26x26xf32>
    %49 = arith.mulf %47, %48 : vector<4x26x26xf32>
    %50 = arith.addf %42, %49 : vector<4x26x26xf32>
    %c6 = arith.constant 6 : index
    %c0_22 = arith.constant 0 : index
    %c0_23 = arith.constant 0 : index
    %c0_24 = arith.constant 0 : index
    %51 = vector.load %arg2[%c6, %c0_22, %c0_23, %c0_24] : memref<9x4x1x26xf32, #tpu.memory_space<vmem>>, vector<1x4x1x26xf32>
    %52 = vector.shape_cast %51 : vector<1x4x1x26xf32> to vector<4x1x26xf32>
    %53 = vector.extract_strided_slice %1 {offsets = [2, 0], sizes = [26, 26], strides = [1, 1]} : vector<28x28xf32> to vector<26x26xf32>
    %54 = vector.shape_cast %53 : vector<26x26xf32> to vector<1x26x26xf32>
    %55 = vector.broadcast %52 : vector<4x1x26xf32> to vector<4x26x26xf32>
    %56 = vector.broadcast %54 : vector<1x26x26xf32> to vector<4x26x26xf32>
    %57 = arith.mulf %55, %56 : vector<4x26x26xf32>
    %58 = arith.addf %50, %57 : vector<4x26x26xf32>
    %c7 = arith.constant 7 : index
    %c0_25 = arith.constant 0 : index
    %c0_26 = arith.constant 0 : index
    %c0_27 = arith.constant 0 : index
    %59 = vector.load %arg2[%c7, %c0_25, %c0_26, %c0_27] : memref<9x4x1x26xf32, #tpu.memory_space<vmem>>, vector<1x4x1x26xf32>
    %60 = vector.shape_cast %59 : vector<1x4x1x26xf32> to vector<4x1x26xf32>
    %61 = vector.extract_strided_slice %1 {offsets = [2, 1], sizes = [26, 26], strides = [1, 1]} : vector<28x28xf32> to vector<26x26xf32>
    %62 = vector.shape_cast %61 : vector<26x26xf32> to vector<1x26x26xf32>
    %63 = vector.broadcast %60 : vector<4x1x26xf32> to vector<4x26x26xf32>
    %64 = vector.broadcast %62 : vector<1x26x26xf32> to vector<4x26x26xf32>
    %65 = arith.mulf %63, %64 : vector<4x26x26xf32>
    %66 = arith.addf %58, %65 : vector<4x26x26xf32>
    %c8 = arith.constant 8 : index
    %c0_28 = arith.constant 0 : index
    %c0_29 = arith.constant 0 : index
    %c0_30 = arith.constant 0 : index
    %67 = vector.load %arg2[%c8, %c0_28, %c0_29, %c0_30] : memref<9x4x1x26xf32, #tpu.memory_space<vmem>>, vector<1x4x1x26xf32>
    %68 = vector.shape_cast %67 : vector<1x4x1x26xf32> to vector<4x1x26xf32>
    %69 = vector.extract_strided_slice %1 {offsets = [2, 2], sizes = [26, 26], strides = [1, 1]} : vector<28x28xf32> to vector<26x26xf32>
    %70 = vector.shape_cast %69 : vector<26x26xf32> to vector<1x26x26xf32>
    %71 = vector.broadcast %68 : vector<4x1x26xf32> to vector<4x26x26xf32>
    %72 = vector.broadcast %70 : vector<1x26x26xf32> to vector<4x26x26xf32>
    %73 = arith.mulf %71, %72 : vector<4x26x26xf32>
    %74 = arith.addf %66, %73 : vector<4x26x26xf32>
    %c0_31 = arith.constant 0 : index
    %c0_32 = arith.constant 0 : index
    %c0_33 = arith.constant 0 : index
    %75 = vector.load %arg3[%c0_31, %c0_32, %c0_33] : memref<4x1x26xf32, #tpu.memory_space<vmem>>, vector<4x1x26xf32>
    %76 = vector.broadcast %75 : vector<4x1x26xf32> to vector<4x26x26xf32>
    %77 = arith.addf %74, %76 : vector<4x26x26xf32>
    %cst_34 = arith.constant 0.000000e+00 : f32
    %78 = vector.broadcast %cst_34 : f32 to vector<4x26x26xf32>
    %79 = arith.maximumf %77, %78 : vector<4x26x26xf32>
    %c0_35 = arith.constant 0 : index
    %c0_36 = arith.constant 0 : index
    %c0_37 = arith.constant 0 : index
    %80 = vector.load %arg4[%c0_35, %c0_36, %c0_37] : memref<4x1x26xf32, #tpu.memory_space<vmem>>, vector<4x1x26xf32>
    %81 = vector.broadcast %80 : vector<4x1x26xf32> to vector<4x26x26xf32>
    %82 = arith.mulf %79, %81 : vector<4x26x26xf32>
    %c0_38 = arith.constant 0 : index
    %c0_39 = arith.constant 0 : index
    %c0_40 = arith.constant 0 : index
    %83 = vector.load %arg5[%c0_38, %c0_39, %c0_40] : memref<4x1x26xf32, #tpu.memory_space<vmem>>, vector<4x1x26xf32>
    %84 = vector.broadcast %83 : vector<4x1x26xf32> to vector<4x26x26xf32>
    %85 = arith.addf %82, %84 : vector<4x26x26xf32>
    %86 = vector.extract_strided_slice %85 {offsets = [0, 0, 0], sizes = [4, 25, 26], strides = [1, 1, 1]} : vector<4x26x26xf32> to vector<4x25x26xf32>
    %87 = vector.extract_strided_slice %85 {offsets = [0, 1, 0], sizes = [4, 25, 26], strides = [1, 1, 1]} : vector<4x26x26xf32> to vector<4x25x26xf32>
    %88 = arith.maximumf %86, %87 : vector<4x25x26xf32>
    %89 = vector.extract_strided_slice %88 {offsets = [0, 0, 0], sizes = [4, 25, 25], strides = [1, 1, 1]} : vector<4x25x26xf32> to vector<4x25x25xf32>
    %90 = vector.extract_strided_slice %88 {offsets = [0, 0, 1], sizes = [4, 25, 25], strides = [1, 1, 1]} : vector<4x25x26xf32> to vector<4x25x25xf32>
    %91 = arith.maximumf %89, %90 : vector<4x25x25xf32>
    %92 = tpu.iota {dimensions = array<i32: 0>} : vector<13x25xi32>
    %93 = tpu.iota {dimensions = array<i32: 1>} : vector<13x25xi32>
    %c2_i32 = arith.constant 2 : i32
    %94 = vector.broadcast %c2_i32 : i32 to vector<13x25xi32>
    %95 = arith.muli %94, %92 : vector<13x25xi32>
    %96 = arith.cmpi eq, %93, %95 : vector<13x25xi32>
    %97 = arith.extui %96 : vector<13x25xi1> to vector<13x25xi32>
    %98 = arith.sitofp %97 : vector<13x25xi32> to vector<13x25xf32>
    %99 = tpu.iota {dimensions = array<i32: 0>} : vector<25x13xi32>
    %100 = tpu.iota {dimensions = array<i32: 1>} : vector<25x13xi32>
    %c2_i32_41 = arith.constant 2 : i32
    %101 = vector.broadcast %c2_i32_41 : i32 to vector<25x13xi32>
    %102 = arith.muli %101, %100 : vector<25x13xi32>
    %103 = arith.cmpi eq, %99, %102 : vector<25x13xi32>
    %104 = arith.extui %103 : vector<25x13xi1> to vector<25x13xi32>
    %105 = arith.sitofp %104 : vector<25x13xi32> to vector<25x13xf32>
    %106 = vector.extract_strided_slice %91 {offsets = [0, 0, 0], sizes = [1, 25, 25], strides = [1, 1, 1]} : vector<4x25x25xf32> to vector<1x25x25xf32>
    %107 = vector.shape_cast %106 : vector<1x25x25xf32> to vector<25x25xf32>
    %cst_42 = arith.constant dense<0.000000e+00> : vector<25x13xf32>
    %108 = tpu.matmul %107, %105, %cst_42 {dimension_numbers = #tpu.dot_dimension_numbers<[1], [0], [0], [1], [0, 0, 1, 1], [], []>} : vector<25x25xf32>, vector<25x13xf32>, vector<25x13xf32> -> vector<25x13xf32>
    %cst_43 = arith.constant dense<0.000000e+00> : vector<13x13xf32>
    %109 = tpu.matmul %98, %108, %cst_43 {dimension_numbers = #tpu.dot_dimension_numbers<[1], [0], [0], [1], [0, 0, 1, 1], [], []>} : vector<13x25xf32>, vector<25x13xf32>, vector<13x13xf32> -> vector<13x13xf32>
    %110 = vector.extract_strided_slice %91 {offsets = [1, 0, 0], sizes = [1, 25, 25], strides = [1, 1, 1]} : vector<4x25x25xf32> to vector<1x25x25xf32>
    %111 = vector.shape_cast %110 : vector<1x25x25xf32> to vector<25x25xf32>
    %cst_44 = arith.constant dense<0.000000e+00> : vector<25x13xf32>
    %112 = tpu.matmul %111, %105, %cst_44 {dimension_numbers = #tpu.dot_dimension_numbers<[1], [0], [0], [1], [0, 0, 1, 1], [], []>} : vector<25x25xf32>, vector<25x13xf32>, vector<25x13xf32> -> vector<25x13xf32>
    %cst_45 = arith.constant dense<0.000000e+00> : vector<13x13xf32>
    %113 = tpu.matmul %98, %112, %cst_45 {dimension_numbers = #tpu.dot_dimension_numbers<[1], [0], [0], [1], [0, 0, 1, 1], [], []>} : vector<13x25xf32>, vector<25x13xf32>, vector<13x13xf32> -> vector<13x13xf32>
    %114 = vector.extract_strided_slice %91 {offsets = [2, 0, 0], sizes = [1, 25, 25], strides = [1, 1, 1]} : vector<4x25x25xf32> to vector<1x25x25xf32>
    %115 = vector.shape_cast %114 : vector<1x25x25xf32> to vector<25x25xf32>
    %cst_46 = arith.constant dense<0.000000e+00> : vector<25x13xf32>
    %116 = tpu.matmul %115, %105, %cst_46 {dimension_numbers = #tpu.dot_dimension_numbers<[1], [0], [0], [1], [0, 0, 1, 1], [], []>} : vector<25x25xf32>, vector<25x13xf32>, vector<25x13xf32> -> vector<25x13xf32>
    %cst_47 = arith.constant dense<0.000000e+00> : vector<13x13xf32>
    %117 = tpu.matmul %98, %116, %cst_47 {dimension_numbers = #tpu.dot_dimension_numbers<[1], [0], [0], [1], [0, 0, 1, 1], [], []>} : vector<13x25xf32>, vector<25x13xf32>, vector<13x13xf32> -> vector<13x13xf32>
    %118 = vector.extract_strided_slice %91 {offsets = [3, 0, 0], sizes = [1, 25, 25], strides = [1, 1, 1]} : vector<4x25x25xf32> to vector<1x25x25xf32>
    %119 = vector.shape_cast %118 : vector<1x25x25xf32> to vector<25x25xf32>
    %cst_48 = arith.constant dense<0.000000e+00> : vector<25x13xf32>
    %120 = tpu.matmul %119, %105, %cst_48 {dimension_numbers = #tpu.dot_dimension_numbers<[1], [0], [0], [1], [0, 0, 1, 1], [], []>} : vector<25x25xf32>, vector<25x13xf32>, vector<25x13xf32> -> vector<25x13xf32>
    %cst_49 = arith.constant dense<0.000000e+00> : vector<13x13xf32>
    %121 = tpu.matmul %98, %120, %cst_49 {dimension_numbers = #tpu.dot_dimension_numbers<[1], [0], [0], [1], [0, 0, 1, 1], [], []>} : vector<13x25xf32>, vector<25x13xf32>, vector<13x13xf32> -> vector<13x13xf32>
    %cst_50 = arith.constant 0.000000e+00 : f32
    %122 = vector.broadcast %cst_50 : f32 to vector<8x11x11xf32>
    %c0_51 = arith.constant 0 : index
    %c0_52 = arith.constant 0 : index
    %c0_53 = arith.constant 0 : index
    %c0_54 = arith.constant 0 : index
    %123 = vector.load %arg6[%c0_51, %c0_52, %c0_53, %c0_54] : memref<36x8x1x11xf32, #tpu.memory_space<vmem>>, vector<1x8x1x11xf32>
    %124 = vector.shape_cast %123 : vector<1x8x1x11xf32> to vector<8x1x11xf32>
    %125 = vector.extract_strided_slice %109 {offsets = [0, 0], sizes = [11, 11], strides = [1, 1]} : vector<13x13xf32> to vector<11x11xf32>
    %126 = vector.shape_cast %125 : vector<11x11xf32> to vector<1x11x11xf32>
    %127 = vector.broadcast %124 : vector<8x1x11xf32> to vector<8x11x11xf32>
    %128 = vector.broadcast %126 : vector<1x11x11xf32> to vector<8x11x11xf32>
    %129 = arith.mulf %127, %128 : vector<8x11x11xf32>
    %130 = arith.addf %122, %129 : vector<8x11x11xf32>
    %c1_55 = arith.constant 1 : index
    %c0_56 = arith.constant 0 : index
    %c0_57 = arith.constant 0 : index
    %c0_58 = arith.constant 0 : index
    %131 = vector.load %arg6[%c1_55, %c0_56, %c0_57, %c0_58] : memref<36x8x1x11xf32, #tpu.memory_space<vmem>>, vector<1x8x1x11xf32>
    %132 = vector.shape_cast %131 : vector<1x8x1x11xf32> to vector<8x1x11xf32>
    %133 = vector.extract_strided_slice %109 {offsets = [0, 1], sizes = [11, 11], strides = [1, 1]} : vector<13x13xf32> to vector<11x11xf32>
    %134 = vector.shape_cast %133 : vector<11x11xf32> to vector<1x11x11xf32>
    %135 = vector.broadcast %132 : vector<8x1x11xf32> to vector<8x11x11xf32>
    %136 = vector.broadcast %134 : vector<1x11x11xf32> to vector<8x11x11xf32>
    %137 = arith.mulf %135, %136 : vector<8x11x11xf32>
    %138 = arith.addf %130, %137 : vector<8x11x11xf32>
    %c2_59 = arith.constant 2 : index
    %c0_60 = arith.constant 0 : index
    %c0_61 = arith.constant 0 : index
    %c0_62 = arith.constant 0 : index
    %139 = vector.load %arg6[%c2_59, %c0_60, %c0_61, %c0_62] : memref<36x8x1x11xf32, #tpu.memory_space<vmem>>, vector<1x8x1x11xf32>
    %140 = vector.shape_cast %139 : vector<1x8x1x11xf32> to vector<8x1x11xf32>
    %141 = vector.extract_strided_slice %109 {offsets = [0, 2], sizes = [11, 11], strides = [1, 1]} : vector<13x13xf32> to vector<11x11xf32>
    %142 = vector.shape_cast %141 : vector<11x11xf32> to vector<1x11x11xf32>
    %143 = vector.broadcast %140 : vector<8x1x11xf32> to vector<8x11x11xf32>
    %144 = vector.broadcast %142 : vector<1x11x11xf32> to vector<8x11x11xf32>
    %145 = arith.mulf %143, %144 : vector<8x11x11xf32>
    %146 = arith.addf %138, %145 : vector<8x11x11xf32>
    %c3_63 = arith.constant 3 : index
    %c0_64 = arith.constant 0 : index
    %c0_65 = arith.constant 0 : index
    %c0_66 = arith.constant 0 : index
    %147 = vector.load %arg6[%c3_63, %c0_64, %c0_65, %c0_66] : memref<36x8x1x11xf32, #tpu.memory_space<vmem>>, vector<1x8x1x11xf32>
    %148 = vector.shape_cast %147 : vector<1x8x1x11xf32> to vector<8x1x11xf32>
    %149 = vector.extract_strided_slice %109 {offsets = [1, 0], sizes = [11, 11], strides = [1, 1]} : vector<13x13xf32> to vector<11x11xf32>
    %150 = vector.shape_cast %149 : vector<11x11xf32> to vector<1x11x11xf32>
    %151 = vector.broadcast %148 : vector<8x1x11xf32> to vector<8x11x11xf32>
    %152 = vector.broadcast %150 : vector<1x11x11xf32> to vector<8x11x11xf32>
    %153 = arith.mulf %151, %152 : vector<8x11x11xf32>
    %154 = arith.addf %146, %153 : vector<8x11x11xf32>
    %c4_67 = arith.constant 4 : index
    %c0_68 = arith.constant 0 : index
    %c0_69 = arith.constant 0 : index
    %c0_70 = arith.constant 0 : index
    %155 = vector.load %arg6[%c4_67, %c0_68, %c0_69, %c0_70] : memref<36x8x1x11xf32, #tpu.memory_space<vmem>>, vector<1x8x1x11xf32>
    %156 = vector.shape_cast %155 : vector<1x8x1x11xf32> to vector<8x1x11xf32>
    %157 = vector.extract_strided_slice %109 {offsets = [1, 1], sizes = [11, 11], strides = [1, 1]} : vector<13x13xf32> to vector<11x11xf32>
    %158 = vector.shape_cast %157 : vector<11x11xf32> to vector<1x11x11xf32>
    %159 = vector.broadcast %156 : vector<8x1x11xf32> to vector<8x11x11xf32>
    %160 = vector.broadcast %158 : vector<1x11x11xf32> to vector<8x11x11xf32>
    %161 = arith.mulf %159, %160 : vector<8x11x11xf32>
    %162 = arith.addf %154, %161 : vector<8x11x11xf32>
    %c5_71 = arith.constant 5 : index
    %c0_72 = arith.constant 0 : index
    %c0_73 = arith.constant 0 : index
    %c0_74 = arith.constant 0 : index
    %163 = vector.load %arg6[%c5_71, %c0_72, %c0_73, %c0_74] : memref<36x8x1x11xf32, #tpu.memory_space<vmem>>, vector<1x8x1x11xf32>
    %164 = vector.shape_cast %163 : vector<1x8x1x11xf32> to vector<8x1x11xf32>
    %165 = vector.extract_strided_slice %109 {offsets = [1, 2], sizes = [11, 11], strides = [1, 1]} : vector<13x13xf32> to vector<11x11xf32>
    %166 = vector.shape_cast %165 : vector<11x11xf32> to vector<1x11x11xf32>
    %167 = vector.broadcast %164 : vector<8x1x11xf32> to vector<8x11x11xf32>
    %168 = vector.broadcast %166 : vector<1x11x11xf32> to vector<8x11x11xf32>
    %169 = arith.mulf %167, %168 : vector<8x11x11xf32>
    %170 = arith.addf %162, %169 : vector<8x11x11xf32>
    %c6_75 = arith.constant 6 : index
    %c0_76 = arith.constant 0 : index
    %c0_77 = arith.constant 0 : index
    %c0_78 = arith.constant 0 : index
    %171 = vector.load %arg6[%c6_75, %c0_76, %c0_77, %c0_78] : memref<36x8x1x11xf32, #tpu.memory_space<vmem>>, vector<1x8x1x11xf32>
    %172 = vector.shape_cast %171 : vector<1x8x1x11xf32> to vector<8x1x11xf32>
    %173 = vector.extract_strided_slice %109 {offsets = [2, 0], sizes = [11, 11], strides = [1, 1]} : vector<13x13xf32> to vector<11x11xf32>
    %174 = vector.shape_cast %173 : vector<11x11xf32> to vector<1x11x11xf32>
    %175 = vector.broadcast %172 : vector<8x1x11xf32> to vector<8x11x11xf32>
    %176 = vector.broadcast %174 : vector<1x11x11xf32> to vector<8x11x11xf32>
    %177 = arith.mulf %175, %176 : vector<8x11x11xf32>
    %178 = arith.addf %170, %177 : vector<8x11x11xf32>
    %c7_79 = arith.constant 7 : index
    %c0_80 = arith.constant 0 : index
    %c0_81 = arith.constant 0 : index
    %c0_82 = arith.constant 0 : index
    %179 = vector.load %arg6[%c7_79, %c0_80, %c0_81, %c0_82] : memref<36x8x1x11xf32, #tpu.memory_space<vmem>>, vector<1x8x1x11xf32>
    %180 = vector.shape_cast %179 : vector<1x8x1x11xf32> to vector<8x1x11xf32>
    %181 = vector.extract_strided_slice %109 {offsets = [2, 1], sizes = [11, 11], strides = [1, 1]} : vector<13x13xf32> to vector<11x11xf32>
    %182 = vector.shape_cast %181 : vector<11x11xf32> to vector<1x11x11xf32>
    %183 = vector.broadcast %180 : vector<8x1x11xf32> to vector<8x11x11xf32>
    %184 = vector.broadcast %182 : vector<1x11x11xf32> to vector<8x11x11xf32>
    %185 = arith.mulf %183, %184 : vector<8x11x11xf32>
    %186 = arith.addf %178, %185 : vector<8x11x11xf32>
    %c8_83 = arith.constant 8 : index
    %c0_84 = arith.constant 0 : index
    %c0_85 = arith.constant 0 : index
    %c0_86 = arith.constant 0 : index
    %187 = vector.load %arg6[%c8_83, %c0_84, %c0_85, %c0_86] : memref<36x8x1x11xf32, #tpu.memory_space<vmem>>, vector<1x8x1x11xf32>
    %188 = vector.shape_cast %187 : vector<1x8x1x11xf32> to vector<8x1x11xf32>
    %189 = vector.extract_strided_slice %109 {offsets = [2, 2], sizes = [11, 11], strides = [1, 1]} : vector<13x13xf32> to vector<11x11xf32>
    %190 = vector.shape_cast %189 : vector<11x11xf32> to vector<1x11x11xf32>
    %191 = vector.broadcast %188 : vector<8x1x11xf32> to vector<8x11x11xf32>
    %192 = vector.broadcast %190 : vector<1x11x11xf32> to vector<8x11x11xf32>
    %193 = arith.mulf %191, %192 : vector<8x11x11xf32>
    %194 = arith.addf %186, %193 : vector<8x11x11xf32>
    %c9 = arith.constant 9 : index
    %c0_87 = arith.constant 0 : index
    %c0_88 = arith.constant 0 : index
    %c0_89 = arith.constant 0 : index
    %195 = vector.load %arg6[%c9, %c0_87, %c0_88, %c0_89] : memref<36x8x1x11xf32, #tpu.memory_space<vmem>>, vector<1x8x1x11xf32>
    %196 = vector.shape_cast %195 : vector<1x8x1x11xf32> to vector<8x1x11xf32>
    %197 = vector.extract_strided_slice %113 {offsets = [0, 0], sizes = [11, 11], strides = [1, 1]} : vector<13x13xf32> to vector<11x11xf32>
    %198 = vector.shape_cast %197 : vector<11x11xf32> to vector<1x11x11xf32>
    %199 = vector.broadcast %196 : vector<8x1x11xf32> to vector<8x11x11xf32>
    %200 = vector.broadcast %198 : vector<1x11x11xf32> to vector<8x11x11xf32>
    %201 = arith.mulf %199, %200 : vector<8x11x11xf32>
    %202 = arith.addf %194, %201 : vector<8x11x11xf32>
    %c10 = arith.constant 10 : index
    %c0_90 = arith.constant 0 : index
    %c0_91 = arith.constant 0 : index
    %c0_92 = arith.constant 0 : index
    %203 = vector.load %arg6[%c10, %c0_90, %c0_91, %c0_92] : memref<36x8x1x11xf32, #tpu.memory_space<vmem>>, vector<1x8x1x11xf32>
    %204 = vector.shape_cast %203 : vector<1x8x1x11xf32> to vector<8x1x11xf32>
    %205 = vector.extract_strided_slice %113 {offsets = [0, 1], sizes = [11, 11], strides = [1, 1]} : vector<13x13xf32> to vector<11x11xf32>
    %206 = vector.shape_cast %205 : vector<11x11xf32> to vector<1x11x11xf32>
    %207 = vector.broadcast %204 : vector<8x1x11xf32> to vector<8x11x11xf32>
    %208 = vector.broadcast %206 : vector<1x11x11xf32> to vector<8x11x11xf32>
    %209 = arith.mulf %207, %208 : vector<8x11x11xf32>
    %210 = arith.addf %202, %209 : vector<8x11x11xf32>
    %c11 = arith.constant 11 : index
    %c0_93 = arith.constant 0 : index
    %c0_94 = arith.constant 0 : index
    %c0_95 = arith.constant 0 : index
    %211 = vector.load %arg6[%c11, %c0_93, %c0_94, %c0_95] : memref<36x8x1x11xf32, #tpu.memory_space<vmem>>, vector<1x8x1x11xf32>
    %212 = vector.shape_cast %211 : vector<1x8x1x11xf32> to vector<8x1x11xf32>
    %213 = vector.extract_strided_slice %113 {offsets = [0, 2], sizes = [11, 11], strides = [1, 1]} : vector<13x13xf32> to vector<11x11xf32>
    %214 = vector.shape_cast %213 : vector<11x11xf32> to vector<1x11x11xf32>
    %215 = vector.broadcast %212 : vector<8x1x11xf32> to vector<8x11x11xf32>
    %216 = vector.broadcast %214 : vector<1x11x11xf32> to vector<8x11x11xf32>
    %217 = arith.mulf %215, %216 : vector<8x11x11xf32>
    %218 = arith.addf %210, %217 : vector<8x11x11xf32>
    %c12 = arith.constant 12 : index
    %c0_96 = arith.constant 0 : index
    %c0_97 = arith.constant 0 : index
    %c0_98 = arith.constant 0 : index
    %219 = vector.load %arg6[%c12, %c0_96, %c0_97, %c0_98] : memref<36x8x1x11xf32, #tpu.memory_space<vmem>>, vector<1x8x1x11xf32>
    %220 = vector.shape_cast %219 : vector<1x8x1x11xf32> to vector<8x1x11xf32>
    %221 = vector.extract_strided_slice %113 {offsets = [1, 0], sizes = [11, 11], strides = [1, 1]} : vector<13x13xf32> to vector<11x11xf32>
    %222 = vector.shape_cast %221 : vector<11x11xf32> to vector<1x11x11xf32>
    %223 = vector.broadcast %220 : vector<8x1x11xf32> to vector<8x11x11xf32>
    %224 = vector.broadcast %222 : vector<1x11x11xf32> to vector<8x11x11xf32>
    %225 = arith.mulf %223, %224 : vector<8x11x11xf32>
    %226 = arith.addf %218, %225 : vector<8x11x11xf32>
    %c13 = arith.constant 13 : index
    %c0_99 = arith.constant 0 : index
    %c0_100 = arith.constant 0 : index
    %c0_101 = arith.constant 0 : index
    %227 = vector.load %arg6[%c13, %c0_99, %c0_100, %c0_101] : memref<36x8x1x11xf32, #tpu.memory_space<vmem>>, vector<1x8x1x11xf32>
    %228 = vector.shape_cast %227 : vector<1x8x1x11xf32> to vector<8x1x11xf32>
    %229 = vector.extract_strided_slice %113 {offsets = [1, 1], sizes = [11, 11], strides = [1, 1]} : vector<13x13xf32> to vector<11x11xf32>
    %230 = vector.shape_cast %229 : vector<11x11xf32> to vector<1x11x11xf32>
    %231 = vector.broadcast %228 : vector<8x1x11xf32> to vector<8x11x11xf32>
    %232 = vector.broadcast %230 : vector<1x11x11xf32> to vector<8x11x11xf32>
    %233 = arith.mulf %231, %232 : vector<8x11x11xf32>
    %234 = arith.addf %226, %233 : vector<8x11x11xf32>
    %c14 = arith.constant 14 : index
    %c0_102 = arith.constant 0 : index
    %c0_103 = arith.constant 0 : index
    %c0_104 = arith.constant 0 : index
    %235 = vector.load %arg6[%c14, %c0_102, %c0_103, %c0_104] : memref<36x8x1x11xf32, #tpu.memory_space<vmem>>, vector<1x8x1x11xf32>
    %236 = vector.shape_cast %235 : vector<1x8x1x11xf32> to vector<8x1x11xf32>
    %237 = vector.extract_strided_slice %113 {offsets = [1, 2], sizes = [11, 11], strides = [1, 1]} : vector<13x13xf32> to vector<11x11xf32>
    %238 = vector.shape_cast %237 : vector<11x11xf32> to vector<1x11x11xf32>
    %239 = vector.broadcast %236 : vector<8x1x11xf32> to vector<8x11x11xf32>
    %240 = vector.broadcast %238 : vector<1x11x11xf32> to vector<8x11x11xf32>
    %241 = arith.mulf %239, %240 : vector<8x11x11xf32>
    %242 = arith.addf %234, %241 : vector<8x11x11xf32>
    %c15 = arith.constant 15 : index
    %c0_105 = arith.constant 0 : index
    %c0_106 = arith.constant 0 : index
    %c0_107 = arith.constant 0 : index
    %243 = vector.load %arg6[%c15, %c0_105, %c0_106, %c0_107] : memref<36x8x1x11xf32, #tpu.memory_space<vmem>>, vector<1x8x1x11xf32>
    %244 = vector.shape_cast %243 : vector<1x8x1x11xf32> to vector<8x1x11xf32>
    %245 = vector.extract_strided_slice %113 {offsets = [2, 0], sizes = [11, 11], strides = [1, 1]} : vector<13x13xf32> to vector<11x11xf32>
    %246 = vector.shape_cast %245 : vector<11x11xf32> to vector<1x11x11xf32>
    %247 = vector.broadcast %244 : vector<8x1x11xf32> to vector<8x11x11xf32>
    %248 = vector.broadcast %246 : vector<1x11x11xf32> to vector<8x11x11xf32>
    %249 = arith.mulf %247, %248 : vector<8x11x11xf32>
    %250 = arith.addf %242, %249 : vector<8x11x11xf32>
    %c16 = arith.constant 16 : index
    %c0_108 = arith.constant 0 : index
    %c0_109 = arith.constant 0 : index
    %c0_110 = arith.constant 0 : index
    %251 = vector.load %arg6[%c16, %c0_108, %c0_109, %c0_110] : memref<36x8x1x11xf32, #tpu.memory_space<vmem>>, vector<1x8x1x11xf32>
    %252 = vector.shape_cast %251 : vector<1x8x1x11xf32> to vector<8x1x11xf32>
    %253 = vector.extract_strided_slice %113 {offsets = [2, 1], sizes = [11, 11], strides = [1, 1]} : vector<13x13xf32> to vector<11x11xf32>
    %254 = vector.shape_cast %253 : vector<11x11xf32> to vector<1x11x11xf32>
    %255 = vector.broadcast %252 : vector<8x1x11xf32> to vector<8x11x11xf32>
    %256 = vector.broadcast %254 : vector<1x11x11xf32> to vector<8x11x11xf32>
    %257 = arith.mulf %255, %256 : vector<8x11x11xf32>
    %258 = arith.addf %250, %257 : vector<8x11x11xf32>
    %c17 = arith.constant 17 : index
    %c0_111 = arith.constant 0 : index
    %c0_112 = arith.constant 0 : index
    %c0_113 = arith.constant 0 : index
    %259 = vector.load %arg6[%c17, %c0_111, %c0_112, %c0_113] : memref<36x8x1x11xf32, #tpu.memory_space<vmem>>, vector<1x8x1x11xf32>
    %260 = vector.shape_cast %259 : vector<1x8x1x11xf32> to vector<8x1x11xf32>
    %261 = vector.extract_strided_slice %113 {offsets = [2, 2], sizes = [11, 11], strides = [1, 1]} : vector<13x13xf32> to vector<11x11xf32>
    %262 = vector.shape_cast %261 : vector<11x11xf32> to vector<1x11x11xf32>
    %263 = vector.broadcast %260 : vector<8x1x11xf32> to vector<8x11x11xf32>
    %264 = vector.broadcast %262 : vector<1x11x11xf32> to vector<8x11x11xf32>
    %265 = arith.mulf %263, %264 : vector<8x11x11xf32>
    %266 = arith.addf %258, %265 : vector<8x11x11xf32>
    %c18 = arith.constant 18 : index
    %c0_114 = arith.constant 0 : index
    %c0_115 = arith.constant 0 : index
    %c0_116 = arith.constant 0 : index
    %267 = vector.load %arg6[%c18, %c0_114, %c0_115, %c0_116] : memref<36x8x1x11xf32, #tpu.memory_space<vmem>>, vector<1x8x1x11xf32>
    %268 = vector.shape_cast %267 : vector<1x8x1x11xf32> to vector<8x1x11xf32>
    %269 = vector.extract_strided_slice %117 {offsets = [0, 0], sizes = [11, 11], strides = [1, 1]} : vector<13x13xf32> to vector<11x11xf32>
    %270 = vector.shape_cast %269 : vector<11x11xf32> to vector<1x11x11xf32>
    %271 = vector.broadcast %268 : vector<8x1x11xf32> to vector<8x11x11xf32>
    %272 = vector.broadcast %270 : vector<1x11x11xf32> to vector<8x11x11xf32>
    %273 = arith.mulf %271, %272 : vector<8x11x11xf32>
    %274 = arith.addf %266, %273 : vector<8x11x11xf32>
    %c19 = arith.constant 19 : index
    %c0_117 = arith.constant 0 : index
    %c0_118 = arith.constant 0 : index
    %c0_119 = arith.constant 0 : index
    %275 = vector.load %arg6[%c19, %c0_117, %c0_118, %c0_119] : memref<36x8x1x11xf32, #tpu.memory_space<vmem>>, vector<1x8x1x11xf32>
    %276 = vector.shape_cast %275 : vector<1x8x1x11xf32> to vector<8x1x11xf32>
    %277 = vector.extract_strided_slice %117 {offsets = [0, 1], sizes = [11, 11], strides = [1, 1]} : vector<13x13xf32> to vector<11x11xf32>
    %278 = vector.shape_cast %277 : vector<11x11xf32> to vector<1x11x11xf32>
    %279 = vector.broadcast %276 : vector<8x1x11xf32> to vector<8x11x11xf32>
    %280 = vector.broadcast %278 : vector<1x11x11xf32> to vector<8x11x11xf32>
    %281 = arith.mulf %279, %280 : vector<8x11x11xf32>
    %282 = arith.addf %274, %281 : vector<8x11x11xf32>
    %c20 = arith.constant 20 : index
    %c0_120 = arith.constant 0 : index
    %c0_121 = arith.constant 0 : index
    %c0_122 = arith.constant 0 : index
    %283 = vector.load %arg6[%c20, %c0_120, %c0_121, %c0_122] : memref<36x8x1x11xf32, #tpu.memory_space<vmem>>, vector<1x8x1x11xf32>
    %284 = vector.shape_cast %283 : vector<1x8x1x11xf32> to vector<8x1x11xf32>
    %285 = vector.extract_strided_slice %117 {offsets = [0, 2], sizes = [11, 11], strides = [1, 1]} : vector<13x13xf32> to vector<11x11xf32>
    %286 = vector.shape_cast %285 : vector<11x11xf32> to vector<1x11x11xf32>
    %287 = vector.broadcast %284 : vector<8x1x11xf32> to vector<8x11x11xf32>
    %288 = vector.broadcast %286 : vector<1x11x11xf32> to vector<8x11x11xf32>
    %289 = arith.mulf %287, %288 : vector<8x11x11xf32>
    %290 = arith.addf %282, %289 : vector<8x11x11xf32>
    %c21 = arith.constant 21 : index
    %c0_123 = arith.constant 0 : index
    %c0_124 = arith.constant 0 : index
    %c0_125 = arith.constant 0 : index
    %291 = vector.load %arg6[%c21, %c0_123, %c0_124, %c0_125] : memref<36x8x1x11xf32, #tpu.memory_space<vmem>>, vector<1x8x1x11xf32>
    %292 = vector.shape_cast %291 : vector<1x8x1x11xf32> to vector<8x1x11xf32>
    %293 = vector.extract_strided_slice %117 {offsets = [1, 0], sizes = [11, 11], strides = [1, 1]} : vector<13x13xf32> to vector<11x11xf32>
    %294 = vector.shape_cast %293 : vector<11x11xf32> to vector<1x11x11xf32>
    %295 = vector.broadcast %292 : vector<8x1x11xf32> to vector<8x11x11xf32>
    %296 = vector.broadcast %294 : vector<1x11x11xf32> to vector<8x11x11xf32>
    %297 = arith.mulf %295, %296 : vector<8x11x11xf32>
    %298 = arith.addf %290, %297 : vector<8x11x11xf32>
    %c22 = arith.constant 22 : index
    %c0_126 = arith.constant 0 : index
    %c0_127 = arith.constant 0 : index
    %c0_128 = arith.constant 0 : index
    %299 = vector.load %arg6[%c22, %c0_126, %c0_127, %c0_128] : memref<36x8x1x11xf32, #tpu.memory_space<vmem>>, vector<1x8x1x11xf32>
    %300 = vector.shape_cast %299 : vector<1x8x1x11xf32> to vector<8x1x11xf32>
    %301 = vector.extract_strided_slice %117 {offsets = [1, 1], sizes = [11, 11], strides = [1, 1]} : vector<13x13xf32> to vector<11x11xf32>
    %302 = vector.shape_cast %301 : vector<11x11xf32> to vector<1x11x11xf32>
    %303 = vector.broadcast %300 : vector<8x1x11xf32> to vector<8x11x11xf32>
    %304 = vector.broadcast %302 : vector<1x11x11xf32> to vector<8x11x11xf32>
    %305 = arith.mulf %303, %304 : vector<8x11x11xf32>
    %306 = arith.addf %298, %305 : vector<8x11x11xf32>
    %c23 = arith.constant 23 : index
    %c0_129 = arith.constant 0 : index
    %c0_130 = arith.constant 0 : index
    %c0_131 = arith.constant 0 : index
    %307 = vector.load %arg6[%c23, %c0_129, %c0_130, %c0_131] : memref<36x8x1x11xf32, #tpu.memory_space<vmem>>, vector<1x8x1x11xf32>
    %308 = vector.shape_cast %307 : vector<1x8x1x11xf32> to vector<8x1x11xf32>
    %309 = vector.extract_strided_slice %117 {offsets = [1, 2], sizes = [11, 11], strides = [1, 1]} : vector<13x13xf32> to vector<11x11xf32>
    %310 = vector.shape_cast %309 : vector<11x11xf32> to vector<1x11x11xf32>
    %311 = vector.broadcast %308 : vector<8x1x11xf32> to vector<8x11x11xf32>
    %312 = vector.broadcast %310 : vector<1x11x11xf32> to vector<8x11x11xf32>
    %313 = arith.mulf %311, %312 : vector<8x11x11xf32>
    %314 = arith.addf %306, %313 : vector<8x11x11xf32>
    %c24 = arith.constant 24 : index
    %c0_132 = arith.constant 0 : index
    %c0_133 = arith.constant 0 : index
    %c0_134 = arith.constant 0 : index
    %315 = vector.load %arg6[%c24, %c0_132, %c0_133, %c0_134] : memref<36x8x1x11xf32, #tpu.memory_space<vmem>>, vector<1x8x1x11xf32>
    %316 = vector.shape_cast %315 : vector<1x8x1x11xf32> to vector<8x1x11xf32>
    %317 = vector.extract_strided_slice %117 {offsets = [2, 0], sizes = [11, 11], strides = [1, 1]} : vector<13x13xf32> to vector<11x11xf32>
    %318 = vector.shape_cast %317 : vector<11x11xf32> to vector<1x11x11xf32>
    %319 = vector.broadcast %316 : vector<8x1x11xf32> to vector<8x11x11xf32>
    %320 = vector.broadcast %318 : vector<1x11x11xf32> to vector<8x11x11xf32>
    %321 = arith.mulf %319, %320 : vector<8x11x11xf32>
    %322 = arith.addf %314, %321 : vector<8x11x11xf32>
    %c25 = arith.constant 25 : index
    %c0_135 = arith.constant 0 : index
    %c0_136 = arith.constant 0 : index
    %c0_137 = arith.constant 0 : index
    %323 = vector.load %arg6[%c25, %c0_135, %c0_136, %c0_137] : memref<36x8x1x11xf32, #tpu.memory_space<vmem>>, vector<1x8x1x11xf32>
    %324 = vector.shape_cast %323 : vector<1x8x1x11xf32> to vector<8x1x11xf32>
    %325 = vector.extract_strided_slice %117 {offsets = [2, 1], sizes = [11, 11], strides = [1, 1]} : vector<13x13xf32> to vector<11x11xf32>
    %326 = vector.shape_cast %325 : vector<11x11xf32> to vector<1x11x11xf32>
    %327 = vector.broadcast %324 : vector<8x1x11xf32> to vector<8x11x11xf32>
    %328 = vector.broadcast %326 : vector<1x11x11xf32> to vector<8x11x11xf32>
    %329 = arith.mulf %327, %328 : vector<8x11x11xf32>
    %330 = arith.addf %322, %329 : vector<8x11x11xf32>
    %c26 = arith.constant 26 : index
    %c0_138 = arith.constant 0 : index
    %c0_139 = arith.constant 0 : index
    %c0_140 = arith.constant 0 : index
    %331 = vector.load %arg6[%c26, %c0_138, %c0_139, %c0_140] : memref<36x8x1x11xf32, #tpu.memory_space<vmem>>, vector<1x8x1x11xf32>
    %332 = vector.shape_cast %331 : vector<1x8x1x11xf32> to vector<8x1x11xf32>
    %333 = vector.extract_strided_slice %117 {offsets = [2, 2], sizes = [11, 11], strides = [1, 1]} : vector<13x13xf32> to vector<11x11xf32>
    %334 = vector.shape_cast %333 : vector<11x11xf32> to vector<1x11x11xf32>
    %335 = vector.broadcast %332 : vector<8x1x11xf32> to vector<8x11x11xf32>
    %336 = vector.broadcast %334 : vector<1x11x11xf32> to vector<8x11x11xf32>
    %337 = arith.mulf %335, %336 : vector<8x11x11xf32>
    %338 = arith.addf %330, %337 : vector<8x11x11xf32>
    %c27 = arith.constant 27 : index
    %c0_141 = arith.constant 0 : index
    %c0_142 = arith.constant 0 : index
    %c0_143 = arith.constant 0 : index
    %339 = vector.load %arg6[%c27, %c0_141, %c0_142, %c0_143] : memref<36x8x1x11xf32, #tpu.memory_space<vmem>>, vector<1x8x1x11xf32>
    %340 = vector.shape_cast %339 : vector<1x8x1x11xf32> to vector<8x1x11xf32>
    %341 = vector.extract_strided_slice %121 {offsets = [0, 0], sizes = [11, 11], strides = [1, 1]} : vector<13x13xf32> to vector<11x11xf32>
    %342 = vector.shape_cast %341 : vector<11x11xf32> to vector<1x11x11xf32>
    %343 = vector.broadcast %340 : vector<8x1x11xf32> to vector<8x11x11xf32>
    %344 = vector.broadcast %342 : vector<1x11x11xf32> to vector<8x11x11xf32>
    %345 = arith.mulf %343, %344 : vector<8x11x11xf32>
    %346 = arith.addf %338, %345 : vector<8x11x11xf32>
    %c28 = arith.constant 28 : index
    %c0_144 = arith.constant 0 : index
    %c0_145 = arith.constant 0 : index
    %c0_146 = arith.constant 0 : index
    %347 = vector.load %arg6[%c28, %c0_144, %c0_145, %c0_146] : memref<36x8x1x11xf32, #tpu.memory_space<vmem>>, vector<1x8x1x11xf32>
    %348 = vector.shape_cast %347 : vector<1x8x1x11xf32> to vector<8x1x11xf32>
    %349 = vector.extract_strided_slice %121 {offsets = [0, 1], sizes = [11, 11], strides = [1, 1]} : vector<13x13xf32> to vector<11x11xf32>
    %350 = vector.shape_cast %349 : vector<11x11xf32> to vector<1x11x11xf32>
    %351 = vector.broadcast %348 : vector<8x1x11xf32> to vector<8x11x11xf32>
    %352 = vector.broadcast %350 : vector<1x11x11xf32> to vector<8x11x11xf32>
    %353 = arith.mulf %351, %352 : vector<8x11x11xf32>
    %354 = arith.addf %346, %353 : vector<8x11x11xf32>
    %c29 = arith.constant 29 : index
    %c0_147 = arith.constant 0 : index
    %c0_148 = arith.constant 0 : index
    %c0_149 = arith.constant 0 : index
    %355 = vector.load %arg6[%c29, %c0_147, %c0_148, %c0_149] : memref<36x8x1x11xf32, #tpu.memory_space<vmem>>, vector<1x8x1x11xf32>
    %356 = vector.shape_cast %355 : vector<1x8x1x11xf32> to vector<8x1x11xf32>
    %357 = vector.extract_strided_slice %121 {offsets = [0, 2], sizes = [11, 11], strides = [1, 1]} : vector<13x13xf32> to vector<11x11xf32>
    %358 = vector.shape_cast %357 : vector<11x11xf32> to vector<1x11x11xf32>
    %359 = vector.broadcast %356 : vector<8x1x11xf32> to vector<8x11x11xf32>
    %360 = vector.broadcast %358 : vector<1x11x11xf32> to vector<8x11x11xf32>
    %361 = arith.mulf %359, %360 : vector<8x11x11xf32>
    %362 = arith.addf %354, %361 : vector<8x11x11xf32>
    %c30 = arith.constant 30 : index
    %c0_150 = arith.constant 0 : index
    %c0_151 = arith.constant 0 : index
    %c0_152 = arith.constant 0 : index
    %363 = vector.load %arg6[%c30, %c0_150, %c0_151, %c0_152] : memref<36x8x1x11xf32, #tpu.memory_space<vmem>>, vector<1x8x1x11xf32>
    %364 = vector.shape_cast %363 : vector<1x8x1x11xf32> to vector<8x1x11xf32>
    %365 = vector.extract_strided_slice %121 {offsets = [1, 0], sizes = [11, 11], strides = [1, 1]} : vector<13x13xf32> to vector<11x11xf32>
    %366 = vector.shape_cast %365 : vector<11x11xf32> to vector<1x11x11xf32>
    %367 = vector.broadcast %364 : vector<8x1x11xf32> to vector<8x11x11xf32>
    %368 = vector.broadcast %366 : vector<1x11x11xf32> to vector<8x11x11xf32>
    %369 = arith.mulf %367, %368 : vector<8x11x11xf32>
    %370 = arith.addf %362, %369 : vector<8x11x11xf32>
    %c31 = arith.constant 31 : index
    %c0_153 = arith.constant 0 : index
    %c0_154 = arith.constant 0 : index
    %c0_155 = arith.constant 0 : index
    %371 = vector.load %arg6[%c31, %c0_153, %c0_154, %c0_155] : memref<36x8x1x11xf32, #tpu.memory_space<vmem>>, vector<1x8x1x11xf32>
    %372 = vector.shape_cast %371 : vector<1x8x1x11xf32> to vector<8x1x11xf32>
    %373 = vector.extract_strided_slice %121 {offsets = [1, 1], sizes = [11, 11], strides = [1, 1]} : vector<13x13xf32> to vector<11x11xf32>
    %374 = vector.shape_cast %373 : vector<11x11xf32> to vector<1x11x11xf32>
    %375 = vector.broadcast %372 : vector<8x1x11xf32> to vector<8x11x11xf32>
    %376 = vector.broadcast %374 : vector<1x11x11xf32> to vector<8x11x11xf32>
    %377 = arith.mulf %375, %376 : vector<8x11x11xf32>
    %378 = arith.addf %370, %377 : vector<8x11x11xf32>
    %c32 = arith.constant 32 : index
    %c0_156 = arith.constant 0 : index
    %c0_157 = arith.constant 0 : index
    %c0_158 = arith.constant 0 : index
    %379 = vector.load %arg6[%c32, %c0_156, %c0_157, %c0_158] : memref<36x8x1x11xf32, #tpu.memory_space<vmem>>, vector<1x8x1x11xf32>
    %380 = vector.shape_cast %379 : vector<1x8x1x11xf32> to vector<8x1x11xf32>
    %381 = vector.extract_strided_slice %121 {offsets = [1, 2], sizes = [11, 11], strides = [1, 1]} : vector<13x13xf32> to vector<11x11xf32>
    %382 = vector.shape_cast %381 : vector<11x11xf32> to vector<1x11x11xf32>
    %383 = vector.broadcast %380 : vector<8x1x11xf32> to vector<8x11x11xf32>
    %384 = vector.broadcast %382 : vector<1x11x11xf32> to vector<8x11x11xf32>
    %385 = arith.mulf %383, %384 : vector<8x11x11xf32>
    %386 = arith.addf %378, %385 : vector<8x11x11xf32>
    %c33 = arith.constant 33 : index
    %c0_159 = arith.constant 0 : index
    %c0_160 = arith.constant 0 : index
    %c0_161 = arith.constant 0 : index
    %387 = vector.load %arg6[%c33, %c0_159, %c0_160, %c0_161] : memref<36x8x1x11xf32, #tpu.memory_space<vmem>>, vector<1x8x1x11xf32>
    %388 = vector.shape_cast %387 : vector<1x8x1x11xf32> to vector<8x1x11xf32>
    %389 = vector.extract_strided_slice %121 {offsets = [2, 0], sizes = [11, 11], strides = [1, 1]} : vector<13x13xf32> to vector<11x11xf32>
    %390 = vector.shape_cast %389 : vector<11x11xf32> to vector<1x11x11xf32>
    %391 = vector.broadcast %388 : vector<8x1x11xf32> to vector<8x11x11xf32>
    %392 = vector.broadcast %390 : vector<1x11x11xf32> to vector<8x11x11xf32>
    %393 = arith.mulf %391, %392 : vector<8x11x11xf32>
    %394 = arith.addf %386, %393 : vector<8x11x11xf32>
    %c34 = arith.constant 34 : index
    %c0_162 = arith.constant 0 : index
    %c0_163 = arith.constant 0 : index
    %c0_164 = arith.constant 0 : index
    %395 = vector.load %arg6[%c34, %c0_162, %c0_163, %c0_164] : memref<36x8x1x11xf32, #tpu.memory_space<vmem>>, vector<1x8x1x11xf32>
    %396 = vector.shape_cast %395 : vector<1x8x1x11xf32> to vector<8x1x11xf32>
    %397 = vector.extract_strided_slice %121 {offsets = [2, 1], sizes = [11, 11], strides = [1, 1]} : vector<13x13xf32> to vector<11x11xf32>
    %398 = vector.shape_cast %397 : vector<11x11xf32> to vector<1x11x11xf32>
    %399 = vector.broadcast %396 : vector<8x1x11xf32> to vector<8x11x11xf32>
    %400 = vector.broadcast %398 : vector<1x11x11xf32> to vector<8x11x11xf32>
    %401 = arith.mulf %399, %400 : vector<8x11x11xf32>
    %402 = arith.addf %394, %401 : vector<8x11x11xf32>
    %c35 = arith.constant 35 : index
    %c0_165 = arith.constant 0 : index
    %c0_166 = arith.constant 0 : index
    %c0_167 = arith.constant 0 : index
    %403 = vector.load %arg6[%c35, %c0_165, %c0_166, %c0_167] : memref<36x8x1x11xf32, #tpu.memory_space<vmem>>, vector<1x8x1x11xf32>
    %404 = vector.shape_cast %403 : vector<1x8x1x11xf32> to vector<8x1x11xf32>
    %405 = vector.extract_strided_slice %121 {offsets = [2, 2], sizes = [11, 11], strides = [1, 1]} : vector<13x13xf32> to vector<11x11xf32>
    %406 = vector.shape_cast %405 : vector<11x11xf32> to vector<1x11x11xf32>
    %407 = vector.broadcast %404 : vector<8x1x11xf32> to vector<8x11x11xf32>
    %408 = vector.broadcast %406 : vector<1x11x11xf32> to vector<8x11x11xf32>
    %409 = arith.mulf %407, %408 : vector<8x11x11xf32>
    %410 = arith.addf %402, %409 : vector<8x11x11xf32>
    %c0_168 = arith.constant 0 : index
    %c0_169 = arith.constant 0 : index
    %c0_170 = arith.constant 0 : index
    %411 = vector.load %arg7[%c0_168, %c0_169, %c0_170] : memref<8x1x11xf32, #tpu.memory_space<vmem>>, vector<8x1x11xf32>
    %412 = vector.broadcast %411 : vector<8x1x11xf32> to vector<8x11x11xf32>
    %413 = arith.addf %410, %412 : vector<8x11x11xf32>
    %cst_171 = arith.constant 0.000000e+00 : f32
    %414 = vector.broadcast %cst_171 : f32 to vector<8x11x11xf32>
    %415 = arith.maximumf %413, %414 : vector<8x11x11xf32>
    %c0_172 = arith.constant 0 : index
    %c0_173 = arith.constant 0 : index
    %c0_174 = arith.constant 0 : index
    %416 = vector.load %arg8[%c0_172, %c0_173, %c0_174] : memref<8x1x11xf32, #tpu.memory_space<vmem>>, vector<8x1x11xf32>
    %417 = vector.broadcast %416 : vector<8x1x11xf32> to vector<8x11x11xf32>
    %418 = arith.mulf %415, %417 : vector<8x11x11xf32>
    %c0_175 = arith.constant 0 : index
    %c0_176 = arith.constant 0 : index
    %c0_177 = arith.constant 0 : index
    %419 = vector.load %arg9[%c0_175, %c0_176, %c0_177] : memref<8x1x11xf32, #tpu.memory_space<vmem>>, vector<8x1x11xf32>
    %420 = vector.broadcast %419 : vector<8x1x11xf32> to vector<8x11x11xf32>
    %421 = arith.addf %418, %420 : vector<8x11x11xf32>
    %422 = vector.extract_strided_slice %421 {offsets = [0, 0, 0], sizes = [1, 1, 11], strides = [1, 1, 1]} : vector<8x11x11xf32> to vector<1x1x11xf32>
    %423 = vector.shape_cast %422 : vector<1x1x11xf32> to vector<1x11xf32>
    %c0_178 = arith.constant 0 : index
    %c0_179 = arith.constant 0 : index
    %424 = vector.load %arg13[%c0_178, %c0_179] : memref<1x968xf32, #tpu.memory_space<vmem>>, vector<1x11xf32>
    tpu.vector_store %arg13[%c0_178, %c0_179], %423 {strides = array<i32>} : memref<1x968xf32, #tpu.memory_space<vmem>>, vector<1x11xf32>,
    %425 = vector.extract_strided_slice %421 {offsets = [0, 1, 0], sizes = [1, 1, 11], strides = [1, 1, 1]} : vector<8x11x11xf32> to vector<1x1x11xf32>
    %426 = vector.shape_cast %425 : vector<1x1x11xf32> to vector<1x11xf32>
    %c0_180 = arith.constant 0 : index
    %c11_181 = arith.constant 11 : index
    %427 = vector.load %arg13[%c0_180, %c11_181] : memref<1x968xf32, #tpu.memory_space<vmem>>, vector<1x11xf32>
    tpu.vector_store %arg13[%c0_180, %c11_181], %426 {strides = array<i32>} : memref<1x968xf32, #tpu.memory_space<vmem>>, vector<1x11xf32>,
    %428 = vector.extract_strided_slice %421 {offsets = [0, 2, 0], sizes = [1, 1, 11], strides = [1, 1, 1]} : vector<8x11x11xf32> to vector<1x1x11xf32>
    %429 = vector.shape_cast %428 : vector<1x1x11xf32> to vector<1x11xf32>
    %c0_182 = arith.constant 0 : index
    %c22_183 = arith.constant 22 : index
    %430 = vector.load %arg13[%c0_182, %c22_183] : memref<1x968xf32, #tpu.memory_space<vmem>>, vector<1x11xf32>
    tpu.vector_store %arg13[%c0_182, %c22_183], %429 {strides = array<i32>} : memref<1x968xf32, #tpu.memory_space<vmem>>, vector<1x11xf32>,
    %431 = vector.extract_strided_slice %421 {offsets = [0, 3, 0], sizes = [1, 1, 11], strides = [1, 1, 1]} : vector<8x11x11xf32> to vector<1x1x11xf32>
    %432 = vector.shape_cast %431 : vector<1x1x11xf32> to vector<1x11xf32>
    %c0_184 = arith.constant 0 : index
    %c33_185 = arith.constant 33 : index
    %433 = vector.load %arg13[%c0_184, %c33_185] : memref<1x968xf32, #tpu.memory_space<vmem>>, vector<1x11xf32>
    tpu.vector_store %arg13[%c0_184, %c33_185], %432 {strides = array<i32>} : memref<1x968xf32, #tpu.memory_space<vmem>>, vector<1x11xf32>,
    %434 = vector.extract_strided_slice %421 {offsets = [0, 4, 0], sizes = [1, 1, 11], strides = [1, 1, 1]} : vector<8x11x11xf32> to vector<1x1x11xf32>
    %435 = vector.shape_cast %434 : vector<1x1x11xf32> to vector<1x11xf32>
    %c0_186 = arith.constant 0 : index
    %c44 = arith.constant 44 : index
    %436 = vector.load %arg13[%c0_186, %c44] : memref<1x968xf32, #tpu.memory_space<vmem>>, vector<1x11xf32>
    tpu.vector_store %arg13[%c0_186, %c44], %435 {strides = array<i32>} : memref<1x968xf32, #tpu.memory_space<vmem>>, vector<1x11xf32>,
    %437 = vector.extract_strided_slice %421 {offsets = [0, 5, 0], sizes = [1, 1, 11], strides = [1, 1, 1]} : vector<8x11x11xf32> to vector<1x1x11xf32>
    %438 = vector.shape_cast %437 : vector<1x1x11xf32> to vector<1x11xf32>
    %c0_187 = arith.constant 0 : index
    %c55 = arith.constant 55 : index
    %439 = vector.load %arg13[%c0_187, %c55] : memref<1x968xf32, #tpu.memory_space<vmem>>, vector<1x11xf32>
    tpu.vector_store %arg13[%c0_187, %c55], %438 {strides = array<i32>} : memref<1x968xf32, #tpu.memory_space<vmem>>, vector<1x11xf32>,
    %440 = vector.extract_strided_slice %421 {offsets = [0, 6, 0], sizes = [1, 1, 11], strides = [1, 1, 1]} : vector<8x11x11xf32> to vector<1x1x11xf32>
    %441 = vector.shape_cast %440 : vector<1x1x11xf32> to vector<1x11xf32>
    %c0_188 = arith.constant 0 : index
    %c66 = arith.constant 66 : index
    %442 = vector.load %arg13[%c0_188, %c66] : memref<1x968xf32, #tpu.memory_space<vmem>>, vector<1x11xf32>
    tpu.vector_store %arg13[%c0_188, %c66], %441 {strides = array<i32>} : memref<1x968xf32, #tpu.memory_space<vmem>>, vector<1x11xf32>,
    %443 = vector.extract_strided_slice %421 {offsets = [0, 7, 0], sizes = [1, 1, 11], strides = [1, 1, 1]} : vector<8x11x11xf32> to vector<1x1x11xf32>
    %444 = vector.shape_cast %443 : vector<1x1x11xf32> to vector<1x11xf32>
    %c0_189 = arith.constant 0 : index
    %c77 = arith.constant 77 : index
    %445 = vector.load %arg13[%c0_189, %c77] : memref<1x968xf32, #tpu.memory_space<vmem>>, vector<1x11xf32>
    tpu.vector_store %arg13[%c0_189, %c77], %444 {strides = array<i32>} : memref<1x968xf32, #tpu.memory_space<vmem>>, vector<1x11xf32>,
    %446 = vector.extract_strided_slice %421 {offsets = [0, 8, 0], sizes = [1, 1, 11], strides = [1, 1, 1]} : vector<8x11x11xf32> to vector<1x1x11xf32>
    %447 = vector.shape_cast %446 : vector<1x1x11xf32> to vector<1x11xf32>
    %c0_190 = arith.constant 0 : index
    %c88 = arith.constant 88 : index
    %448 = vector.load %arg13[%c0_190, %c88] : memref<1x968xf32, #tpu.memory_space<vmem>>, vector<1x11xf32>
    tpu.vector_store %arg13[%c0_190, %c88], %447 {strides = array<i32>} : memref<1x968xf32, #tpu.memory_space<vmem>>, vector<1x11xf32>,
    %449 = vector.extract_strided_slice %421 {offsets = [0, 9, 0], sizes = [1, 1, 11], strides = [1, 1, 1]} : vector<8x11x11xf32> to vector<1x1x11xf32>
    %450 = vector.shape_cast %449 : vector<1x1x11xf32> to vector<1x11xf32>
    %c0_191 = arith.constant 0 : index
    %c99 = arith.constant 99 : index
    %451 = vector.load %arg13[%c0_191, %c99] : memref<1x968xf32, #tpu.memory_space<vmem>>, vector<1x11xf32>
    tpu.vector_store %arg13[%c0_191, %c99], %450 {strides = array<i32>} : memref<1x968xf32, #tpu.memory_space<vmem>>, vector<1x11xf32>,
    %452 = vector.extract_strided_slice %421 {offsets = [0, 10, 0], sizes = [1, 1, 11], strides = [1, 1, 1]} : vector<8x11x11xf32> to vector<1x1x11xf32>
    %453 = vector.shape_cast %452 : vector<1x1x11xf32> to vector<1x11xf32>
    %c0_192 = arith.constant 0 : index
    %c110 = arith.constant 110 : index
    %454 = vector.load %arg13[%c0_192, %c110] : memref<1x968xf32, #tpu.memory_space<vmem>>, vector<1x11xf32>
    tpu.vector_store %arg13[%c0_192, %c110], %453 {strides = array<i32>} : memref<1x968xf32, #tpu.memory_space<vmem>>, vector<1x11xf32>,
    %455 = vector.extract_strided_slice %421 {offsets = [1, 0, 0], sizes = [1, 1, 11], strides = [1, 1, 1]} : vector<8x11x11xf32> to vector<1x1x11xf32>
    %456 = vector.shape_cast %455 : vector<1x1x11xf32> to vector<1x11xf32>
    %c0_193 = arith.constant 0 : index
    %c121 = arith.constant 121 : index
    %457 = vector.load %arg13[%c0_193, %c121] : memref<1x968xf32, #tpu.memory_space<vmem>>, vector<1x11xf32>
    tpu.vector_store %arg13[%c0_193, %c121], %456 {strides = array<i32>} : memref<1x968xf32, #tpu.memory_space<vmem>>, vector<1x11xf32>,
    %458 = vector.extract_strided_slice %421 {offsets = [1, 1, 0], sizes = [1, 1, 11], strides = [1, 1, 1]} : vector<8x11x11xf32> to vector<1x1x11xf32>
    %459 = vector.shape_cast %458 : vector<1x1x11xf32> to vector<1x11xf32>
    %c0_194 = arith.constant 0 : index
    %c132 = arith.constant 132 : index
    %460 = vector.load %arg13[%c0_194, %c132] : memref<1x968xf32, #tpu.memory_space<vmem>>, vector<1x11xf32>
    tpu.vector_store %arg13[%c0_194, %c132], %459 {strides = array<i32>} : memref<1x968xf32, #tpu.memory_space<vmem>>, vector<1x11xf32>,
    %461 = vector.extract_strided_slice %421 {offsets = [1, 2, 0], sizes = [1, 1, 11], strides = [1, 1, 1]} : vector<8x11x11xf32> to vector<1x1x11xf32>
    %462 = vector.shape_cast %461 : vector<1x1x11xf32> to vector<1x11xf32>
    %c0_195 = arith.constant 0 : index
    %c143 = arith.constant 143 : index
    %463 = vector.load %arg13[%c0_195, %c143] : memref<1x968xf32, #tpu.memory_space<vmem>>, vector<1x11xf32>
    tpu.vector_store %arg13[%c0_195, %c143], %462 {strides = array<i32>} : memref<1x968xf32, #tpu.memory_space<vmem>>, vector<1x11xf32>,
    %464 = vector.extract_strided_slice %421 {offsets = [1, 3, 0], sizes = [1, 1, 11], strides = [1, 1, 1]} : vector<8x11x11xf32> to vector<1x1x11xf32>
    %465 = vector.shape_cast %464 : vector<1x1x11xf32> to vector<1x11xf32>
    %c0_196 = arith.constant 0 : index
    %c154 = arith.constant 154 : index
    %466 = vector.load %arg13[%c0_196, %c154] : memref<1x968xf32, #tpu.memory_space<vmem>>, vector<1x11xf32>
    tpu.vector_store %arg13[%c0_196, %c154], %465 {strides = array<i32>} : memref<1x968xf32, #tpu.memory_space<vmem>>, vector<1x11xf32>,
    %467 = vector.extract_strided_slice %421 {offsets = [1, 4, 0], sizes = [1, 1, 11], strides = [1, 1, 1]} : vector<8x11x11xf32> to vector<1x1x11xf32>
    %468 = vector.shape_cast %467 : vector<1x1x11xf32> to vector<1x11xf32>
    %c0_197 = arith.constant 0 : index
    %c165 = arith.constant 165 : index
    %469 = vector.load %arg13[%c0_197, %c165] : memref<1x968xf32, #tpu.memory_space<vmem>>, vector<1x11xf32>
    tpu.vector_store %arg13[%c0_197, %c165], %468 {strides = array<i32>} : memref<1x968xf32, #tpu.memory_space<vmem>>, vector<1x11xf32>,
    %470 = vector.extract_strided_slice %421 {offsets = [1, 5, 0], sizes = [1, 1, 11], strides = [1, 1, 1]} : vector<8x11x11xf32> to vector<1x1x11xf32>
    %471 = vector.shape_cast %470 : vector<1x1x11xf32> to vector<1x11xf32>
    %c0_198 = arith.constant 0 : index
    %c176 = arith.constant 176 : index
    %472 = vector.load %arg13[%c0_198, %c176] : memref<1x968xf32, #tpu.memory_space<vmem>>, vector<1x11xf32>
    tpu.vector_store %arg13[%c0_198, %c176], %471 {strides = array<i32>} : memref<1x968xf32, #tpu.memory_space<vmem>>, vector<1x11xf32>,
    %473 = vector.extract_strided_slice %421 {offsets = [1, 6, 0], sizes = [1, 1, 11], strides = [1, 1, 1]} : vector<8x11x11xf32> to vector<1x1x11xf32>
    %474 = vector.shape_cast %473 : vector<1x1x11xf32> to vector<1x11xf32>
    %c0_199 = arith.constant 0 : index
    %c187 = arith.constant 187 : index
    %475 = vector.load %arg13[%c0_199, %c187] : memref<1x968xf32, #tpu.memory_space<vmem>>, vector<1x11xf32>
    tpu.vector_store %arg13[%c0_199, %c187], %474 {strides = array<i32>} : memref<1x968xf32, #tpu.memory_space<vmem>>, vector<1x11xf32>,
    %476 = vector.extract_strided_slice %421 {offsets = [1, 7, 0], sizes = [1, 1, 11], strides = [1, 1, 1]} : vector<8x11x11xf32> to vector<1x1x11xf32>
    %477 = vector.shape_cast %476 : vector<1x1x11xf32> to vector<1x11xf32>
    %c0_200 = arith.constant 0 : index
    %c198 = arith.constant 198 : index
    %478 = vector.load %arg13[%c0_200, %c198] : memref<1x968xf32, #tpu.memory_space<vmem>>, vector<1x11xf32>
    tpu.vector_store %arg13[%c0_200, %c198], %477 {strides = array<i32>} : memref<1x968xf32, #tpu.memory_space<vmem>>, vector<1x11xf32>,
    %479 = vector.extract_strided_slice %421 {offsets = [1, 8, 0], sizes = [1, 1, 11], strides = [1, 1, 1]} : vector<8x11x11xf32> to vector<1x1x11xf32>
    %480 = vector.shape_cast %479 : vector<1x1x11xf32> to vector<1x11xf32>
    %c0_201 = arith.constant 0 : index
    %c209 = arith.constant 209 : index
    %481 = vector.load %arg13[%c0_201, %c209] : memref<1x968xf32, #tpu.memory_space<vmem>>, vector<1x11xf32>
    tpu.vector_store %arg13[%c0_201, %c209], %480 {strides = array<i32>} : memref<1x968xf32, #tpu.memory_space<vmem>>, vector<1x11xf32>,
    %482 = vector.extract_strided_slice %421 {offsets = [1, 9, 0], sizes = [1, 1, 11], strides = [1, 1, 1]} : vector<8x11x11xf32> to vector<1x1x11xf32>
    %483 = vector.shape_cast %482 : vector<1x1x11xf32> to vector<1x11xf32>
    %c0_202 = arith.constant 0 : index
    %c220 = arith.constant 220 : index
    %484 = vector.load %arg13[%c0_202, %c220] : memref<1x968xf32, #tpu.memory_space<vmem>>, vector<1x11xf32>
    tpu.vector_store %arg13[%c0_202, %c220], %483 {strides = array<i32>} : memref<1x968xf32, #tpu.memory_space<vmem>>, vector<1x11xf32>,
    %485 = vector.extract_strided_slice %421 {offsets = [1, 10, 0], sizes = [1, 1, 11], strides = [1, 1, 1]} : vector<8x11x11xf32> to vector<1x1x11xf32>
    %486 = vector.shape_cast %485 : vector<1x1x11xf32> to vector<1x11xf32>
    %c0_203 = arith.constant 0 : index
    %c231 = arith.constant 231 : index
    %487 = vector.load %arg13[%c0_203, %c231] : memref<1x968xf32, #tpu.memory_space<vmem>>, vector<1x11xf32>
    tpu.vector_store %arg13[%c0_203, %c231], %486 {strides = array<i32>} : memref<1x968xf32, #tpu.memory_space<vmem>>, vector<1x11xf32>,
    %488 = vector.extract_strided_slice %421 {offsets = [2, 0, 0], sizes = [1, 1, 11], strides = [1, 1, 1]} : vector<8x11x11xf32> to vector<1x1x11xf32>
    %489 = vector.shape_cast %488 : vector<1x1x11xf32> to vector<1x11xf32>
    %c0_204 = arith.constant 0 : index
    %c242 = arith.constant 242 : index
    %490 = vector.load %arg13[%c0_204, %c242] : memref<1x968xf32, #tpu.memory_space<vmem>>, vector<1x11xf32>
    tpu.vector_store %arg13[%c0_204, %c242], %489 {strides = array<i32>} : memref<1x968xf32, #tpu.memory_space<vmem>>, vector<1x11xf32>,
    %491 = vector.extract_strided_slice %421 {offsets = [2, 1, 0], sizes = [1, 1, 11], strides = [1, 1, 1]} : vector<8x11x11xf32> to vector<1x1x11xf32>
    %492 = vector.shape_cast %491 : vector<1x1x11xf32> to vector<1x11xf32>
    %c0_205 = arith.constant 0 : index
    %c253 = arith.constant 253 : index
    %493 = vector.load %arg13[%c0_205, %c253] : memref<1x968xf32, #tpu.memory_space<vmem>>, vector<1x11xf32>
    tpu.vector_store %arg13[%c0_205, %c253], %492 {strides = array<i32>} : memref<1x968xf32, #tpu.memory_space<vmem>>, vector<1x11xf32>,
    %494 = vector.extract_strided_slice %421 {offsets = [2, 2, 0], sizes = [1, 1, 11], strides = [1, 1, 1]} : vector<8x11x11xf32> to vector<1x1x11xf32>
    %495 = vector.shape_cast %494 : vector<1x1x11xf32> to vector<1x11xf32>
    %c0_206 = arith.constant 0 : index
    %c264 = arith.constant 264 : index
    %496 = vector.load %arg13[%c0_206, %c264] : memref<1x968xf32, #tpu.memory_space<vmem>>, vector<1x11xf32>
    tpu.vector_store %arg13[%c0_206, %c264], %495 {strides = array<i32>} : memref<1x968xf32, #tpu.memory_space<vmem>>, vector<1x11xf32>,
    %497 = vector.extract_strided_slice %421 {offsets = [2, 3, 0], sizes = [1, 1, 11], strides = [1, 1, 1]} : vector<8x11x11xf32> to vector<1x1x11xf32>
    %498 = vector.shape_cast %497 : vector<1x1x11xf32> to vector<1x11xf32>
    %c0_207 = arith.constant 0 : index
    %c275 = arith.constant 275 : index
    %499 = vector.load %arg13[%c0_207, %c275] : memref<1x968xf32, #tpu.memory_space<vmem>>, vector<1x11xf32>
    tpu.vector_store %arg13[%c0_207, %c275], %498 {strides = array<i32>} : memref<1x968xf32, #tpu.memory_space<vmem>>, vector<1x11xf32>,
    %500 = vector.extract_strided_slice %421 {offsets = [2, 4, 0], sizes = [1, 1, 11], strides = [1, 1, 1]} : vector<8x11x11xf32> to vector<1x1x11xf32>
    %501 = vector.shape_cast %500 : vector<1x1x11xf32> to vector<1x11xf32>
    %c0_208 = arith.constant 0 : index
    %c286 = arith.constant 286 : index
    %502 = vector.load %arg13[%c0_208, %c286] : memref<1x968xf32, #tpu.memory_space<vmem>>, vector<1x11xf32>
    tpu.vector_store %arg13[%c0_208, %c286], %501 {strides = array<i32>} : memref<1x968xf32, #tpu.memory_space<vmem>>, vector<1x11xf32>,
    %503 = vector.extract_strided_slice %421 {offsets = [2, 5, 0], sizes = [1, 1, 11], strides = [1, 1, 1]} : vector<8x11x11xf32> to vector<1x1x11xf32>
    %504 = vector.shape_cast %503 : vector<1x1x11xf32> to vector<1x11xf32>
    %c0_209 = arith.constant 0 : index
    %c297 = arith.constant 297 : index
    %505 = vector.load %arg13[%c0_209, %c297] : memref<1x968xf32, #tpu.memory_space<vmem>>, vector<1x11xf32>
    tpu.vector_store %arg13[%c0_209, %c297], %504 {strides = array<i32>} : memref<1x968xf32, #tpu.memory_space<vmem>>, vector<1x11xf32>,
    %506 = vector.extract_strided_slice %421 {offsets = [2, 6, 0], sizes = [1, 1, 11], strides = [1, 1, 1]} : vector<8x11x11xf32> to vector<1x1x11xf32>
    %507 = vector.shape_cast %506 : vector<1x1x11xf32> to vector<1x11xf32>
    %c0_210 = arith.constant 0 : index
    %c308 = arith.constant 308 : index
    %508 = vector.load %arg13[%c0_210, %c308] : memref<1x968xf32, #tpu.memory_space<vmem>>, vector<1x11xf32>
    tpu.vector_store %arg13[%c0_210, %c308], %507 {strides = array<i32>} : memref<1x968xf32, #tpu.memory_space<vmem>>, vector<1x11xf32>,
    %509 = vector.extract_strided_slice %421 {offsets = [2, 7, 0], sizes = [1, 1, 11], strides = [1, 1, 1]} : vector<8x11x11xf32> to vector<1x1x11xf32>
    %510 = vector.shape_cast %509 : vector<1x1x11xf32> to vector<1x11xf32>
    %c0_211 = arith.constant 0 : index
    %c319 = arith.constant 319 : index
    %511 = vector.load %arg13[%c0_211, %c319] : memref<1x968xf32, #tpu.memory_space<vmem>>, vector<1x11xf32>
    tpu.vector_store %arg13[%c0_211, %c319], %510 {strides = array<i32>} : memref<1x968xf32, #tpu.memory_space<vmem>>, vector<1x11xf32>,
    %512 = vector.extract_strided_slice %421 {offsets = [2, 8, 0], sizes = [1, 1, 11], strides = [1, 1, 1]} : vector<8x11x11xf32> to vector<1x1x11xf32>
    %513 = vector.shape_cast %512 : vector<1x1x11xf32> to vector<1x11xf32>
    %c0_212 = arith.constant 0 : index
    %c330 = arith.constant 330 : index
    %514 = vector.load %arg13[%c0_212, %c330] : memref<1x968xf32, #tpu.memory_space<vmem>>, vector<1x11xf32>
    tpu.vector_store %arg13[%c0_212, %c330], %513 {strides = array<i32>} : memref<1x968xf32, #tpu.memory_space<vmem>>, vector<1x11xf32>,
    %515 = vector.extract_strided_slice %421 {offsets = [2, 9, 0], sizes = [1, 1, 11], strides = [1, 1, 1]} : vector<8x11x11xf32> to vector<1x1x11xf32>
    %516 = vector.shape_cast %515 : vector<1x1x11xf32> to vector<1x11xf32>
    %c0_213 = arith.constant 0 : index
    %c341 = arith.constant 341 : index
    %517 = vector.load %arg13[%c0_213, %c341] : memref<1x968xf32, #tpu.memory_space<vmem>>, vector<1x11xf32>
    tpu.vector_store %arg13[%c0_213, %c341], %516 {strides = array<i32>} : memref<1x968xf32, #tpu.memory_space<vmem>>, vector<1x11xf32>,
    %518 = vector.extract_strided_slice %421 {offsets = [2, 10, 0], sizes = [1, 1, 11], strides = [1, 1, 1]} : vector<8x11x11xf32> to vector<1x1x11xf32>
    %519 = vector.shape_cast %518 : vector<1x1x11xf32> to vector<1x11xf32>
    %c0_214 = arith.constant 0 : index
    %c352 = arith.constant 352 : index
    %520 = vector.load %arg13[%c0_214, %c352] : memref<1x968xf32, #tpu.memory_space<vmem>>, vector<1x11xf32>
    tpu.vector_store %arg13[%c0_214, %c352], %519 {strides = array<i32>} : memref<1x968xf32, #tpu.memory_space<vmem>>, vector<1x11xf32>,
    %521 = vector.extract_strided_slice %421 {offsets = [3, 0, 0], sizes = [1, 1, 11], strides = [1, 1, 1]} : vector<8x11x11xf32> to vector<1x1x11xf32>
    %522 = vector.shape_cast %521 : vector<1x1x11xf32> to vector<1x11xf32>
    %c0_215 = arith.constant 0 : index
    %c363 = arith.constant 363 : index
    %523 = vector.load %arg13[%c0_215, %c363] : memref<1x968xf32, #tpu.memory_space<vmem>>, vector<1x11xf32>
    tpu.vector_store %arg13[%c0_215, %c363], %522 {strides = array<i32>} : memref<1x968xf32, #tpu.memory_space<vmem>>, vector<1x11xf32>,
    %524 = vector.extract_strided_slice %421 {offsets = [3, 1, 0], sizes = [1, 1, 11], strides = [1, 1, 1]} : vector<8x11x11xf32> to vector<1x1x11xf32>
    %525 = vector.shape_cast %524 : vector<1x1x11xf32> to vector<1x11xf32>
    %c0_216 = arith.constant 0 : index
    %c374 = arith.constant 374 : index
    %526 = vector.load %arg13[%c0_216, %c374] : memref<1x968xf32, #tpu.memory_space<vmem>>, vector<1x11xf32>
    tpu.vector_store %arg13[%c0_216, %c374], %525 {strides = array<i32>} : memref<1x968xf32, #tpu.memory_space<vmem>>, vector<1x11xf32>,
    %527 = vector.extract_strided_slice %421 {offsets = [3, 2, 0], sizes = [1, 1, 11], strides = [1, 1, 1]} : vector<8x11x11xf32> to vector<1x1x11xf32>
    %528 = vector.shape_cast %527 : vector<1x1x11xf32> to vector<1x11xf32>
    %c0_217 = arith.constant 0 : index
    %c385 = arith.constant 385 : index
    %529 = vector.load %arg13[%c0_217, %c385] : memref<1x968xf32, #tpu.memory_space<vmem>>, vector<1x11xf32>
    tpu.vector_store %arg13[%c0_217, %c385], %528 {strides = array<i32>} : memref<1x968xf32, #tpu.memory_space<vmem>>, vector<1x11xf32>,
    %530 = vector.extract_strided_slice %421 {offsets = [3, 3, 0], sizes = [1, 1, 11], strides = [1, 1, 1]} : vector<8x11x11xf32> to vector<1x1x11xf32>
    %531 = vector.shape_cast %530 : vector<1x1x11xf32> to vector<1x11xf32>
    %c0_218 = arith.constant 0 : index
    %c396 = arith.constant 396 : index
    %532 = vector.load %arg13[%c0_218, %c396] : memref<1x968xf32, #tpu.memory_space<vmem>>, vector<1x11xf32>
    tpu.vector_store %arg13[%c0_218, %c396], %531 {strides = array<i32>} : memref<1x968xf32, #tpu.memory_space<vmem>>, vector<1x11xf32>,
    %533 = vector.extract_strided_slice %421 {offsets = [3, 4, 0], sizes = [1, 1, 11], strides = [1, 1, 1]} : vector<8x11x11xf32> to vector<1x1x11xf32>
    %534 = vector.shape_cast %533 : vector<1x1x11xf32> to vector<1x11xf32>
    %c0_219 = arith.constant 0 : index
    %c407 = arith.constant 407 : index
    %535 = vector.load %arg13[%c0_219, %c407] : memref<1x968xf32, #tpu.memory_space<vmem>>, vector<1x11xf32>
    tpu.vector_store %arg13[%c0_219, %c407], %534 {strides = array<i32>} : memref<1x968xf32, #tpu.memory_space<vmem>>, vector<1x11xf32>,
    %536 = vector.extract_strided_slice %421 {offsets = [3, 5, 0], sizes = [1, 1, 11], strides = [1, 1, 1]} : vector<8x11x11xf32> to vector<1x1x11xf32>
    %537 = vector.shape_cast %536 : vector<1x1x11xf32> to vector<1x11xf32>
    %c0_220 = arith.constant 0 : index
    %c418 = arith.constant 418 : index
    %538 = vector.load %arg13[%c0_220, %c418] : memref<1x968xf32, #tpu.memory_space<vmem>>, vector<1x11xf32>
    tpu.vector_store %arg13[%c0_220, %c418], %537 {strides = array<i32>} : memref<1x968xf32, #tpu.memory_space<vmem>>, vector<1x11xf32>,
    %539 = vector.extract_strided_slice %421 {offsets = [3, 6, 0], sizes = [1, 1, 11], strides = [1, 1, 1]} : vector<8x11x11xf32> to vector<1x1x11xf32>
    %540 = vector.shape_cast %539 : vector<1x1x11xf32> to vector<1x11xf32>
    %c0_221 = arith.constant 0 : index
    %c429 = arith.constant 429 : index
    %541 = vector.load %arg13[%c0_221, %c429] : memref<1x968xf32, #tpu.memory_space<vmem>>, vector<1x11xf32>
    tpu.vector_store %arg13[%c0_221, %c429], %540 {strides = array<i32>} : memref<1x968xf32, #tpu.memory_space<vmem>>, vector<1x11xf32>,
    %542 = vector.extract_strided_slice %421 {offsets = [3, 7, 0], sizes = [1, 1, 11], strides = [1, 1, 1]} : vector<8x11x11xf32> to vector<1x1x11xf32>
    %543 = vector.shape_cast %542 : vector<1x1x11xf32> to vector<1x11xf32>
    %c0_222 = arith.constant 0 : index
    %c440 = arith.constant 440 : index
    %544 = vector.load %arg13[%c0_222, %c440] : memref<1x968xf32, #tpu.memory_space<vmem>>, vector<1x11xf32>
    tpu.vector_store %arg13[%c0_222, %c440], %543 {strides = array<i32>} : memref<1x968xf32, #tpu.memory_space<vmem>>, vector<1x11xf32>,
    %545 = vector.extract_strided_slice %421 {offsets = [3, 8, 0], sizes = [1, 1, 11], strides = [1, 1, 1]} : vector<8x11x11xf32> to vector<1x1x11xf32>
    %546 = vector.shape_cast %545 : vector<1x1x11xf32> to vector<1x11xf32>
    %c0_223 = arith.constant 0 : index
    %c451 = arith.constant 451 : index
    %547 = vector.load %arg13[%c0_223, %c451] : memref<1x968xf32, #tpu.memory_space<vmem>>, vector<1x11xf32>
    tpu.vector_store %arg13[%c0_223, %c451], %546 {strides = array<i32>} : memref<1x968xf32, #tpu.memory_space<vmem>>, vector<1x11xf32>,
    %548 = vector.extract_strided_slice %421 {offsets = [3, 9, 0], sizes = [1, 1, 11], strides = [1, 1, 1]} : vector<8x11x11xf32> to vector<1x1x11xf32>
    %549 = vector.shape_cast %548 : vector<1x1x11xf32> to vector<1x11xf32>
    %c0_224 = arith.constant 0 : index
    %c462 = arith.constant 462 : index
    %550 = vector.load %arg13[%c0_224, %c462] : memref<1x968xf32, #tpu.memory_space<vmem>>, vector<1x11xf32>
    tpu.vector_store %arg13[%c0_224, %c462], %549 {strides = array<i32>} : memref<1x968xf32, #tpu.memory_space<vmem>>, vector<1x11xf32>,
    %551 = vector.extract_strided_slice %421 {offsets = [3, 10, 0], sizes = [1, 1, 11], strides = [1, 1, 1]} : vector<8x11x11xf32> to vector<1x1x11xf32>
    %552 = vector.shape_cast %551 : vector<1x1x11xf32> to vector<1x11xf32>
    %c0_225 = arith.constant 0 : index
    %c473 = arith.constant 473 : index
    %553 = vector.load %arg13[%c0_225, %c473] : memref<1x968xf32, #tpu.memory_space<vmem>>, vector<1x11xf32>
    tpu.vector_store %arg13[%c0_225, %c473], %552 {strides = array<i32>} : memref<1x968xf32, #tpu.memory_space<vmem>>, vector<1x11xf32>,
    %554 = vector.extract_strided_slice %421 {offsets = [4, 0, 0], sizes = [1, 1, 11], strides = [1, 1, 1]} : vector<8x11x11xf32> to vector<1x1x11xf32>
    %555 = vector.shape_cast %554 : vector<1x1x11xf32> to vector<1x11xf32>
    %c0_226 = arith.constant 0 : index
    %c484 = arith.constant 484 : index
    %556 = vector.load %arg13[%c0_226, %c484] : memref<1x968xf32, #tpu.memory_space<vmem>>, vector<1x11xf32>
    tpu.vector_store %arg13[%c0_226, %c484], %555 {strides = array<i32>} : memref<1x968xf32, #tpu.memory_space<vmem>>, vector<1x11xf32>,
    %557 = vector.extract_strided_slice %421 {offsets = [4, 1, 0], sizes = [1, 1, 11], strides = [1, 1, 1]} : vector<8x11x11xf32> to vector<1x1x11xf32>
    %558 = vector.shape_cast %557 : vector<1x1x11xf32> to vector<1x11xf32>
    %c0_227 = arith.constant 0 : index
    %c495 = arith.constant 495 : index
    %559 = vector.load %arg13[%c0_227, %c495] : memref<1x968xf32, #tpu.memory_space<vmem>>, vector<1x11xf32>
    tpu.vector_store %arg13[%c0_227, %c495], %558 {strides = array<i32>} : memref<1x968xf32, #tpu.memory_space<vmem>>, vector<1x11xf32>,
    %560 = vector.extract_strided_slice %421 {offsets = [4, 2, 0], sizes = [1, 1, 11], strides = [1, 1, 1]} : vector<8x11x11xf32> to vector<1x1x11xf32>
    %561 = vector.shape_cast %560 : vector<1x1x11xf32> to vector<1x11xf32>
    %c0_228 = arith.constant 0 : index
    %c506 = arith.constant 506 : index
    %562 = vector.load %arg13[%c0_228, %c506] : memref<1x968xf32, #tpu.memory_space<vmem>>, vector<1x11xf32>
    tpu.vector_store %arg13[%c0_228, %c506], %561 {strides = array<i32>} : memref<1x968xf32, #tpu.memory_space<vmem>>, vector<1x11xf32>,
    %563 = vector.extract_strided_slice %421 {offsets = [4, 3, 0], sizes = [1, 1, 11], strides = [1, 1, 1]} : vector<8x11x11xf32> to vector<1x1x11xf32>
    %564 = vector.shape_cast %563 : vector<1x1x11xf32> to vector<1x11xf32>
    %c0_229 = arith.constant 0 : index
    %c517 = arith.constant 517 : index
    %565 = vector.load %arg13[%c0_229, %c517] : memref<1x968xf32, #tpu.memory_space<vmem>>, vector<1x11xf32>
    tpu.vector_store %arg13[%c0_229, %c517], %564 {strides = array<i32>} : memref<1x968xf32, #tpu.memory_space<vmem>>, vector<1x11xf32>,
    %566 = vector.extract_strided_slice %421 {offsets = [4, 4, 0], sizes = [1, 1, 11], strides = [1, 1, 1]} : vector<8x11x11xf32> to vector<1x1x11xf32>
    %567 = vector.shape_cast %566 : vector<1x1x11xf32> to vector<1x11xf32>
    %c0_230 = arith.constant 0 : index
    %c528 = arith.constant 528 : index
    %568 = vector.load %arg13[%c0_230, %c528] : memref<1x968xf32, #tpu.memory_space<vmem>>, vector<1x11xf32>
    tpu.vector_store %arg13[%c0_230, %c528], %567 {strides = array<i32>} : memref<1x968xf32, #tpu.memory_space<vmem>>, vector<1x11xf32>,
    %569 = vector.extract_strided_slice %421 {offsets = [4, 5, 0], sizes = [1, 1, 11], strides = [1, 1, 1]} : vector<8x11x11xf32> to vector<1x1x11xf32>
    %570 = vector.shape_cast %569 : vector<1x1x11xf32> to vector<1x11xf32>
    %c0_231 = arith.constant 0 : index
    %c539 = arith.constant 539 : index
    %571 = vector.load %arg13[%c0_231, %c539] : memref<1x968xf32, #tpu.memory_space<vmem>>, vector<1x11xf32>
    tpu.vector_store %arg13[%c0_231, %c539], %570 {strides = array<i32>} : memref<1x968xf32, #tpu.memory_space<vmem>>, vector<1x11xf32>,
    %572 = vector.extract_strided_slice %421 {offsets = [4, 6, 0], sizes = [1, 1, 11], strides = [1, 1, 1]} : vector<8x11x11xf32> to vector<1x1x11xf32>
    %573 = vector.shape_cast %572 : vector<1x1x11xf32> to vector<1x11xf32>
    %c0_232 = arith.constant 0 : index
    %c550 = arith.constant 550 : index
    %574 = vector.load %arg13[%c0_232, %c550] : memref<1x968xf32, #tpu.memory_space<vmem>>, vector<1x11xf32>
    tpu.vector_store %arg13[%c0_232, %c550], %573 {strides = array<i32>} : memref<1x968xf32, #tpu.memory_space<vmem>>, vector<1x11xf32>,
    %575 = vector.extract_strided_slice %421 {offsets = [4, 7, 0], sizes = [1, 1, 11], strides = [1, 1, 1]} : vector<8x11x11xf32> to vector<1x1x11xf32>
    %576 = vector.shape_cast %575 : vector<1x1x11xf32> to vector<1x11xf32>
    %c0_233 = arith.constant 0 : index
    %c561 = arith.constant 561 : index
    %577 = vector.load %arg13[%c0_233, %c561] : memref<1x968xf32, #tpu.memory_space<vmem>>, vector<1x11xf32>
    tpu.vector_store %arg13[%c0_233, %c561], %576 {strides = array<i32>} : memref<1x968xf32, #tpu.memory_space<vmem>>, vector<1x11xf32>,
    %578 = vector.extract_strided_slice %421 {offsets = [4, 8, 0], sizes = [1, 1, 11], strides = [1, 1, 1]} : vector<8x11x11xf32> to vector<1x1x11xf32>
    %579 = vector.shape_cast %578 : vector<1x1x11xf32> to vector<1x11xf32>
    %c0_234 = arith.constant 0 : index
    %c572 = arith.constant 572 : index
    %580 = vector.load %arg13[%c0_234, %c572] : memref<1x968xf32, #tpu.memory_space<vmem>>, vector<1x11xf32>
    tpu.vector_store %arg13[%c0_234, %c572], %579 {strides = array<i32>} : memref<1x968xf32, #tpu.memory_space<vmem>>, vector<1x11xf32>,
    %581 = vector.extract_strided_slice %421 {offsets = [4, 9, 0], sizes = [1, 1, 11], strides = [1, 1, 1]} : vector<8x11x11xf32> to vector<1x1x11xf32>
    %582 = vector.shape_cast %581 : vector<1x1x11xf32> to vector<1x11xf32>
    %c0_235 = arith.constant 0 : index
    %c583 = arith.constant 583 : index
    %583 = vector.load %arg13[%c0_235, %c583] : memref<1x968xf32, #tpu.memory_space<vmem>>, vector<1x11xf32>
    tpu.vector_store %arg13[%c0_235, %c583], %582 {strides = array<i32>} : memref<1x968xf32, #tpu.memory_space<vmem>>, vector<1x11xf32>,
    %584 = vector.extract_strided_slice %421 {offsets = [4, 10, 0], sizes = [1, 1, 11], strides = [1, 1, 1]} : vector<8x11x11xf32> to vector<1x1x11xf32>
    %585 = vector.shape_cast %584 : vector<1x1x11xf32> to vector<1x11xf32>
    %c0_236 = arith.constant 0 : index
    %c594 = arith.constant 594 : index
    %586 = vector.load %arg13[%c0_236, %c594] : memref<1x968xf32, #tpu.memory_space<vmem>>, vector<1x11xf32>
    tpu.vector_store %arg13[%c0_236, %c594], %585 {strides = array<i32>} : memref<1x968xf32, #tpu.memory_space<vmem>>, vector<1x11xf32>,
    %587 = vector.extract_strided_slice %421 {offsets = [5, 0, 0], sizes = [1, 1, 11], strides = [1, 1, 1]} : vector<8x11x11xf32> to vector<1x1x11xf32>
    %588 = vector.shape_cast %587 : vector<1x1x11xf32> to vector<1x11xf32>
    %c0_237 = arith.constant 0 : index
    %c605 = arith.constant 605 : index
    %589 = vector.load %arg13[%c0_237, %c605] : memref<1x968xf32, #tpu.memory_space<vmem>>, vector<1x11xf32>
    tpu.vector_store %arg13[%c0_237, %c605], %588 {strides = array<i32>} : memref<1x968xf32, #tpu.memory_space<vmem>>, vector<1x11xf32>,
    %590 = vector.extract_strided_slice %421 {offsets = [5, 1, 0], sizes = [1, 1, 11], strides = [1, 1, 1]} : vector<8x11x11xf32> to vector<1x1x11xf32>
    %591 = vector.shape_cast %590 : vector<1x1x11xf32> to vector<1x11xf32>
    %c0_238 = arith.constant 0 : index
    %c616 = arith.constant 616 : index
    %592 = vector.load %arg13[%c0_238, %c616] : memref<1x968xf32, #tpu.memory_space<vmem>>, vector<1x11xf32>
    tpu.vector_store %arg13[%c0_238, %c616], %591 {strides = array<i32>} : memref<1x968xf32, #tpu.memory_space<vmem>>, vector<1x11xf32>,
    %593 = vector.extract_strided_slice %421 {offsets = [5, 2, 0], sizes = [1, 1, 11], strides = [1, 1, 1]} : vector<8x11x11xf32> to vector<1x1x11xf32>
    %594 = vector.shape_cast %593 : vector<1x1x11xf32> to vector<1x11xf32>
    %c0_239 = arith.constant 0 : index
    %c627 = arith.constant 627 : index
    %595 = vector.load %arg13[%c0_239, %c627] : memref<1x968xf32, #tpu.memory_space<vmem>>, vector<1x11xf32>
    tpu.vector_store %arg13[%c0_239, %c627], %594 {strides = array<i32>} : memref<1x968xf32, #tpu.memory_space<vmem>>, vector<1x11xf32>,
    %596 = vector.extract_strided_slice %421 {offsets = [5, 3, 0], sizes = [1, 1, 11], strides = [1, 1, 1]} : vector<8x11x11xf32> to vector<1x1x11xf32>
    %597 = vector.shape_cast %596 : vector<1x1x11xf32> to vector<1x11xf32>
    %c0_240 = arith.constant 0 : index
    %c638 = arith.constant 638 : index
    %598 = vector.load %arg13[%c0_240, %c638] : memref<1x968xf32, #tpu.memory_space<vmem>>, vector<1x11xf32>
    tpu.vector_store %arg13[%c0_240, %c638], %597 {strides = array<i32>} : memref<1x968xf32, #tpu.memory_space<vmem>>, vector<1x11xf32>,
    %599 = vector.extract_strided_slice %421 {offsets = [5, 4, 0], sizes = [1, 1, 11], strides = [1, 1, 1]} : vector<8x11x11xf32> to vector<1x1x11xf32>
    %600 = vector.shape_cast %599 : vector<1x1x11xf32> to vector<1x11xf32>
    %c0_241 = arith.constant 0 : index
    %c649 = arith.constant 649 : index
    %601 = vector.load %arg13[%c0_241, %c649] : memref<1x968xf32, #tpu.memory_space<vmem>>, vector<1x11xf32>
    tpu.vector_store %arg13[%c0_241, %c649], %600 {strides = array<i32>} : memref<1x968xf32, #tpu.memory_space<vmem>>, vector<1x11xf32>,
    %602 = vector.extract_strided_slice %421 {offsets = [5, 5, 0], sizes = [1, 1, 11], strides = [1, 1, 1]} : vector<8x11x11xf32> to vector<1x1x11xf32>
    %603 = vector.shape_cast %602 : vector<1x1x11xf32> to vector<1x11xf32>
    %c0_242 = arith.constant 0 : index
    %c660 = arith.constant 660 : index
    %604 = vector.load %arg13[%c0_242, %c660] : memref<1x968xf32, #tpu.memory_space<vmem>>, vector<1x11xf32>
    tpu.vector_store %arg13[%c0_242, %c660], %603 {strides = array<i32>} : memref<1x968xf32, #tpu.memory_space<vmem>>, vector<1x11xf32>,
    %605 = vector.extract_strided_slice %421 {offsets = [5, 6, 0], sizes = [1, 1, 11], strides = [1, 1, 1]} : vector<8x11x11xf32> to vector<1x1x11xf32>
    %606 = vector.shape_cast %605 : vector<1x1x11xf32> to vector<1x11xf32>
    %c0_243 = arith.constant 0 : index
    %c671 = arith.constant 671 : index
    %607 = vector.load %arg13[%c0_243, %c671] : memref<1x968xf32, #tpu.memory_space<vmem>>, vector<1x11xf32>
    tpu.vector_store %arg13[%c0_243, %c671], %606 {strides = array<i32>} : memref<1x968xf32, #tpu.memory_space<vmem>>, vector<1x11xf32>,
    %608 = vector.extract_strided_slice %421 {offsets = [5, 7, 0], sizes = [1, 1, 11], strides = [1, 1, 1]} : vector<8x11x11xf32> to vector<1x1x11xf32>
    %609 = vector.shape_cast %608 : vector<1x1x11xf32> to vector<1x11xf32>
    %c0_244 = arith.constant 0 : index
    %c682 = arith.constant 682 : index
    %610 = vector.load %arg13[%c0_244, %c682] : memref<1x968xf32, #tpu.memory_space<vmem>>, vector<1x11xf32>
    tpu.vector_store %arg13[%c0_244, %c682], %609 {strides = array<i32>} : memref<1x968xf32, #tpu.memory_space<vmem>>, vector<1x11xf32>,
    %611 = vector.extract_strided_slice %421 {offsets = [5, 8, 0], sizes = [1, 1, 11], strides = [1, 1, 1]} : vector<8x11x11xf32> to vector<1x1x11xf32>
    %612 = vector.shape_cast %611 : vector<1x1x11xf32> to vector<1x11xf32>
    %c0_245 = arith.constant 0 : index
    %c693 = arith.constant 693 : index
    %613 = vector.load %arg13[%c0_245, %c693] : memref<1x968xf32, #tpu.memory_space<vmem>>, vector<1x11xf32>
    tpu.vector_store %arg13[%c0_245, %c693], %612 {strides = array<i32>} : memref<1x968xf32, #tpu.memory_space<vmem>>, vector<1x11xf32>,
    %614 = vector.extract_strided_slice %421 {offsets = [5, 9, 0], sizes = [1, 1, 11], strides = [1, 1, 1]} : vector<8x11x11xf32> to vector<1x1x11xf32>
    %615 = vector.shape_cast %614 : vector<1x1x11xf32> to vector<1x11xf32>
    %c0_246 = arith.constant 0 : index
    %c704 = arith.constant 704 : index
    %616 = vector.load %arg13[%c0_246, %c704] : memref<1x968xf32, #tpu.memory_space<vmem>>, vector<1x11xf32>
    tpu.vector_store %arg13[%c0_246, %c704], %615 {strides = array<i32>} : memref<1x968xf32, #tpu.memory_space<vmem>>, vector<1x11xf32>,
    %617 = vector.extract_strided_slice %421 {offsets = [5, 10, 0], sizes = [1, 1, 11], strides = [1, 1, 1]} : vector<8x11x11xf32> to vector<1x1x11xf32>
    %618 = vector.shape_cast %617 : vector<1x1x11xf32> to vector<1x11xf32>
    %c0_247 = arith.constant 0 : index
    %c715 = arith.constant 715 : index
    %619 = vector.load %arg13[%c0_247, %c715] : memref<1x968xf32, #tpu.memory_space<vmem>>, vector<1x11xf32>
    tpu.vector_store %arg13[%c0_247, %c715], %618 {strides = array<i32>} : memref<1x968xf32, #tpu.memory_space<vmem>>, vector<1x11xf32>,
    %620 = vector.extract_strided_slice %421 {offsets = [6, 0, 0], sizes = [1, 1, 11], strides = [1, 1, 1]} : vector<8x11x11xf32> to vector<1x1x11xf32>
    %621 = vector.shape_cast %620 : vector<1x1x11xf32> to vector<1x11xf32>
    %c0_248 = arith.constant 0 : index
    %c726 = arith.constant 726 : index
    %622 = vector.load %arg13[%c0_248, %c726] : memref<1x968xf32, #tpu.memory_space<vmem>>, vector<1x11xf32>
    tpu.vector_store %arg13[%c0_248, %c726], %621 {strides = array<i32>} : memref<1x968xf32, #tpu.memory_space<vmem>>, vector<1x11xf32>,
    %623 = vector.extract_strided_slice %421 {offsets = [6, 1, 0], sizes = [1, 1, 11], strides = [1, 1, 1]} : vector<8x11x11xf32> to vector<1x1x11xf32>
    %624 = vector.shape_cast %623 : vector<1x1x11xf32> to vector<1x11xf32>
    %c0_249 = arith.constant 0 : index
    %c737 = arith.constant 737 : index
    %625 = vector.load %arg13[%c0_249, %c737] : memref<1x968xf32, #tpu.memory_space<vmem>>, vector<1x11xf32>
    tpu.vector_store %arg13[%c0_249, %c737], %624 {strides = array<i32>} : memref<1x968xf32, #tpu.memory_space<vmem>>, vector<1x11xf32>,
    %626 = vector.extract_strided_slice %421 {offsets = [6, 2, 0], sizes = [1, 1, 11], strides = [1, 1, 1]} : vector<8x11x11xf32> to vector<1x1x11xf32>
    %627 = vector.shape_cast %626 : vector<1x1x11xf32> to vector<1x11xf32>
    %c0_250 = arith.constant 0 : index
    %c748 = arith.constant 748 : index
    %628 = vector.load %arg13[%c0_250, %c748] : memref<1x968xf32, #tpu.memory_space<vmem>>, vector<1x11xf32>
    tpu.vector_store %arg13[%c0_250, %c748], %627 {strides = array<i32>} : memref<1x968xf32, #tpu.memory_space<vmem>>, vector<1x11xf32>,
    %629 = vector.extract_strided_slice %421 {offsets = [6, 3, 0], sizes = [1, 1, 11], strides = [1, 1, 1]} : vector<8x11x11xf32> to vector<1x1x11xf32>
    %630 = vector.shape_cast %629 : vector<1x1x11xf32> to vector<1x11xf32>
    %c0_251 = arith.constant 0 : index
    %c759 = arith.constant 759 : index
    %631 = vector.load %arg13[%c0_251, %c759] : memref<1x968xf32, #tpu.memory_space<vmem>>, vector<1x11xf32>
    tpu.vector_store %arg13[%c0_251, %c759], %630 {strides = array<i32>} : memref<1x968xf32, #tpu.memory_space<vmem>>, vector<1x11xf32>,
    %632 = vector.extract_strided_slice %421 {offsets = [6, 4, 0], sizes = [1, 1, 11], strides = [1, 1, 1]} : vector<8x11x11xf32> to vector<1x1x11xf32>
    %633 = vector.shape_cast %632 : vector<1x1x11xf32> to vector<1x11xf32>
    %c0_252 = arith.constant 0 : index
    %c770 = arith.constant 770 : index
    %634 = vector.load %arg13[%c0_252, %c770] : memref<1x968xf32, #tpu.memory_space<vmem>>, vector<1x11xf32>
    tpu.vector_store %arg13[%c0_252, %c770], %633 {strides = array<i32>} : memref<1x968xf32, #tpu.memory_space<vmem>>, vector<1x11xf32>,
    %635 = vector.extract_strided_slice %421 {offsets = [6, 5, 0], sizes = [1, 1, 11], strides = [1, 1, 1]} : vector<8x11x11xf32> to vector<1x1x11xf32>
    %636 = vector.shape_cast %635 : vector<1x1x11xf32> to vector<1x11xf32>
    %c0_253 = arith.constant 0 : index
    %c781 = arith.constant 781 : index
    %637 = vector.load %arg13[%c0_253, %c781] : memref<1x968xf32, #tpu.memory_space<vmem>>, vector<1x11xf32>
    tpu.vector_store %arg13[%c0_253, %c781], %636 {strides = array<i32>} : memref<1x968xf32, #tpu.memory_space<vmem>>, vector<1x11xf32>,
    %638 = vector.extract_strided_slice %421 {offsets = [6, 6, 0], sizes = [1, 1, 11], strides = [1, 1, 1]} : vector<8x11x11xf32> to vector<1x1x11xf32>
    %639 = vector.shape_cast %638 : vector<1x1x11xf32> to vector<1x11xf32>
    %c0_254 = arith.constant 0 : index
    %c792 = arith.constant 792 : index
    %640 = vector.load %arg13[%c0_254, %c792] : memref<1x968xf32, #tpu.memory_space<vmem>>, vector<1x11xf32>
    tpu.vector_store %arg13[%c0_254, %c792], %639 {strides = array<i32>} : memref<1x968xf32, #tpu.memory_space<vmem>>, vector<1x11xf32>,
    %641 = vector.extract_strided_slice %421 {offsets = [6, 7, 0], sizes = [1, 1, 11], strides = [1, 1, 1]} : vector<8x11x11xf32> to vector<1x1x11xf32>
    %642 = vector.shape_cast %641 : vector<1x1x11xf32> to vector<1x11xf32>
    %c0_255 = arith.constant 0 : index
    %c803 = arith.constant 803 : index
    %643 = vector.load %arg13[%c0_255, %c803] : memref<1x968xf32, #tpu.memory_space<vmem>>, vector<1x11xf32>
    tpu.vector_store %arg13[%c0_255, %c803], %642 {strides = array<i32>} : memref<1x968xf32, #tpu.memory_space<vmem>>, vector<1x11xf32>,
    %644 = vector.extract_strided_slice %421 {offsets = [6, 8, 0], sizes = [1, 1, 11], strides = [1, 1, 1]} : vector<8x11x11xf32> to vector<1x1x11xf32>
    %645 = vector.shape_cast %644 : vector<1x1x11xf32> to vector<1x11xf32>
    %c0_256 = arith.constant 0 : index
    %c814 = arith.constant 814 : index
    %646 = vector.load %arg13[%c0_256, %c814] : memref<1x968xf32, #tpu.memory_space<vmem>>, vector<1x11xf32>
    tpu.vector_store %arg13[%c0_256, %c814], %645 {strides = array<i32>} : memref<1x968xf32, #tpu.memory_space<vmem>>, vector<1x11xf32>,
    %647 = vector.extract_strided_slice %421 {offsets = [6, 9, 0], sizes = [1, 1, 11], strides = [1, 1, 1]} : vector<8x11x11xf32> to vector<1x1x11xf32>
    %648 = vector.shape_cast %647 : vector<1x1x11xf32> to vector<1x11xf32>
    %c0_257 = arith.constant 0 : index
    %c825 = arith.constant 825 : index
    %649 = vector.load %arg13[%c0_257, %c825] : memref<1x968xf32, #tpu.memory_space<vmem>>, vector<1x11xf32>
    tpu.vector_store %arg13[%c0_257, %c825], %648 {strides = array<i32>} : memref<1x968xf32, #tpu.memory_space<vmem>>, vector<1x11xf32>,
    %650 = vector.extract_strided_slice %421 {offsets = [6, 10, 0], sizes = [1, 1, 11], strides = [1, 1, 1]} : vector<8x11x11xf32> to vector<1x1x11xf32>
    %651 = vector.shape_cast %650 : vector<1x1x11xf32> to vector<1x11xf32>
    %c0_258 = arith.constant 0 : index
    %c836 = arith.constant 836 : index
    %652 = vector.load %arg13[%c0_258, %c836] : memref<1x968xf32, #tpu.memory_space<vmem>>, vector<1x11xf32>
    tpu.vector_store %arg13[%c0_258, %c836], %651 {strides = array<i32>} : memref<1x968xf32, #tpu.memory_space<vmem>>, vector<1x11xf32>,
    %653 = vector.extract_strided_slice %421 {offsets = [7, 0, 0], sizes = [1, 1, 11], strides = [1, 1, 1]} : vector<8x11x11xf32> to vector<1x1x11xf32>
    %654 = vector.shape_cast %653 : vector<1x1x11xf32> to vector<1x11xf32>
    %c0_259 = arith.constant 0 : index
    %c847 = arith.constant 847 : index
    %655 = vector.load %arg13[%c0_259, %c847] : memref<1x968xf32, #tpu.memory_space<vmem>>, vector<1x11xf32>
    tpu.vector_store %arg13[%c0_259, %c847], %654 {strides = array<i32>} : memref<1x968xf32, #tpu.memory_space<vmem>>, vector<1x11xf32>,
    %656 = vector.extract_strided_slice %421 {offsets = [7, 1, 0], sizes = [1, 1, 11], strides = [1, 1, 1]} : vector<8x11x11xf32> to vector<1x1x11xf32>
    %657 = vector.shape_cast %656 : vector<1x1x11xf32> to vector<1x11xf32>
    %c0_260 = arith.constant 0 : index
    %c858 = arith.constant 858 : index
    %658 = vector.load %arg13[%c0_260, %c858] : memref<1x968xf32, #tpu.memory_space<vmem>>, vector<1x11xf32>
    tpu.vector_store %arg13[%c0_260, %c858], %657 {strides = array<i32>} : memref<1x968xf32, #tpu.memory_space<vmem>>, vector<1x11xf32>,
    %659 = vector.extract_strided_slice %421 {offsets = [7, 2, 0], sizes = [1, 1, 11], strides = [1, 1, 1]} : vector<8x11x11xf32> to vector<1x1x11xf32>
    %660 = vector.shape_cast %659 : vector<1x1x11xf32> to vector<1x11xf32>
    %c0_261 = arith.constant 0 : index
    %c869 = arith.constant 869 : index
    %661 = vector.load %arg13[%c0_261, %c869] : memref<1x968xf32, #tpu.memory_space<vmem>>, vector<1x11xf32>
    tpu.vector_store %arg13[%c0_261, %c869], %660 {strides = array<i32>} : memref<1x968xf32, #tpu.memory_space<vmem>>, vector<1x11xf32>,
    %662 = vector.extract_strided_slice %421 {offsets = [7, 3, 0], sizes = [1, 1, 11], strides = [1, 1, 1]} : vector<8x11x11xf32> to vector<1x1x11xf32>
    %663 = vector.shape_cast %662 : vector<1x1x11xf32> to vector<1x11xf32>
    %c0_262 = arith.constant 0 : index
    %c880 = arith.constant 880 : index
    %664 = vector.load %arg13[%c0_262, %c880] : memref<1x968xf32, #tpu.memory_space<vmem>>, vector<1x11xf32>
    tpu.vector_store %arg13[%c0_262, %c880], %663 {strides = array<i32>} : memref<1x968xf32, #tpu.memory_space<vmem>>, vector<1x11xf32>,
    %665 = vector.extract_strided_slice %421 {offsets = [7, 4, 0], sizes = [1, 1, 11], strides = [1, 1, 1]} : vector<8x11x11xf32> to vector<1x1x11xf32>
    %666 = vector.shape_cast %665 : vector<1x1x11xf32> to vector<1x11xf32>
    %c0_263 = arith.constant 0 : index
    %c891 = arith.constant 891 : index
    %667 = vector.load %arg13[%c0_263, %c891] : memref<1x968xf32, #tpu.memory_space<vmem>>, vector<1x11xf32>
    tpu.vector_store %arg13[%c0_263, %c891], %666 {strides = array<i32>} : memref<1x968xf32, #tpu.memory_space<vmem>>, vector<1x11xf32>,
    %668 = vector.extract_strided_slice %421 {offsets = [7, 5, 0], sizes = [1, 1, 11], strides = [1, 1, 1]} : vector<8x11x11xf32> to vector<1x1x11xf32>
    %669 = vector.shape_cast %668 : vector<1x1x11xf32> to vector<1x11xf32>
    %c0_264 = arith.constant 0 : index
    %c902 = arith.constant 902 : index
    %670 = vector.load %arg13[%c0_264, %c902] : memref<1x968xf32, #tpu.memory_space<vmem>>, vector<1x11xf32>
    tpu.vector_store %arg13[%c0_264, %c902], %669 {strides = array<i32>} : memref<1x968xf32, #tpu.memory_space<vmem>>, vector<1x11xf32>,
    %671 = vector.extract_strided_slice %421 {offsets = [7, 6, 0], sizes = [1, 1, 11], strides = [1, 1, 1]} : vector<8x11x11xf32> to vector<1x1x11xf32>
    %672 = vector.shape_cast %671 : vector<1x1x11xf32> to vector<1x11xf32>
    %c0_265 = arith.constant 0 : index
    %c913 = arith.constant 913 : index
    %673 = vector.load %arg13[%c0_265, %c913] : memref<1x968xf32, #tpu.memory_space<vmem>>, vector<1x11xf32>
    tpu.vector_store %arg13[%c0_265, %c913], %672 {strides = array<i32>} : memref<1x968xf32, #tpu.memory_space<vmem>>, vector<1x11xf32>,
    %674 = vector.extract_strided_slice %421 {offsets = [7, 7, 0], sizes = [1, 1, 11], strides = [1, 1, 1]} : vector<8x11x11xf32> to vector<1x1x11xf32>
    %675 = vector.shape_cast %674 : vector<1x1x11xf32> to vector<1x11xf32>
    %c0_266 = arith.constant 0 : index
    %c924 = arith.constant 924 : index
    %676 = vector.load %arg13[%c0_266, %c924] : memref<1x968xf32, #tpu.memory_space<vmem>>, vector<1x11xf32>
    tpu.vector_store %arg13[%c0_266, %c924], %675 {strides = array<i32>} : memref<1x968xf32, #tpu.memory_space<vmem>>, vector<1x11xf32>,
    %677 = vector.extract_strided_slice %421 {offsets = [7, 8, 0], sizes = [1, 1, 11], strides = [1, 1, 1]} : vector<8x11x11xf32> to vector<1x1x11xf32>
    %678 = vector.shape_cast %677 : vector<1x1x11xf32> to vector<1x11xf32>
    %c0_267 = arith.constant 0 : index
    %c935 = arith.constant 935 : index
    %679 = vector.load %arg13[%c0_267, %c935] : memref<1x968xf32, #tpu.memory_space<vmem>>, vector<1x11xf32>
    tpu.vector_store %arg13[%c0_267, %c935], %678 {strides = array<i32>} : memref<1x968xf32, #tpu.memory_space<vmem>>, vector<1x11xf32>,
    %680 = vector.extract_strided_slice %421 {offsets = [7, 9, 0], sizes = [1, 1, 11], strides = [1, 1, 1]} : vector<8x11x11xf32> to vector<1x1x11xf32>
    %681 = vector.shape_cast %680 : vector<1x1x11xf32> to vector<1x11xf32>
    %c0_268 = arith.constant 0 : index
    %c946 = arith.constant 946 : index
    %682 = vector.load %arg13[%c0_268, %c946] : memref<1x968xf32, #tpu.memory_space<vmem>>, vector<1x11xf32>
    tpu.vector_store %arg13[%c0_268, %c946], %681 {strides = array<i32>} : memref<1x968xf32, #tpu.memory_space<vmem>>, vector<1x11xf32>,
    %683 = vector.extract_strided_slice %421 {offsets = [7, 10, 0], sizes = [1, 1, 11], strides = [1, 1, 1]} : vector<8x11x11xf32> to vector<1x1x11xf32>
    %684 = vector.shape_cast %683 : vector<1x1x11xf32> to vector<1x11xf32>
    %c0_269 = arith.constant 0 : index
    %c957 = arith.constant 957 : index
    %685 = vector.load %arg13[%c0_269, %c957] : memref<1x968xf32, #tpu.memory_space<vmem>>, vector<1x11xf32>
    tpu.vector_store %arg13[%c0_269, %c957], %684 {strides = array<i32>} : memref<1x968xf32, #tpu.memory_space<vmem>>, vector<1x11xf32>,
    %c0_270 = arith.constant 0 : index
    %c0_271 = arith.constant 0 : index
    %686 = vector.load %arg13[%c0_270, %c0_271] : memref<1x968xf32, #tpu.memory_space<vmem>>, vector<1x968xf32>
    %c0_272 = arith.constant 0 : index
    %c0_273 = arith.constant 0 : index
    %687 = vector.load %arg10[%c0_272, %c0_273] : memref<968x10xf32, #tpu.memory_space<vmem>>, vector<968x10xf32>
    %cst_274 = arith.constant dense<0.000000e+00> : vector<1x10xf32>
    %688 = tpu.matmul %686, %687, %cst_274 {dimension_numbers = #tpu.dot_dimension_numbers<[1], [0], [0], [1], [0, 0, 1, 1], [], []>} : vector<1x968xf32>, vector<968x10xf32>, vector<1x10xf32> -> vector<1x10xf32>
    %c0_275 = arith.constant 0 : index
    %c0_276 = arith.constant 0 : index
    %689 = vector.load %arg11[%c0_275, %c0_276] : memref<1x10xf32, #tpu.memory_space<vmem>>, vector<1x10xf32>
    %690 = arith.addf %688, %689 : vector<1x10xf32>
    %c0_277 = arith.constant 0 : index
    %c0_278 = arith.constant 0 : index
    %c0_279 = arith.constant 0 : index
    %691 = vector.load %arg12[%c0_277, %c0_278, %c0_279] : memref<1x1x10xf32, #tpu.memory_space<vmem>>, vector<1x1x10xf32>
    %692 = vector.shape_cast %691 : vector<1x1x10xf32> to vector<1x10xf32>
    %693 = vector.shape_cast %690 : vector<1x10xf32> to vector<1x1x10xf32>
    tpu.vector_store %arg12[%c0_277, %c0_278, %c0_279], %693 {strides = array<i32>} : memref<1x1x10xf32, #tpu.memory_space<vmem>>, vector<1x1x10xf32>,
    return
  }
  func.func @transform_0(%arg0: i32) -> (i32, i32, i32, i32) {
    %c0_i32 = arith.constant 0 : i32
    %c0_i32_0 = arith.constant 0 : i32
    %c0_i32_1 = arith.constant 0 : i32
    %c0_i32_2 = arith.constant 0 : i32
    return %arg0, %c0_i32, %c0_i32_0, %c0_i32_1 : i32, i32, i32, i32
  }
  func.func @transform_1(%arg0: i32) -> (i32, i32, i32, i32) {
    %c0_i32 = arith.constant 0 : i32
    %c0_i32_0 = arith.constant 0 : i32
    %c0_i32_1 = arith.constant 0 : i32
    %c0_i32_2 = arith.constant 0 : i32
    %c0_i32_3 = arith.constant 0 : i32
    return %c0_i32, %c0_i32_0, %c0_i32_1, %c0_i32_2 : i32, i32, i32, i32
  }
  func.func @transform_2(%arg0: i32) -> (i32, i32, i32) {
    %c0_i32 = arith.constant 0 : i32
    %c0_i32_0 = arith.constant 0 : i32
    %c0_i32_1 = arith.constant 0 : i32
    %c0_i32_2 = arith.constant 0 : i32
    return %c0_i32, %c0_i32_0, %c0_i32_1 : i32, i32, i32
  }
  func.func @transform_3(%arg0: i32) -> (i32, i32, i32) {
    %c0_i32 = arith.constant 0 : i32
    %c0_i32_0 = arith.constant 0 : i32
    %c0_i32_1 = arith.constant 0 : i32
    %c0_i32_2 = arith.constant 0 : i32
    return %c0_i32, %c0_i32_0, %c0_i32_1 : i32, i32, i32
  }
  func.func @transform_4(%arg0: i32) -> (i32, i32, i32) {
    %c0_i32 = arith.constant 0 : i32
    %c0_i32_0 = arith.constant 0 : i32
    %c0_i32_1 = arith.constant 0 : i32
    %c0_i32_2 = arith.constant 0 : i32
    return %c0_i32, %c0_i32_0, %c0_i32_1 : i32, i32, i32
  }
  func.func @transform_5(%arg0: i32) -> (i32, i32, i32, i32) {
    %c0_i32 = arith.constant 0 : i32
    %c0_i32_0 = arith.constant 0 : i32
    %c0_i32_1 = arith.constant 0 : i32
    %c0_i32_2 = arith.constant 0 : i32
    %c0_i32_3 = arith.constant 0 : i32
    return %c0_i32, %c0_i32_0, %c0_i32_1, %c0_i32_2 : i32, i32, i32, i32
  }
  func.func @transform_6(%arg0: i32) -> (i32, i32, i32) {
    %c0_i32 = arith.constant 0 : i32
    %c0_i32_0 = arith.constant 0 : i32
    %c0_i32_1 = arith.constant 0 : i32
    %c0_i32_2 = arith.constant 0 : i32
    return %c0_i32, %c0_i32_0, %c0_i32_1 : i32, i32, i32
  }
  func.func @transform_7(%arg0: i32) -> (i32, i32, i32) {
    %c0_i32 = arith.constant 0 : i32
    %c0_i32_0 = arith.constant 0 : i32
    %c0_i32_1 = arith.constant 0 : i32
    %c0_i32_2 = arith.constant 0 : i32
    return %c0_i32, %c0_i32_0, %c0_i32_1 : i32, i32, i32
  }
  func.func @transform_8(%arg0: i32) -> (i32, i32, i32) {
    %c0_i32 = arith.constant 0 : i32
    %c0_i32_0 = arith.constant 0 : i32
    %c0_i32_1 = arith.constant 0 : i32
    %c0_i32_2 = arith.constant 0 : i32
    return %c0_i32, %c0_i32_0, %c0_i32_1 : i32, i32, i32
  }
  func.func @transform_9(%arg0: i32) -> (i32, i32) {
    %c0_i32 = arith.constant 0 : i32
    %c0_i32_0 = arith.constant 0 : i32
    %c0_i32_1 = arith.constant 0 : i32
    return %c0_i32, %c0_i32_0 : i32, i32
  }
  func.func @transform_10(%arg0: i32) -> (i32, i32) {
    %c0_i32 = arith.constant 0 : i32
    %c0_i32_0 = arith.constant 0 : i32
    %c0_i32_1 = arith.constant 0 : i32
    return %c0_i32, %c0_i32_0 : i32, i32
  }
  func.func @transform_11(%arg0: i32) -> (i32, i32, i32) {
    %c0_i32 = arith.constant 0 : i32
    %c0_i32_0 = arith.constant 0 : i32
    %c0_i32_1 = arith.constant 0 : i32
    return %arg0, %c0_i32, %c0_i32_0 : i32, i32, i32
  }
}

</mosaic_0001>

<llo_original>
// kernel: network_forward.1
$region0: #{network_forward.1}
  #allocation0 [shape = 'u32[]', space=smem, size = 0x4, offset = 0x4, fixed_abs, tag = 'smem constant byte address 0x4 - core index']
  #allocation1 [shape = 'u32[144,128]{1,0:T(1,128)}', space=vmem, size = 0x12000, scoped, tag = 'internal scratch']
  #allocation2 [shape = 'f32[1,968]{1,0:T(1,128)}', space=vmem, size = 0x1000, scoped, tag = 'scratch operand']
  %s0 = inlined_call_operand.vmem [shape: f32[2,1,28,28], index: 0, kind: input, shape index: {}]
  %s1 = inlined_call_operand.vmem [shape: f32[9,4,1,26], index: 1, kind: input, shape index: {}]
  %s2 = inlined_call_operand.vmem [shape: f32[4,1,26], index: 2, kind: input, shape index: {}]
  %s3 = inlined_call_operand.vmem [shape: f32[4,1,26], index: 3, kind: input, shape index: {}]
  %s4 = inlined_call_operand.vmem [shape: f32[4,1,26], index: 4, kind: input, shape index: {}]
  %s5 = inlined_call_operand.vmem [shape: f32[36,8,1,11], index: 5, kind: input, shape index: {}]
  %s6 = inlined_call_operand.vmem [shape: f32[8,1,11], index: 6, kind: input, shape index: {}]
  %s7 = inlined_call_operand.vmem [shape: f32[8,1,11], index: 7, kind: input, shape index: {}]
  %s8 = inlined_call_operand.vmem [shape: f32[8,1,11], index: 8, kind: input, shape index: {}]
  %s9 = inlined_call_operand.vmem [shape: f32[968,10], index: 9, kind: input, shape index: {}]
  %s10 = inlined_call_operand.vmem [shape: f32[1,10], index: 10, kind: input, shape index: {}]
  %s11 = inlined_call_operand.hbm [shape: f32[2,1,10], index: 11, kind: output, shape index: {}]
  %s12 = sld [smem:[#allocation0]]
  $region77: #{network_forward.1} parent=0
    _
  %s14 = ssub.s32 1, %s12
  %s15 = scalar_select 0, %s14, %s12
  $region1: #{network_forward.1} parent=0
    #allocation3 [shape = 'u8[1024]{0}', space=vmem, size = 0x400, scoped, tag = 'output window, operand 0']
    #allocation4 [shape = 's32[2]{0}', space=sflag, size = 0x8, scoped, tag = 'scoped memory for network_forward.1']
    %16 = vsyncpa [#allocation4], 0
    %s17 = scalar_lea.sflag [#allocation4], 1
    %18 = vsyncpa %s17, 0
    loop: start=0, step=1, limit=4
    $region2: #{network_forward.1} parent=1 // loop_pre_header
      _
    $region3: #{network_forward.1} parent=1 // loop_header
      %s20 = sphi 0, %s24
      %p21 = scmp.ge.s32.totalorder %s20, 4
      %s30 = sphi 0, %s32
      %s33 = sphi 0, %s30
      %s34 = sphi 0, %s33
      %s50 = sphi 0, %s34
      %s54 = sphi 0, %s54
      %s56 = sphi 0, %s54
      %s57 = sphi 0, %s56
      %s71 = sphi 0, %s57
      %s75 = sphi 0, %s75
      %s77 = sphi 0, %s75
      %s78 = sphi 0, %s77
      %s92 = sphi 0, %s78
      %s96 = sphi 0, %s96
      %s98 = sphi 0, %s96
      %s99 = sphi 0, %s98
      %s113 = sphi 0, %s99
      %s117 = sphi 0, %s117
      %s119 = sphi 0, %s117
      %s120 = sphi 0, %s119
      %s134 = sphi 0, %s120
      %s138 = sphi 0, %s138
      %s140 = sphi 0, %s138
      %s141 = sphi 0, %s140
      %s155 = sphi 0, %s141
      %s159 = sphi 0, %s159
      %s161 = sphi 0, %s159
      %s162 = sphi 0, %s161
      %s176 = sphi 0, %s162
      %s180 = sphi 0, %s180
      %s182 = sphi 0, %s180
      %s183 = sphi 0, %s182
      %s197 = sphi 0, %s183
      %s201 = sphi 0, %s201
      %s203 = sphi 0, %s201
      %s204 = sphi 0, %s203
      %s218 = sphi 0, %s204
      %s222 = sphi 0, %s222
      %s224 = sphi 0, %s222
      %s225 = sphi 0, %s224
      %s239 = sphi 0, %s225
      %s243 = sphi 0, %s243
      %s245 = sphi 0, %s243
      %s246 = sphi 0, %s245
      %s260 = sphi 0, %s246
      %s266 = sphi 0, %s268
      %s269 = sphi 0, %s266
      %s270 = sphi 0, %s269
      %s286 = sphi 0, %s270
    $region4: #{network_forward.1} parent=1 // loop_header_branch
      %23 = sbr.rel (%p21) target = $region8
    $region5: #{network_forward.1} parent=1 // loop_body
      %s25 = ssub.s32 %s20, 1
      %s26 = ssub.s32 %s20, 2
      %s27 = sadd.s32 %s20, 1
      %s28 = ssub.s32 %s20, %s27
      %p29 = scmp.eq.s32.totalorder %s28, 0
      %s31 = sadd.s32 %s30, 1
      %s32 = scalar_select %p29, %s30, %s31
      %p35 = pneg %p29
      %p36 = scmp.eq.s32.totalorder %s20, 1
      %p37 = por %p35, %p36
      %p38 = scmp.ne.s32.totalorder %s30, %s33
      %p39 = scmp.eq.s32.totalorder %s20, 0
      %p40 = por %p38, %p39
      %p41 = scmp.ne.s32.totalorder %s30, %s33
      %p42 = scmp.eq.s32.totalorder %s25, 1
      %p43 = por %p41, %p42
      %p44 = scmp.ne.s32.totalorder %s33, %s34
      %p45 = scmp.eq.s32.totalorder %s25, 0
      %p46 = por %p44, %p45
      %p47 = scmp.ne.s32.totalorder %s33, %s34
      %p48 = scmp.eq.s32.totalorder %s26, 1
      %p49 = por %p47, %p48
      %p51 = scmp.ne.s32.totalorder %s34, %s50
      %p52 = scmp.eq.s32.totalorder %s26, 0
      %p53 = por %p51, %p52
      %s55 = sadd.s32 %s54, 1
      %p58 = scmp.eq.s32.totalorder %s20, 1
      %p59 = scmp.ne.s32.totalorder %s54, %s56
      %p60 = scmp.eq.s32.totalorder %s20, 0
      %p61 = por %p59, %p60
      %p62 = scmp.ne.s32.totalorder %s54, %s56
      %p63 = scmp.eq.s32.totalorder %s25, 1
      %p64 = por %p62, %p63
      %p65 = scmp.ne.s32.totalorder %s56, %s57
      %p66 = scmp.eq.s32.totalorder %s25, 0
      %p67 = por %p65, %p66
      %p68 = scmp.ne.s32.totalorder %s56, %s57
      %p69 = scmp.eq.s32.totalorder %s26, 1
      %p70 = por %p68, %p69
      %p72 = scmp.ne.s32.totalorder %s57, %s71
      %p73 = scmp.eq.s32.totalorder %s26, 0
      %p74 = por %p72, %p73
      %s76 = sadd.s32 %s75, 1
      %p79 = scmp.eq.s32.totalorder %s20, 1
      %p80 = scmp.ne.s32.totalorder %s75, %s77
      %p81 = scmp.eq.s32.totalorder %s20, 0
      %p82 = por %p80, %p81
      %p83 = scmp.ne.s32.totalorder %s75, %s77
      %p84 = scmp.eq.s32.totalorder %s25, 1
      %p85 = por %p83, %p84
      %p86 = scmp.ne.s32.totalorder %s77, %s78
      %p87 = scmp.eq.s32.totalorder %s25, 0
      %p88 = por %p86, %p87
      %p89 = scmp.ne.s32.totalorder %s77, %s78
      %p90 = scmp.eq.s32.totalorder %s26, 1
      %p91 = por %p89, %p90
      %p93 = scmp.ne.s32.totalorder %s78, %s92
      %p94 = scmp.eq.s32.totalorder %s26, 0
      %p95 = por %p93, %p94
      %s97 = sadd.s32 %s96, 1
      %p100 = scmp.eq.s32.totalorder %s20, 1
      %p101 = scmp.ne.s32.totalorder %s96, %s98
      %p102 = scmp.eq.s32.totalorder %s20, 0
      %p103 = por %p101, %p102
      %p104 = scmp.ne.s32.totalorder %s96, %s98
      %p105 = scmp.eq.s32.totalorder %s25, 1
      %p106 = por %p104, %p105
      %p107 = scmp.ne.s32.totalorder %s98, %s99
      %p108 = scmp.eq.s32.totalorder %s25, 0
      %p109 = por %p107, %p108
      %p110 = scmp.ne.s32.totalorder %s98, %s99
      %p111 = scmp.eq.s32.totalorder %s26, 1
      %p112 = por %p110, %p111
      %p114 = scmp.ne.s32.totalorder %s99, %s113
      %p115 = scmp.eq.s32.totalorder %s26, 0
      %p116 = por %p114, %p115
      %s118 = sadd.s32 %s117, 1
      %p121 = scmp.eq.s32.totalorder %s20, 1
      %p122 = scmp.ne.s32.totalorder %s117, %s119
      %p123 = scmp.eq.s32.totalorder %s20, 0
      %p124 = por %p122, %p123
      %p125 = scmp.ne.s32.totalorder %s117, %s119
      %p126 = scmp.eq.s32.totalorder %s25, 1
      %p127 = por %p125, %p126
      %p128 = scmp.ne.s32.totalorder %s119, %s120
      %p129 = scmp.eq.s32.totalorder %s25, 0
      %p130 = por %p128, %p129
      %p131 = scmp.ne.s32.totalorder %s119, %s120
      %p132 = scmp.eq.s32.totalorder %s26, 1
      %p133 = por %p131, %p132
      %p135 = scmp.ne.s32.totalorder %s120, %s134
      %p136 = scmp.eq.s32.totalorder %s26, 0
      %p137 = por %p135, %p136
      %s139 = sadd.s32 %s138, 1
      %p142 = scmp.eq.s32.totalorder %s20, 1
      %p143 = scmp.ne.s32.totalorder %s138, %s140
      %p144 = scmp.eq.s32.totalorder %s20, 0
      %p145 = por %p143, %p144
      %p146 = scmp.ne.s32.totalorder %s138, %s140
      %p147 = scmp.eq.s32.totalorder %s25, 1
      %p148 = por %p146, %p147
      %p149 = scmp.ne.s32.totalorder %s140, %s141
      %p150 = scmp.eq.s32.totalorder %s25, 0
      %p151 = por %p149, %p150
      %p152 = scmp.ne.s32.totalorder %s140, %s141
      %p153 = scmp.eq.s32.totalorder %s26, 1
      %p154 = por %p152, %p153
      %p156 = scmp.ne.s32.totalorder %s141, %s155
      %p157 = scmp.eq.s32.totalorder %s26, 0
      %p158 = por %p156, %p157
      %s160 = sadd.s32 %s159, 1
      %p163 = scmp.eq.s32.totalorder %s20, 1
      %p164 = scmp.ne.s32.totalorder %s159, %s161
      %p165 = scmp.eq.s32.totalorder %s20, 0
      %p166 = por %p164, %p165
      %p167 = scmp.ne.s32.totalorder %s159, %s161
      %p168 = scmp.eq.s32.totalorder %s25, 1
      %p169 = por %p167, %p168
      %p170 = scmp.ne.s32.totalorder %s161, %s162
      %p171 = scmp.eq.s32.totalorder %s25, 0
      %p172 = por %p170, %p171
      %p173 = scmp.ne.s32.totalorder %s161, %s162
      %p174 = scmp.eq.s32.totalorder %s26, 1
      %p175 = por %p173, %p174
      %p177 = scmp.ne.s32.totalorder %s162, %s176
      %p178 = scmp.eq.s32.totalorder %s26, 0
      %p179 = por %p177, %p178
      %s181 = sadd.s32 %s180, 1
      %p184 = scmp.eq.s32.totalorder %s20, 1
      %p185 = scmp.ne.s32.totalorder %s180, %s182
      %p186 = scmp.eq.s32.totalorder %s20, 0
      %p187 = por %p185, %p186
      %p188 = scmp.ne.s32.totalorder %s180, %s182
      %p189 = scmp.eq.s32.totalorder %s25, 1
      %p190 = por %p188, %p189
      %p191 = scmp.ne.s32.totalorder %s182, %s183
      %p192 = scmp.eq.s32.totalorder %s25, 0
      %p193 = por %p191, %p192
      %p194 = scmp.ne.s32.totalorder %s182, %s183
      %p195 = scmp.eq.s32.totalorder %s26, 1
      %p196 = por %p194, %p195
      %p198 = scmp.ne.s32.totalorder %s183, %s197
      %p199 = scmp.eq.s32.totalorder %s26, 0
      %p200 = por %p198, %p199
      %s202 = sadd.s32 %s201, 1
      %p205 = scmp.eq.s32.totalorder %s20, 1
      %p206 = scmp.ne.s32.totalorder %s201, %s203
      %p207 = scmp.eq.s32.totalorder %s20, 0
      %p208 = por %p206, %p207
      %p209 = scmp.ne.s32.totalorder %s201, %s203
      %p210 = scmp.eq.s32.totalorder %s25, 1
      %p211 = por %p209, %p210
      %p212 = scmp.ne.s32.totalorder %s203, %s204
      %p213 = scmp.eq.s32.totalorder %s25, 0
      %p214 = por %p212, %p213
      %p215 = scmp.ne.s32.totalorder %s203, %s204
      %p216 = scmp.eq.s32.totalorder %s26, 1
      %p217 = por %p215, %p216
      %p219 = scmp.ne.s32.totalorder %s204, %s218
      %p220 = scmp.eq.s32.totalorder %s26, 0
      %p221 = por %p219, %p220
      %s223 = sadd.s32 %s222, 1
      %p226 = scmp.eq.s32.totalorder %s20, 1
      %p227 = scmp.ne.s32.totalorder %s222, %s224
      %p228 = scmp.eq.s32.totalorder %s20, 0
      %p229 = por %p227, %p228
      %p230 = scmp.ne.s32.totalorder %s222, %s224
      %p231 = scmp.eq.s32.totalorder %s25, 1
      %p232 = por %p230, %p231
      %p233 = scmp.ne.s32.totalorder %s224, %s225
      %p234 = scmp.eq.s32.totalorder %s25, 0
      %p235 = por %p233, %p234
      %p236 = scmp.ne.s32.totalorder %s224, %s225
      %p237 = scmp.eq.s32.totalorder %s26, 1
      %p238 = por %p236, %p237
      %p240 = scmp.ne.s32.totalorder %s225, %s239
      %p241 = scmp.eq.s32.totalorder %s26, 0
      %p242 = por %p240, %p241
      %s244 = sadd.s32 %s243, 1
      %p247 = scmp.eq.s32.totalorder %s20, 1
      %p248 = scmp.ne.s32.totalorder %s243, %s245
      %p249 = scmp.eq.s32.totalorder %s20, 0
      %p250 = por %p248, %p249
      %p251 = scmp.ne.s32.totalorder %s243, %s245
      %p252 = scmp.eq.s32.totalorder %s25, 1
      %p253 = por %p251, %p252
      %p254 = scmp.ne.s32.totalorder %s245, %s246
      %p255 = scmp.eq.s32.totalorder %s25, 0
      %p256 = por %p254, %p255
      %p257 = scmp.ne.s32.totalorder %s245, %s246
      %p258 = scmp.eq.s32.totalorder %s26, 1
      %p259 = por %p257, %p258
      %p261 = scmp.ne.s32.totalorder %s246, %s260
      %p262 = scmp.eq.s32.totalorder %s26, 0
      %p263 = por %p261, %p262
      %s264 = ssub.s32 %s20, %s27
      %p265 = scmp.eq.s32.totalorder %s264, 0
      %s267 = sadd.s32 %s266, 1
      %s268 = scalar_select %p265, %s266, %s267
      %p271 = pneg %p265
      %p272 = scmp.eq.s32.totalorder %s20, 1
      %p273 = por %p271, %p272
      %p274 = scmp.ne.s32.totalorder %s266, %s269
      %p275 = scmp.eq.s32.totalorder %s20, 0
      %p276 = por %p274, %p275
      %p277 = scmp.ne.s32.totalorder %s266, %s269
      %p278 = scmp.eq.s32.totalorder %s25, 1
      %p279 = por %p277, %p278
      %p280 = scmp.ne.s32.totalorder %s269, %s270
      %p281 = scmp.eq.s32.totalorder %s25, 0
      %p282 = por %p280, %p281
      %p283 = scmp.ne.s32.totalorder %s269, %s270
      %p284 = scmp.eq.s32.totalorder %s26, 1
      %p285 = por %p283, %p284
      %p287 = scmp.ne.s32.totalorder %s270, %s286
      %p288 = scmp.eq.s32.totalorder %s26, 0
      %p289 = por %p287, %p288
      %p290 = scmp.le.s32.totalorder 1, %s20
      %p291 = scmp.lt.s32.totalorder %s20, 3
      %p292 = pnand %p290, %p291
      %p293 = pneg %p292
      // Predicated region
      $region9: #{network_forward.1} parent=5 // pred_check
        _
      $region10: #{network_forward.1} parent=5 // pred_check_branch
        %295 = sbr.rel (%p292) target = $region12
      $region11: #{network_forward.1} parent=5 // pred_region
        %s296 = ssub.s32 %s20, 1
        // Predicated region
        $region13: #{network_forward.1} parent=11 // pred_check
          %p297 = pneg %p67
        $region14: #{network_forward.1} parent=11 // pred_check_branch
          %299 = sbr.rel (%p297) target = $region16
        $region15: #{network_forward.1} parent=11 // pred_region
          _
        $region16: #{network_forward.1} parent=11 // pred_fallthru
          _
        // Predicated region
        $region17: #{network_forward.1} parent=11 // pred_check
          %p300 = pneg %p88
        $region18: #{network_forward.1} parent=11 // pred_check_branch
          %302 = sbr.rel (%p300) target = $region20
        $region19: #{network_forward.1} parent=11 // pred_region
          _
        $region20: #{network_forward.1} parent=11 // pred_fallthru
          _
        // Predicated region
        $region21: #{network_forward.1} parent=11 // pred_check
          %p303 = pneg %p109
        $region22: #{network_forward.1} parent=11 // pred_check_branch
          %305 = sbr.rel (%p303) target = $region24
        $region23: #{network_forward.1} parent=11 // pred_region
          _
        $region24: #{network_forward.1} parent=11 // pred_fallthru
          _
        // Predicated region
        $region25: #{network_forward.1} parent=11 // pred_check
          %p306 = pneg %p130
        $region26: #{network_forward.1} parent=11 // pred_check_branch
          %308 = sbr.rel (%p306) target = $region28
        $region27: #{network_forward.1} parent=11 // pred_region
          _
        $region28: #{network_forward.1} parent=11 // pred_fallthru
          _
        // Predicated region
        $region29: #{network_forward.1} parent=11 // pred_check
          %p309 = pneg %p151
        $region30: #{network_forward.1} parent=11 // pred_check_branch
          %311 = sbr.rel (%p309) target = $region32
        $region31: #{network_forward.1} parent=11 // pred_region
          _
        $region32: #{network_forward.1} parent=11 // pred_fallthru
          _
        // Predicated region
        $region33: #{network_forward.1} parent=11 // pred_check
          %p312 = pneg %p172
        $region34: #{network_forward.1} parent=11 // pred_check_branch
          %314 = sbr.rel (%p312) target = $region36
        $region35: #{network_forward.1} parent=11 // pred_region
          _
        $region36: #{network_forward.1} parent=11 // pred_fallthru
          _
        // Predicated region
        $region37: #{network_forward.1} parent=11 // pred_check
          %p315 = pneg %p193
        $region38: #{network_forward.1} parent=11 // pred_check_branch
          %317 = sbr.rel (%p315) target = $region40
        $region39: #{network_forward.1} parent=11 // pred_region
          _
        $region40: #{network_forward.1} parent=11 // pred_fallthru
          _
        // Predicated region
        $region41: #{network_forward.1} parent=11 // pred_check
          %p318 = pneg %p214
        $region42: #{network_forward.1} parent=11 // pred_check_branch
          %320 = sbr.rel (%p318) target = $region44
        $region43: #{network_forward.1} parent=11 // pred_region
          _
        $region44: #{network_forward.1} parent=11 // pred_fallthru
          _
        // Predicated region
        $region45: #{network_forward.1} parent=11 // pred_check
          %p321 = pneg %p235
        $region46: #{network_forward.1} parent=11 // pred_check_branch
          %323 = sbr.rel (%p321) target = $region48
        $region47: #{network_forward.1} parent=11 // pred_region
          _
        $region48: #{network_forward.1} parent=11 // pred_fallthru
          _
        // Predicated region
        $region49: #{network_forward.1} parent=11 // pred_check
          %p324 = pneg %p256
        $region50: #{network_forward.1} parent=11 // pred_check_branch
          %326 = sbr.rel (%p324) target = $region52
        $region51: #{network_forward.1} parent=11 // pred_region
          _
        $region52: #{network_forward.1} parent=11 // pred_fallthru
          _
      $region12: #{network_forward.1} parent=5 // pred_fallthru
        _
      %p327 = scmp.lt.s32.totalorder %s20, 2
      // Predicated region
      $region53: #{network_forward.1} parent=5 // pred_check
        %p328 = pneg %p327
      $region54: #{network_forward.1} parent=5 // pred_check_branch
        %330 = sbr.rel (%p328) target = $region56
      $region55: #{network_forward.1} parent=5 // pred_region
        // Predicated region
        $region57: #{network_forward.1} parent=55 // pred_check
          %p331 = pneg %p40
        $region58: #{network_forward.1} parent=55 // pred_check_branch
          %333 = sbr.rel (%p331) target = $region60
        $region59: #{network_forward.1} parent=55 // pred_region
          %p334 = scmp.lt.s32.totalorder %s20, 1
          %s335 = scalar_select %p334, %s20, 1
          %s336 = smul.addr %s335, 4
          %s337 = smul.addr %s336, 8
          %s338 = scalar_lea.vmem %s0, %s337
        $region60: #{network_forward.1} parent=55 // pred_fallthru
          _
      $region56: #{network_forward.1} parent=5 // pred_fallthru
        _
      %p339 = scmp.le.s32.totalorder 1, %s20
      %p340 = scmp.lt.s32.totalorder %s20, 3
      %p341 = pnand %p339, %p340
      %p342 = pneg %p341
      // Predicated region
      $region61: #{network_forward.1} parent=5 // pred_check
        _
      $region62: #{network_forward.1} parent=5 // pred_check_branch
        %344 = sbr.rel (%p341) target = $region64
      $region63: #{network_forward.1} parent=5 // pred_region
        %s345 = ssub.s32 %s20, 1
        %p346 = scmp.lt.s32.totalorder %s25, 1
        %s347 = scalar_select %p346, %s25, 1
        %s348 = smul.addr %s347, 4
        %s349 = smul.addr %s348, 8
        %s350 = scalar_lea.vmem %s0, %s349
        %p351 = pneg %p46
        %p352 = pneg %p43
        %p353 = pneg %p67
        %p354 = pneg %p64
        %p355 = pneg %p88
        %p356 = pneg %p85
        %p357 = pneg %p109
        %p358 = pneg %p106
        %p359 = pneg %p130
        %p360 = pneg %p127
        %p361 = pneg %p151
        %p362 = pneg %p148
        %p363 = pneg %p172
        %p364 = pneg %p169
        %p365 = pneg %p193
        %p366 = pneg %p190
        %p367 = pneg %p214
        %p368 = pneg %p211
        %p369 = pneg %p235
        %p370 = pneg %p232
        %p371 = pneg %p256
        %p372 = pneg %p253
        %p373 = pneg %p282
        %p374 = pneg %p279
        %s375 = sand.u32 %s269, 1
        %s376 = scalar_lea.sflag [#allocation4], %s375
        %s377 = sand.u32 %s269, 1
        %s378 = scalar_lea.vmem [#allocation3], %s377
        %p379 = scmp.lt.s32.totalorder %s25, 1
        %s380 = scalar_select %p379, %s25, 1
        %s381 = smul.addr %s380, 4
        %s382 = smul.addr %s381, 8
        %s383 = scalar_lea.vmem %s0, %s382
        %v384 = vld [vmem:[%s383] sm:$0xff]
        %v385 = vld [vmem:[%s383 + $0x8] sm:$0xff]
        %v386 = vld [vmem:[%s383 + $0x10] sm:$0xff]
        %v387 = vld [vmem:[%s383 + $0x18] sm:$0xf]
        %v388 = vld [vmem:[%s1] sm:$0x1]
        %v389 = vld [vmem:[%s1 + $0x1] sm:$0x1]
        %v390 = vld [vmem:[%s1 + $0x2] sm:$0x1]
        %v391 = vld [vmem:[%s1 + $0x3] sm:$0x1]
        %v396 = vlaneseq
        %v397 = vshrl.u32 %v396, 7
        %v398 = vsub.s32 0, %v397
        %v399 = vrot.slane %v388, %v398
        %v400 = vlaneseq
        %v401 = vshrl.u32 %v400, 7
        %v402 = vsub.s32 0, %v401
        %v403 = vrot.slane %v389, %v402
        %v404 = vlaneseq
        %v405 = vshrl.u32 %v404, 7
        %v406 = vsub.s32 0, %v405
        %v407 = vrot.slane %v390, %v406
        %v408 = vlaneseq
        %v409 = vshrl.u32 %v408, 7
        %v410 = vsub.s32 0, %v409
        %v411 = vrot.slane %v391, %v410
        %v416 = vmul.f32 %v399, %v384
        %v417 = vmul.f32 %v399, %v385
        %v418 = vmul.f32 %v399, %v386
        %v419 = vmul.f32 %v399, %v387
        %v420 = vmul.f32 %v403, %v384
        %v421 = vmul.f32 %v403, %v385
        %v422 = vmul.f32 %v403, %v386
        %v423 = vmul.f32 %v403, %v387
        %v424 = vmul.f32 %v407, %v384
        %v425 = vmul.f32 %v407, %v385
        %v426 = vmul.f32 %v407, %v386
        %v427 = vmul.f32 %v407, %v387
        %v428 = vmul.f32 %v411, %v384
        %v429 = vmul.f32 %v411, %v385
        %v430 = vmul.f32 %v411, %v386
        %v431 = vmul.f32 %v411, %v387
        %v432 = vadd.f32 %v416, 0.0
        %v433 = vadd.f32 %v417, 0.0
        %v434 = vadd.f32 %v418, 0.0
        %v435 = vadd.f32 %v419, 0.0
        %v436 = vadd.f32 %v420, 0.0
        %v437 = vadd.f32 %v421, 0.0
        %v438 = vadd.f32 %v422, 0.0
        %v439 = vadd.f32 %v423, 0.0
        %v440 = vadd.f32 %v424, 0.0
        %v441 = vadd.f32 %v425, 0.0
        %v442 = vadd.f32 %v426, 0.0
        %v443 = vadd.f32 %v427, 0.0
        %v444 = vadd.f32 %v428, 0.0
        %v445 = vadd.f32 %v429, 0.0
        %v446 = vadd.f32 %v430, 0.0
        %v447 = vadd.f32 %v431, 0.0
        %s448 = scalar_lea.vmem %s1, 4
        %v449 = vld [vmem:[%s448] sm:$0x1]
        %v450 = vld [vmem:[%s448 + $0x1] sm:$0x1]
        %v451 = vld [vmem:[%s448 + $0x2] sm:$0x1]
        %v452 = vld [vmem:[%s448 + $0x3] sm:$0x1]
        %v457 = vlaneseq
        %v458 = vshrl.u32 %v457, 7
        %v459 = vsub.s32 0, %v458
        %v460 = vrot.slane %v449, %v459
        %v461 = vlaneseq
        %v462 = vshrl.u32 %v461, 7
        %v463 = vsub.s32 0, %v462
        %v464 = vrot.slane %v450, %v463
        %v465 = vlaneseq
        %v466 = vshrl.u32 %v465, 7
        %v467 = vsub.s32 0, %v466
        %v468 = vrot.slane %v451, %v467
        %v469 = vlaneseq
        %v470 = vshrl.u32 %v469, 7
        %v471 = vsub.s32 0, %v470
        %v472 = vrot.slane %v452, %v471
        %481 = vrot.lane.b32.xlu0 %v384, 127
        %v482 = vpop.permute.xlu0 %481
        %483 = vrot.lane.b32.xlu0 %v385, 127
        %v484 = vpop.permute.xlu0 %483
        %485 = vrot.lane.b32.xlu0 %v386, 127
        %v486 = vpop.permute.xlu0 %485
        %487 = vrot.lane.b32.xlu0 %v387, 127
        %v488 = vpop.permute.xlu0 %487
        %v493 = vmul.f32 %v460, %v482
        %v494 = vmul.f32 %v460, %v484
        %v495 = vmul.f32 %v460, %v486
        %v496 = vmul.f32 %v460, %v488
        %v497 = vmul.f32 %v464, %v482
        %v498 = vmul.f32 %v464, %v484
        %v499 = vmul.f32 %v464, %v486
        %v500 = vmul.f32 %v464, %v488
        %v501 = vmul.f32 %v468, %v482
        %v502 = vmul.f32 %v468, %v484
        %v503 = vmul.f32 %v468, %v486
        %v504 = vmul.f32 %v468, %v488
        %v505 = vmul.f32 %v472, %v482
        %v506 = vmul.f32 %v472, %v484
        %v507 = vmul.f32 %v472, %v486
        %v508 = vmul.f32 %v472, %v488
        %v509 = vadd.f32 %v432, %v493
        %v510 = vadd.f32 %v433, %v494
        %v511 = vadd.f32 %v434, %v495
        %v512 = vadd.f32 %v435, %v496
        %v513 = vadd.f32 %v436, %v497
        %v514 = vadd.f32 %v437, %v498
        %v515 = vadd.f32 %v438, %v499
        %v516 = vadd.f32 %v439, %v500
        %v517 = vadd.f32 %v440, %v501
        %v518 = vadd.f32 %v441, %v502
        %v519 = vadd.f32 %v442, %v503
        %v520 = vadd.f32 %v443, %v504
        %v521 = vadd.f32 %v444, %v505
        %v522 = vadd.f32 %v445, %v506
        %v523 = vadd.f32 %v446, %v507
        %v524 = vadd.f32 %v447, %v508
        %s525 = scalar_lea.vmem %s1, 8
        %v526 = vld [vmem:[%s525] sm:$0x1]
        %v527 = vld [vmem:[%s525 + $0x1] sm:$0x1]
        %v528 = vld [vmem:[%s525 + $0x2] sm:$0x1]
        %v529 = vld [vmem:[%s525 + $0x3] sm:$0x1]
        %v534 = vlaneseq
        %v535 = vshrl.u32 %v534, 7
        %v536 = vsub.s32 0, %v535
        %v537 = vrot.slane %v526, %v536
        %v538 = vlaneseq
        %v539 = vshrl.u32 %v538, 7
        %v540 = vsub.s32 0, %v539
        %v541 = vrot.slane %v527, %v540
        %v542 = vlaneseq
        %v543 = vshrl.u32 %v542, 7
        %v544 = vsub.s32 0, %v543
        %v545 = vrot.slane %v528, %v544
        %v546 = vlaneseq
        %v547 = vshrl.u32 %v546, 7
        %v548 = vsub.s32 0, %v547
        %v549 = vrot.slane %v529, %v548
        %554 = vrot.lane.b32.xlu0 %v384, 126
        %v555 = vpop.permute.xlu0 %554
        %556 = vrot.lane.b32.xlu0 %v385, 126
        %v557 = vpop.permute.xlu0 %556
        %558 = vrot.lane.b32.xlu0 %v386, 126
        %v559 = vpop.permute.xlu0 %558
        %560 = vrot.lane.b32.xlu0 %v387, 126
        %v561 = vpop.permute.xlu0 %560
        %v566 = vmul.f32 %v537, %v555
        %v567 = vmul.f32 %v537, %v557
        %v568 = vmul.f32 %v537, %v559
        %v569 = vmul.f32 %v537, %v561
        %v570 = vmul.f32 %v541, %v555
        %v571 = vmul.f32 %v541, %v557
        %v572 = vmul.f32 %v541, %v559
        %v573 = vmul.f32 %v541, %v561
        %v574 = vmul.f32 %v545, %v555
        %v575 = vmul.f32 %v545, %v557
        %v576 = vmul.f32 %v545, %v559
        %v577 = vmul.f32 %v545, %v561
        %v578 = vmul.f32 %v549, %v555
        %v579 = vmul.f32 %v549, %v557
        %v580 = vmul.f32 %v549, %v559
        %v581 = vmul.f32 %v549, %v561
        %v582 = vadd.f32 %v509, %v566
        %v583 = vadd.f32 %v510, %v567
        %v584 = vadd.f32 %v511, %v568
        %v585 = vadd.f32 %v512, %v569
        %v586 = vadd.f32 %v513, %v570
        %v587 = vadd.f32 %v514, %v571
        %v588 = vadd.f32 %v515, %v572
        %v589 = vadd.f32 %v516, %v573
        %v590 = vadd.f32 %v517, %v574
        %v591 = vadd.f32 %v518, %v575
        %v592 = vadd.f32 %v519, %v576
        %v593 = vadd.f32 %v520, %v577
        %v594 = vadd.f32 %v521, %v578
        %v595 = vadd.f32 %v522, %v579
        %v596 = vadd.f32 %v523, %v580
        %v597 = vadd.f32 %v524, %v581
        %s598 = scalar_lea.vmem %s1, 12
        %v599 = vld [vmem:[%s598] sm:$0x1]
        %v600 = vld [vmem:[%s598 + $0x1] sm:$0x1]
        %v601 = vld [vmem:[%s598 + $0x2] sm:$0x1]
        %v602 = vld [vmem:[%s598 + $0x3] sm:$0x1]
        %v607 = vlaneseq
        %v608 = vshrl.u32 %v607, 7
        %v609 = vsub.s32 0, %v608
        %v610 = vrot.slane %v599, %v609
        %v611 = vlaneseq
        %v612 = vshrl.u32 %v611, 7
        %v613 = vsub.s32 0, %v612
        %v614 = vrot.slane %v600, %v613
        %v615 = vlaneseq
        %v616 = vshrl.u32 %v615, 7
        %v617 = vsub.s32 0, %v616
        %v618 = vrot.slane %v601, %v617
        %v619 = vlaneseq
        %v620 = vshrl.u32 %v619, 7
        %v621 = vsub.s32 0, %v620
        %v622 = vrot.slane %v602, %v621
        %v627 = vmul.f32 %v610, %v384
        %v628 = vmul.f32 %v610, %v385
        %v629 = vmul.f32 %v610, %v386
        %v630 = vmul.f32 %v610, %v387
        %v631 = vmul.f32 %v614, %v384
        %v632 = vmul.f32 %v614, %v385
        %v633 = vmul.f32 %v614, %v386
        %v634 = vmul.f32 %v614, %v387
        %v635 = vmul.f32 %v618, %v384
        %v636 = vmul.f32 %v618, %v385
        %v637 = vmul.f32 %v618, %v386
        %v638 = vmul.f32 %v618, %v387
        %v639 = vmul.f32 %v622, %v384
        %v640 = vmul.f32 %v622, %v385
        %v641 = vmul.f32 %v622, %v386
        %v642 = vmul.f32 %v622, %v387
        %vm659 = vcmask 1046528
        %v660 = vrot.slane %v627, 1
        %v661 = vrot.slane %v628, 1
        %v662 = vsel %vm659, %v660, %v661
        %v663 = vrot.slane %v629, 1
        %v664 = vsel %vm659, %v661, %v663
        %v665 = vrot.slane %v630, 1
        %v666 = vsel %vm659, %v663, %v665
        %v667 = vrot.slane %v631, 1
        %v668 = vrot.slane %v632, 1
        %v669 = vsel %vm659, %v667, %v668
        %v670 = vrot.slane %v633, 1
        %v671 = vsel %vm659, %v668, %v670
        %v672 = vrot.slane %v634, 1
        %v673 = vsel %vm659, %v670, %v672
        %v674 = vrot.slane %v635, 1
        %v675 = vrot.slane %v636, 1
        %v676 = vsel %vm659, %v674, %v675
        %v677 = vrot.slane %v637, 1
        %v678 = vsel %vm659, %v675, %v677
        %v679 = vrot.slane %v638, 1
        %v680 = vsel %vm659, %v677, %v679
        %v681 = vrot.slane %v639, 1
        %v682 = vrot.slane %v640, 1
        %v683 = vsel %vm659, %v681, %v682
        %v684 = vrot.slane %v641, 1
        %v685 = vsel %vm659, %v682, %v684
        %v686 = vrot.slane %v642, 1
        %v687 = vsel %vm659, %v684, %v686
        %v704 = vadd.f32 %v582, %v662
        %v705 = vadd.f32 %v583, %v664
        %v706 = vadd.f32 %v584, %v666
        %v707 = vadd.f32 %v585, %v665
        %v708 = vadd.f32 %v586, %v669
        %v709 = vadd.f32 %v587, %v671
        %v710 = vadd.f32 %v588, %v673
        %v711 = vadd.f32 %v589, %v672
        %v712 = vadd.f32 %v590, %v676
        %v713 = vadd.f32 %v591, %v678
        %v714 = vadd.f32 %v592, %v680
        %v715 = vadd.f32 %v593, %v679
        %v716 = vadd.f32 %v594, %v683
        %v717 = vadd.f32 %v595, %v685
        %v718 = vadd.f32 %v596, %v687
        %v719 = vadd.f32 %v597, %v686
        %s720 = scalar_lea.vmem %s1, 16
        %v721 = vld [vmem:[%s720] sm:$0x1]
        %v722 = vld [vmem:[%s720 + $0x1] sm:$0x1]
        %v723 = vld [vmem:[%s720 + $0x2] sm:$0x1]
        %v724 = vld [vmem:[%s720 + $0x3] sm:$0x1]
        %v729 = vlaneseq
        %v730 = vshrl.u32 %v729, 7
        %v731 = vsub.s32 0, %v730
        %v732 = vrot.slane %v721, %v731
        %v733 = vlaneseq
        %v734 = vshrl.u32 %v733, 7
        %v735 = vsub.s32 0, %v734
        %v736 = vrot.slane %v722, %v735
        %v737 = vlaneseq
        %v738 = vshrl.u32 %v737, 7
        %v739 = vsub.s32 0, %v738
        %v740 = vrot.slane %v723, %v739
        %v741 = vlaneseq
        %v742 = vshrl.u32 %v741, 7
        %v743 = vsub.s32 0, %v742
        %v744 = vrot.slane %v724, %v743
        %v749 = vrot.slane %v384, 1
        %v750 = vrot.slane %v385, 1
        %v751 = vsel %vm659, %v749, %v750
        %v752 = vrot.slane %v386, 1
        %v753 = vsel %vm659, %v750, %v752
        %v754 = vrot.slane %v387, 1
        %v755 = vsel %vm659, %v752, %v754
        %756 = vrot.lane.b32.xlu0 %v751, 127
        %v757 = vpop.permute.xlu0 %756
        %758 = vrot.lane.b32.xlu0 %v753, 127
        %v759 = vpop.permute.xlu0 %758
        %760 = vrot.lane.b32.xlu0 %v755, 127
        %v761 = vpop.permute.xlu0 %760
        %762 = vrot.lane.b32.xlu0 %v754, 127
        %v763 = vpop.permute.xlu0 %762
        %v768 = vmul.f32 %v732, %v757
        %v769 = vmul.f32 %v732, %v759
        %v770 = vmul.f32 %v732, %v761
        %v771 = vmul.f32 %v732, %v763
        %v772 = vmul.f32 %v736, %v757
        %v773 = vmul.f32 %v736, %v759
        %v774 = vmul.f32 %v736, %v761
        %v775 = vmul.f32 %v736, %v763
        %v776 = vmul.f32 %v740, %v757
        %v777 = vmul.f32 %v740, %v759
        %v778 = vmul.f32 %v740, %v761
        %v779 = vmul.f32 %v740, %v763
        %v780 = vmul.f32 %v744, %v757
        %v781 = vmul.f32 %v744, %v759
        %v782 = vmul.f32 %v744, %v761
        %v783 = vmul.f32 %v744, %v763
        %v784 = vadd.f32 %v704, %v768
        %v785 = vadd.f32 %v705, %v769
        %v786 = vadd.f32 %v706, %v770
        %v787 = vadd.f32 %v707, %v771
        %v788 = vadd.f32 %v708, %v772
        %v789 = vadd.f32 %v709, %v773
        %v790 = vadd.f32 %v710, %v774
        %v791 = vadd.f32 %v711, %v775
        %v792 = vadd.f32 %v712, %v776
        %v793 = vadd.f32 %v713, %v777
        %v794 = vadd.f32 %v714, %v778
        %v795 = vadd.f32 %v715, %v779
        %v796 = vadd.f32 %v716, %v780
        %v797 = vadd.f32 %v717, %v781
        %v798 = vadd.f32 %v718, %v782
        %v799 = vadd.f32 %v719, %v783
        %s800 = scalar_lea.vmem %s1, 20
        %v801 = vld [vmem:[%s800] sm:$0x1]
        %v802 = vld [vmem:[%s800 + $0x1] sm:$0x1]
        %v803 = vld [vmem:[%s800 + $0x2] sm:$0x1]
        %v804 = vld [vmem:[%s800 + $0x3] sm:$0x1]
        %v809 = vlaneseq
        %v810 = vshrl.u32 %v809, 7
        %v811 = vsub.s32 0, %v810
        %v812 = vrot.slane %v801, %v811
        %v813 = vlaneseq
        %v814 = vshrl.u32 %v813, 7
        %v815 = vsub.s32 0, %v814
        %v816 = vrot.slane %v802, %v815
        %v817 = vlaneseq
        %v818 = vshrl.u32 %v817, 7
        %v819 = vsub.s32 0, %v818
        %v820 = vrot.slane %v803, %v819
        %v821 = vlaneseq
        %v822 = vshrl.u32 %v821, 7
        %v823 = vsub.s32 0, %v822
        %v824 = vrot.slane %v804, %v823
        %829 = vrot.lane.b32.xlu0 %v751, 126
        %v830 = vpop.permute.xlu0 %829
        %831 = vrot.lane.b32.xlu0 %v753, 126
        %v832 = vpop.permute.xlu0 %831
        %833 = vrot.lane.b32.xlu0 %v755, 126
        %v834 = vpop.permute.xlu0 %833
        %835 = vrot.lane.b32.xlu0 %v754, 126
        %v836 = vpop.permute.xlu0 %835
        %v841 = vmul.f32 %v812, %v830
        %v842 = vmul.f32 %v812, %v832
        %v843 = vmul.f32 %v812, %v834
        %v844 = vmul.f32 %v812, %v836
        %v845 = vmul.f32 %v816, %v830
        %v846 = vmul.f32 %v816, %v832
        %v847 = vmul.f32 %v816, %v834
        %v848 = vmul.f32 %v816, %v836
        %v849 = vmul.f32 %v820, %v830
        %v850 = vmul.f32 %v820, %v832
        %v851 = vmul.f32 %v820, %v834
        %v852 = vmul.f32 %v820, %v836
        %v853 = vmul.f32 %v824, %v830
        %v854 = vmul.f32 %v824, %v832
        %v855 = vmul.f32 %v824, %v834
        %v856 = vmul.f32 %v824, %v836
        %v857 = vadd.f32 %v784, %v841
        %v858 = vadd.f32 %v785, %v842
        %v859 = vadd.f32 %v786, %v843
        %v860 = vadd.f32 %v787, %v844
        %v861 = vadd.f32 %v788, %v845
        %v862 = vadd.f32 %v789, %v846
        %v863 = vadd.f32 %v790, %v847
        %v864 = vadd.f32 %v791, %v848
        %v865 = vadd.f32 %v792, %v849
        %v866 = vadd.f32 %v793, %v850
        %v867 = vadd.f32 %v794, %v851
        %v868 = vadd.f32 %v795, %v852
        %v869 = vadd.f32 %v796, %v853
        %v870 = vadd.f32 %v797, %v854
        %v871 = vadd.f32 %v798, %v855
        %v872 = vadd.f32 %v799, %v856
        %s873 = scalar_lea.vmem %s1, 24
        %v874 = vld [vmem:[%s873] sm:$0x1]
        %v875 = vld [vmem:[%s873 + $0x1] sm:$0x1]
        %v876 = vld [vmem:[%s873 + $0x2] sm:$0x1]
        %v877 = vld [vmem:[%s873 + $0x3] sm:$0x1]
        %v882 = vlaneseq
        %v883 = vshrl.u32 %v882, 7
        %v884 = vsub.s32 0, %v883
        %v885 = vrot.slane %v874, %v884
        %v886 = vlaneseq
        %v887 = vshrl.u32 %v886, 7
        %v888 = vsub.s32 0, %v887
        %v889 = vrot.slane %v875, %v888
        %v890 = vlaneseq
        %v891 = vshrl.u32 %v890, 7
        %v892 = vsub.s32 0, %v891
        %v893 = vrot.slane %v876, %v892
        %v894 = vlaneseq
        %v895 = vshrl.u32 %v894, 7
        %v896 = vsub.s32 0, %v895
        %v897 = vrot.slane %v877, %v896
        %v902 = vmul.f32 %v885, %v384
        %v903 = vmul.f32 %v885, %v385
        %v904 = vmul.f32 %v885, %v386
        %v905 = vmul.f32 %v885, %v387
        %v906 = vmul.f32 %v889, %v384
        %v907 = vmul.f32 %v889, %v385
        %v908 = vmul.f32 %v889, %v386
        %v909 = vmul.f32 %v889, %v387
        %v910 = vmul.f32 %v893, %v384
        %v911 = vmul.f32 %v893, %v385
        %v912 = vmul.f32 %v893, %v386
        %v913 = vmul.f32 %v893, %v387
        %v914 = vmul.f32 %v897, %v384
        %v915 = vmul.f32 %v897, %v385
        %v916 = vmul.f32 %v897, %v386
        %v917 = vmul.f32 %v897, %v387
        %vm934 = vcmask 1045504
        %v935 = vrot.slane %v902, 2
        %v936 = vrot.slane %v903, 2
        %v937 = vsel %vm934, %v935, %v936
        %v938 = vrot.slane %v904, 2
        %v939 = vsel %vm934, %v936, %v938
        %v940 = vrot.slane %v905, 2
        %v941 = vsel %vm934, %v938, %v940
        %v942 = vrot.slane %v906, 2
        %v943 = vrot.slane %v907, 2
        %v944 = vsel %vm934, %v942, %v943
        %v945 = vrot.slane %v908, 2
        %v946 = vsel %vm934, %v943, %v945
        %v947 = vrot.slane %v909, 2
        %v948 = vsel %vm934, %v945, %v947
        %v949 = vrot.slane %v910, 2
        %v950 = vrot.slane %v911, 2
        %v951 = vsel %vm934, %v949, %v950
        %v952 = vrot.slane %v912, 2
        %v953 = vsel %vm934, %v950, %v952
        %v954 = vrot.slane %v913, 2
        %v955 = vsel %vm934, %v952, %v954
        %v956 = vrot.slane %v914, 2
        %v957 = vrot.slane %v915, 2
        %v958 = vsel %vm934, %v956, %v957
        %v959 = vrot.slane %v916, 2
        %v960 = vsel %vm934, %v957, %v959
        %v961 = vrot.slane %v917, 2
        %v962 = vsel %vm934, %v959, %v961
        %v979 = vadd.f32 %v857, %v937
        %v980 = vadd.f32 %v858, %v939
        %v981 = vadd.f32 %v859, %v941
        %v982 = vadd.f32 %v860, %v940
        %v983 = vadd.f32 %v861, %v944
        %v984 = vadd.f32 %v862, %v946
        %v985 = vadd.f32 %v863, %v948
        %v986 = vadd.f32 %v864, %v947
        %v987 = vadd.f32 %v865, %v951
        %v988 = vadd.f32 %v866, %v953
        %v989 = vadd.f32 %v867, %v955
        %v990 = vadd.f32 %v868, %v954
        %v991 = vadd.f32 %v869, %v958
        %v992 = vadd.f32 %v870, %v960
        %v993 = vadd.f32 %v871, %v962
        %v994 = vadd.f32 %v872, %v961
        %s995 = scalar_lea.vmem %s1, 28
        %v996 = vld [vmem:[%s995] sm:$0x1]
        %v997 = vld [vmem:[%s995 + $0x1] sm:$0x1]
        %v998 = vld [vmem:[%s995 + $0x2] sm:$0x1]
        %v999 = vld [vmem:[%s995 + $0x3] sm:$0x1]
        %v1004 = vlaneseq
        %v1005 = vshrl.u32 %v1004, 7
        %v1006 = vsub.s32 0, %v1005
        %v1007 = vrot.slane %v996, %v1006
        %v1008 = vlaneseq
        %v1009 = vshrl.u32 %v1008, 7
        %v1010 = vsub.s32 0, %v1009
        %v1011 = vrot.slane %v997, %v1010
        %v1012 = vlaneseq
        %v1013 = vshrl.u32 %v1012, 7
        %v1014 = vsub.s32 0, %v1013
        %v1015 = vrot.slane %v998, %v1014
        %v1016 = vlaneseq
        %v1017 = vshrl.u32 %v1016, 7
        %v1018 = vsub.s32 0, %v1017
        %v1019 = vrot.slane %v999, %v1018
        %v1024 = vrot.slane %v384, 2
        %v1025 = vrot.slane %v385, 2
        %v1026 = vsel %vm934, %v1024, %v1025
        %v1027 = vrot.slane %v386, 2
        %v1028 = vsel %vm934, %v1025, %v1027
        %v1029 = vrot.slane %v387, 2
        %v1030 = vsel %vm934, %v1027, %v1029
        %1031 = vrot.lane.b32.xlu0 %v1026, 127
        %v1032 = vpop.permute.xlu0 %1031
        %1033 = vrot.lane.b32.xlu0 %v1028, 127
        %v1034 = vpop.permute.xlu0 %1033
        %1035 = vrot.lane.b32.xlu0 %v1030, 127
        %v1036 = vpop.permute.xlu0 %1035
        %1037 = vrot.lane.b32.xlu0 %v1029, 127
        %v1038 = vpop.permute.xlu0 %1037
        %v1043 = vmul.f32 %v1007, %v1032
        %v1044 = vmul.f32 %v1007, %v1034
        %v1045 = vmul.f32 %v1007, %v1036
        %v1046 = vmul.f32 %v1007, %v1038
        %v1047 = vmul.f32 %v1011, %v1032
        %v1048 = vmul.f32 %v1011, %v1034
        %v1049 = vmul.f32 %v1011, %v1036
        %v1050 = vmul.f32 %v1011, %v1038
        %v1051 = vmul.f32 %v1015, %v1032
        %v1052 = vmul.f32 %v1015, %v1034
        %v1053 = vmul.f32 %v1015, %v1036
        %v1054 = vmul.f32 %v1015, %v1038
        %v1055 = vmul.f32 %v1019, %v1032
        %v1056 = vmul.f32 %v1019, %v1034
        %v1057 = vmul.f32 %v1019, %v1036
        %v1058 = vmul.f32 %v1019, %v1038
        %v1059 = vadd.f32 %v979, %v1043
        %v1060 = vadd.f32 %v980, %v1044
        %v1061 = vadd.f32 %v981, %v1045
        %v1062 = vadd.f32 %v982, %v1046
        %v1063 = vadd.f32 %v983, %v1047
        %v1064 = vadd.f32 %v984, %v1048
        %v1065 = vadd.f32 %v985, %v1049
        %v1066 = vadd.f32 %v986, %v1050
        %v1067 = vadd.f32 %v987, %v1051
        %v1068 = vadd.f32 %v988, %v1052
        %v1069 = vadd.f32 %v989, %v1053
        %v1070 = vadd.f32 %v990, %v1054
        %v1071 = vadd.f32 %v991, %v1055
        %v1072 = vadd.f32 %v992, %v1056
        %v1073 = vadd.f32 %v993, %v1057
        %v1074 = vadd.f32 %v994, %v1058
        %s1075 = scalar_lea.vmem %s1, 32
        %v1076 = vld [vmem:[%s1075] sm:$0x1]
        %v1077 = vld [vmem:[%s1075 + $0x1] sm:$0x1]
        %v1078 = vld [vmem:[%s1075 + $0x2] sm:$0x1]
        %v1079 = vld [vmem:[%s1075 + $0x3] sm:$0x1]
        %v1084 = vlaneseq
        %v1085 = vshrl.u32 %v1084, 7
        %v1086 = vsub.s32 0, %v1085
        %v1087 = vrot.slane %v1076, %v1086
        %v1088 = vlaneseq
        %v1089 = vshrl.u32 %v1088, 7
        %v1090 = vsub.s32 0, %v1089
        %v1091 = vrot.slane %v1077, %v1090
        %v1092 = vlaneseq
        %v1093 = vshrl.u32 %v1092, 7
        %v1094 = vsub.s32 0, %v1093
        %v1095 = vrot.slane %v1078, %v1094
        %v1096 = vlaneseq
        %v1097 = vshrl.u32 %v1096, 7
        %v1098 = vsub.s32 0, %v1097
        %v1099 = vrot.slane %v1079, %v1098
        %1104 = vrot.lane.b32.xlu0 %v1026, 126
        %v1105 = vpop.permute.xlu0 %1104
        %1106 = vrot.lane.b32.xlu0 %v1028, 126
        %v1107 = vpop.permute.xlu0 %1106
        %1108 = vrot.lane.b32.xlu0 %v1030, 126
        %v1109 = vpop.permute.xlu0 %1108
        %1110 = vrot.lane.b32.xlu0 %v1029, 126
        %v1111 = vpop.permute.xlu0 %1110
        %v1116 = vmul.f32 %v1087, %v1105
        %v1117 = vmul.f32 %v1087, %v1107
        %v1118 = vmul.f32 %v1087, %v1109
        %v1119 = vmul.f32 %v1087, %v1111
        %v1120 = vmul.f32 %v1091, %v1105
        %v1121 = vmul.f32 %v1091, %v1107
        %v1122 = vmul.f32 %v1091, %v1109
        %v1123 = vmul.f32 %v1091, %v1111
        %v1124 = vmul.f32 %v1095, %v1105
        %v1125 = vmul.f32 %v1095, %v1107
        %v1126 = vmul.f32 %v1095, %v1109
        %v1127 = vmul.f32 %v1095, %v1111
        %v1128 = vmul.f32 %v1099, %v1105
        %v1129 = vmul.f32 %v1099, %v1107
        %v1130 = vmul.f32 %v1099, %v1109
        %v1131 = vmul.f32 %v1099, %v1111
        %v1132 = vadd.f32 %v1059, %v1116
        %v1133 = vadd.f32 %v1060, %v1117
        %v1134 = vadd.f32 %v1061, %v1118
        %v1135 = vadd.f32 %v1062, %v1119
        %v1136 = vadd.f32 %v1063, %v1120
        %v1137 = vadd.f32 %v1064, %v1121
        %v1138 = vadd.f32 %v1065, %v1122
        %v1139 = vadd.f32 %v1066, %v1123
        %v1140 = vadd.f32 %v1067, %v1124
        %v1141 = vadd.f32 %v1068, %v1125
        %v1142 = vadd.f32 %v1069, %v1126
        %v1143 = vadd.f32 %v1070, %v1127
        %v1144 = vadd.f32 %v1071, %v1128
        %v1145 = vadd.f32 %v1072, %v1129
        %v1146 = vadd.f32 %v1073, %v1130
        %v1147 = vadd.f32 %v1074, %v1131
        %v1148 = vld [vmem:[%s2] sm:$0x1]
        %v1149 = vld [vmem:[%s2 + $0x1] sm:$0x1]
        %v1150 = vld [vmem:[%s2 + $0x2] sm:$0x1]
        %v1151 = vld [vmem:[%s2 + $0x3] sm:$0x1]
        %v1156 = vlaneseq
        %v1157 = vshrl.u32 %v1156, 7
        %v1158 = vsub.s32 0, %v1157
        %v1159 = vrot.slane %v1148, %v1158
        %v1160 = vlaneseq
        %v1161 = vshrl.u32 %v1160, 7
        %v1162 = vsub.s32 0, %v1161
        %v1163 = vrot.slane %v1149, %v1162
        %v1164 = vlaneseq
        %v1165 = vshrl.u32 %v1164, 7
        %v1166 = vsub.s32 0, %v1165
        %v1167 = vrot.slane %v1150, %v1166
        %v1168 = vlaneseq
        %v1169 = vshrl.u32 %v1168, 7
        %v1170 = vsub.s32 0, %v1169
        %v1171 = vrot.slane %v1151, %v1170
        %v1176 = vadd.f32 %v1132, %v1159
        %v1177 = vadd.f32 %v1133, %v1159
        %v1178 = vadd.f32 %v1134, %v1159
        %v1179 = vadd.f32 %v1135, %v1159
        %v1180 = vadd.f32 %v1136, %v1163
        %v1181 = vadd.f32 %v1137, %v1163
        %v1182 = vadd.f32 %v1138, %v1163
        %v1183 = vadd.f32 %v1139, %v1163
        %v1184 = vadd.f32 %v1140, %v1167
        %v1185 = vadd.f32 %v1141, %v1167
        %v1186 = vadd.f32 %v1142, %v1167
        %v1187 = vadd.f32 %v1143, %v1167
        %v1188 = vadd.f32 %v1144, %v1171
        %v1189 = vadd.f32 %v1145, %v1171
        %v1190 = vadd.f32 %v1146, %v1171
        %v1191 = vadd.f32 %v1147, %v1171
        %v1192 = vmax.f32 %v1176, 0.0
        %v1193 = vmax.f32 %v1177, 0.0
        %v1194 = vmax.f32 %v1178, 0.0
        %v1195 = vmax.f32 %v1179, 0.0
        %v1196 = vmax.f32 %v1180, 0.0
        %v1197 = vmax.f32 %v1181, 0.0
        %v1198 = vmax.f32 %v1182, 0.0
        %v1199 = vmax.f32 %v1183, 0.0
        %v1200 = vmax.f32 %v1184, 0.0
        %v1201 = vmax.f32 %v1185, 0.0
        %v1202 = vmax.f32 %v1186, 0.0
        %v1203 = vmax.f32 %v1187, 0.0
        %v1204 = vmax.f32 %v1188, 0.0
        %v1205 = vmax.f32 %v1189, 0.0
        %v1206 = vmax.f32 %v1190, 0.0
        %v1207 = vmax.f32 %v1191, 0.0
        %v1208 = vld [vmem:[%s3] sm:$0x1]
        %v1209 = vld [vmem:[%s3 + $0x1] sm:$0x1]
        %v1210 = vld [vmem:[%s3 + $0x2] sm:$0x1]
        %v1211 = vld [vmem:[%s3 + $0x3] sm:$0x1]
        %v1216 = vlaneseq
        %v1217 = vshrl.u32 %v1216, 7
        %v1218 = vsub.s32 0, %v1217
        %v1219 = vrot.slane %v1208, %v1218
        %v1220 = vlaneseq
        %v1221 = vshrl.u32 %v1220, 7
        %v1222 = vsub.s32 0, %v1221
        %v1223 = vrot.slane %v1209, %v1222
        %v1224 = vlaneseq
        %v1225 = vshrl.u32 %v1224, 7
        %v1226 = vsub.s32 0, %v1225
        %v1227 = vrot.slane %v1210, %v1226
        %v1228 = vlaneseq
        %v1229 = vshrl.u32 %v1228, 7
        %v1230 = vsub.s32 0, %v1229
        %v1231 = vrot.slane %v1211, %v1230
        %v1236 = vmul.f32 %v1192, %v1219
        %v1237 = vmul.f32 %v1193, %v1219
        %v1238 = vmul.f32 %v1194, %v1219
        %v1239 = vmul.f32 %v1195, %v1219
        %v1240 = vmul.f32 %v1196, %v1223
        %v1241 = vmul.f32 %v1197, %v1223
        %v1242 = vmul.f32 %v1198, %v1223
        %v1243 = vmul.f32 %v1199, %v1223
        %v1244 = vmul.f32 %v1200, %v1227
        %v1245 = vmul.f32 %v1201, %v1227
        %v1246 = vmul.f32 %v1202, %v1227
        %v1247 = vmul.f32 %v1203, %v1227
        %v1248 = vmul.f32 %v1204, %v1231
        %v1249 = vmul.f32 %v1205, %v1231
        %v1250 = vmul.f32 %v1206, %v1231
        %v1251 = vmul.f32 %v1207, %v1231
        %v1252 = vld [vmem:[%s4] sm:$0x1]
        %v1253 = vld [vmem:[%s4 + $0x1] sm:$0x1]
        %v1254 = vld [vmem:[%s4 + $0x2] sm:$0x1]
        %v1255 = vld [vmem:[%s4 + $0x3] sm:$0x1]
        %v1260 = vlaneseq
        %v1261 = vshrl.u32 %v1260, 7
        %v1262 = vsub.s32 0, %v1261
        %v1263 = vrot.slane %v1252, %v1262
        %v1264 = vlaneseq
        %v1265 = vshrl.u32 %v1264, 7
        %v1266 = vsub.s32 0, %v1265
        %v1267 = vrot.slane %v1253, %v1266
        %v1268 = vlaneseq
        %v1269 = vshrl.u32 %v1268, 7
        %v1270 = vsub.s32 0, %v1269
        %v1271 = vrot.slane %v1254, %v1270
        %v1272 = vlaneseq
        %v1273 = vshrl.u32 %v1272, 7
        %v1274 = vsub.s32 0, %v1273
        %v1275 = vrot.slane %v1255, %v1274
        %v1280 = vadd.f32 %v1236, %v1263
        %v1281 = vadd.f32 %v1237, %v1263
        %v1282 = vadd.f32 %v1238, %v1263
        %v1283 = vadd.f32 %v1239, %v1263
        %v1284 = vadd.f32 %v1240, %v1267
        %v1285 = vadd.f32 %v1241, %v1267
        %v1286 = vadd.f32 %v1242, %v1267
        %v1287 = vadd.f32 %v1243, %v1267
        %v1288 = vadd.f32 %v1244, %v1271
        %v1289 = vadd.f32 %v1245, %v1271
        %v1290 = vadd.f32 %v1246, %v1271
        %v1291 = vadd.f32 %v1247, %v1271
        %v1292 = vadd.f32 %v1248, %v1275
        %v1293 = vadd.f32 %v1249, %v1275
        %v1294 = vadd.f32 %v1250, %v1275
        %v1295 = vadd.f32 %v1251, %v1275
        %v1312 = vrot.slane %v1280, 1
        %v1313 = vrot.slane %v1281, 1
        %v1314 = vsel %vm659, %v1312, %v1313
        %v1315 = vrot.slane %v1282, 1
        %v1316 = vsel %vm659, %v1313, %v1315
        %v1317 = vrot.slane %v1283, 1
        %v1318 = vsel %vm659, %v1315, %v1317
        %v1319 = vrot.slane %v1284, 1
        %v1320 = vrot.slane %v1285, 1
        %v1321 = vsel %vm659, %v1319, %v1320
        %v1322 = vrot.slane %v1286, 1
        %v1323 = vsel %vm659, %v1320, %v1322
        %v1324 = vrot.slane %v1287, 1
        %v1325 = vsel %vm659, %v1322, %v1324
        %v1326 = vrot.slane %v1288, 1
        %v1327 = vrot.slane %v1289, 1
        %v1328 = vsel %vm659, %v1326, %v1327
        %v1329 = vrot.slane %v1290, 1
        %v1330 = vsel %vm659, %v1327, %v1329
        %v1331 = vrot.slane %v1291, 1
        %v1332 = vsel %vm659, %v1329, %v1331
        %v1333 = vrot.slane %v1292, 1
        %v1334 = vrot.slane %v1293, 1
        %v1335 = vsel %vm659, %v1333, %v1334
        %v1336 = vrot.slane %v1294, 1
        %v1337 = vsel %vm659, %v1334, %v1336
        %v1338 = vrot.slane %v1295, 1
        %v1339 = vsel %vm659, %v1336, %v1338
        %v1356 = vmax.f32 %v1280, %v1314
        %v1357 = vmax.f32 %v1281, %v1316
        %v1358 = vmax.f32 %v1282, %v1318
        %v1359 = vmax.f32 %v1283, %v1317
        %v1360 = vmax.f32 %v1284, %v1321
        %v1361 = vmax.f32 %v1285, %v1323
        %v1362 = vmax.f32 %v1286, %v1325
        %v1363 = vmax.f32 %v1287, %v1324
        %v1364 = vmax.f32 %v1288, %v1328
        %v1365 = vmax.f32 %v1289, %v1330
        %v1366 = vmax.f32 %v1290, %v1332
        %v1367 = vmax.f32 %v1291, %v1331
        %v1368 = vmax.f32 %v1292, %v1335
        %v1369 = vmax.f32 %v1293, %v1337
        %v1370 = vmax.f32 %v1294, %v1339
        %v1371 = vmax.f32 %v1295, %v1338
        %1388 = vrot.lane.b32.xlu0 %v1356, 127
        %v1389 = vpop.permute.xlu0 %1388
        %1390 = vrot.lane.b32.xlu0 %v1357, 127
        %v1391 = vpop.permute.xlu0 %1390
        %1392 = vrot.lane.b32.xlu0 %v1358, 127
        %v1393 = vpop.permute.xlu0 %1392
        %1394 = vrot.lane.b32.xlu0 %v1359, 127
        %v1395 = vpop.permute.xlu0 %1394
        %1396 = vrot.lane.b32.xlu0 %v1360, 127
        %v1397 = vpop.permute.xlu0 %1396
        %1398 = vrot.lane.b32.xlu0 %v1361, 127
        %v1399 = vpop.permute.xlu0 %1398
        %1400 = vrot.lane.b32.xlu0 %v1362, 127
        %v1401 = vpop.permute.xlu0 %1400
        %1402 = vrot.lane.b32.xlu0 %v1363, 127
        %v1403 = vpop.permute.xlu0 %1402
        %1404 = vrot.lane.b32.xlu0 %v1364, 127
        %v1405 = vpop.permute.xlu0 %1404
        %1406 = vrot.lane.b32.xlu0 %v1365, 127
        %v1407 = vpop.permute.xlu0 %1406
        %1408 = vrot.lane.b32.xlu0 %v1366, 127
        %v1409 = vpop.permute.xlu0 %1408
        %1410 = vrot.lane.b32.xlu0 %v1367, 127
        %v1411 = vpop.permute.xlu0 %1410
        %1412 = vrot.lane.b32.xlu0 %v1368, 127
        %v1413 = vpop.permute.xlu0 %1412
        %1414 = vrot.lane.b32.xlu0 %v1369, 127
        %v1415 = vpop.permute.xlu0 %1414
        %1416 = vrot.lane.b32.xlu0 %v1370, 127
        %v1417 = vpop.permute.xlu0 %1416
        %1418 = vrot.lane.b32.xlu0 %v1371, 127
        %v1419 = vpop.permute.xlu0 %1418
        %v1436 = vmax.f32 %v1356, %v1389
        %v1437 = vmax.f32 %v1357, %v1391
        %v1438 = vmax.f32 %v1358, %v1393
        %v1439 = vmax.f32 %v1359, %v1395
        %v1440 = vmax.f32 %v1360, %v1397
        %v1441 = vmax.f32 %v1361, %v1399
        %v1442 = vmax.f32 %v1362, %v1401
        %v1443 = vmax.f32 %v1363, %v1403
        %v1444 = vmax.f32 %v1364, %v1405
        %v1445 = vmax.f32 %v1365, %v1407
        %v1446 = vmax.f32 %v1366, %v1409
        %v1447 = vmax.f32 %v1367, %v1411
        %v1448 = vmax.f32 %v1368, %v1413
        %v1449 = vmax.f32 %v1369, %v1415
        %v1450 = vmax.f32 %v1370, %v1417
        %v1451 = vmax.f32 %v1371, %v1419
        %v1452 = vlaneseq
        %v1453 = vshrl.u32 %v1452, 7
        %v1454 = vadd.s32 %v1453, 8
        %v1455 = vlaneseq
        %v1456 = vand.u32 %v1455, 127
        %v1457 = vmul.u32 %v1453, 2
        %v1458 = vmul.u32 %v1454, 2
        %vm1459 = vcmp.eq.s32.totalorder %v1456, %v1457
        %vm1460 = vcmp.eq.s32.totalorder %v1456, %v1458
        %v1461 = vsel %vm1459, 1, 0
        %v1462 = vsel %vm1460, 1, 0
        %v1463 = vcvt.s32.f32 %v1461
        %v1464 = vcvt.s32.f32 %v1462
        %v1465 = vadd.s32 %v1453, 16
        %v1466 = vadd.s32 %v1453, 24
        %v1467 = vmul.u32 %v1456, 2
        %vm1468 = vcmp.eq.s32.totalorder %v1453, %v1467
        %vm1469 = vcmp.eq.s32.totalorder %v1454, %v1467
        %vm1470 = vcmp.eq.s32.totalorder %v1465, %v1467
        %vm1471 = vcmp.eq.s32.totalorder %v1466, %v1467
        %v1472 = vsel %vm1468, 1, 0
        %v1473 = vsel %vm1469, 1, 0
        %v1474 = vsel %vm1470, 1, 0
        %v1475 = vsel %vm1471, 1, 0
        %v1476 = vcvt.s32.f32 %v1472
        %v1477 = vcvt.s32.f32 %v1473
        %v1478 = vcvt.s32.f32 %v1474
        %v1479 = vcvt.s32.f32 %v1475
        %vm1480 = vcmask 203776
        %v1482 = vsel %vm1480, %v1436, 0
        %v1485 = vsel %vm1480, %v1437, 0
        %v1488 = vsel %vm1480, %v1438, 0
        %v1491 = vsel %vm1480, %v1439, 0
        %vm1493 = vcmask 1040384
        %v1495 = vsel %vm1493, %v1479, 0
        %1497 = vmatprep.subr.mxu0 0.0
        %1498 = vmatpush1.msra.mxu0 0.0
        %1499 = vmatprep.subr.mxu0 0.0
        %1500 = vmatpush1.msra.mxu0 0.0
        %1501 = vmatprep.subr.mxu0 0.0
        %1502 = vmatpush1.msra.mxu0 0.0
        %1503 = vmatprep.subr.mxu0 0.0
        %1504 = vmatpush1.msra.mxu0 0.0
        %1505 = vmatprep.subr.mxu0 0.0
        %1506 = vmatpush1.msra.mxu0 0.0
        %1507 = vmatprep.subr.mxu0 0.0
        %1508 = vmatpush1.msra.mxu0 0.0
        %1509 = vmatprep.subr.mxu0 0.0
        %1510 = vmatpush1.msra.mxu0 0.0
        %1511 = vmatprep.subr.mxu0 0.0
        %1512 = vmatpush1.msra.mxu0 0.0
        %1513 = vmatprep.subr.mxu0 0.0
        %1514 = vmatpush1.msra.mxu0 0.0
        %1515 = vmatprep.subr.mxu0 0.0
        %1516 = vmatpush1.msra.mxu0 0.0
        %1517 = vmatprep.subr.mxu0 0.0
        %1518 = vmatpush1.msra.mxu0 0.0
        %1519 = vmatprep.subr.mxu0 0.0
        %1520 = vmatpush1.msra.mxu0 0.0
        %1521 = vmatprep.subr.mxu0 0.0
        %1522 = vmatpush1.msra.mxu0 %v1495
        %1523 = vmatprep.subr.mxu0 0.0
        %1524 = vmatpush1.msra.mxu0 %v1478
        %1525 = vmatprep.subr.mxu0 0.0
        %1526 = vmatpush1.msra.mxu0 %v1477
        %1527 = vmatprep.subr.mxu0 0.0
        %1528 = vmatpush1.msra.mxu0 %v1476
        %1529 = vmatprep.subr.mxu0 0.0
        %1530 = vmatpush2.msra.mxu0 0.0
        %1531 = vmatprep.subr.mxu0 0.0
        %1532 = vmatpush2.msra.mxu0 0.0
        %1533 = vmatprep.subr.mxu0 0.0
        %1534 = vmatpush2.msra.mxu0 0.0
        %1535 = vmatprep.subr.mxu0 0.0
        %1536 = vmatpush2.msra.mxu0 0.0
        %1537 = vmatprep.subr.mxu0 0.0
        %1538 = vmatpush2.msra.mxu0 0.0
        %1539 = vmatprep.subr.mxu0 0.0
        %1540 = vmatpush2.msra.mxu0 0.0
        %1541 = vmatprep.subr.mxu0 0.0
        %1542 = vmatpush2.msra.mxu0 0.0
        %1543 = vmatprep.subr.mxu0 0.0
        %1544 = vmatpush2.msra.mxu0 0.0
        %1545 = vmatprep.subr.mxu0 0.0
        %1546 = vmatpush2.msra.mxu0 0.0
        %1547 = vmatprep.subr.mxu0 0.0
        %1548 = vmatpush2.msra.mxu0 0.0
        %1549 = vmatprep.subr.mxu0 0.0
        %1550 = vmatpush2.msra.mxu0 0.0
        %1551 = vmatprep.subr.mxu0 0.0
        %1552 = vmatpush2.msra.mxu0 0.0
        %1553 = vmatprep.subr.mxu0 0.0
        %1554 = vmatpush2.msra.mxu0 0.0
        %1555 = vmatprep.subr.mxu0 0.0
        %1556 = vmatpush2.msra.mxu0 0.0
        %1557 = vmatprep.subr.mxu0 0.0
        %1558 = vmatpush2.msra.mxu0 0.0
        %1559 = vmatprep.subr.mxu0 0.0
        %1560 = vmatpush2.msra.mxu0 0.0
        %1561 = vmatprep.mubr.f32.mxu0 0.0
        %1562 = vmatmul.mubr.f32.gmra.mxu0 %v1482
        %v1563 = vpop.f32.mrf.mxu0
        %v1564 = vadd.f32 0.0, %v1563
        %v1565 = vpop.f32.mrf.mxu0
        %1566 = vmatprep.mubr.f32.mxu0 0.0
        %1567 = vmatmul.mubr.f32.gmra.mxu0 %v1485
        %v1568 = vpop.f32.mrf.mxu0
        %v1569 = vadd.f32 0.0, %v1568
        %v1570 = vpop.f32.mrf.mxu0
        %1571 = vmatprep.mubr.f32.mxu0 0.0
        %1572 = vmatmul.mubr.f32.gmra.mxu0 %v1488
        %v1573 = vpop.f32.mrf.mxu0
        %v1574 = vadd.f32 0.0, %v1573
        %v1575 = vpop.f32.mrf.mxu0
        %1576 = vmatprep.mubr.f32.mxu0 0.0
        %1577 = vmatmul.mubr.f32.gmra.mxu0 %v1491
        %v1578 = vpop.f32.mrf.mxu0
        %v1579 = vadd.f32 0.0, %v1578
        %v1580 = vpop.f32.mrf.mxu0
        %1581 = vdwg.mxu0
        %v1583 = vsel %vm1480, %v1463, 0
        %v1586 = vsel %vm1480, %v1464, 0
        %v1589 = vsel %vm1493, %v1579, 0
        %1591 = vmatprep.subr.mxu0 0.0
        %1592 = vmatpush1.msra.mxu0 0.0
        %1593 = vmatprep.subr.mxu0 0.0
        %1594 = vmatpush1.msra.mxu0 0.0
        %1595 = vmatprep.subr.mxu0 0.0
        %1596 = vmatpush1.msra.mxu0 0.0
        %1597 = vmatprep.subr.mxu0 0.0
        %1598 = vmatpush1.msra.mxu0 0.0
        %1599 = vmatprep.subr.mxu0 0.0
        %1600 = vmatpush1.msra.mxu0 0.0
        %1601 = vmatprep.subr.mxu0 0.0
        %1602 = vmatpush1.msra.mxu0 0.0
        %1603 = vmatprep.subr.mxu0 0.0
        %1604 = vmatpush1.msra.mxu0 0.0
        %1605 = vmatprep.subr.mxu0 0.0
        %1606 = vmatpush1.msra.mxu0 0.0
        %1607 = vmatprep.subr.mxu0 0.0
        %1608 = vmatpush1.msra.mxu0 0.0
        %1609 = vmatprep.subr.mxu0 0.0
        %1610 = vmatpush1.msra.mxu0 0.0
        %1611 = vmatprep.subr.mxu0 0.0
        %1612 = vmatpush1.msra.mxu0 0.0
        %1613 = vmatprep.subr.mxu0 0.0
        %1614 = vmatpush1.msra.mxu0 0.0
        %1615 = vmatprep.subr.mxu0 0.0
        %1616 = vmatpush1.msra.mxu0 %v1589
        %1617 = vmatprep.subr.mxu0 0.0
        %1618 = vmatpush1.msra.mxu0 %v1574
        %1619 = vmatprep.subr.mxu0 0.0
        %1620 = vmatpush1.msra.mxu0 %v1569
        %1621 = vmatprep.subr.mxu0 0.0
        %1622 = vmatpush1.msra.mxu0 %v1564
        %1623 = vmatprep.subr.mxu0 0.0
        %1624 = vmatpush2.msra.mxu0 0.0
        %1625 = vmatprep.subr.mxu0 0.0
        %1626 = vmatpush2.msra.mxu0 0.0
        %1627 = vmatprep.subr.mxu0 0.0
        %1628 = vmatpush2.msra.mxu0 0.0
        %1629 = vmatprep.subr.mxu0 0.0
        %1630 = vmatpush2.msra.mxu0 0.0
        %1631 = vmatprep.subr.mxu0 0.0
        %1632 = vmatpush2.msra.mxu0 0.0
        %1633 = vmatprep.subr.mxu0 0.0
        %1634 = vmatpush2.msra.mxu0 0.0
        %1635 = vmatprep.subr.mxu0 0.0
        %1636 = vmatpush2.msra.mxu0 0.0
        %1637 = vmatprep.subr.mxu0 0.0
        %1638 = vmatpush2.msra.mxu0 0.0
        %1639 = vmatprep.subr.mxu0 0.0
        %1640 = vmatpush2.msra.mxu0 0.0
        %1641 = vmatprep.subr.mxu0 0.0
        %1642 = vmatpush2.msra.mxu0 0.0
        %1643 = vmatprep.subr.mxu0 0.0
        %1644 = vmatpush2.msra.mxu0 0.0
        %1645 = vmatprep.subr.mxu0 0.0
        %1646 = vmatpush2.msra.mxu0 0.0
        %1647 = vmatprep.subr.mxu0 0.0
        %1648 = vmatpush2.msra.mxu0 0.0
        %1649 = vmatprep.subr.mxu0 0.0
        %1650 = vmatpush2.msra.mxu0 0.0
        %1651 = vmatprep.subr.mxu0 0.0
        %1652 = vmatpush2.msra.mxu0 0.0
        %1653 = vmatprep.subr.mxu0 0.0
        %1654 = vmatpush2.msra.mxu0 0.0
        %1655 = vmatprep.mubr.f32.mxu0 0.0
        %1656 = vmatmul.mubr.f32.gmra.mxu0 %v1583
        %v1657 = vpop.f32.mrf.mxu0
        %v1658 = vadd.f32 0.0, %v1657
        %v1659 = vpop.f32.mrf.mxu0
        %1660 = vmatprep.mubr.f32.mxu0 0.0
        %1661 = vmatmul.mubr.f32.gmra.mxu0 %v1586
        %v1662 = vpop.f32.mrf.mxu0
        %v1663 = vadd.f32 0.0, %v1662
        %v1664 = vpop.f32.mrf.mxu0
        %1665 = vdwg.mxu0
        %v1667 = vsel %vm1480, %v1440, 0
        %v1670 = vsel %vm1480, %v1441, 0
        %v1673 = vsel %vm1480, %v1442, 0
        %v1676 = vsel %vm1480, %v1443, 0
        %1678 = vmatprep.subr.mxu0 0.0
        %1679 = vmatpush1.msra.mxu0 0.0
        %1680 = vmatprep.subr.mxu0 0.0
        %1681 = vmatpush1.msra.mxu0 0.0
        %1682 = vmatprep.subr.mxu0 0.0
        %1683 = vmatpush1.msra.mxu0 0.0
        %1684 = vmatprep.subr.mxu0 0.0
        %1685 = vmatpush1.msra.mxu0 0.0
        %1686 = vmatprep.subr.mxu0 0.0
        %1687 = vmatpush1.msra.mxu0 0.0
        %1688 = vmatprep.subr.mxu0 0.0
        %1689 = vmatpush1.msra.mxu0 0.0
        %1690 = vmatprep.subr.mxu0 0.0
        %1691 = vmatpush1.msra.mxu0 0.0
        %1692 = vmatprep.subr.mxu0 0.0
        %1693 = vmatpush1.msra.mxu0 0.0
        %1694 = vmatprep.subr.mxu0 0.0
        %1695 = vmatpush1.msra.mxu0 0.0
        %1696 = vmatprep.subr.mxu0 0.0
        %1697 = vmatpush1.msra.mxu0 0.0
        %1698 = vmatprep.subr.mxu0 0.0
        %1699 = vmatpush1.msra.mxu0 0.0
        %1700 = vmatprep.subr.mxu0 0.0
        %1701 = vmatpush1.msra.mxu0 0.0
        %1702 = vmatprep.subr.mxu0 0.0
        %1703 = vmatpush1.msra.mxu0 %v1495
        %1704 = vmatprep.subr.mxu0 0.0
        %1705 = vmatpush1.msra.mxu0 %v1478
        %1706 = vmatprep.subr.mxu0 0.0
        %1707 = vmatpush1.msra.mxu0 %v1477
        %1708 = vmatprep.subr.mxu0 0.0
        %1709 = vmatpush1.msra.mxu0 %v1476
        %1710 = vmatprep.subr.mxu0 0.0
        %1711 = vmatpush2.msra.mxu0 0.0
        %1712 = vmatprep.subr.mxu0 0.0
        %1713 = vmatpush2.msra.mxu0 0.0
        %1714 = vmatprep.subr.mxu0 0.0
        %1715 = vmatpush2.msra.mxu0 0.0
        %1716 = vmatprep.subr.mxu0 0.0
        %1717 = vmatpush2.msra.mxu0 0.0
        %1718 = vmatprep.subr.mxu0 0.0
        %1719 = vmatpush2.msra.mxu0 0.0
        %1720 = vmatprep.subr.mxu0 0.0
        %1721 = vmatpush2.msra.mxu0 0.0
        %1722 = vmatprep.subr.mxu0 0.0
        %1723 = vmatpush2.msra.mxu0 0.0
        %1724 = vmatprep.subr.mxu0 0.0
        %1725 = vmatpush2.msra.mxu0 0.0
        %1726 = vmatprep.subr.mxu0 0.0
        %1727 = vmatpush2.msra.mxu0 0.0
        %1728 = vmatprep.subr.mxu0 0.0
        %1729 = vmatpush2.msra.mxu0 0.0
        %1730 = vmatprep.subr.mxu0 0.0
        %1731 = vmatpush2.msra.mxu0 0.0
        %1732 = vmatprep.subr.mxu0 0.0
        %1733 = vmatpush2.msra.mxu0 0.0
        %1734 = vmatprep.subr.mxu0 0.0
        %1735 = vmatpush2.msra.mxu0 0.0
        %1736 = vmatprep.subr.mxu0 0.0
        %1737 = vmatpush2.msra.mxu0 0.0
        %1738 = vmatprep.subr.mxu0 0.0
        %1739 = vmatpush2.msra.mxu0 0.0
        %1740 = vmatprep.subr.mxu0 0.0
        %1741 = vmatpush2.msra.mxu0 0.0
        %1742 = vmatprep.mubr.f32.mxu0 0.0
        %1743 = vmatmul.mubr.f32.gmra.mxu0 %v1667
        %v1744 = vpop.f32.mrf.mxu0
        %v1745 = vadd.f32 0.0, %v1744
        %v1746 = vpop.f32.mrf.mxu0
        %1747 = vmatprep.mubr.f32.mxu0 0.0
        %1748 = vmatmul.mubr.f32.gmra.mxu0 %v1670
        %v1749 = vpop.f32.mrf.mxu0
        %v1750 = vadd.f32 0.0, %v1749
        %v1751 = vpop.f32.mrf.mxu0
        %1752 = vmatprep.mubr.f32.mxu0 0.0
        %1753 = vmatmul.mubr.f32.gmra.mxu0 %v1673
        %v1754 = vpop.f32.mrf.mxu0
        %v1755 = vadd.f32 0.0, %v1754
        %v1756 = vpop.f32.mrf.mxu0
        %1757 = vmatprep.mubr.f32.mxu0 0.0
        %1758 = vmatmul.mubr.f32.gmra.mxu0 %v1676
        %v1759 = vpop.f32.mrf.mxu0
        %v1760 = vadd.f32 0.0, %v1759
        %v1761 = vpop.f32.mrf.mxu0
        %1762 = vdwg.mxu0
        %v1764 = vsel %vm1493, %v1760, 0
        %1766 = vmatprep.subr.mxu0 0.0
        %1767 = vmatpush1.msra.mxu0 0.0
        %1768 = vmatprep.subr.mxu0 0.0
        %1769 = vmatpush1.msra.mxu0 0.0
        %1770 = vmatprep.subr.mxu0 0.0
        %1771 = vmatpush1.msra.mxu0 0.0
        %1772 = vmatprep.subr.mxu0 0.0
        %1773 = vmatpush1.msra.mxu0 0.0
        %1774 = vmatprep.subr.mxu0 0.0
        %1775 = vmatpush1.msra.mxu0 0.0
        %1776 = vmatprep.subr.mxu0 0.0
        %1777 = vmatpush1.msra.mxu0 0.0
        %1778 = vmatprep.subr.mxu0 0.0
        %1779 = vmatpush1.msra.mxu0 0.0
        %1780 = vmatprep.subr.mxu0 0.0
        %1781 = vmatpush1.msra.mxu0 0.0
        %1782 = vmatprep.subr.mxu0 0.0
        %1783 = vmatpush1.msra.mxu0 0.0
        %1784 = vmatprep.subr.mxu0 0.0
        %1785 = vmatpush1.msra.mxu0 0.0
        %1786 = vmatprep.subr.mxu0 0.0
        %1787 = vmatpush1.msra.mxu0 0.0
        %1788 = vmatprep.subr.mxu0 0.0
        %1789 = vmatpush1.msra.mxu0 0.0
        %1790 = vmatprep.subr.mxu0 0.0
        %1791 = vmatpush1.msra.mxu0 %v1764
        %1792 = vmatprep.subr.mxu0 0.0
        %1793 = vmatpush1.msra.mxu0 %v1755
        %1794 = vmatprep.subr.mxu0 0.0
        %1795 = vmatpush1.msra.mxu0 %v1750
        %1796 = vmatprep.subr.mxu0 0.0
        %1797 = vmatpush1.msra.mxu0 %v1745
        %1798 = vmatprep.subr.mxu0 0.0
        %1799 = vmatpush2.msra.mxu0 0.0
        %1800 = vmatprep.subr.mxu0 0.0
        %1801 = vmatpush2.msra.mxu0 0.0
        %1802 = vmatprep.subr.mxu0 0.0
        %1803 = vmatpush2.msra.mxu0 0.0
        %1804 = vmatprep.subr.mxu0 0.0
        %1805 = vmatpush2.msra.mxu0 0.0
        %1806 = vmatprep.subr.mxu0 0.0
        %1807 = vmatpush2.msra.mxu0 0.0
        %1808 = vmatprep.subr.mxu0 0.0
        %1809 = vmatpush2.msra.mxu0 0.0
        %1810 = vmatprep.subr.mxu0 0.0
        %1811 = vmatpush2.msra.mxu0 0.0
        %1812 = vmatprep.subr.mxu0 0.0
        %1813 = vmatpush2.msra.mxu0 0.0
        %1814 = vmatprep.subr.mxu0 0.0
        %1815 = vmatpush2.msra.mxu0 0.0
        %1816 = vmatprep.subr.mxu0 0.0
        %1817 = vmatpush2.msra.mxu0 0.0
        %1818 = vmatprep.subr.mxu0 0.0
        %1819 = vmatpush2.msra.mxu0 0.0
        %1820 = vmatprep.subr.mxu0 0.0
        %1821 = vmatpush2.msra.mxu0 0.0
        %1822 = vmatprep.subr.mxu0 0.0
        %1823 = vmatpush2.msra.mxu0 0.0
        %1824 = vmatprep.subr.mxu0 0.0
        %1825 = vmatpush2.msra.mxu0 0.0
        %1826 = vmatprep.subr.mxu0 0.0
        %1827 = vmatpush2.msra.mxu0 0.0
        %1828 = vmatprep.subr.mxu0 0.0
        %1829 = vmatpush2.msra.mxu0 0.0
        %1830 = vmatprep.mubr.f32.mxu0 0.0
        %1831 = vmatmul.mubr.f32.gmra.mxu0 %v1583
        %v1832 = vpop.f32.mrf.mxu0
        %v1833 = vadd.f32 0.0, %v1832
        %v1834 = vpop.f32.mrf.mxu0
        %1835 = vmatprep.mubr.f32.mxu0 0.0
        %1836 = vmatmul.mubr.f32.gmra.mxu0 %v1586
        %v1837 = vpop.f32.mrf.mxu0
        %v1838 = vadd.f32 0.0, %v1837
        %v1839 = vpop.f32.mrf.mxu0
        %1840 = vdwg.mxu0
        %v1842 = vsel %vm1480, %v1444, 0
        %v1845 = vsel %vm1480, %v1445, 0
        %v1848 = vsel %vm1480, %v1446, 0
        %v1851 = vsel %vm1480, %v1447, 0
        %1853 = vmatprep.subr.mxu0 0.0
        %1854 = vmatpush1.msra.mxu0 0.0
        %1855 = vmatprep.subr.mxu0 0.0
        %1856 = vmatpush1.msra.mxu0 0.0
        %1857 = vmatprep.subr.mxu0 0.0
        %1858 = vmatpush1.msra.mxu0 0.0
        %1859 = vmatprep.subr.mxu0 0.0
        %1860 = vmatpush1.msra.mxu0 0.0
        %1861 = vmatprep.subr.mxu0 0.0
        %1862 = vmatpush1.msra.mxu0 0.0
        %1863 = vmatprep.subr.mxu0 0.0
        %1864 = vmatpush1.msra.mxu0 0.0
        %1865 = vmatprep.subr.mxu0 0.0
        %1866 = vmatpush1.msra.mxu0 0.0
        %1867 = vmatprep.subr.mxu0 0.0
        %1868 = vmatpush1.msra.mxu0 0.0
        %1869 = vmatprep.subr.mxu0 0.0
        %1870 = vmatpush1.msra.mxu0 0.0
        %1871 = vmatprep.subr.mxu0 0.0
        %1872 = vmatpush1.msra.mxu0 0.0
        %1873 = vmatprep.subr.mxu0 0.0
        %1874 = vmatpush1.msra.mxu0 0.0
        %1875 = vmatprep.subr.mxu0 0.0
        %1876 = vmatpush1.msra.mxu0 0.0
        %1877 = vmatprep.subr.mxu0 0.0
        %1878 = vmatpush1.msra.mxu0 %v1495
        %1879 = vmatprep.subr.mxu0 0.0
        %1880 = vmatpush1.msra.mxu0 %v1478
        %1881 = vmatprep.subr.mxu0 0.0
        %1882 = vmatpush1.msra.mxu0 %v1477
        %1883 = vmatprep.subr.mxu0 0.0
        %1884 = vmatpush1.msra.mxu0 %v1476
        %1885 = vmatprep.subr.mxu0 0.0
        %1886 = vmatpush2.msra.mxu0 0.0
        %1887 = vmatprep.subr.mxu0 0.0
        %1888 = vmatpush2.msra.mxu0 0.0
        %1889 = vmatprep.subr.mxu0 0.0
        %1890 = vmatpush2.msra.mxu0 0.0
        %1891 = vmatprep.subr.mxu0 0.0
        %1892 = vmatpush2.msra.mxu0 0.0
        %1893 = vmatprep.subr.mxu0 0.0
        %1894 = vmatpush2.msra.mxu0 0.0
        %1895 = vmatprep.subr.mxu0 0.0
        %1896 = vmatpush2.msra.mxu0 0.0
        %1897 = vmatprep.subr.mxu0 0.0
        %1898 = vmatpush2.msra.mxu0 0.0
        %1899 = vmatprep.subr.mxu0 0.0
        %1900 = vmatpush2.msra.mxu0 0.0
        %1901 = vmatprep.subr.mxu0 0.0
        %1902 = vmatpush2.msra.mxu0 0.0
        %1903 = vmatprep.subr.mxu0 0.0
        %1904 = vmatpush2.msra.mxu0 0.0
        %1905 = vmatprep.subr.mxu0 0.0
        %1906 = vmatpush2.msra.mxu0 0.0
        %1907 = vmatprep.subr.mxu0 0.0
        %1908 = vmatpush2.msra.mxu0 0.0
        %1909 = vmatprep.subr.mxu0 0.0
        %1910 = vmatpush2.msra.mxu0 0.0
        %1911 = vmatprep.subr.mxu0 0.0
        %1912 = vmatpush2.msra.mxu0 0.0
        %1913 = vmatprep.subr.mxu0 0.0
        %1914 = vmatpush2.msra.mxu0 0.0
        %1915 = vmatprep.subr.mxu0 0.0
        %1916 = vmatpush2.msra.mxu0 0.0
        %1917 = vmatprep.mubr.f32.mxu0 0.0
        %1918 = vmatmul.mubr.f32.gmra.mxu0 %v1842
        %v1919 = vpop.f32.mrf.mxu0
        %v1920 = vadd.f32 0.0, %v1919
        %v1921 = vpop.f32.mrf.mxu0
        %1922 = vmatprep.mubr.f32.mxu0 0.0
        %1923 = vmatmul.mubr.f32.gmra.mxu0 %v1845
        %v1924 = vpop.f32.mrf.mxu0
        %v1925 = vadd.f32 0.0, %v1924
        %v1926 = vpop.f32.mrf.mxu0
        %1927 = vmatprep.mubr.f32.mxu0 0.0
        %1928 = vmatmul.mubr.f32.gmra.mxu0 %v1848
        %v1929 = vpop.f32.mrf.mxu0
        %v1930 = vadd.f32 0.0, %v1929
        %v1931 = vpop.f32.mrf.mxu0
        %1932 = vmatprep.mubr.f32.mxu0 0.0
        %1933 = vmatmul.mubr.f32.gmra.mxu0 %v1851
        %v1934 = vpop.f32.mrf.mxu0
        %v1935 = vadd.f32 0.0, %v1934
        %v1936 = vpop.f32.mrf.mxu0
        %1937 = vdwg.mxu0
        %v1939 = vsel %vm1493, %v1935, 0
        %1941 = vmatprep.subr.mxu0 0.0
        %1942 = vmatpush1.msra.mxu0 0.0
        %1943 = vmatprep.subr.mxu0 0.0
        %1944 = vmatpush1.msra.mxu0 0.0
        %1945 = vmatprep.subr.mxu0 0.0
        %1946 = vmatpush1.msra.mxu0 0.0
        %1947 = vmatprep.subr.mxu0 0.0
        %1948 = vmatpush1.msra.mxu0 0.0
        %1949 = vmatprep.subr.mxu0 0.0
        %1950 = vmatpush1.msra.mxu0 0.0
        %1951 = vmatprep.subr.mxu0 0.0
        %1952 = vmatpush1.msra.mxu0 0.0
        %1953 = vmatprep.subr.mxu0 0.0
        %1954 = vmatpush1.msra.mxu0 0.0
        %1955 = vmatprep.subr.mxu0 0.0
        %1956 = vmatpush1.msra.mxu0 0.0
        %1957 = vmatprep.subr.mxu0 0.0
        %1958 = vmatpush1.msra.mxu0 0.0
        %1959 = vmatprep.subr.mxu0 0.0
        %1960 = vmatpush1.msra.mxu0 0.0
        %1961 = vmatprep.subr.mxu0 0.0
        %1962 = vmatpush1.msra.mxu0 0.0
        %1963 = vmatprep.subr.mxu0 0.0
        %1964 = vmatpush1.msra.mxu0 0.0
        %1965 = vmatprep.subr.mxu0 0.0
        %1966 = vmatpush1.msra.mxu0 %v1939
        %1967 = vmatprep.subr.mxu0 0.0
        %1968 = vmatpush1.msra.mxu0 %v1930
        %1969 = vmatprep.subr.mxu0 0.0
        %1970 = vmatpush1.msra.mxu0 %v1925
        %1971 = vmatprep.subr.mxu0 0.0
        %1972 = vmatpush1.msra.mxu0 %v1920
        %1973 = vmatprep.subr.mxu0 0.0
        %1974 = vmatpush2.msra.mxu0 0.0
        %1975 = vmatprep.subr.mxu0 0.0
        %1976 = vmatpush2.msra.mxu0 0.0
        %1977 = vmatprep.subr.mxu0 0.0
        %1978 = vmatpush2.msra.mxu0 0.0
        %1979 = vmatprep.subr.mxu0 0.0
        %1980 = vmatpush2.msra.mxu0 0.0
        %1981 = vmatprep.subr.mxu0 0.0
        %1982 = vmatpush2.msra.mxu0 0.0
        %1983 = vmatprep.subr.mxu0 0.0
        %1984 = vmatpush2.msra.mxu0 0.0
        %1985 = vmatprep.subr.mxu0 0.0
        %1986 = vmatpush2.msra.mxu0 0.0
        %1987 = vmatprep.subr.mxu0 0.0
        %1988 = vmatpush2.msra.mxu0 0.0
        %1989 = vmatprep.subr.mxu0 0.0
        %1990 = vmatpush2.msra.mxu0 0.0
        %1991 = vmatprep.subr.mxu0 0.0
        %1992 = vmatpush2.msra.mxu0 0.0
        %1993 = vmatprep.subr.mxu0 0.0
        %1994 = vmatpush2.msra.mxu0 0.0
        %1995 = vmatprep.subr.mxu0 0.0
        %1996 = vmatpush2.msra.mxu0 0.0
        %1997 = vmatprep.subr.mxu0 0.0
        %1998 = vmatpush2.msra.mxu0 0.0
        %1999 = vmatprep.subr.mxu0 0.0
        %2000 = vmatpush2.msra.mxu0 0.0
        %2001 = vmatprep.subr.mxu0 0.0
        %2002 = vmatpush2.msra.mxu0 0.0
        %2003 = vmatprep.subr.mxu0 0.0
        %2004 = vmatpush2.msra.mxu0 0.0
        %2005 = vmatprep.mubr.f32.mxu0 0.0
        %2006 = vmatmul.mubr.f32.gmra.mxu0 %v1583
        %v2007 = vpop.f32.mrf.mxu0
        %v2008 = vadd.f32 0.0, %v2007
        %v2009 = vpop.f32.mrf.mxu0
        %2010 = vmatprep.mubr.f32.mxu0 0.0
        %2011 = vmatmul.mubr.f32.gmra.mxu0 %v1586
        %v2012 = vpop.f32.mrf.mxu0
        %v2013 = vadd.f32 0.0, %v2012
        %v2014 = vpop.f32.mrf.mxu0
        %2015 = vdwg.mxu0
        %v2017 = vsel %vm1480, %v1448, 0
        %v2020 = vsel %vm1480, %v1449, 0
        %v2023 = vsel %vm1480, %v1450, 0
        %v2026 = vsel %vm1480, %v1451, 0
        %2028 = vmatprep.subr.mxu0 0.0
        %2029 = vmatpush1.msra.mxu0 0.0
        %2030 = vmatprep.subr.mxu0 0.0
        %2031 = vmatpush1.msra.mxu0 0.0
        %2032 = vmatprep.subr.mxu0 0.0
        %2033 = vmatpush1.msra.mxu0 0.0
        %2034 = vmatprep.subr.mxu0 0.0
        %2035 = vmatpush1.msra.mxu0 0.0
        %2036 = vmatprep.subr.mxu0 0.0
        %2037 = vmatpush1.msra.mxu0 0.0
        %2038 = vmatprep.subr.mxu0 0.0
        %2039 = vmatpush1.msra.mxu0 0.0
        %2040 = vmatprep.subr.mxu0 0.0
        %2041 = vmatpush1.msra.mxu0 0.0
        %2042 = vmatprep.subr.mxu0 0.0
        %2043 = vmatpush1.msra.mxu0 0.0
        %2044 = vmatprep.subr.mxu0 0.0
        %2045 = vmatpush1.msra.mxu0 0.0
        %2046 = vmatprep.subr.mxu0 0.0
        %2047 = vmatpush1.msra.mxu0 0.0
        %2048 = vmatprep.subr.mxu0 0.0
        %2049 = vmatpush1.msra.mxu0 0.0
        %2050 = vmatprep.subr.mxu0 0.0
        %2051 = vmatpush1.msra.mxu0 0.0
        %2052 = vmatprep.subr.mxu0 0.0
        %2053 = vmatpush1.msra.mxu0 %v1495
        %2054 = vmatprep.subr.mxu0 0.0
        %2055 = vmatpush1.msra.mxu0 %v1478
        %2056 = vmatprep.subr.mxu0 0.0
        %2057 = vmatpush1.msra.mxu0 %v1477
        %2058 = vmatprep.subr.mxu0 0.0
        %2059 = vmatpush1.msra.mxu0 %v1476
        %2060 = vmatprep.subr.mxu0 0.0
        %2061 = vmatpush2.msra.mxu0 0.0
        %2062 = vmatprep.subr.mxu0 0.0
        %2063 = vmatpush2.msra.mxu0 0.0
        %2064 = vmatprep.subr.mxu0 0.0
        %2065 = vmatpush2.msra.mxu0 0.0
        %2066 = vmatprep.subr.mxu0 0.0
        %2067 = vmatpush2.msra.mxu0 0.0
        %2068 = vmatprep.subr.mxu0 0.0
        %2069 = vmatpush2.msra.mxu0 0.0
        %2070 = vmatprep.subr.mxu0 0.0
        %2071 = vmatpush2.msra.mxu0 0.0
        %2072 = vmatprep.subr.mxu0 0.0
        %2073 = vmatpush2.msra.mxu0 0.0
        %2074 = vmatprep.subr.mxu0 0.0
        %2075 = vmatpush2.msra.mxu0 0.0
        %2076 = vmatprep.subr.mxu0 0.0
        %2077 = vmatpush2.msra.mxu0 0.0
        %2078 = vmatprep.subr.mxu0 0.0
        %2079 = vmatpush2.msra.mxu0 0.0
        %2080 = vmatprep.subr.mxu0 0.0
        %2081 = vmatpush2.msra.mxu0 0.0
        %2082 = vmatprep.subr.mxu0 0.0
        %2083 = vmatpush2.msra.mxu0 0.0
        %2084 = vmatprep.subr.mxu0 0.0
        %2085 = vmatpush2.msra.mxu0 0.0
        %2086 = vmatprep.subr.mxu0 0.0
        %2087 = vmatpush2.msra.mxu0 0.0
        %2088 = vmatprep.subr.mxu0 0.0
        %2089 = vmatpush2.msra.mxu0 0.0
        %2090 = vmatprep.subr.mxu0 0.0
        %2091 = vmatpush2.msra.mxu0 0.0
        %2092 = vmatprep.mubr.f32.mxu0 0.0
        %2093 = vmatmul.mubr.f32.gmra.mxu0 %v2017
        %v2094 = vpop.f32.mrf.mxu0
        %v2095 = vadd.f32 0.0, %v2094
        %v2096 = vpop.f32.mrf.mxu0
        %2097 = vmatprep.mubr.f32.mxu0 0.0
        %2098 = vmatmul.mubr.f32.gmra.mxu0 %v2020
        %v2099 = vpop.f32.mrf.mxu0
        %v2100 = vadd.f32 0.0, %v2099
        %v2101 = vpop.f32.mrf.mxu0
        %2102 = vmatprep.mubr.f32.mxu0 0.0
        %2103 = vmatmul.mubr.f32.gmra.mxu0 %v2023
        %v2104 = vpop.f32.mrf.mxu0
        %v2105 = vadd.f32 0.0, %v2104
        %v2106 = vpop.f32.mrf.mxu0
        %2107 = vmatprep.mubr.f32.mxu0 0.0
        %2108 = vmatmul.mubr.f32.gmra.mxu0 %v2026
        %v2109 = vpop.f32.mrf.mxu0
        %v2110 = vadd.f32 0.0, %v2109
        %v2111 = vpop.f32.mrf.mxu0
        %2112 = vdwg.mxu0
        %v2114 = vsel %vm1493, %v2110, 0
        %2116 = vmatprep.subr.mxu0 0.0
        %2117 = vmatpush1.msra.mxu0 0.0
        %2118 = vmatprep.subr.mxu0 0.0
        %2119 = vmatpush1.msra.mxu0 0.0
        %2120 = vmatprep.subr.mxu0 0.0
        %2121 = vmatpush1.msra.mxu0 0.0
        %2122 = vmatprep.subr.mxu0 0.0
        %2123 = vmatpush1.msra.mxu0 0.0
        %2124 = vmatprep.subr.mxu0 0.0
        %2125 = vmatpush1.msra.mxu0 0.0
        %2126 = vmatprep.subr.mxu0 0.0
        %2127 = vmatpush1.msra.mxu0 0.0
        %2128 = vmatprep.subr.mxu0 0.0
        %2129 = vmatpush1.msra.mxu0 0.0
        %2130 = vmatprep.subr.mxu0 0.0
        %2131 = vmatpush1.msra.mxu0 0.0
        %2132 = vmatprep.subr.mxu0 0.0
        %2133 = vmatpush1.msra.mxu0 0.0
        %2134 = vmatprep.subr.mxu0 0.0
        %2135 = vmatpush1.msra.mxu0 0.0
        %2136 = vmatprep.subr.mxu0 0.0
        %2137 = vmatpush1.msra.mxu0 0.0
        %2138 = vmatprep.subr.mxu0 0.0
        %2139 = vmatpush1.msra.mxu0 0.0
        %2140 = vmatprep.subr.mxu0 0.0
        %2141 = vmatpush1.msra.mxu0 %v2114
        %2142 = vmatprep.subr.mxu0 0.0
        %2143 = vmatpush1.msra.mxu0 %v2105
        %2144 = vmatprep.subr.mxu0 0.0
        %2145 = vmatpush1.msra.mxu0 %v2100
        %2146 = vmatprep.subr.mxu0 0.0
        %2147 = vmatpush1.msra.mxu0 %v2095
        %2148 = vmatprep.subr.mxu0 0.0
        %2149 = vmatpush2.msra.mxu0 0.0
        %2150 = vmatprep.subr.mxu0 0.0
        %2151 = vmatpush2.msra.mxu0 0.0
        %2152 = vmatprep.subr.mxu0 0.0
        %2153 = vmatpush2.msra.mxu0 0.0
        %2154 = vmatprep.subr.mxu0 0.0
        %2155 = vmatpush2.msra.mxu0 0.0
        %2156 = vmatprep.subr.mxu0 0.0
        %2157 = vmatpush2.msra.mxu0 0.0
        %2158 = vmatprep.subr.mxu0 0.0
        %2159 = vmatpush2.msra.mxu0 0.0
        %2160 = vmatprep.subr.mxu0 0.0
        %2161 = vmatpush2.msra.mxu0 0.0
        %2162 = vmatprep.subr.mxu0 0.0
        %2163 = vmatpush2.msra.mxu0 0.0
        %2164 = vmatprep.subr.mxu0 0.0
        %2165 = vmatpush2.msra.mxu0 0.0
        %2166 = vmatprep.subr.mxu0 0.0
        %2167 = vmatpush2.msra.mxu0 0.0
        %2168 = vmatprep.subr.mxu0 0.0
        %2169 = vmatpush2.msra.mxu0 0.0
        %2170 = vmatprep.subr.mxu0 0.0
        %2171 = vmatpush2.msra.mxu0 0.0
        %2172 = vmatprep.subr.mxu0 0.0
        %2173 = vmatpush2.msra.mxu0 0.0
        %2174 = vmatprep.subr.mxu0 0.0
        %2175 = vmatpush2.msra.mxu0 0.0
        %2176 = vmatprep.subr.mxu0 0.0
        %2177 = vmatpush2.msra.mxu0 0.0
        %2178 = vmatprep.subr.mxu0 0.0
        %2179 = vmatpush2.msra.mxu0 0.0
        %2180 = vmatprep.mubr.f32.mxu0 0.0
        %2181 = vmatmul.mubr.f32.gmra.mxu0 %v1583
        %v2182 = vpop.f32.mrf.mxu0
        %v2183 = vadd.f32 0.0, %v2182
        %v2184 = vpop.f32.mrf.mxu0
        %2185 = vmatprep.mubr.f32.mxu0 0.0
        %2186 = vmatmul.mubr.f32.gmra.mxu0 %v1586
        %v2187 = vpop.f32.mrf.mxu0
        %v2188 = vadd.f32 0.0, %v2187
        %v2189 = vpop.f32.mrf.mxu0
        %2190 = vdwg.mxu0
        %v2191 = vld [vmem:[%s5] sm:$0x1]
        %v2192 = vld [vmem:[%s5 + $0x1] sm:$0x1]
        %v2193 = vld [vmem:[%s5 + $0x2] sm:$0x1]
        %v2194 = vld [vmem:[%s5 + $0x3] sm:$0x1]
        %v2195 = vld [vmem:[%s5 + $0x4] sm:$0x1]
        %v2196 = vld [vmem:[%s5 + $0x5] sm:$0x1]
        %v2197 = vld [vmem:[%s5 + $0x6] sm:$0x1]
        %v2198 = vld [vmem:[%s5 + $0x7] sm:$0x1]
        %v2207 = vlaneseq
        %v2208 = vshrl.u32 %v2207, 7
        %v2209 = vsub.s32 0, %v2208
        %v2210 = vrot.slane %v2191, %v2209
        %v2211 = vlaneseq
        %v2212 = vshrl.u32 %v2211, 7
        %v2213 = vsub.s32 0, %v2212
        %v2214 = vrot.slane %v2192, %v2213
        %v2215 = vlaneseq
        %v2216 = vshrl.u32 %v2215, 7
        %v2217 = vsub.s32 0, %v2216
        %v2218 = vrot.slane %v2193, %v2217
        %v2219 = vlaneseq
        %v2220 = vshrl.u32 %v2219, 7
        %v2221 = vsub.s32 0, %v2220
        %v2222 = vrot.slane %v2194, %v2221
        %v2223 = vlaneseq
        %v2224 = vshrl.u32 %v2223, 7
        %v2225 = vsub.s32 0, %v2224
        %v2226 = vrot.slane %v2195, %v2225
        %v2227 = vlaneseq
        %v2228 = vshrl.u32 %v2227, 7
        %v2229 = vsub.s32 0, %v2228
        %v2230 = vrot.slane %v2196, %v2229
        %v2231 = vlaneseq
        %v2232 = vshrl.u32 %v2231, 7
        %v2233 = vsub.s32 0, %v2232
        %v2234 = vrot.slane %v2197, %v2233
        %v2235 = vlaneseq
        %v2236 = vshrl.u32 %v2235, 7
        %v2237 = vsub.s32 0, %v2236
        %v2238 = vrot.slane %v2198, %v2237
        %v2247 = vmul.f32 %v2210, %v1658
        %v2248 = vmul.f32 %v2210, %v1663
        %v2249 = vmul.f32 %v2214, %v1658
        %v2250 = vmul.f32 %v2214, %v1663
        %v2251 = vmul.f32 %v2218, %v1658
        %v2252 = vmul.f32 %v2218, %v1663
        %v2253 = vmul.f32 %v2222, %v1658
        %v2254 = vmul.f32 %v2222, %v1663
        %v2255 = vmul.f32 %v2226, %v1658
        %v2256 = vmul.f32 %v2226, %v1663
        %v2257 = vmul.f32 %v2230, %v1658
        %v2258 = vmul.f32 %v2230, %v1663
        %v2259 = vmul.f32 %v2234, %v1658
        %v2260 = vmul.f32 %v2234, %v1663
        %v2261 = vmul.f32 %v2238, %v1658
        %v2262 = vmul.f32 %v2238, %v1663
        %v2263 = vadd.f32 %v2247, 0.0
        %v2264 = vadd.f32 %v2248, 0.0
        %v2265 = vadd.f32 %v2249, 0.0
        %v2266 = vadd.f32 %v2250, 0.0
        %v2267 = vadd.f32 %v2251, 0.0
        %v2268 = vadd.f32 %v2252, 0.0
        %v2269 = vadd.f32 %v2253, 0.0
        %v2270 = vadd.f32 %v2254, 0.0
        %v2271 = vadd.f32 %v2255, 0.0
        %v2272 = vadd.f32 %v2256, 0.0
        %v2273 = vadd.f32 %v2257, 0.0
        %v2274 = vadd.f32 %v2258, 0.0
        %v2275 = vadd.f32 %v2259, 0.0
        %v2276 = vadd.f32 %v2260, 0.0
        %v2277 = vadd.f32 %v2261, 0.0
        %v2278 = vadd.f32 %v2262, 0.0
        %s2279 = scalar_lea.vmem %s5, 8
        %v2280 = vld [vmem:[%s2279] sm:$0x1]
        %v2281 = vld [vmem:[%s2279 + $0x1] sm:$0x1]
        %v2282 = vld [vmem:[%s2279 + $0x2] sm:$0x1]
        %v2283 = vld [vmem:[%s2279 + $0x3] sm:$0x1]
        %v2284 = vld [vmem:[%s2279 + $0x4] sm:$0x1]
        %v2285 = vld [vmem:[%s2279 + $0x5] sm:$0x1]
        %v2286 = vld [vmem:[%s2279 + $0x6] sm:$0x1]
        %v2287 = vld [vmem:[%s2279 + $0x7] sm:$0x1]
        %v2296 = vlaneseq
        %v2297 = vshrl.u32 %v2296, 7
        %v2298 = vsub.s32 0, %v2297
        %v2299 = vrot.slane %v2280, %v2298
        %v2300 = vlaneseq
        %v2301 = vshrl.u32 %v2300, 7
        %v2302 = vsub.s32 0, %v2301
        %v2303 = vrot.slane %v2281, %v2302
        %v2304 = vlaneseq
        %v2305 = vshrl.u32 %v2304, 7
        %v2306 = vsub.s32 0, %v2305
        %v2307 = vrot.slane %v2282, %v2306
        %v2308 = vlaneseq
        %v2309 = vshrl.u32 %v2308, 7
        %v2310 = vsub.s32 0, %v2309
        %v2311 = vrot.slane %v2283, %v2310
        %v2312 = vlaneseq
        %v2313 = vshrl.u32 %v2312, 7
        %v2314 = vsub.s32 0, %v2313
        %v2315 = vrot.slane %v2284, %v2314
        %v2316 = vlaneseq
        %v2317 = vshrl.u32 %v2316, 7
        %v2318 = vsub.s32 0, %v2317
        %v2319 = vrot.slane %v2285, %v2318
        %v2320 = vlaneseq
        %v2321 = vshrl.u32 %v2320, 7
        %v2322 = vsub.s32 0, %v2321
        %v2323 = vrot.slane %v2286, %v2322
        %v2324 = vlaneseq
        %v2325 = vshrl.u32 %v2324, 7
        %v2326 = vsub.s32 0, %v2325
        %v2327 = vrot.slane %v2287, %v2326
        %2338 = vrot.lane.b32.xlu0 %v1658, 127
        %v2339 = vpop.permute.xlu0 %2338
        %2340 = vrot.lane.b32.xlu0 %v1663, 127
        %v2341 = vpop.permute.xlu0 %2340
        %v2344 = vmul.f32 %v2299, %v2339
        %v2345 = vmul.f32 %v2299, %v2341
        %v2346 = vmul.f32 %v2303, %v2339
        %v2347 = vmul.f32 %v2303, %v2341
        %v2348 = vmul.f32 %v2307, %v2339
        %v2349 = vmul.f32 %v2307, %v2341
        %v2350 = vmul.f32 %v2311, %v2339
        %v2351 = vmul.f32 %v2311, %v2341
        %v2352 = vmul.f32 %v2315, %v2339
        %v2353 = vmul.f32 %v2315, %v2341
        %v2354 = vmul.f32 %v2319, %v2339
        %v2355 = vmul.f32 %v2319, %v2341
        %v2356 = vmul.f32 %v2323, %v2339
        %v2357 = vmul.f32 %v2323, %v2341
        %v2358 = vmul.f32 %v2327, %v2339
        %v2359 = vmul.f32 %v2327, %v2341
        %v2360 = vadd.f32 %v2263, %v2344
        %v2361 = vadd.f32 %v2264, %v2345
        %v2362 = vadd.f32 %v2265, %v2346
        %v2363 = vadd.f32 %v2266, %v2347
        %v2364 = vadd.f32 %v2267, %v2348
        %v2365 = vadd.f32 %v2268, %v2349
        %v2366 = vadd.f32 %v2269, %v2350
        %v2367 = vadd.f32 %v2270, %v2351
        %v2368 = vadd.f32 %v2271, %v2352
        %v2369 = vadd.f32 %v2272, %v2353
        %v2370 = vadd.f32 %v2273, %v2354
        %v2371 = vadd.f32 %v2274, %v2355
        %v2372 = vadd.f32 %v2275, %v2356
        %v2373 = vadd.f32 %v2276, %v2357
        %v2374 = vadd.f32 %v2277, %v2358
        %v2375 = vadd.f32 %v2278, %v2359
        %s2376 = scalar_lea.vmem %s5, 16
        %v2377 = vld [vmem:[%s2376] sm:$0x1]
        %v2378 = vld [vmem:[%s2376 + $0x1] sm:$0x1]
        %v2379 = vld [vmem:[%s2376 + $0x2] sm:$0x1]
        %v2380 = vld [vmem:[%s2376 + $0x3] sm:$0x1]
        %v2381 = vld [vmem:[%s2376 + $0x4] sm:$0x1]
        %v2382 = vld [vmem:[%s2376 + $0x5] sm:$0x1]
        %v2383 = vld [vmem:[%s2376 + $0x6] sm:$0x1]
        %v2384 = vld [vmem:[%s2376 + $0x7] sm:$0x1]
        %v2393 = vlaneseq
        %v2394 = vshrl.u32 %v2393, 7
        %v2395 = vsub.s32 0, %v2394
        %v2396 = vrot.slane %v2377, %v2395
        %v2397 = vlaneseq
        %v2398 = vshrl.u32 %v2397, 7
        %v2399 = vsub.s32 0, %v2398
        %v2400 = vrot.slane %v2378, %v2399
        %v2401 = vlaneseq
        %v2402 = vshrl.u32 %v2401, 7
        %v2403 = vsub.s32 0, %v2402
        %v2404 = vrot.slane %v2379, %v2403
        %v2405 = vlaneseq
        %v2406 = vshrl.u32 %v2405, 7
        %v2407 = vsub.s32 0, %v2406
        %v2408 = vrot.slane %v2380, %v2407
        %v2409 = vlaneseq
        %v2410 = vshrl.u32 %v2409, 7
        %v2411 = vsub.s32 0, %v2410
        %v2412 = vrot.slane %v2381, %v2411
        %v2413 = vlaneseq
        %v2414 = vshrl.u32 %v2413, 7
        %v2415 = vsub.s32 0, %v2414
        %v2416 = vrot.slane %v2382, %v2415
        %v2417 = vlaneseq
        %v2418 = vshrl.u32 %v2417, 7
        %v2419 = vsub.s32 0, %v2418
        %v2420 = vrot.slane %v2383, %v2419
        %v2421 = vlaneseq
        %v2422 = vshrl.u32 %v2421, 7
        %v2423 = vsub.s32 0, %v2422
        %v2424 = vrot.slane %v2384, %v2423
        %2433 = vrot.lane.b32.xlu0 %v1658, 126
        %v2434 = vpop.permute.xlu0 %2433
        %2435 = vrot.lane.b32.xlu0 %v1663, 126
        %v2436 = vpop.permute.xlu0 %2435
        %v2439 = vmul.f32 %v2396, %v2434
        %v2440 = vmul.f32 %v2396, %v2436
        %v2441 = vmul.f32 %v2400, %v2434
        %v2442 = vmul.f32 %v2400, %v2436
        %v2443 = vmul.f32 %v2404, %v2434
        %v2444 = vmul.f32 %v2404, %v2436
        %v2445 = vmul.f32 %v2408, %v2434
        %v2446 = vmul.f32 %v2408, %v2436
        %v2447 = vmul.f32 %v2412, %v2434
        %v2448 = vmul.f32 %v2412, %v2436
        %v2449 = vmul.f32 %v2416, %v2434
        %v2450 = vmul.f32 %v2416, %v2436
        %v2451 = vmul.f32 %v2420, %v2434
        %v2452 = vmul.f32 %v2420, %v2436
        %v2453 = vmul.f32 %v2424, %v2434
        %v2454 = vmul.f32 %v2424, %v2436
        %v2455 = vadd.f32 %v2360, %v2439
        %v2456 = vadd.f32 %v2361, %v2440
        %v2457 = vadd.f32 %v2362, %v2441
        %v2458 = vadd.f32 %v2363, %v2442
        %v2459 = vadd.f32 %v2364, %v2443
        %v2460 = vadd.f32 %v2365, %v2444
        %v2461 = vadd.f32 %v2366, %v2445
        %v2462 = vadd.f32 %v2367, %v2446
        %v2463 = vadd.f32 %v2368, %v2447
        %v2464 = vadd.f32 %v2369, %v2448
        %v2465 = vadd.f32 %v2370, %v2449
        %v2466 = vadd.f32 %v2371, %v2450
        %v2467 = vadd.f32 %v2372, %v2451
        %v2468 = vadd.f32 %v2373, %v2452
        %v2469 = vadd.f32 %v2374, %v2453
        %v2470 = vadd.f32 %v2375, %v2454
        %s2471 = scalar_lea.vmem %s5, 24
        %v2472 = vld [vmem:[%s2471] sm:$0x1]
        %v2473 = vld [vmem:[%s2471 + $0x1] sm:$0x1]
        %v2474 = vld [vmem:[%s2471 + $0x2] sm:$0x1]
        %v2475 = vld [vmem:[%s2471 + $0x3] sm:$0x1]
        %v2476 = vld [vmem:[%s2471 + $0x4] sm:$0x1]
        %v2477 = vld [vmem:[%s2471 + $0x5] sm:$0x1]
        %v2478 = vld [vmem:[%s2471 + $0x6] sm:$0x1]
        %v2479 = vld [vmem:[%s2471 + $0x7] sm:$0x1]
        %v2488 = vlaneseq
        %v2489 = vshrl.u32 %v2488, 7
        %v2490 = vsub.s32 0, %v2489
        %v2491 = vrot.slane %v2472, %v2490
        %v2492 = vlaneseq
        %v2493 = vshrl.u32 %v2492, 7
        %v2494 = vsub.s32 0, %v2493
        %v2495 = vrot.slane %v2473, %v2494
        %v2496 = vlaneseq
        %v2497 = vshrl.u32 %v2496, 7
        %v2498 = vsub.s32 0, %v2497
        %v2499 = vrot.slane %v2474, %v2498
        %v2500 = vlaneseq
        %v2501 = vshrl.u32 %v2500, 7
        %v2502 = vsub.s32 0, %v2501
        %v2503 = vrot.slane %v2475, %v2502
        %v2504 = vlaneseq
        %v2505 = vshrl.u32 %v2504, 7
        %v2506 = vsub.s32 0, %v2505
        %v2507 = vrot.slane %v2476, %v2506
        %v2508 = vlaneseq
        %v2509 = vshrl.u32 %v2508, 7
        %v2510 = vsub.s32 0, %v2509
        %v2511 = vrot.slane %v2477, %v2510
        %v2512 = vlaneseq
        %v2513 = vshrl.u32 %v2512, 7
        %v2514 = vsub.s32 0, %v2513
        %v2515 = vrot.slane %v2478, %v2514
        %v2516 = vlaneseq
        %v2517 = vshrl.u32 %v2516, 7
        %v2518 = vsub.s32 0, %v2517
        %v2519 = vrot.slane %v2479, %v2518
        %v2528 = vmul.f32 %v2491, %v1658
        %v2529 = vmul.f32 %v2491, %v1663
        %v2530 = vmul.f32 %v2495, %v1658
        %v2531 = vmul.f32 %v2495, %v1663
        %v2532 = vmul.f32 %v2499, %v1658
        %v2533 = vmul.f32 %v2499, %v1663
        %v2534 = vmul.f32 %v2503, %v1658
        %v2535 = vmul.f32 %v2503, %v1663
        %v2536 = vmul.f32 %v2507, %v1658
        %v2537 = vmul.f32 %v2507, %v1663
        %v2538 = vmul.f32 %v2511, %v1658
        %v2539 = vmul.f32 %v2511, %v1663
        %v2540 = vmul.f32 %v2515, %v1658
        %v2541 = vmul.f32 %v2515, %v1663
        %v2542 = vmul.f32 %v2519, %v1658
        %v2543 = vmul.f32 %v2519, %v1663
        %v2560 = vrot.slane %v2528, 1
        %v2561 = vrot.slane %v2529, 1
        %v2562 = vsel %vm659, %v2560, %v2561
        %v2563 = vrot.slane %v2530, 1
        %v2564 = vrot.slane %v2531, 1
        %v2565 = vsel %vm659, %v2563, %v2564
        %v2566 = vrot.slane %v2532, 1
        %v2567 = vrot.slane %v2533, 1
        %v2568 = vsel %vm659, %v2566, %v2567
        %v2569 = vrot.slane %v2534, 1
        %v2570 = vrot.slane %v2535, 1
        %v2571 = vsel %vm659, %v2569, %v2570
        %v2572 = vrot.slane %v2536, 1
        %v2573 = vrot.slane %v2537, 1
        %v2574 = vsel %vm659, %v2572, %v2573
        %v2575 = vrot.slane %v2538, 1
        %v2576 = vrot.slane %v2539, 1
        %v2577 = vsel %vm659, %v2575, %v2576
        %v2578 = vrot.slane %v2540, 1
        %v2579 = vrot.slane %v2541, 1
        %v2580 = vsel %vm659, %v2578, %v2579
        %v2581 = vrot.slane %v2542, 1
        %v2582 = vrot.slane %v2543, 1
        %v2583 = vsel %vm659, %v2581, %v2582
        %v2600 = vadd.f32 %v2455, %v2562
        %v2601 = vadd.f32 %v2456, %v2561
        %v2602 = vadd.f32 %v2457, %v2565
        %v2603 = vadd.f32 %v2458, %v2564
        %v2604 = vadd.f32 %v2459, %v2568
        %v2605 = vadd.f32 %v2460, %v2567
        %v2606 = vadd.f32 %v2461, %v2571
        %v2607 = vadd.f32 %v2462, %v2570
        %v2608 = vadd.f32 %v2463, %v2574
        %v2609 = vadd.f32 %v2464, %v2573
        %v2610 = vadd.f32 %v2465, %v2577
        %v2611 = vadd.f32 %v2466, %v2576
        %v2612 = vadd.f32 %v2467, %v2580
        %v2613 = vadd.f32 %v2468, %v2579
        %v2614 = vadd.f32 %v2469, %v2583
        %v2615 = vadd.f32 %v2470, %v2582
        %s2616 = scalar_lea.vmem %s5, 32
        %v2617 = vld [vmem:[%s2616] sm:$0x1]
        %v2618 = vld [vmem:[%s2616 + $0x1] sm:$0x1]
        %v2619 = vld [vmem:[%s2616 + $0x2] sm:$0x1]
        %v2620 = vld [vmem:[%s2616 + $0x3] sm:$0x1]
        %v2621 = vld [vmem:[%s2616 + $0x4] sm:$0x1]
        %v2622 = vld [vmem:[%s2616 + $0x5] sm:$0x1]
        %v2623 = vld [vmem:[%s2616 + $0x6] sm:$0x1]
        %v2624 = vld [vmem:[%s2616 + $0x7] sm:$0x1]
        %v2633 = vlaneseq
        %v2634 = vshrl.u32 %v2633, 7
        %v2635 = vsub.s32 0, %v2634
        %v2636 = vrot.slane %v2617, %v2635
        %v2637 = vlaneseq
        %v2638 = vshrl.u32 %v2637, 7
        %v2639 = vsub.s32 0, %v2638
        %v2640 = vrot.slane %v2618, %v2639
        %v2641 = vlaneseq
        %v2642 = vshrl.u32 %v2641, 7
        %v2643 = vsub.s32 0, %v2642
        %v2644 = vrot.slane %v2619, %v2643
        %v2645 = vlaneseq
        %v2646 = vshrl.u32 %v2645, 7
        %v2647 = vsub.s32 0, %v2646
        %v2648 = vrot.slane %v2620, %v2647
        %v2649 = vlaneseq
        %v2650 = vshrl.u32 %v2649, 7
        %v2651 = vsub.s32 0, %v2650
        %v2652 = vrot.slane %v2621, %v2651
        %v2653 = vlaneseq
        %v2654 = vshrl.u32 %v2653, 7
        %v2655 = vsub.s32 0, %v2654
        %v2656 = vrot.slane %v2622, %v2655
        %v2657 = vlaneseq
        %v2658 = vshrl.u32 %v2657, 7
        %v2659 = vsub.s32 0, %v2658
        %v2660 = vrot.slane %v2623, %v2659
        %v2661 = vlaneseq
        %v2662 = vshrl.u32 %v2661, 7
        %v2663 = vsub.s32 0, %v2662
        %v2664 = vrot.slane %v2624, %v2663
        %v2673 = vrot.slane %v1658, 1
        %v2674 = vrot.slane %v1663, 1
        %v2675 = vsel %vm659, %v2673, %v2674
        %2676 = vrot.lane.b32.xlu0 %v2675, 127
        %v2677 = vpop.permute.xlu0 %2676
        %2678 = vrot.lane.b32.xlu0 %v2674, 127
        %v2679 = vpop.permute.xlu0 %2678
        %v2682 = vmul.f32 %v2636, %v2677
        %v2683 = vmul.f32 %v2636, %v2679
        %v2684 = vmul.f32 %v2640, %v2677
        %v2685 = vmul.f32 %v2640, %v2679
        %v2686 = vmul.f32 %v2644, %v2677
        %v2687 = vmul.f32 %v2644, %v2679
        %v2688 = vmul.f32 %v2648, %v2677
        %v2689 = vmul.f32 %v2648, %v2679
        %v2690 = vmul.f32 %v2652, %v2677
        %v2691 = vmul.f32 %v2652, %v2679
        %v2692 = vmul.f32 %v2656, %v2677
        %v2693 = vmul.f32 %v2656, %v2679
        %v2694 = vmul.f32 %v2660, %v2677
        %v2695 = vmul.f32 %v2660, %v2679
        %v2696 = vmul.f32 %v2664, %v2677
        %v2697 = vmul.f32 %v2664, %v2679
        %v2698 = vadd.f32 %v2600, %v2682
        %v2699 = vadd.f32 %v2601, %v2683
        %v2700 = vadd.f32 %v2602, %v2684
        %v2701 = vadd.f32 %v2603, %v2685
        %v2702 = vadd.f32 %v2604, %v2686
        %v2703 = vadd.f32 %v2605, %v2687
        %v2704 = vadd.f32 %v2606, %v2688
        %v2705 = vadd.f32 %v2607, %v2689
        %v2706 = vadd.f32 %v2608, %v2690
        %v2707 = vadd.f32 %v2609, %v2691
        %v2708 = vadd.f32 %v2610, %v2692
        %v2709 = vadd.f32 %v2611, %v2693
        %v2710 = vadd.f32 %v2612, %v2694
        %v2711 = vadd.f32 %v2613, %v2695
        %v2712 = vadd.f32 %v2614, %v2696
        %v2713 = vadd.f32 %v2615, %v2697
        %s2714 = scalar_lea.vmem %s5, 40
        %v2715 = vld [vmem:[%s2714] sm:$0x1]
        %v2716 = vld [vmem:[%s2714 + $0x1] sm:$0x1]
        %v2717 = vld [vmem:[%s2714 + $0x2] sm:$0x1]
        %v2718 = vld [vmem:[%s2714 + $0x3] sm:$0x1]
        %v2719 = vld [vmem:[%s2714 + $0x4] sm:$0x1]
        %v2720 = vld [vmem:[%s2714 + $0x5] sm:$0x1]
        %v2721 = vld [vmem:[%s2714 + $0x6] sm:$0x1]
        %v2722 = vld [vmem:[%s2714 + $0x7] sm:$0x1]
        %v2731 = vlaneseq
        %v2732 = vshrl.u32 %v2731, 7
        %v2733 = vsub.s32 0, %v2732
        %v2734 = vrot.slane %v2715, %v2733
        %v2735 = vlaneseq
        %v2736 = vshrl.u32 %v2735, 7
        %v2737 = vsub.s32 0, %v2736
        %v2738 = vrot.slane %v2716, %v2737
        %v2739 = vlaneseq
        %v2740 = vshrl.u32 %v2739, 7
        %v2741 = vsub.s32 0, %v2740
        %v2742 = vrot.slane %v2717, %v2741
        %v2743 = vlaneseq
        %v2744 = vshrl.u32 %v2743, 7
        %v2745 = vsub.s32 0, %v2744
        %v2746 = vrot.slane %v2718, %v2745
        %v2747 = vlaneseq
        %v2748 = vshrl.u32 %v2747, 7
        %v2749 = vsub.s32 0, %v2748
        %v2750 = vrot.slane %v2719, %v2749
        %v2751 = vlaneseq
        %v2752 = vshrl.u32 %v2751, 7
        %v2753 = vsub.s32 0, %v2752
        %v2754 = vrot.slane %v2720, %v2753
        %v2755 = vlaneseq
        %v2756 = vshrl.u32 %v2755, 7
        %v2757 = vsub.s32 0, %v2756
        %v2758 = vrot.slane %v2721, %v2757
        %v2759 = vlaneseq
        %v2760 = vshrl.u32 %v2759, 7
        %v2761 = vsub.s32 0, %v2760
        %v2762 = vrot.slane %v2722, %v2761
        %2771 = vrot.lane.b32.xlu0 %v2675, 126
        %v2772 = vpop.permute.xlu0 %2771
        %2773 = vrot.lane.b32.xlu0 %v2674, 126
        %v2774 = vpop.permute.xlu0 %2773
        %v2777 = vmul.f32 %v2734, %v2772
        %v2778 = vmul.f32 %v2734, %v2774
        %v2779 = vmul.f32 %v2738, %v2772
        %v2780 = vmul.f32 %v2738, %v2774
        %v2781 = vmul.f32 %v2742, %v2772
        %v2782 = vmul.f32 %v2742, %v2774
        %v2783 = vmul.f32 %v2746, %v2772
        %v2784 = vmul.f32 %v2746, %v2774
        %v2785 = vmul.f32 %v2750, %v2772
        %v2786 = vmul.f32 %v2750, %v2774
        %v2787 = vmul.f32 %v2754, %v2772
        %v2788 = vmul.f32 %v2754, %v2774
        %v2789 = vmul.f32 %v2758, %v2772
        %v2790 = vmul.f32 %v2758, %v2774
        %v2791 = vmul.f32 %v2762, %v2772
        %v2792 = vmul.f32 %v2762, %v2774
        %v2793 = vadd.f32 %v2698, %v2777
        %v2794 = vadd.f32 %v2699, %v2778
        %v2795 = vadd.f32 %v2700, %v2779
        %v2796 = vadd.f32 %v2701, %v2780
        %v2797 = vadd.f32 %v2702, %v2781
        %v2798 = vadd.f32 %v2703, %v2782
        %v2799 = vadd.f32 %v2704, %v2783
        %v2800 = vadd.f32 %v2705, %v2784
        %v2801 = vadd.f32 %v2706, %v2785
        %v2802 = vadd.f32 %v2707, %v2786
        %v2803 = vadd.f32 %v2708, %v2787
        %v2804 = vadd.f32 %v2709, %v2788
        %v2805 = vadd.f32 %v2710, %v2789
        %v2806 = vadd.f32 %v2711, %v2790
        %v2807 = vadd.f32 %v2712, %v2791
        %v2808 = vadd.f32 %v2713, %v2792
        %s2809 = scalar_lea.vmem %s5, 48
        %v2810 = vld [vmem:[%s2809] sm:$0x1]
        %v2811 = vld [vmem:[%s2809 + $0x1] sm:$0x1]
        %v2812 = vld [vmem:[%s2809 + $0x2] sm:$0x1]
        %v2813 = vld [vmem:[%s2809 + $0x3] sm:$0x1]
        %v2814 = vld [vmem:[%s2809 + $0x4] sm:$0x1]
        %v2815 = vld [vmem:[%s2809 + $0x5] sm:$0x1]
        %v2816 = vld [vmem:[%s2809 + $0x6] sm:$0x1]
        %v2817 = vld [vmem:[%s2809 + $0x7] sm:$0x1]
        %v2826 = vlaneseq
        %v2827 = vshrl.u32 %v2826, 7
        %v2828 = vsub.s32 0, %v2827
        %v2829 = vrot.slane %v2810, %v2828
        %v2830 = vlaneseq
        %v2831 = vshrl.u32 %v2830, 7
        %v2832 = vsub.s32 0, %v2831
        %v2833 = vrot.slane %v2811, %v2832
        %v2834 = vlaneseq
        %v2835 = vshrl.u32 %v2834, 7
        %v2836 = vsub.s32 0, %v2835
        %v2837 = vrot.slane %v2812, %v2836
        %v2838 = vlaneseq
        %v2839 = vshrl.u32 %v2838, 7
        %v2840 = vsub.s32 0, %v2839
        %v2841 = vrot.slane %v2813, %v2840
        %v2842 = vlaneseq
        %v2843 = vshrl.u32 %v2842, 7
        %v2844 = vsub.s32 0, %v2843
        %v2845 = vrot.slane %v2814, %v2844
        %v2846 = vlaneseq
        %v2847 = vshrl.u32 %v2846, 7
        %v2848 = vsub.s32 0, %v2847
        %v2849 = vrot.slane %v2815, %v2848
        %v2850 = vlaneseq
        %v2851 = vshrl.u32 %v2850, 7
        %v2852 = vsub.s32 0, %v2851
        %v2853 = vrot.slane %v2816, %v2852
        %v2854 = vlaneseq
        %v2855 = vshrl.u32 %v2854, 7
        %v2856 = vsub.s32 0, %v2855
        %v2857 = vrot.slane %v2817, %v2856
        %v2866 = vmul.f32 %v2829, %v1658
        %v2867 = vmul.f32 %v2829, %v1663
        %v2868 = vmul.f32 %v2833, %v1658
        %v2869 = vmul.f32 %v2833, %v1663
        %v2870 = vmul.f32 %v2837, %v1658
        %v2871 = vmul.f32 %v2837, %v1663
        %v2872 = vmul.f32 %v2841, %v1658
        %v2873 = vmul.f32 %v2841, %v1663
        %v2874 = vmul.f32 %v2845, %v1658
        %v2875 = vmul.f32 %v2845, %v1663
        %v2876 = vmul.f32 %v2849, %v1658
        %v2877 = vmul.f32 %v2849, %v1663
        %v2878 = vmul.f32 %v2853, %v1658
        %v2879 = vmul.f32 %v2853, %v1663
        %v2880 = vmul.f32 %v2857, %v1658
        %v2881 = vmul.f32 %v2857, %v1663
        %v2898 = vrot.slane %v2866, 2
        %v2899 = vrot.slane %v2867, 2
        %v2900 = vsel %vm934, %v2898, %v2899
        %v2901 = vrot.slane %v2868, 2
        %v2902 = vrot.slane %v2869, 2
        %v2903 = vsel %vm934, %v2901, %v2902
        %v2904 = vrot.slane %v2870, 2
        %v2905 = vrot.slane %v2871, 2
        %v2906 = vsel %vm934, %v2904, %v2905
        %v2907 = vrot.slane %v2872, 2
        %v2908 = vrot.slane %v2873, 2
        %v2909 = vsel %vm934, %v2907, %v2908
        %v2910 = vrot.slane %v2874, 2
        %v2911 = vrot.slane %v2875, 2
        %v2912 = vsel %vm934, %v2910, %v2911
        %v2913 = vrot.slane %v2876, 2
        %v2914 = vrot.slane %v2877, 2
        %v2915 = vsel %vm934, %v2913, %v2914
        %v2916 = vrot.slane %v2878, 2
        %v2917 = vrot.slane %v2879, 2
        %v2918 = vsel %vm934, %v2916, %v2917
        %v2919 = vrot.slane %v2880, 2
        %v2920 = vrot.slane %v2881, 2
        %v2921 = vsel %vm934, %v2919, %v2920
        %v2938 = vadd.f32 %v2793, %v2900
        %v2939 = vadd.f32 %v2794, %v2899
        %v2940 = vadd.f32 %v2795, %v2903
        %v2941 = vadd.f32 %v2796, %v2902
        %v2942 = vadd.f32 %v2797, %v2906
        %v2943 = vadd.f32 %v2798, %v2905
        %v2944 = vadd.f32 %v2799, %v2909
        %v2945 = vadd.f32 %v2800, %v2908
        %v2946 = vadd.f32 %v2801, %v2912
        %v2947 = vadd.f32 %v2802, %v2911
        %v2948 = vadd.f32 %v2803, %v2915
        %v2949 = vadd.f32 %v2804, %v2914
        %v2950 = vadd.f32 %v2805, %v2918
        %v2951 = vadd.f32 %v2806, %v2917
        %v2952 = vadd.f32 %v2807, %v2921
        %v2953 = vadd.f32 %v2808, %v2920
        %s2954 = scalar_lea.vmem %s5, 56
        %v2955 = vld [vmem:[%s2954] sm:$0x1]
        %v2956 = vld [vmem:[%s2954 + $0x1] sm:$0x1]
        %v2957 = vld [vmem:[%s2954 + $0x2] sm:$0x1]
        %v2958 = vld [vmem:[%s2954 + $0x3] sm:$0x1]
        %v2959 = vld [vmem:[%s2954 + $0x4] sm:$0x1]
        %v2960 = vld [vmem:[%s2954 + $0x5] sm:$0x1]
        %v2961 = vld [vmem:[%s2954 + $0x6] sm:$0x1]
        %v2962 = vld [vmem:[%s2954 + $0x7] sm:$0x1]
        %v2971 = vlaneseq
        %v2972 = vshrl.u32 %v2971, 7
        %v2973 = vsub.s32 0, %v2972
        %v2974 = vrot.slane %v2955, %v2973
        %v2975 = vlaneseq
        %v2976 = vshrl.u32 %v2975, 7
        %v2977 = vsub.s32 0, %v2976
        %v2978 = vrot.slane %v2956, %v2977
        %v2979 = vlaneseq
        %v2980 = vshrl.u32 %v2979, 7
        %v2981 = vsub.s32 0, %v2980
        %v2982 = vrot.slane %v2957, %v2981
        %v2983 = vlaneseq
        %v2984 = vshrl.u32 %v2983, 7
        %v2985 = vsub.s32 0, %v2984
        %v2986 = vrot.slane %v2958, %v2985
        %v2987 = vlaneseq
        %v2988 = vshrl.u32 %v2987, 7
        %v2989 = vsub.s32 0, %v2988
        %v2990 = vrot.slane %v2959, %v2989
        %v2991 = vlaneseq
        %v2992 = vshrl.u32 %v2991, 7
        %v2993 = vsub.s32 0, %v2992
        %v2994 = vrot.slane %v2960, %v2993
        %v2995 = vlaneseq
        %v2996 = vshrl.u32 %v2995, 7
        %v2997 = vsub.s32 0, %v2996
        %v2998 = vrot.slane %v2961, %v2997
        %v2999 = vlaneseq
        %v3000 = vshrl.u32 %v2999, 7
        %v3001 = vsub.s32 0, %v3000
        %v3002 = vrot.slane %v2962, %v3001
        %v3011 = vrot.slane %v1658, 2
        %v3012 = vrot.slane %v1663, 2
        %v3013 = vsel %vm934, %v3011, %v3012
        %3014 = vrot.lane.b32.xlu0 %v3013, 127
        %v3015 = vpop.permute.xlu0 %3014
        %3016 = vrot.lane.b32.xlu0 %v3012, 127
        %v3017 = vpop.permute.xlu0 %3016
        %v3020 = vmul.f32 %v2974, %v3015
        %v3021 = vmul.f32 %v2974, %v3017
        %v3022 = vmul.f32 %v2978, %v3015
        %v3023 = vmul.f32 %v2978, %v3017
        %v3024 = vmul.f32 %v2982, %v3015
        %v3025 = vmul.f32 %v2982, %v3017
        %v3026 = vmul.f32 %v2986, %v3015
        %v3027 = vmul.f32 %v2986, %v3017
        %v3028 = vmul.f32 %v2990, %v3015
        %v3029 = vmul.f32 %v2990, %v3017
        %v3030 = vmul.f32 %v2994, %v3015
        %v3031 = vmul.f32 %v2994, %v3017
        %v3032 = vmul.f32 %v2998, %v3015
        %v3033 = vmul.f32 %v2998, %v3017
        %v3034 = vmul.f32 %v3002, %v3015
        %v3035 = vmul.f32 %v3002, %v3017
        %v3036 = vadd.f32 %v2938, %v3020
        %v3037 = vadd.f32 %v2939, %v3021
        %v3038 = vadd.f32 %v2940, %v3022
        %v3039 = vadd.f32 %v2941, %v3023
        %v3040 = vadd.f32 %v2942, %v3024
        %v3041 = vadd.f32 %v2943, %v3025
        %v3042 = vadd.f32 %v2944, %v3026
        %v3043 = vadd.f32 %v2945, %v3027
        %v3044 = vadd.f32 %v2946, %v3028
        %v3045 = vadd.f32 %v2947, %v3029
        %v3046 = vadd.f32 %v2948, %v3030
        %v3047 = vadd.f32 %v2949, %v3031
        %v3048 = vadd.f32 %v2950, %v3032
        %v3049 = vadd.f32 %v2951, %v3033
        %v3050 = vadd.f32 %v2952, %v3034
        %v3051 = vadd.f32 %v2953, %v3035
        %s3052 = scalar_lea.vmem %s5, 64
        %v3053 = vld [vmem:[%s3052] sm:$0x1]
        %v3054 = vld [vmem:[%s3052 + $0x1] sm:$0x1]
        %v3055 = vld [vmem:[%s3052 + $0x2] sm:$0x1]
        %v3056 = vld [vmem:[%s3052 + $0x3] sm:$0x1]
        %v3057 = vld [vmem:[%s3052 + $0x4] sm:$0x1]
        %v3058 = vld [vmem:[%s3052 + $0x5] sm:$0x1]
        %v3059 = vld [vmem:[%s3052 + $0x6] sm:$0x1]
        %v3060 = vld [vmem:[%s3052 + $0x7] sm:$0x1]
        %v3069 = vlaneseq
        %v3070 = vshrl.u32 %v3069, 7
        %v3071 = vsub.s32 0, %v3070
        %v3072 = vrot.slane %v3053, %v3071
        %v3073 = vlaneseq
        %v3074 = vshrl.u32 %v3073, 7
        %v3075 = vsub.s32 0, %v3074
        %v3076 = vrot.slane %v3054, %v3075
        %v3077 = vlaneseq
        %v3078 = vshrl.u32 %v3077, 7
        %v3079 = vsub.s32 0, %v3078
        %v3080 = vrot.slane %v3055, %v3079
        %v3081 = vlaneseq
        %v3082 = vshrl.u32 %v3081, 7
        %v3083 = vsub.s32 0, %v3082
        %v3084 = vrot.slane %v3056, %v3083
        %v3085 = vlaneseq
        %v3086 = vshrl.u32 %v3085, 7
        %v3087 = vsub.s32 0, %v3086
        %v3088 = vrot.slane %v3057, %v3087
        %v3089 = vlaneseq
        %v3090 = vshrl.u32 %v3089, 7
        %v3091 = vsub.s32 0, %v3090
        %v3092 = vrot.slane %v3058, %v3091
        %v3093 = vlaneseq
        %v3094 = vshrl.u32 %v3093, 7
        %v3095 = vsub.s32 0, %v3094
        %v3096 = vrot.slane %v3059, %v3095
        %v3097 = vlaneseq
        %v3098 = vshrl.u32 %v3097, 7
        %v3099 = vsub.s32 0, %v3098
        %v3100 = vrot.slane %v3060, %v3099
        %3109 = vrot.lane.b32.xlu0 %v3013, 126
        %v3110 = vpop.permute.xlu0 %3109
        %3111 = vrot.lane.b32.xlu0 %v3012, 126
        %v3112 = vpop.permute.xlu0 %3111
        %v3115 = vmul.f32 %v3072, %v3110
        %v3116 = vmul.f32 %v3072, %v3112
        %v3117 = vmul.f32 %v3076, %v3110
        %v3118 = vmul.f32 %v3076, %v3112
        %v3119 = vmul.f32 %v3080, %v3110
        %v3120 = vmul.f32 %v3080, %v3112
        %v3121 = vmul.f32 %v3084, %v3110
        %v3122 = vmul.f32 %v3084, %v3112
        %v3123 = vmul.f32 %v3088, %v3110
        %v3124 = vmul.f32 %v3088, %v3112
        %v3125 = vmul.f32 %v3092, %v3110
        %v3126 = vmul.f32 %v3092, %v3112
        %v3127 = vmul.f32 %v3096, %v3110
        %v3128 = vmul.f32 %v3096, %v3112
        %v3129 = vmul.f32 %v3100, %v3110
        %v3130 = vmul.f32 %v3100, %v3112
        %v3131 = vadd.f32 %v3036, %v3115
        %v3132 = vadd.f32 %v3037, %v3116
        %v3133 = vadd.f32 %v3038, %v3117
        %v3134 = vadd.f32 %v3039, %v3118
        %v3135 = vadd.f32 %v3040, %v3119
        %v3136 = vadd.f32 %v3041, %v3120
        %v3137 = vadd.f32 %v3042, %v3121
        %v3138 = vadd.f32 %v3043, %v3122
        %v3139 = vadd.f32 %v3044, %v3123
        %v3140 = vadd.f32 %v3045, %v3124
        %v3141 = vadd.f32 %v3046, %v3125
        %v3142 = vadd.f32 %v3047, %v3126
        %v3143 = vadd.f32 %v3048, %v3127
        %v3144 = vadd.f32 %v3049, %v3128
        %v3145 = vadd.f32 %v3050, %v3129
        %v3146 = vadd.f32 %v3051, %v3130
        %s3147 = scalar_lea.vmem %s5, 72
        %v3148 = vld [vmem:[%s3147] sm:$0x1]
        %v3149 = vld [vmem:[%s3147 + $0x1] sm:$0x1]
        %v3150 = vld [vmem:[%s3147 + $0x2] sm:$0x1]
        %v3151 = vld [vmem:[%s3147 + $0x3] sm:$0x1]
        %v3152 = vld [vmem:[%s3147 + $0x4] sm:$0x1]
        %v3153 = vld [vmem:[%s3147 + $0x5] sm:$0x1]
        %v3154 = vld [vmem:[%s3147 + $0x6] sm:$0x1]
        %v3155 = vld [vmem:[%s3147 + $0x7] sm:$0x1]
        %v3164 = vlaneseq
        %v3165 = vshrl.u32 %v3164, 7
        %v3166 = vsub.s32 0, %v3165
        %v3167 = vrot.slane %v3148, %v3166
        %v3168 = vlaneseq
        %v3169 = vshrl.u32 %v3168, 7
        %v3170 = vsub.s32 0, %v3169
        %v3171 = vrot.slane %v3149, %v3170
        %v3172 = vlaneseq
        %v3173 = vshrl.u32 %v3172, 7
        %v3174 = vsub.s32 0, %v3173
        %v3175 = vrot.slane %v3150, %v3174
        %v3176 = vlaneseq
        %v3177 = vshrl.u32 %v3176, 7
        %v3178 = vsub.s32 0, %v3177
        %v3179 = vrot.slane %v3151, %v3178
        %v3180 = vlaneseq
        %v3181 = vshrl.u32 %v3180, 7
        %v3182 = vsub.s32 0, %v3181
        %v3183 = vrot.slane %v3152, %v3182
        %v3184 = vlaneseq
        %v3185 = vshrl.u32 %v3184, 7
        %v3186 = vsub.s32 0, %v3185
        %v3187 = vrot.slane %v3153, %v3186
        %v3188 = vlaneseq
        %v3189 = vshrl.u32 %v3188, 7
        %v3190 = vsub.s32 0, %v3189
        %v3191 = vrot.slane %v3154, %v3190
        %v3192 = vlaneseq
        %v3193 = vshrl.u32 %v3192, 7
        %v3194 = vsub.s32 0, %v3193
        %v3195 = vrot.slane %v3155, %v3194
        %v3204 = vmul.f32 %v3167, %v1833
        %v3205 = vmul.f32 %v3167, %v1838
        %v3206 = vmul.f32 %v3171, %v1833
        %v3207 = vmul.f32 %v3171, %v1838
        %v3208 = vmul.f32 %v3175, %v1833
        %v3209 = vmul.f32 %v3175, %v1838
        %v3210 = vmul.f32 %v3179, %v1833
        %v3211 = vmul.f32 %v3179, %v1838
        %v3212 = vmul.f32 %v3183, %v1833
        %v3213 = vmul.f32 %v3183, %v1838
        %v3214 = vmul.f32 %v3187, %v1833
        %v3215 = vmul.f32 %v3187, %v1838
        %v3216 = vmul.f32 %v3191, %v1833
        %v3217 = vmul.f32 %v3191, %v1838
        %v3218 = vmul.f32 %v3195, %v1833
        %v3219 = vmul.f32 %v3195, %v1838
        %v3220 = vadd.f32 %v3131, %v3204
        %v3221 = vadd.f32 %v3132, %v3205
        %v3222 = vadd.f32 %v3133, %v3206
        %v3223 = vadd.f32 %v3134, %v3207
        %v3224 = vadd.f32 %v3135, %v3208
        %v3225 = vadd.f32 %v3136, %v3209
        %v3226 = vadd.f32 %v3137, %v3210
        %v3227 = vadd.f32 %v3138, %v3211
        %v3228 = vadd.f32 %v3139, %v3212
        %v3229 = vadd.f32 %v3140, %v3213
        %v3230 = vadd.f32 %v3141, %v3214
        %v3231 = vadd.f32 %v3142, %v3215
        %v3232 = vadd.f32 %v3143, %v3216
        %v3233 = vadd.f32 %v3144, %v3217
        %v3234 = vadd.f32 %v3145, %v3218
        %v3235 = vadd.f32 %v3146, %v3219
        %s3236 = scalar_lea.vmem %s5, 80
        %v3237 = vld [vmem:[%s3236] sm:$0x1]
        %v3238 = vld [vmem:[%s3236 + $0x1] sm:$0x1]
        %v3239 = vld [vmem:[%s3236 + $0x2] sm:$0x1]
        %v3240 = vld [vmem:[%s3236 + $0x3] sm:$0x1]
        %v3241 = vld [vmem:[%s3236 + $0x4] sm:$0x1]
        %v3242 = vld [vmem:[%s3236 + $0x5] sm:$0x1]
        %v3243 = vld [vmem:[%s3236 + $0x6] sm:$0x1]
        %v3244 = vld [vmem:[%s3236 + $0x7] sm:$0x1]
        %v3253 = vlaneseq
        %v3254 = vshrl.u32 %v3253, 7
        %v3255 = vsub.s32 0, %v3254
        %v3256 = vrot.slane %v3237, %v3255
        %v3257 = vlaneseq
        %v3258 = vshrl.u32 %v3257, 7
        %v3259 = vsub.s32 0, %v3258
        %v3260 = vrot.slane %v3238, %v3259
        %v3261 = vlaneseq
        %v3262 = vshrl.u32 %v3261, 7
        %v3263 = vsub.s32 0, %v3262
        %v3264 = vrot.slane %v3239, %v3263
        %v3265 = vlaneseq
        %v3266 = vshrl.u32 %v3265, 7
        %v3267 = vsub.s32 0, %v3266
        %v3268 = vrot.slane %v3240, %v3267
        %v3269 = vlaneseq
        %v3270 = vshrl.u32 %v3269, 7
        %v3271 = vsub.s32 0, %v3270
        %v3272 = vrot.slane %v3241, %v3271
        %v3273 = vlaneseq
        %v3274 = vshrl.u32 %v3273, 7
        %v3275 = vsub.s32 0, %v3274
        %v3276 = vrot.slane %v3242, %v3275
        %v3277 = vlaneseq
        %v3278 = vshrl.u32 %v3277, 7
        %v3279 = vsub.s32 0, %v3278
        %v3280 = vrot.slane %v3243, %v3279
        %v3281 = vlaneseq
        %v3282 = vshrl.u32 %v3281, 7
        %v3283 = vsub.s32 0, %v3282
        %v3284 = vrot.slane %v3244, %v3283
        %3295 = vrot.lane.b32.xlu0 %v1833, 127
        %v3296 = vpop.permute.xlu0 %3295
        %3297 = vrot.lane.b32.xlu0 %v1838, 127
        %v3298 = vpop.permute.xlu0 %3297
        %v3301 = vmul.f32 %v3256, %v3296
        %v3302 = vmul.f32 %v3256, %v3298
        %v3303 = vmul.f32 %v3260, %v3296
        %v3304 = vmul.f32 %v3260, %v3298
        %v3305 = vmul.f32 %v3264, %v3296
        %v3306 = vmul.f32 %v3264, %v3298
        %v3307 = vmul.f32 %v3268, %v3296
        %v3308 = vmul.f32 %v3268, %v3298
        %v3309 = vmul.f32 %v3272, %v3296
        %v3310 = vmul.f32 %v3272, %v3298
        %v3311 = vmul.f32 %v3276, %v3296
        %v3312 = vmul.f32 %v3276, %v3298
        %v3313 = vmul.f32 %v3280, %v3296
        %v3314 = vmul.f32 %v3280, %v3298
        %v3315 = vmul.f32 %v3284, %v3296
        %v3316 = vmul.f32 %v3284, %v3298
        %v3317 = vadd.f32 %v3220, %v3301
        %v3318 = vadd.f32 %v3221, %v3302
        %v3319 = vadd.f32 %v3222, %v3303
        %v3320 = vadd.f32 %v3223, %v3304
        %v3321 = vadd.f32 %v3224, %v3305
        %v3322 = vadd.f32 %v3225, %v3306
        %v3323 = vadd.f32 %v3226, %v3307
        %v3324 = vadd.f32 %v3227, %v3308
        %v3325 = vadd.f32 %v3228, %v3309
        %v3326 = vadd.f32 %v3229, %v3310
        %v3327 = vadd.f32 %v3230, %v3311
        %v3328 = vadd.f32 %v3231, %v3312
        %v3329 = vadd.f32 %v3232, %v3313
        %v3330 = vadd.f32 %v3233, %v3314
        %v3331 = vadd.f32 %v3234, %v3315
        %v3332 = vadd.f32 %v3235, %v3316
        %s3333 = scalar_lea.vmem %s5, 88
        %v3334 = vld [vmem:[%s3333] sm:$0x1]
        %v3335 = vld [vmem:[%s3333 + $0x1] sm:$0x1]
        %v3336 = vld [vmem:[%s3333 + $0x2] sm:$0x1]
        %v3337 = vld [vmem:[%s3333 + $0x3] sm:$0x1]
        %v3338 = vld [vmem:[%s3333 + $0x4] sm:$0x1]
        %v3339 = vld [vmem:[%s3333 + $0x5] sm:$0x1]
        %v3340 = vld [vmem:[%s3333 + $0x6] sm:$0x1]
        %v3341 = vld [vmem:[%s3333 + $0x7] sm:$0x1]
        %v3350 = vlaneseq
        %v3351 = vshrl.u32 %v3350, 7
        %v3352 = vsub.s32 0, %v3351
        %v3353 = vrot.slane %v3334, %v3352
        %v3354 = vlaneseq
        %v3355 = vshrl.u32 %v3354, 7
        %v3356 = vsub.s32 0, %v3355
        %v3357 = vrot.slane %v3335, %v3356
        %v3358 = vlaneseq
        %v3359 = vshrl.u32 %v3358, 7
        %v3360 = vsub.s32 0, %v3359
        %v3361 = vrot.slane %v3336, %v3360
        %v3362 = vlaneseq
        %v3363 = vshrl.u32 %v3362, 7
        %v3364 = vsub.s32 0, %v3363
        %v3365 = vrot.slane %v3337, %v3364
        %v3366 = vlaneseq
        %v3367 = vshrl.u32 %v3366, 7
        %v3368 = vsub.s32 0, %v3367
        %v3369 = vrot.slane %v3338, %v3368
        %v3370 = vlaneseq
        %v3371 = vshrl.u32 %v3370, 7
        %v3372 = vsub.s32 0, %v3371
        %v3373 = vrot.slane %v3339, %v3372
        %v3374 = vlaneseq
        %v3375 = vshrl.u32 %v3374, 7
        %v3376 = vsub.s32 0, %v3375
        %v3377 = vrot.slane %v3340, %v3376
        %v3378 = vlaneseq
        %v3379 = vshrl.u32 %v3378, 7
        %v3380 = vsub.s32 0, %v3379
        %v3381 = vrot.slane %v3341, %v3380
        %3390 = vrot.lane.b32.xlu0 %v1833, 126
        %v3391 = vpop.permute.xlu0 %3390
        %3392 = vrot.lane.b32.xlu0 %v1838, 126
        %v3393 = vpop.permute.xlu0 %3392
        %v3396 = vmul.f32 %v3353, %v3391
        %v3397 = vmul.f32 %v3353, %v3393
        %v3398 = vmul.f32 %v3357, %v3391
        %v3399 = vmul.f32 %v3357, %v3393
        %v3400 = vmul.f32 %v3361, %v3391
        %v3401 = vmul.f32 %v3361, %v3393
        %v3402 = vmul.f32 %v3365, %v3391
        %v3403 = vmul.f32 %v3365, %v3393
        %v3404 = vmul.f32 %v3369, %v3391
        %v3405 = vmul.f32 %v3369, %v3393
        %v3406 = vmul.f32 %v3373, %v3391
        %v3407 = vmul.f32 %v3373, %v3393
        %v3408 = vmul.f32 %v3377, %v3391
        %v3409 = vmul.f32 %v3377, %v3393
        %v3410 = vmul.f32 %v3381, %v3391
        %v3411 = vmul.f32 %v3381, %v3393
        %v3412 = vadd.f32 %v3317, %v3396
        %v3413 = vadd.f32 %v3318, %v3397
        %v3414 = vadd.f32 %v3319, %v3398
        %v3415 = vadd.f32 %v3320, %v3399
        %v3416 = vadd.f32 %v3321, %v3400
        %v3417 = vadd.f32 %v3322, %v3401
        %v3418 = vadd.f32 %v3323, %v3402
        %v3419 = vadd.f32 %v3324, %v3403
        %v3420 = vadd.f32 %v3325, %v3404
        %v3421 = vadd.f32 %v3326, %v3405
        %v3422 = vadd.f32 %v3327, %v3406
        %v3423 = vadd.f32 %v3328, %v3407
        %v3424 = vadd.f32 %v3329, %v3408
        %v3425 = vadd.f32 %v3330, %v3409
        %v3426 = vadd.f32 %v3331, %v3410
        %v3427 = vadd.f32 %v3332, %v3411
        %s3428 = scalar_lea.vmem %s5, 96
        %v3429 = vld [vmem:[%s3428] sm:$0x1]
        %v3430 = vld [vmem:[%s3428 + $0x1] sm:$0x1]
        %v3431 = vld [vmem:[%s3428 + $0x2] sm:$0x1]
        %v3432 = vld [vmem:[%s3428 + $0x3] sm:$0x1]
        %v3433 = vld [vmem:[%s3428 + $0x4] sm:$0x1]
        %v3434 = vld [vmem:[%s3428 + $0x5] sm:$0x1]
        %v3435 = vld [vmem:[%s3428 + $0x6] sm:$0x1]
        %v3436 = vld [vmem:[%s3428 + $0x7] sm:$0x1]
        %v3445 = vlaneseq
        %v3446 = vshrl.u32 %v3445, 7
        %v3447 = vsub.s32 0, %v3446
        %v3448 = vrot.slane %v3429, %v3447
        %v3449 = vlaneseq
        %v3450 = vshrl.u32 %v3449, 7
        %v3451 = vsub.s32 0, %v3450
        %v3452 = vrot.slane %v3430, %v3451
        %v3453 = vlaneseq
        %v3454 = vshrl.u32 %v3453, 7
        %v3455 = vsub.s32 0, %v3454
        %v3456 = vrot.slane %v3431, %v3455
        %v3457 = vlaneseq
        %v3458 = vshrl.u32 %v3457, 7
        %v3459 = vsub.s32 0, %v3458
        %v3460 = vrot.slane %v3432, %v3459
        %v3461 = vlaneseq
        %v3462 = vshrl.u32 %v3461, 7
        %v3463 = vsub.s32 0, %v3462
        %v3464 = vrot.slane %v3433, %v3463
        %v3465 = vlaneseq
        %v3466 = vshrl.u32 %v3465, 7
        %v3467 = vsub.s32 0, %v3466
        %v3468 = vrot.slane %v3434, %v3467
        %v3469 = vlaneseq
        %v3470 = vshrl.u32 %v3469, 7
        %v3471 = vsub.s32 0, %v3470
        %v3472 = vrot.slane %v3435, %v3471
        %v3473 = vlaneseq
        %v3474 = vshrl.u32 %v3473, 7
        %v3475 = vsub.s32 0, %v3474
        %v3476 = vrot.slane %v3436, %v3475
        %v3485 = vmul.f32 %v3448, %v1833
        %v3486 = vmul.f32 %v3448, %v1838
        %v3487 = vmul.f32 %v3452, %v1833
        %v3488 = vmul.f32 %v3452, %v1838
        %v3489 = vmul.f32 %v3456, %v1833
        %v3490 = vmul.f32 %v3456, %v1838
        %v3491 = vmul.f32 %v3460, %v1833
        %v3492 = vmul.f32 %v3460, %v1838
        %v3493 = vmul.f32 %v3464, %v1833
        %v3494 = vmul.f32 %v3464, %v1838
        %v3495 = vmul.f32 %v3468, %v1833
        %v3496 = vmul.f32 %v3468, %v1838
        %v3497 = vmul.f32 %v3472, %v1833
        %v3498 = vmul.f32 %v3472, %v1838
        %v3499 = vmul.f32 %v3476, %v1833
        %v3500 = vmul.f32 %v3476, %v1838
        %v3517 = vrot.slane %v3485, 1
        %v3518 = vrot.slane %v3486, 1
        %v3519 = vsel %vm659, %v3517, %v3518
        %v3520 = vrot.slane %v3487, 1
        %v3521 = vrot.slane %v3488, 1
        %v3522 = vsel %vm659, %v3520, %v3521
        %v3523 = vrot.slane %v3489, 1
        %v3524 = vrot.slane %v3490, 1
        %v3525 = vsel %vm659, %v3523, %v3524
        %v3526 = vrot.slane %v3491, 1
        %v3527 = vrot.slane %v3492, 1
        %v3528 = vsel %vm659, %v3526, %v3527
        %v3529 = vrot.slane %v3493, 1
        %v3530 = vrot.slane %v3494, 1
        %v3531 = vsel %vm659, %v3529, %v3530
        %v3532 = vrot.slane %v3495, 1
        %v3533 = vrot.slane %v3496, 1
        %v3534 = vsel %vm659, %v3532, %v3533
        %v3535 = vrot.slane %v3497, 1
        %v3536 = vrot.slane %v3498, 1
        %v3537 = vsel %vm659, %v3535, %v3536
        %v3538 = vrot.slane %v3499, 1
        %v3539 = vrot.slane %v3500, 1
        %v3540 = vsel %vm659, %v3538, %v3539
        %v3557 = vadd.f32 %v3412, %v3519
        %v3558 = vadd.f32 %v3413, %v3518
        %v3559 = vadd.f32 %v3414, %v3522
        %v3560 = vadd.f32 %v3415, %v3521
        %v3561 = vadd.f32 %v3416, %v3525
        %v3562 = vadd.f32 %v3417, %v3524
        %v3563 = vadd.f32 %v3418, %v3528
        %v3564 = vadd.f32 %v3419, %v3527
        %v3565 = vadd.f32 %v3420, %v3531
        %v3566 = vadd.f32 %v3421, %v3530
        %v3567 = vadd.f32 %v3422, %v3534
        %v3568 = vadd.f32 %v3423, %v3533
        %v3569 = vadd.f32 %v3424, %v3537
        %v3570 = vadd.f32 %v3425, %v3536
        %v3571 = vadd.f32 %v3426, %v3540
        %v3572 = vadd.f32 %v3427, %v3539
        %s3573 = scalar_lea.vmem %s5, 104
        %v3574 = vld [vmem:[%s3573] sm:$0x1]
        %v3575 = vld [vmem:[%s3573 + $0x1] sm:$0x1]
        %v3576 = vld [vmem:[%s3573 + $0x2] sm:$0x1]
        %v3577 = vld [vmem:[%s3573 + $0x3] sm:$0x1]
        %v3578 = vld [vmem:[%s3573 + $0x4] sm:$0x1]
        %v3579 = vld [vmem:[%s3573 + $0x5] sm:$0x1]
        %v3580 = vld [vmem:[%s3573 + $0x6] sm:$0x1]
        %v3581 = vld [vmem:[%s3573 + $0x7] sm:$0x1]
        %v3590 = vlaneseq
        %v3591 = vshrl.u32 %v3590, 7
        %v3592 = vsub.s32 0, %v3591
        %v3593 = vrot.slane %v3574, %v3592
        %v3594 = vlaneseq
        %v3595 = vshrl.u32 %v3594, 7
        %v3596 = vsub.s32 0, %v3595
        %v3597 = vrot.slane %v3575, %v3596
        %v3598 = vlaneseq
        %v3599 = vshrl.u32 %v3598, 7
        %v3600 = vsub.s32 0, %v3599
        %v3601 = vrot.slane %v3576, %v3600
        %v3602 = vlaneseq
        %v3603 = vshrl.u32 %v3602, 7
        %v3604 = vsub.s32 0, %v3603
        %v3605 = vrot.slane %v3577, %v3604
        %v3606 = vlaneseq
        %v3607 = vshrl.u32 %v3606, 7
        %v3608 = vsub.s32 0, %v3607
        %v3609 = vrot.slane %v3578, %v3608
        %v3610 = vlaneseq
        %v3611 = vshrl.u32 %v3610, 7
        %v3612 = vsub.s32 0, %v3611
        %v3613 = vrot.slane %v3579, %v3612
        %v3614 = vlaneseq
        %v3615 = vshrl.u32 %v3614, 7
        %v3616 = vsub.s32 0, %v3615
        %v3617 = vrot.slane %v3580, %v3616
        %v3618 = vlaneseq
        %v3619 = vshrl.u32 %v3618, 7
        %v3620 = vsub.s32 0, %v3619
        %v3621 = vrot.slane %v3581, %v3620
        %v3630 = vrot.slane %v1833, 1
        %v3631 = vrot.slane %v1838, 1
        %v3632 = vsel %vm659, %v3630, %v3631
        %3633 = vrot.lane.b32.xlu0 %v3632, 127
        %v3634 = vpop.permute.xlu0 %3633
        %3635 = vrot.lane.b32.xlu0 %v3631, 127
        %v3636 = vpop.permute.xlu0 %3635
        %v3639 = vmul.f32 %v3593, %v3634
        %v3640 = vmul.f32 %v3593, %v3636
        %v3641 = vmul.f32 %v3597, %v3634
        %v3642 = vmul.f32 %v3597, %v3636
        %v3643 = vmul.f32 %v3601, %v3634
        %v3644 = vmul.f32 %v3601, %v3636
        %v3645 = vmul.f32 %v3605, %v3634
        %v3646 = vmul.f32 %v3605, %v3636
        %v3647 = vmul.f32 %v3609, %v3634
        %v3648 = vmul.f32 %v3609, %v3636
        %v3649 = vmul.f32 %v3613, %v3634
        %v3650 = vmul.f32 %v3613, %v3636
        %v3651 = vmul.f32 %v3617, %v3634
        %v3652 = vmul.f32 %v3617, %v3636
        %v3653 = vmul.f32 %v3621, %v3634
        %v3654 = vmul.f32 %v3621, %v3636
        %v3655 = vadd.f32 %v3557, %v3639
        %v3656 = vadd.f32 %v3558, %v3640
        %v3657 = vadd.f32 %v3559, %v3641
        %v3658 = vadd.f32 %v3560, %v3642
        %v3659 = vadd.f32 %v3561, %v3643
        %v3660 = vadd.f32 %v3562, %v3644
        %v3661 = vadd.f32 %v3563, %v3645
        %v3662 = vadd.f32 %v3564, %v3646
        %v3663 = vadd.f32 %v3565, %v3647
        %v3664 = vadd.f32 %v3566, %v3648
        %v3665 = vadd.f32 %v3567, %v3649
        %v3666 = vadd.f32 %v3568, %v3650
        %v3667 = vadd.f32 %v3569, %v3651
        %v3668 = vadd.f32 %v3570, %v3652
        %v3669 = vadd.f32 %v3571, %v3653
        %v3670 = vadd.f32 %v3572, %v3654
        %s3671 = scalar_lea.vmem %s5, 112
        %v3672 = vld [vmem:[%s3671] sm:$0x1]
        %v3673 = vld [vmem:[%s3671 + $0x1] sm:$0x1]
        %v3674 = vld [vmem:[%s3671 + $0x2] sm:$0x1]
        %v3675 = vld [vmem:[%s3671 + $0x3] sm:$0x1]
        %v3676 = vld [vmem:[%s3671 + $0x4] sm:$0x1]
        %v3677 = vld [vmem:[%s3671 + $0x5] sm:$0x1]
        %v3678 = vld [vmem:[%s3671 + $0x6] sm:$0x1]
        %v3679 = vld [vmem:[%s3671 + $0x7] sm:$0x1]
        %v3688 = vlaneseq
        %v3689 = vshrl.u32 %v3688, 7
        %v3690 = vsub.s32 0, %v3689
        %v3691 = vrot.slane %v3672, %v3690
        %v3692 = vlaneseq
        %v3693 = vshrl.u32 %v3692, 7
        %v3694 = vsub.s32 0, %v3693
        %v3695 = vrot.slane %v3673, %v3694
        %v3696 = vlaneseq
        %v3697 = vshrl.u32 %v3696, 7
        %v3698 = vsub.s32 0, %v3697
        %v3699 = vrot.slane %v3674, %v3698
        %v3700 = vlaneseq
        %v3701 = vshrl.u32 %v3700, 7
        %v3702 = vsub.s32 0, %v3701
        %v3703 = vrot.slane %v3675, %v3702
        %v3704 = vlaneseq
        %v3705 = vshrl.u32 %v3704, 7
        %v3706 = vsub.s32 0, %v3705
        %v3707 = vrot.slane %v3676, %v3706
        %v3708 = vlaneseq
        %v3709 = vshrl.u32 %v3708, 7
        %v3710 = vsub.s32 0, %v3709
        %v3711 = vrot.slane %v3677, %v3710
        %v3712 = vlaneseq
        %v3713 = vshrl.u32 %v3712, 7
        %v3714 = vsub.s32 0, %v3713
        %v3715 = vrot.slane %v3678, %v3714
        %v3716 = vlaneseq
        %v3717 = vshrl.u32 %v3716, 7
        %v3718 = vsub.s32 0, %v3717
        %v3719 = vrot.slane %v3679, %v3718
        %3728 = vrot.lane.b32.xlu0 %v3632, 126
        %v3729 = vpop.permute.xlu0 %3728
        %3730 = vrot.lane.b32.xlu0 %v3631, 126
        %v3731 = vpop.permute.xlu0 %3730
        %v3734 = vmul.f32 %v3691, %v3729
        %v3735 = vmul.f32 %v3691, %v3731
        %v3736 = vmul.f32 %v3695, %v3729
        %v3737 = vmul.f32 %v3695, %v3731
        %v3738 = vmul.f32 %v3699, %v3729
        %v3739 = vmul.f32 %v3699, %v3731
        %v3740 = vmul.f32 %v3703, %v3729
        %v3741 = vmul.f32 %v3703, %v3731
        %v3742 = vmul.f32 %v3707, %v3729
        %v3743 = vmul.f32 %v3707, %v3731
        %v3744 = vmul.f32 %v3711, %v3729
        %v3745 = vmul.f32 %v3711, %v3731
        %v3746 = vmul.f32 %v3715, %v3729
        %v3747 = vmul.f32 %v3715, %v3731
        %v3748 = vmul.f32 %v3719, %v3729
        %v3749 = vmul.f32 %v3719, %v3731
        %v3750 = vadd.f32 %v3655, %v3734
        %v3751 = vadd.f32 %v3656, %v3735
        %v3752 = vadd.f32 %v3657, %v3736
        %v3753 = vadd.f32 %v3658, %v3737
        %v3754 = vadd.f32 %v3659, %v3738
        %v3755 = vadd.f32 %v3660, %v3739
        %v3756 = vadd.f32 %v3661, %v3740
        %v3757 = vadd.f32 %v3662, %v3741
        %v3758 = vadd.f32 %v3663, %v3742
        %v3759 = vadd.f32 %v3664, %v3743
        %v3760 = vadd.f32 %v3665, %v3744
        %v3761 = vadd.f32 %v3666, %v3745
        %v3762 = vadd.f32 %v3667, %v3746
        %v3763 = vadd.f32 %v3668, %v3747
        %v3764 = vadd.f32 %v3669, %v3748
        %v3765 = vadd.f32 %v3670, %v3749
        %s3766 = scalar_lea.vmem %s5, 120
        %v3767 = vld [vmem:[%s3766] sm:$0x1]
        %v3768 = vld [vmem:[%s3766 + $0x1] sm:$0x1]
        %v3769 = vld [vmem:[%s3766 + $0x2] sm:$0x1]
        %v3770 = vld [vmem:[%s3766 + $0x3] sm:$0x1]
        %v3771 = vld [vmem:[%s3766 + $0x4] sm:$0x1]
        %v3772 = vld [vmem:[%s3766 + $0x5] sm:$0x1]
        %v3773 = vld [vmem:[%s3766 + $0x6] sm:$0x1]
        %v3774 = vld [vmem:[%s3766 + $0x7] sm:$0x1]
        %v3783 = vlaneseq
        %v3784 = vshrl.u32 %v3783, 7
        %v3785 = vsub.s32 0, %v3784
        %v3786 = vrot.slane %v3767, %v3785
        %v3787 = vlaneseq
        %v3788 = vshrl.u32 %v3787, 7
        %v3789 = vsub.s32 0, %v3788
        %v3790 = vrot.slane %v3768, %v3789
        %v3791 = vlaneseq
        %v3792 = vshrl.u32 %v3791, 7
        %v3793 = vsub.s32 0, %v3792
        %v3794 = vrot.slane %v3769, %v3793
        %v3795 = vlaneseq
        %v3796 = vshrl.u32 %v3795, 7
        %v3797 = vsub.s32 0, %v3796
        %v3798 = vrot.slane %v3770, %v3797
        %v3799 = vlaneseq
        %v3800 = vshrl.u32 %v3799, 7
        %v3801 = vsub.s32 0, %v3800
        %v3802 = vrot.slane %v3771, %v3801
        %v3803 = vlaneseq
        %v3804 = vshrl.u32 %v3803, 7
        %v3805 = vsub.s32 0, %v3804
        %v3806 = vrot.slane %v3772, %v3805
        %v3807 = vlaneseq
        %v3808 = vshrl.u32 %v3807, 7
        %v3809 = vsub.s32 0, %v3808
        %v3810 = vrot.slane %v3773, %v3809
        %v3811 = vlaneseq
        %v3812 = vshrl.u32 %v3811, 7
        %v3813 = vsub.s32 0, %v3812
        %v3814 = vrot.slane %v3774, %v3813
        %v3823 = vmul.f32 %v3786, %v1833
        %v3824 = vmul.f32 %v3786, %v1838
        %v3825 = vmul.f32 %v3790, %v1833
        %v3826 = vmul.f32 %v3790, %v1838
        %v3827 = vmul.f32 %v3794, %v1833
        %v3828 = vmul.f32 %v3794, %v1838
        %v3829 = vmul.f32 %v3798, %v1833
        %v3830 = vmul.f32 %v3798, %v1838
        %v3831 = vmul.f32 %v3802, %v1833
        %v3832 = vmul.f32 %v3802, %v1838
        %v3833 = vmul.f32 %v3806, %v1833
        %v3834 = vmul.f32 %v3806, %v1838
        %v3835 = vmul.f32 %v3810, %v1833
        %v3836 = vmul.f32 %v3810, %v1838
        %v3837 = vmul.f32 %v3814, %v1833
        %v3838 = vmul.f32 %v3814, %v1838
        %v3855 = vrot.slane %v3823, 2
        %v3856 = vrot.slane %v3824, 2
        %v3857 = vsel %vm934, %v3855, %v3856
        %v3858 = vrot.slane %v3825, 2
        %v3859 = vrot.slane %v3826, 2
        %v3860 = vsel %vm934, %v3858, %v3859
        %v3861 = vrot.slane %v3827, 2
        %v3862 = vrot.slane %v3828, 2
        %v3863 = vsel %vm934, %v3861, %v3862
        %v3864 = vrot.slane %v3829, 2
        %v3865 = vrot.slane %v3830, 2
        %v3866 = vsel %vm934, %v3864, %v3865
        %v3867 = vrot.slane %v3831, 2
        %v3868 = vrot.slane %v3832, 2
        %v3869 = vsel %vm934, %v3867, %v3868
        %v3870 = vrot.slane %v3833, 2
        %v3871 = vrot.slane %v3834, 2
        %v3872 = vsel %vm934, %v3870, %v3871
        %v3873 = vrot.slane %v3835, 2
        %v3874 = vrot.slane %v3836, 2
        %v3875 = vsel %vm934, %v3873, %v3874
        %v3876 = vrot.slane %v3837, 2
        %v3877 = vrot.slane %v3838, 2
        %v3878 = vsel %vm934, %v3876, %v3877
        %v3895 = vadd.f32 %v3750, %v3857
        %v3896 = vadd.f32 %v3751, %v3856
        %v3897 = vadd.f32 %v3752, %v3860
        %v3898 = vadd.f32 %v3753, %v3859
        %v3899 = vadd.f32 %v3754, %v3863
        %v3900 = vadd.f32 %v3755, %v3862
        %v3901 = vadd.f32 %v3756, %v3866
        %v3902 = vadd.f32 %v3757, %v3865
        %v3903 = vadd.f32 %v3758, %v3869
        %v3904 = vadd.f32 %v3759, %v3868
        %v3905 = vadd.f32 %v3760, %v3872
        %v3906 = vadd.f32 %v3761, %v3871
        %v3907 = vadd.f32 %v3762, %v3875
        %v3908 = vadd.f32 %v3763, %v3874
        %v3909 = vadd.f32 %v3764, %v3878
        %v3910 = vadd.f32 %v3765, %v3877
        %s3911 = scalar_lea.vmem %s5, 128
        %v3912 = vld [vmem:[%s3911] sm:$0x1]
        %v3913 = vld [vmem:[%s3911 + $0x1] sm:$0x1]
        %v3914 = vld [vmem:[%s3911 + $0x2] sm:$0x1]
        %v3915 = vld [vmem:[%s3911 + $0x3] sm:$0x1]
        %v3916 = vld [vmem:[%s3911 + $0x4] sm:$0x1]
        %v3917 = vld [vmem:[%s3911 + $0x5] sm:$0x1]
        %v3918 = vld [vmem:[%s3911 + $0x6] sm:$0x1]
        %v3919 = vld [vmem:[%s3911 + $0x7] sm:$0x1]
        %v3928 = vlaneseq
        %v3929 = vshrl.u32 %v3928, 7
        %v3930 = vsub.s32 0, %v3929
        %v3931 = vrot.slane %v3912, %v3930
        %v3932 = vlaneseq
        %v3933 = vshrl.u32 %v3932, 7
        %v3934 = vsub.s32 0, %v3933
        %v3935 = vrot.slane %v3913, %v3934
        %v3936 = vlaneseq
        %v3937 = vshrl.u32 %v3936, 7
        %v3938 = vsub.s32 0, %v3937
        %v3939 = vrot.slane %v3914, %v3938
        %v3940 = vlaneseq
        %v3941 = vshrl.u32 %v3940, 7
        %v3942 = vsub.s32 0, %v3941
        %v3943 = vrot.slane %v3915, %v3942
        %v3944 = vlaneseq
        %v3945 = vshrl.u32 %v3944, 7
        %v3946 = vsub.s32 0, %v3945
        %v3947 = vrot.slane %v3916, %v3946
        %v3948 = vlaneseq
        %v3949 = vshrl.u32 %v3948, 7
        %v3950 = vsub.s32 0, %v3949
        %v3951 = vrot.slane %v3917, %v3950
        %v3952 = vlaneseq
        %v3953 = vshrl.u32 %v3952, 7
        %v3954 = vsub.s32 0, %v3953
        %v3955 = vrot.slane %v3918, %v3954
        %v3956 = vlaneseq
        %v3957 = vshrl.u32 %v3956, 7
        %v3958 = vsub.s32 0, %v3957
        %v3959 = vrot.slane %v3919, %v3958
        %v3968 = vrot.slane %v1833, 2
        %v3969 = vrot.slane %v1838, 2
        %v3970 = vsel %vm934, %v3968, %v3969
        %3971 = vrot.lane.b32.xlu0 %v3970, 127
        %v3972 = vpop.permute.xlu0 %3971
        %3973 = vrot.lane.b32.xlu0 %v3969, 127
        %v3974 = vpop.permute.xlu0 %3973
        %v3977 = vmul.f32 %v3931, %v3972
        %v3978 = vmul.f32 %v3931, %v3974
        %v3979 = vmul.f32 %v3935, %v3972
        %v3980 = vmul.f32 %v3935, %v3974
        %v3981 = vmul.f32 %v3939, %v3972
        %v3982 = vmul.f32 %v3939, %v3974
        %v3983 = vmul.f32 %v3943, %v3972
        %v3984 = vmul.f32 %v3943, %v3974
        %v3985 = vmul.f32 %v3947, %v3972
        %v3986 = vmul.f32 %v3947, %v3974
        %v3987 = vmul.f32 %v3951, %v3972
        %v3988 = vmul.f32 %v3951, %v3974
        %v3989 = vmul.f32 %v3955, %v3972
        %v3990 = vmul.f32 %v3955, %v3974
        %v3991 = vmul.f32 %v3959, %v3972
        %v3992 = vmul.f32 %v3959, %v3974
        %v3993 = vadd.f32 %v3895, %v3977
        %v3994 = vadd.f32 %v3896, %v3978
        %v3995 = vadd.f32 %v3897, %v3979
        %v3996 = vadd.f32 %v3898, %v3980
        %v3997 = vadd.f32 %v3899, %v3981
        %v3998 = vadd.f32 %v3900, %v3982
        %v3999 = vadd.f32 %v3901, %v3983
        %v4000 = vadd.f32 %v3902, %v3984
        %v4001 = vadd.f32 %v3903, %v3985
        %v4002 = vadd.f32 %v3904, %v3986
        %v4003 = vadd.f32 %v3905, %v3987
        %v4004 = vadd.f32 %v3906, %v3988
        %v4005 = vadd.f32 %v3907, %v3989
        %v4006 = vadd.f32 %v3908, %v3990
        %v4007 = vadd.f32 %v3909, %v3991
        %v4008 = vadd.f32 %v3910, %v3992
        %s4009 = scalar_lea.vmem %s5, 136
        %v4010 = vld [vmem:[%s4009] sm:$0x1]
        %v4011 = vld [vmem:[%s4009 + $0x1] sm:$0x1]
        %v4012 = vld [vmem:[%s4009 + $0x2] sm:$0x1]
        %v4013 = vld [vmem:[%s4009 + $0x3] sm:$0x1]
        %v4014 = vld [vmem:[%s4009 + $0x4] sm:$0x1]
        %v4015 = vld [vmem:[%s4009 + $0x5] sm:$0x1]
        %v4016 = vld [vmem:[%s4009 + $0x6] sm:$0x1]
        %v4017 = vld [vmem:[%s4009 + $0x7] sm:$0x1]
        %v4026 = vlaneseq
        %v4027 = vshrl.u32 %v4026, 7
        %v4028 = vsub.s32 0, %v4027
        %v4029 = vrot.slane %v4010, %v4028
        %v4030 = vlaneseq
        %v4031 = vshrl.u32 %v4030, 7
        %v4032 = vsub.s32 0, %v4031
        %v4033 = vrot.slane %v4011, %v4032
        %v4034 = vlaneseq
        %v4035 = vshrl.u32 %v4034, 7
        %v4036 = vsub.s32 0, %v4035
        %v4037 = vrot.slane %v4012, %v4036
        %v4038 = vlaneseq
        %v4039 = vshrl.u32 %v4038, 7
        %v4040 = vsub.s32 0, %v4039
        %v4041 = vrot.slane %v4013, %v4040
        %v4042 = vlaneseq
        %v4043 = vshrl.u32 %v4042, 7
        %v4044 = vsub.s32 0, %v4043
        %v4045 = vrot.slane %v4014, %v4044
        %v4046 = vlaneseq
        %v4047 = vshrl.u32 %v4046, 7
        %v4048 = vsub.s32 0, %v4047
        %v4049 = vrot.slane %v4015, %v4048
        %v4050 = vlaneseq
        %v4051 = vshrl.u32 %v4050, 7
        %v4052 = vsub.s32 0, %v4051
        %v4053 = vrot.slane %v4016, %v4052
        %v4054 = vlaneseq
        %v4055 = vshrl.u32 %v4054, 7
        %v4056 = vsub.s32 0, %v4055
        %v4057 = vrot.slane %v4017, %v4056
        %4066 = vrot.lane.b32.xlu0 %v3970, 126
        %v4067 = vpop.permute.xlu0 %4066
        %4068 = vrot.lane.b32.xlu0 %v3969, 126
        %v4069 = vpop.permute.xlu0 %4068
        %v4072 = vmul.f32 %v4029, %v4067
        %v4073 = vmul.f32 %v4029, %v4069
        %v4074 = vmul.f32 %v4033, %v4067
        %v4075 = vmul.f32 %v4033, %v4069
        %v4076 = vmul.f32 %v4037, %v4067
        %v4077 = vmul.f32 %v4037, %v4069
        %v4078 = vmul.f32 %v4041, %v4067
        %v4079 = vmul.f32 %v4041, %v4069
        %v4080 = vmul.f32 %v4045, %v4067
        %v4081 = vmul.f32 %v4045, %v4069
        %v4082 = vmul.f32 %v4049, %v4067
        %v4083 = vmul.f32 %v4049, %v4069
        %v4084 = vmul.f32 %v4053, %v4067
        %v4085 = vmul.f32 %v4053, %v4069
        %v4086 = vmul.f32 %v4057, %v4067
        %v4087 = vmul.f32 %v4057, %v4069
        %v4088 = vadd.f32 %v3993, %v4072
        %v4089 = vadd.f32 %v3994, %v4073
        %v4090 = vadd.f32 %v3995, %v4074
        %v4091 = vadd.f32 %v3996, %v4075
        %v4092 = vadd.f32 %v3997, %v4076
        %v4093 = vadd.f32 %v3998, %v4077
        %v4094 = vadd.f32 %v3999, %v4078
        %v4095 = vadd.f32 %v4000, %v4079
        %v4096 = vadd.f32 %v4001, %v4080
        %v4097 = vadd.f32 %v4002, %v4081
        %v4098 = vadd.f32 %v4003, %v4082
        %v4099 = vadd.f32 %v4004, %v4083
        %v4100 = vadd.f32 %v4005, %v4084
        %v4101 = vadd.f32 %v4006, %v4085
        %v4102 = vadd.f32 %v4007, %v4086
        %v4103 = vadd.f32 %v4008, %v4087
        %s4104 = scalar_lea.vmem %s5, 144
        %v4105 = vld [vmem:[%s4104] sm:$0x1]
        %v4106 = vld [vmem:[%s4104 + $0x1] sm:$0x1]
        %v4107 = vld [vmem:[%s4104 + $0x2] sm:$0x1]
        %v4108 = vld [vmem:[%s4104 + $0x3] sm:$0x1]
        %v4109 = vld [vmem:[%s4104 + $0x4] sm:$0x1]
        %v4110 = vld [vmem:[%s4104 + $0x5] sm:$0x1]
        %v4111 = vld [vmem:[%s4104 + $0x6] sm:$0x1]
        %v4112 = vld [vmem:[%s4104 + $0x7] sm:$0x1]
        %v4121 = vlaneseq
        %v4122 = vshrl.u32 %v4121, 7
        %v4123 = vsub.s32 0, %v4122
        %v4124 = vrot.slane %v4105, %v4123
        %v4125 = vlaneseq
        %v4126 = vshrl.u32 %v4125, 7
        %v4127 = vsub.s32 0, %v4126
        %v4128 = vrot.slane %v4106, %v4127
        %v4129 = vlaneseq
        %v4130 = vshrl.u32 %v4129, 7
        %v4131 = vsub.s32 0, %v4130
        %v4132 = vrot.slane %v4107, %v4131
        %v4133 = vlaneseq
        %v4134 = vshrl.u32 %v4133, 7
        %v4135 = vsub.s32 0, %v4134
        %v4136 = vrot.slane %v4108, %v4135
        %v4137 = vlaneseq
        %v4138 = vshrl.u32 %v4137, 7
        %v4139 = vsub.s32 0, %v4138
        %v4140 = vrot.slane %v4109, %v4139
        %v4141 = vlaneseq
        %v4142 = vshrl.u32 %v4141, 7
        %v4143 = vsub.s32 0, %v4142
        %v4144 = vrot.slane %v4110, %v4143
        %v4145 = vlaneseq
        %v4146 = vshrl.u32 %v4145, 7
        %v4147 = vsub.s32 0, %v4146
        %v4148 = vrot.slane %v4111, %v4147
        %v4149 = vlaneseq
        %v4150 = vshrl.u32 %v4149, 7
        %v4151 = vsub.s32 0, %v4150
        %v4152 = vrot.slane %v4112, %v4151
        %v4161 = vmul.f32 %v4124, %v2008
        %v4162 = vmul.f32 %v4124, %v2013
        %v4163 = vmul.f32 %v4128, %v2008
        %v4164 = vmul.f32 %v4128, %v2013
        %v4165 = vmul.f32 %v4132, %v2008
        %v4166 = vmul.f32 %v4132, %v2013
        %v4167 = vmul.f32 %v4136, %v2008
        %v4168 = vmul.f32 %v4136, %v2013
        %v4169 = vmul.f32 %v4140, %v2008
        %v4170 = vmul.f32 %v4140, %v2013
        %v4171 = vmul.f32 %v4144, %v2008
        %v4172 = vmul.f32 %v4144, %v2013
        %v4173 = vmul.f32 %v4148, %v2008
        %v4174 = vmul.f32 %v4148, %v2013
        %v4175 = vmul.f32 %v4152, %v2008
        %v4176 = vmul.f32 %v4152, %v2013
        %v4177 = vadd.f32 %v4088, %v4161
        %v4178 = vadd.f32 %v4089, %v4162
        %v4179 = vadd.f32 %v4090, %v4163
        %v4180 = vadd.f32 %v4091, %v4164
        %v4181 = vadd.f32 %v4092, %v4165
        %v4182 = vadd.f32 %v4093, %v4166
        %v4183 = vadd.f32 %v4094, %v4167
        %v4184 = vadd.f32 %v4095, %v4168
        %v4185 = vadd.f32 %v4096, %v4169
        %v4186 = vadd.f32 %v4097, %v4170
        %v4187 = vadd.f32 %v4098, %v4171
        %v4188 = vadd.f32 %v4099, %v4172
        %v4189 = vadd.f32 %v4100, %v4173
        %v4190 = vadd.f32 %v4101, %v4174
        %v4191 = vadd.f32 %v4102, %v4175
        %v4192 = vadd.f32 %v4103, %v4176
        %s4193 = scalar_lea.vmem %s5, 152
        %v4194 = vld [vmem:[%s4193] sm:$0x1]
        %v4195 = vld [vmem:[%s4193 + $0x1] sm:$0x1]
        %v4196 = vld [vmem:[%s4193 + $0x2] sm:$0x1]
        %v4197 = vld [vmem:[%s4193 + $0x3] sm:$0x1]
        %v4198 = vld [vmem:[%s4193 + $0x4] sm:$0x1]
        %v4199 = vld [vmem:[%s4193 + $0x5] sm:$0x1]
        %v4200 = vld [vmem:[%s4193 + $0x6] sm:$0x1]
        %v4201 = vld [vmem:[%s4193 + $0x7] sm:$0x1]
        %v4210 = vlaneseq
        %v4211 = vshrl.u32 %v4210, 7
        %v4212 = vsub.s32 0, %v4211
        %v4213 = vrot.slane %v4194, %v4212
        %v4214 = vlaneseq
        %v4215 = vshrl.u32 %v4214, 7
        %v4216 = vsub.s32 0, %v4215
        %v4217 = vrot.slane %v4195, %v4216
        %v4218 = vlaneseq
        %v4219 = vshrl.u32 %v4218, 7
        %v4220 = vsub.s32 0, %v4219
        %v4221 = vrot.slane %v4196, %v4220
        %v4222 = vlaneseq
        %v4223 = vshrl.u32 %v4222, 7
        %v4224 = vsub.s32 0, %v4223
        %v4225 = vrot.slane %v4197, %v4224
        %v4226 = vlaneseq
        %v4227 = vshrl.u32 %v4226, 7
        %v4228 = vsub.s32 0, %v4227
        %v4229 = vrot.slane %v4198, %v4228
        %v4230 = vlaneseq
        %v4231 = vshrl.u32 %v4230, 7
        %v4232 = vsub.s32 0, %v4231
        %v4233 = vrot.slane %v4199, %v4232
        %v4234 = vlaneseq
        %v4235 = vshrl.u32 %v4234, 7
        %v4236 = vsub.s32 0, %v4235
        %v4237 = vrot.slane %v4200, %v4236
        %v4238 = vlaneseq
        %v4239 = vshrl.u32 %v4238, 7
        %v4240 = vsub.s32 0, %v4239
        %v4241 = vrot.slane %v4201, %v4240
        %4252 = vrot.lane.b32.xlu0 %v2008, 127
        %v4253 = vpop.permute.xlu0 %4252
        %4254 = vrot.lane.b32.xlu0 %v2013, 127
        %v4255 = vpop.permute.xlu0 %4254
        %v4258 = vmul.f32 %v4213, %v4253
        %v4259 = vmul.f32 %v4213, %v4255
        %v4260 = vmul.f32 %v4217, %v4253
        %v4261 = vmul.f32 %v4217, %v4255
        %v4262 = vmul.f32 %v4221, %v4253
        %v4263 = vmul.f32 %v4221, %v4255
        %v4264 = vmul.f32 %v4225, %v4253
        %v4265 = vmul.f32 %v4225, %v4255
        %v4266 = vmul.f32 %v4229, %v4253
        %v4267 = vmul.f32 %v4229, %v4255
        %v4268 = vmul.f32 %v4233, %v4253
        %v4269 = vmul.f32 %v4233, %v4255
        %v4270 = vmul.f32 %v4237, %v4253
        %v4271 = vmul.f32 %v4237, %v4255
        %v4272 = vmul.f32 %v4241, %v4253
        %v4273 = vmul.f32 %v4241, %v4255
        %v4274 = vadd.f32 %v4177, %v4258
        %v4275 = vadd.f32 %v4178, %v4259
        %v4276 = vadd.f32 %v4179, %v4260
        %v4277 = vadd.f32 %v4180, %v4261
        %v4278 = vadd.f32 %v4181, %v4262
        %v4279 = vadd.f32 %v4182, %v4263
        %v4280 = vadd.f32 %v4183, %v4264
        %v4281 = vadd.f32 %v4184, %v4265
        %v4282 = vadd.f32 %v4185, %v4266
        %v4283 = vadd.f32 %v4186, %v4267
        %v4284 = vadd.f32 %v4187, %v4268
        %v4285 = vadd.f32 %v4188, %v4269
        %v4286 = vadd.f32 %v4189, %v4270
        %v4287 = vadd.f32 %v4190, %v4271
        %v4288 = vadd.f32 %v4191, %v4272
        %v4289 = vadd.f32 %v4192, %v4273
        %s4290 = scalar_lea.vmem %s5, 160
        %v4291 = vld [vmem:[%s4290] sm:$0x1]
        %v4292 = vld [vmem:[%s4290 + $0x1] sm:$0x1]
        %v4293 = vld [vmem:[%s4290 + $0x2] sm:$0x1]
        %v4294 = vld [vmem:[%s4290 + $0x3] sm:$0x1]
        %v4295 = vld [vmem:[%s4290 + $0x4] sm:$0x1]
        %v4296 = vld [vmem:[%s4290 + $0x5] sm:$0x1]
        %v4297 = vld [vmem:[%s4290 + $0x6] sm:$0x1]
        %v4298 = vld [vmem:[%s4290 + $0x7] sm:$0x1]
        %v4307 = vlaneseq
        %v4308 = vshrl.u32 %v4307, 7
        %v4309 = vsub.s32 0, %v4308
        %v4310 = vrot.slane %v4291, %v4309
        %v4311 = vlaneseq
        %v4312 = vshrl.u32 %v4311, 7
        %v4313 = vsub.s32 0, %v4312
        %v4314 = vrot.slane %v4292, %v4313
        %v4315 = vlaneseq
        %v4316 = vshrl.u32 %v4315, 7
        %v4317 = vsub.s32 0, %v4316
        %v4318 = vrot.slane %v4293, %v4317
        %v4319 = vlaneseq
        %v4320 = vshrl.u32 %v4319, 7
        %v4321 = vsub.s32 0, %v4320
        %v4322 = vrot.slane %v4294, %v4321
        %v4323 = vlaneseq
        %v4324 = vshrl.u32 %v4323, 7
        %v4325 = vsub.s32 0, %v4324
        %v4326 = vrot.slane %v4295, %v4325
        %v4327 = vlaneseq
        %v4328 = vshrl.u32 %v4327, 7
        %v4329 = vsub.s32 0, %v4328
        %v4330 = vrot.slane %v4296, %v4329
        %v4331 = vlaneseq
        %v4332 = vshrl.u32 %v4331, 7
        %v4333 = vsub.s32 0, %v4332
        %v4334 = vrot.slane %v4297, %v4333
        %v4335 = vlaneseq
        %v4336 = vshrl.u32 %v4335, 7
        %v4337 = vsub.s32 0, %v4336
        %v4338 = vrot.slane %v4298, %v4337
        %4347 = vrot.lane.b32.xlu0 %v2008, 126
        %v4348 = vpop.permute.xlu0 %4347
        %4349 = vrot.lane.b32.xlu0 %v2013, 126
        %v4350 = vpop.permute.xlu0 %4349
        %v4353 = vmul.f32 %v4310, %v4348
        %v4354 = vmul.f32 %v4310, %v4350
        %v4355 = vmul.f32 %v4314, %v4348
        %v4356 = vmul.f32 %v4314, %v4350
        %v4357 = vmul.f32 %v4318, %v4348
        %v4358 = vmul.f32 %v4318, %v4350
        %v4359 = vmul.f32 %v4322, %v4348
        %v4360 = vmul.f32 %v4322, %v4350
        %v4361 = vmul.f32 %v4326, %v4348
        %v4362 = vmul.f32 %v4326, %v4350
        %v4363 = vmul.f32 %v4330, %v4348
        %v4364 = vmul.f32 %v4330, %v4350
        %v4365 = vmul.f32 %v4334, %v4348
        %v4366 = vmul.f32 %v4334, %v4350
        %v4367 = vmul.f32 %v4338, %v4348
        %v4368 = vmul.f32 %v4338, %v4350
        %v4369 = vadd.f32 %v4274, %v4353
        %v4370 = vadd.f32 %v4275, %v4354
        %v4371 = vadd.f32 %v4276, %v4355
        %v4372 = vadd.f32 %v4277, %v4356
        %v4373 = vadd.f32 %v4278, %v4357
        %v4374 = vadd.f32 %v4279, %v4358
        %v4375 = vadd.f32 %v4280, %v4359
        %v4376 = vadd.f32 %v4281, %v4360
        %v4377 = vadd.f32 %v4282, %v4361
        %v4378 = vadd.f32 %v4283, %v4362
        %v4379 = vadd.f32 %v4284, %v4363
        %v4380 = vadd.f32 %v4285, %v4364
        %v4381 = vadd.f32 %v4286, %v4365
        %v4382 = vadd.f32 %v4287, %v4366
        %v4383 = vadd.f32 %v4288, %v4367
        %v4384 = vadd.f32 %v4289, %v4368
        %s4385 = scalar_lea.vmem %s5, 168
        %v4386 = vld [vmem:[%s4385] sm:$0x1]
        %v4387 = vld [vmem:[%s4385 + $0x1] sm:$0x1]
        %v4388 = vld [vmem:[%s4385 + $0x2] sm:$0x1]
        %v4389 = vld [vmem:[%s4385 + $0x3] sm:$0x1]
        %v4390 = vld [vmem:[%s4385 + $0x4] sm:$0x1]
        %v4391 = vld [vmem:[%s4385 + $0x5] sm:$0x1]
        %v4392 = vld [vmem:[%s4385 + $0x6] sm:$0x1]
        %v4393 = vld [vmem:[%s4385 + $0x7] sm:$0x1]
        %v4402 = vlaneseq
        %v4403 = vshrl.u32 %v4402, 7
        %v4404 = vsub.s32 0, %v4403
        %v4405 = vrot.slane %v4386, %v4404
        %v4406 = vlaneseq
        %v4407 = vshrl.u32 %v4406, 7
        %v4408 = vsub.s32 0, %v4407
        %v4409 = vrot.slane %v4387, %v4408
        %v4410 = vlaneseq
        %v4411 = vshrl.u32 %v4410, 7
        %v4412 = vsub.s32 0, %v4411
        %v4413 = vrot.slane %v4388, %v4412
        %v4414 = vlaneseq
        %v4415 = vshrl.u32 %v4414, 7
        %v4416 = vsub.s32 0, %v4415
        %v4417 = vrot.slane %v4389, %v4416
        %v4418 = vlaneseq
        %v4419 = vshrl.u32 %v4418, 7
        %v4420 = vsub.s32 0, %v4419
        %v4421 = vrot.slane %v4390, %v4420
        %v4422 = vlaneseq
        %v4423 = vshrl.u32 %v4422, 7
        %v4424 = vsub.s32 0, %v4423
        %v4425 = vrot.slane %v4391, %v4424
        %v4426 = vlaneseq
        %v4427 = vshrl.u32 %v4426, 7
        %v4428 = vsub.s32 0, %v4427
        %v4429 = vrot.slane %v4392, %v4428
        %v4430 = vlaneseq
        %v4431 = vshrl.u32 %v4430, 7
        %v4432 = vsub.s32 0, %v4431
        %v4433 = vrot.slane %v4393, %v4432
        %v4442 = vmul.f32 %v4405, %v2008
        %v4443 = vmul.f32 %v4405, %v2013
        %v4444 = vmul.f32 %v4409, %v2008
        %v4445 = vmul.f32 %v4409, %v2013
        %v4446 = vmul.f32 %v4413, %v2008
        %v4447 = vmul.f32 %v4413, %v2013
        %v4448 = vmul.f32 %v4417, %v2008
        %v4449 = vmul.f32 %v4417, %v2013
        %v4450 = vmul.f32 %v4421, %v2008
        %v4451 = vmul.f32 %v4421, %v2013
        %v4452 = vmul.f32 %v4425, %v2008
        %v4453 = vmul.f32 %v4425, %v2013
        %v4454 = vmul.f32 %v4429, %v2008
        %v4455 = vmul.f32 %v4429, %v2013
        %v4456 = vmul.f32 %v4433, %v2008
        %v4457 = vmul.f32 %v4433, %v2013
        %v4474 = vrot.slane %v4442, 1
        %v4475 = vrot.slane %v4443, 1
        %v4476 = vsel %vm659, %v4474, %v4475
        %v4477 = vrot.slane %v4444, 1
        %v4478 = vrot.slane %v4445, 1
        %v4479 = vsel %vm659, %v4477, %v4478
        %v4480 = vrot.slane %v4446, 1
        %v4481 = vrot.slane %v4447, 1
        %v4482 = vsel %vm659, %v4480, %v4481
        %v4483 = vrot.slane %v4448, 1
        %v4484 = vrot.slane %v4449, 1
        %v4485 = vsel %vm659, %v4483, %v4484
        %v4486 = vrot.slane %v4450, 1
        %v4487 = vrot.slane %v4451, 1
        %v4488 = vsel %vm659, %v4486, %v4487
        %v4489 = vrot.slane %v4452, 1
        %v4490 = vrot.slane %v4453, 1
        %v4491 = vsel %vm659, %v4489, %v4490
        %v4492 = vrot.slane %v4454, 1
        %v4493 = vrot.slane %v4455, 1
        %v4494 = vsel %vm659, %v4492, %v4493
        %v4495 = vrot.slane %v4456, 1
        %v4496 = vrot.slane %v4457, 1
        %v4497 = vsel %vm659, %v4495, %v4496
        %v4514 = vadd.f32 %v4369, %v4476
        %v4515 = vadd.f32 %v4370, %v4475
        %v4516 = vadd.f32 %v4371, %v4479
        %v4517 = vadd.f32 %v4372, %v4478
        %v4518 = vadd.f32 %v4373, %v4482
        %v4519 = vadd.f32 %v4374, %v4481
        %v4520 = vadd.f32 %v4375, %v4485
        %v4521 = vadd.f32 %v4376, %v4484
        %v4522 = vadd.f32 %v4377, %v4488
        %v4523 = vadd.f32 %v4378, %v4487
        %v4524 = vadd.f32 %v4379, %v4491
        %v4525 = vadd.f32 %v4380, %v4490
        %v4526 = vadd.f32 %v4381, %v4494
        %v4527 = vadd.f32 %v4382, %v4493
        %v4528 = vadd.f32 %v4383, %v4497
        %v4529 = vadd.f32 %v4384, %v4496
        %s4530 = scalar_lea.vmem %s5, 176
        %v4531 = vld [vmem:[%s4530] sm:$0x1]
        %v4532 = vld [vmem:[%s4530 + $0x1] sm:$0x1]
        %v4533 = vld [vmem:[%s4530 + $0x2] sm:$0x1]
        %v4534 = vld [vmem:[%s4530 + $0x3] sm:$0x1]
        %v4535 = vld [vmem:[%s4530 + $0x4] sm:$0x1]
        %v4536 = vld [vmem:[%s4530 + $0x5] sm:$0x1]
        %v4537 = vld [vmem:[%s4530 + $0x6] sm:$0x1]
        %v4538 = vld [vmem:[%s4530 + $0x7] sm:$0x1]
        %v4547 = vlaneseq
        %v4548 = vshrl.u32 %v4547, 7
        %v4549 = vsub.s32 0, %v4548
        %v4550 = vrot.slane %v4531, %v4549
        %v4551 = vlaneseq
        %v4552 = vshrl.u32 %v4551, 7
        %v4553 = vsub.s32 0, %v4552
        %v4554 = vrot.slane %v4532, %v4553
        %v4555 = vlaneseq
        %v4556 = vshrl.u32 %v4555, 7
        %v4557 = vsub.s32 0, %v4556
        %v4558 = vrot.slane %v4533, %v4557
        %v4559 = vlaneseq
        %v4560 = vshrl.u32 %v4559, 7
        %v4561 = vsub.s32 0, %v4560
        %v4562 = vrot.slane %v4534, %v4561
        %v4563 = vlaneseq
        %v4564 = vshrl.u32 %v4563, 7
        %v4565 = vsub.s32 0, %v4564
        %v4566 = vrot.slane %v4535, %v4565
        %v4567 = vlaneseq
        %v4568 = vshrl.u32 %v4567, 7
        %v4569 = vsub.s32 0, %v4568
        %v4570 = vrot.slane %v4536, %v4569
        %v4571 = vlaneseq
        %v4572 = vshrl.u32 %v4571, 7
        %v4573 = vsub.s32 0, %v4572
        %v4574 = vrot.slane %v4537, %v4573
        %v4575 = vlaneseq
        %v4576 = vshrl.u32 %v4575, 7
        %v4577 = vsub.s32 0, %v4576
        %v4578 = vrot.slane %v4538, %v4577
        %v4587 = vrot.slane %v2008, 1
        %v4588 = vrot.slane %v2013, 1
        %v4589 = vsel %vm659, %v4587, %v4588
        %4590 = vrot.lane.b32.xlu0 %v4589, 127
        %v4591 = vpop.permute.xlu0 %4590
        %4592 = vrot.lane.b32.xlu0 %v4588, 127
        %v4593 = vpop.permute.xlu0 %4592
        %v4596 = vmul.f32 %v4550, %v4591
        %v4597 = vmul.f32 %v4550, %v4593
        %v4598 = vmul.f32 %v4554, %v4591
        %v4599 = vmul.f32 %v4554, %v4593
        %v4600 = vmul.f32 %v4558, %v4591
        %v4601 = vmul.f32 %v4558, %v4593
        %v4602 = vmul.f32 %v4562, %v4591
        %v4603 = vmul.f32 %v4562, %v4593
        %v4604 = vmul.f32 %v4566, %v4591
        %v4605 = vmul.f32 %v4566, %v4593
        %v4606 = vmul.f32 %v4570, %v4591
        %v4607 = vmul.f32 %v4570, %v4593
        %v4608 = vmul.f32 %v4574, %v4591
        %v4609 = vmul.f32 %v4574, %v4593
        %v4610 = vmul.f32 %v4578, %v4591
        %v4611 = vmul.f32 %v4578, %v4593
        %v4612 = vadd.f32 %v4514, %v4596
        %v4613 = vadd.f32 %v4515, %v4597
        %v4614 = vadd.f32 %v4516, %v4598
        %v4615 = vadd.f32 %v4517, %v4599
        %v4616 = vadd.f32 %v4518, %v4600
        %v4617 = vadd.f32 %v4519, %v4601
        %v4618 = vadd.f32 %v4520, %v4602
        %v4619 = vadd.f32 %v4521, %v4603
        %v4620 = vadd.f32 %v4522, %v4604
        %v4621 = vadd.f32 %v4523, %v4605
        %v4622 = vadd.f32 %v4524, %v4606
        %v4623 = vadd.f32 %v4525, %v4607
        %v4624 = vadd.f32 %v4526, %v4608
        %v4625 = vadd.f32 %v4527, %v4609
        %v4626 = vadd.f32 %v4528, %v4610
        %v4627 = vadd.f32 %v4529, %v4611
        %s4628 = scalar_lea.vmem %s5, 184
        %v4629 = vld [vmem:[%s4628] sm:$0x1]
        %v4630 = vld [vmem:[%s4628 + $0x1] sm:$0x1]
        %v4631 = vld [vmem:[%s4628 + $0x2] sm:$0x1]
        %v4632 = vld [vmem:[%s4628 + $0x3] sm:$0x1]
        %v4633 = vld [vmem:[%s4628 + $0x4] sm:$0x1]
        %v4634 = vld [vmem:[%s4628 + $0x5] sm:$0x1]
        %v4635 = vld [vmem:[%s4628 + $0x6] sm:$0x1]
        %v4636 = vld [vmem:[%s4628 + $0x7] sm:$0x1]
        %v4645 = vlaneseq
        %v4646 = vshrl.u32 %v4645, 7
        %v4647 = vsub.s32 0, %v4646
        %v4648 = vrot.slane %v4629, %v4647
        %v4649 = vlaneseq
        %v4650 = vshrl.u32 %v4649, 7
        %v4651 = vsub.s32 0, %v4650
        %v4652 = vrot.slane %v4630, %v4651
        %v4653 = vlaneseq
        %v4654 = vshrl.u32 %v4653, 7
        %v4655 = vsub.s32 0, %v4654
        %v4656 = vrot.slane %v4631, %v4655
        %v4657 = vlaneseq
        %v4658 = vshrl.u32 %v4657, 7
        %v4659 = vsub.s32 0, %v4658
        %v4660 = vrot.slane %v4632, %v4659
        %v4661 = vlaneseq
        %v4662 = vshrl.u32 %v4661, 7
        %v4663 = vsub.s32 0, %v4662
        %v4664 = vrot.slane %v4633, %v4663
        %v4665 = vlaneseq
        %v4666 = vshrl.u32 %v4665, 7
        %v4667 = vsub.s32 0, %v4666
        %v4668 = vrot.slane %v4634, %v4667
        %v4669 = vlaneseq
        %v4670 = vshrl.u32 %v4669, 7
        %v4671 = vsub.s32 0, %v4670
        %v4672 = vrot.slane %v4635, %v4671
        %v4673 = vlaneseq
        %v4674 = vshrl.u32 %v4673, 7
        %v4675 = vsub.s32 0, %v4674
        %v4676 = vrot.slane %v4636, %v4675
        %4685 = vrot.lane.b32.xlu0 %v4589, 126
        %v4686 = vpop.permute.xlu0 %4685
        %4687 = vrot.lane.b32.xlu0 %v4588, 126
        %v4688 = vpop.permute.xlu0 %4687
        %v4691 = vmul.f32 %v4648, %v4686
        %v4692 = vmul.f32 %v4648, %v4688
        %v4693 = vmul.f32 %v4652, %v4686
        %v4694 = vmul.f32 %v4652, %v4688
        %v4695 = vmul.f32 %v4656, %v4686
        %v4696 = vmul.f32 %v4656, %v4688
        %v4697 = vmul.f32 %v4660, %v4686
        %v4698 = vmul.f32 %v4660, %v4688
        %v4699 = vmul.f32 %v4664, %v4686
        %v4700 = vmul.f32 %v4664, %v4688
        %v4701 = vmul.f32 %v4668, %v4686
        %v4702 = vmul.f32 %v4668, %v4688
        %v4703 = vmul.f32 %v4672, %v4686
        %v4704 = vmul.f32 %v4672, %v4688
        %v4705 = vmul.f32 %v4676, %v4686
        %v4706 = vmul.f32 %v4676, %v4688
        %v4707 = vadd.f32 %v4612, %v4691
        %v4708 = vadd.f32 %v4613, %v4692
        %v4709 = vadd.f32 %v4614, %v4693
        %v4710 = vadd.f32 %v4615, %v4694
        %v4711 = vadd.f32 %v4616, %v4695
        %v4712 = vadd.f32 %v4617, %v4696
        %v4713 = vadd.f32 %v4618, %v4697
        %v4714 = vadd.f32 %v4619, %v4698
        %v4715 = vadd.f32 %v4620, %v4699
        %v4716 = vadd.f32 %v4621, %v4700
        %v4717 = vadd.f32 %v4622, %v4701
        %v4718 = vadd.f32 %v4623, %v4702
        %v4719 = vadd.f32 %v4624, %v4703
        %v4720 = vadd.f32 %v4625, %v4704
        %v4721 = vadd.f32 %v4626, %v4705
        %v4722 = vadd.f32 %v4627, %v4706
        %s4723 = scalar_lea.vmem %s5, 192
        %v4724 = vld [vmem:[%s4723] sm:$0x1]
        %v4725 = vld [vmem:[%s4723 + $0x1] sm:$0x1]
        %v4726 = vld [vmem:[%s4723 + $0x2] sm:$0x1]
        %v4727 = vld [vmem:[%s4723 + $0x3] sm:$0x1]
        %v4728 = vld [vmem:[%s4723 + $0x4] sm:$0x1]
        %v4729 = vld [vmem:[%s4723 + $0x5] sm:$0x1]
        %v4730 = vld [vmem:[%s4723 + $0x6] sm:$0x1]
        %v4731 = vld [vmem:[%s4723 + $0x7] sm:$0x1]
        %v4740 = vlaneseq
        %v4741 = vshrl.u32 %v4740, 7
        %v4742 = vsub.s32 0, %v4741
        %v4743 = vrot.slane %v4724, %v4742
        %v4744 = vlaneseq
        %v4745 = vshrl.u32 %v4744, 7
        %v4746 = vsub.s32 0, %v4745
        %v4747 = vrot.slane %v4725, %v4746
        %v4748 = vlaneseq
        %v4749 = vshrl.u32 %v4748, 7
        %v4750 = vsub.s32 0, %v4749
        %v4751 = vrot.slane %v4726, %v4750
        %v4752 = vlaneseq
        %v4753 = vshrl.u32 %v4752, 7
        %v4754 = vsub.s32 0, %v4753
        %v4755 = vrot.slane %v4727, %v4754
        %v4756 = vlaneseq
        %v4757 = vshrl.u32 %v4756, 7
        %v4758 = vsub.s32 0, %v4757
        %v4759 = vrot.slane %v4728, %v4758
        %v4760 = vlaneseq
        %v4761 = vshrl.u32 %v4760, 7
        %v4762 = vsub.s32 0, %v4761
        %v4763 = vrot.slane %v4729, %v4762
        %v4764 = vlaneseq
        %v4765 = vshrl.u32 %v4764, 7
        %v4766 = vsub.s32 0, %v4765
        %v4767 = vrot.slane %v4730, %v4766
        %v4768 = vlaneseq
        %v4769 = vshrl.u32 %v4768, 7
        %v4770 = vsub.s32 0, %v4769
        %v4771 = vrot.slane %v4731, %v4770
        %v4780 = vmul.f32 %v4743, %v2008
        %v4781 = vmul.f32 %v4743, %v2013
        %v4782 = vmul.f32 %v4747, %v2008
        %v4783 = vmul.f32 %v4747, %v2013
        %v4784 = vmul.f32 %v4751, %v2008
        %v4785 = vmul.f32 %v4751, %v2013
        %v4786 = vmul.f32 %v4755, %v2008
        %v4787 = vmul.f32 %v4755, %v2013
        %v4788 = vmul.f32 %v4759, %v2008
        %v4789 = vmul.f32 %v4759, %v2013
        %v4790 = vmul.f32 %v4763, %v2008
        %v4791 = vmul.f32 %v4763, %v2013
        %v4792 = vmul.f32 %v4767, %v2008
        %v4793 = vmul.f32 %v4767, %v2013
        %v4794 = vmul.f32 %v4771, %v2008
        %v4795 = vmul.f32 %v4771, %v2013
        %v4812 = vrot.slane %v4780, 2
        %v4813 = vrot.slane %v4781, 2
        %v4814 = vsel %vm934, %v4812, %v4813
        %v4815 = vrot.slane %v4782, 2
        %v4816 = vrot.slane %v4783, 2
        %v4817 = vsel %vm934, %v4815, %v4816
        %v4818 = vrot.slane %v4784, 2
        %v4819 = vrot.slane %v4785, 2
        %v4820 = vsel %vm934, %v4818, %v4819
        %v4821 = vrot.slane %v4786, 2
        %v4822 = vrot.slane %v4787, 2
        %v4823 = vsel %vm934, %v4821, %v4822
        %v4824 = vrot.slane %v4788, 2
        %v4825 = vrot.slane %v4789, 2
        %v4826 = vsel %vm934, %v4824, %v4825
        %v4827 = vrot.slane %v4790, 2
        %v4828 = vrot.slane %v4791, 2
        %v4829 = vsel %vm934, %v4827, %v4828
        %v4830 = vrot.slane %v4792, 2
        %v4831 = vrot.slane %v4793, 2
        %v4832 = vsel %vm934, %v4830, %v4831
        %v4833 = vrot.slane %v4794, 2
        %v4834 = vrot.slane %v4795, 2
        %v4835 = vsel %vm934, %v4833, %v4834
        %v4852 = vadd.f32 %v4707, %v4814
        %v4853 = vadd.f32 %v4708, %v4813
        %v4854 = vadd.f32 %v4709, %v4817
        %v4855 = vadd.f32 %v4710, %v4816
        %v4856 = vadd.f32 %v4711, %v4820
        %v4857 = vadd.f32 %v4712, %v4819
        %v4858 = vadd.f32 %v4713, %v4823
        %v4859 = vadd.f32 %v4714, %v4822
        %v4860 = vadd.f32 %v4715, %v4826
        %v4861 = vadd.f32 %v4716, %v4825
        %v4862 = vadd.f32 %v4717, %v4829
        %v4863 = vadd.f32 %v4718, %v4828
        %v4864 = vadd.f32 %v4719, %v4832
        %v4865 = vadd.f32 %v4720, %v4831
        %v4866 = vadd.f32 %v4721, %v4835
        %v4867 = vadd.f32 %v4722, %v4834
        %s4868 = scalar_lea.vmem %s5, 200
        %v4869 = vld [vmem:[%s4868] sm:$0x1]
        %v4870 = vld [vmem:[%s4868 + $0x1] sm:$0x1]
        %v4871 = vld [vmem:[%s4868 + $0x2] sm:$0x1]
        %v4872 = vld [vmem:[%s4868 + $0x3] sm:$0x1]
        %v4873 = vld [vmem:[%s4868 + $0x4] sm:$0x1]
        %v4874 = vld [vmem:[%s4868 + $0x5] sm:$0x1]
        %v4875 = vld [vmem:[%s4868 + $0x6] sm:$0x1]
        %v4876 = vld [vmem:[%s4868 + $0x7] sm:$0x1]
        %v4885 = vlaneseq
        %v4886 = vshrl.u32 %v4885, 7
        %v4887 = vsub.s32 0, %v4886
        %v4888 = vrot.slane %v4869, %v4887
        %v4889 = vlaneseq
        %v4890 = vshrl.u32 %v4889, 7
        %v4891 = vsub.s32 0, %v4890
        %v4892 = vrot.slane %v4870, %v4891
        %v4893 = vlaneseq
        %v4894 = vshrl.u32 %v4893, 7
        %v4895 = vsub.s32 0, %v4894
        %v4896 = vrot.slane %v4871, %v4895
        %v4897 = vlaneseq
        %v4898 = vshrl.u32 %v4897, 7
        %v4899 = vsub.s32 0, %v4898
        %v4900 = vrot.slane %v4872, %v4899
        %v4901 = vlaneseq
        %v4902 = vshrl.u32 %v4901, 7
        %v4903 = vsub.s32 0, %v4902
        %v4904 = vrot.slane %v4873, %v4903
        %v4905 = vlaneseq
        %v4906 = vshrl.u32 %v4905, 7
        %v4907 = vsub.s32 0, %v4906
        %v4908 = vrot.slane %v4874, %v4907
        %v4909 = vlaneseq
        %v4910 = vshrl.u32 %v4909, 7
        %v4911 = vsub.s32 0, %v4910
        %v4912 = vrot.slane %v4875, %v4911
        %v4913 = vlaneseq
        %v4914 = vshrl.u32 %v4913, 7
        %v4915 = vsub.s32 0, %v4914
        %v4916 = vrot.slane %v4876, %v4915
        %v4925 = vrot.slane %v2008, 2
        %v4926 = vrot.slane %v2013, 2
        %v4927 = vsel %vm934, %v4925, %v4926
        %4928 = vrot.lane.b32.xlu0 %v4927, 127
        %v4929 = vpop.permute.xlu0 %4928
        %4930 = vrot.lane.b32.xlu0 %v4926, 127
        %v4931 = vpop.permute.xlu0 %4930
        %v4934 = vmul.f32 %v4888, %v4929
        %v4935 = vmul.f32 %v4888, %v4931
        %v4936 = vmul.f32 %v4892, %v4929
        %v4937 = vmul.f32 %v4892, %v4931
        %v4938 = vmul.f32 %v4896, %v4929
        %v4939 = vmul.f32 %v4896, %v4931
        %v4940 = vmul.f32 %v4900, %v4929
        %v4941 = vmul.f32 %v4900, %v4931
        %v4942 = vmul.f32 %v4904, %v4929
        %v4943 = vmul.f32 %v4904, %v4931
        %v4944 = vmul.f32 %v4908, %v4929
        %v4945 = vmul.f32 %v4908, %v4931
        %v4946 = vmul.f32 %v4912, %v4929
        %v4947 = vmul.f32 %v4912, %v4931
        %v4948 = vmul.f32 %v4916, %v4929
        %v4949 = vmul.f32 %v4916, %v4931
        %v4950 = vadd.f32 %v4852, %v4934
        %v4951 = vadd.f32 %v4853, %v4935
        %v4952 = vadd.f32 %v4854, %v4936
        %v4953 = vadd.f32 %v4855, %v4937
        %v4954 = vadd.f32 %v4856, %v4938
        %v4955 = vadd.f32 %v4857, %v4939
        %v4956 = vadd.f32 %v4858, %v4940
        %v4957 = vadd.f32 %v4859, %v4941
        %v4958 = vadd.f32 %v4860, %v4942
        %v4959 = vadd.f32 %v4861, %v4943
        %v4960 = vadd.f32 %v4862, %v4944
        %v4961 = vadd.f32 %v4863, %v4945
        %v4962 = vadd.f32 %v4864, %v4946
        %v4963 = vadd.f32 %v4865, %v4947
        %v4964 = vadd.f32 %v4866, %v4948
        %v4965 = vadd.f32 %v4867, %v4949
        %s4966 = scalar_lea.vmem %s5, 208
        %v4967 = vld [vmem:[%s4966] sm:$0x1]
        %v4968 = vld [vmem:[%s4966 + $0x1] sm:$0x1]
        %v4969 = vld [vmem:[%s4966 + $0x2] sm:$0x1]
        %v4970 = vld [vmem:[%s4966 + $0x3] sm:$0x1]
        %v4971 = vld [vmem:[%s4966 + $0x4] sm:$0x1]
        %v4972 = vld [vmem:[%s4966 + $0x5] sm:$0x1]
        %v4973 = vld [vmem:[%s4966 + $0x6] sm:$0x1]
        %v4974 = vld [vmem:[%s4966 + $0x7] sm:$0x1]
        %v4983 = vlaneseq
        %v4984 = vshrl.u32 %v4983, 7
        %v4985 = vsub.s32 0, %v4984
        %v4986 = vrot.slane %v4967, %v4985
        %v4987 = vlaneseq
        %v4988 = vshrl.u32 %v4987, 7
        %v4989 = vsub.s32 0, %v4988
        %v4990 = vrot.slane %v4968, %v4989
        %v4991 = vlaneseq
        %v4992 = vshrl.u32 %v4991, 7
        %v4993 = vsub.s32 0, %v4992
        %v4994 = vrot.slane %v4969, %v4993
        %v4995 = vlaneseq
        %v4996 = vshrl.u32 %v4995, 7
        %v4997 = vsub.s32 0, %v4996
        %v4998 = vrot.slane %v4970, %v4997
        %v4999 = vlaneseq
        %v5000 = vshrl.u32 %v4999, 7
        %v5001 = vsub.s32 0, %v5000
        %v5002 = vrot.slane %v4971, %v5001
        %v5003 = vlaneseq
        %v5004 = vshrl.u32 %v5003, 7
        %v5005 = vsub.s32 0, %v5004
        %v5006 = vrot.slane %v4972, %v5005
        %v5007 = vlaneseq
        %v5008 = vshrl.u32 %v5007, 7
        %v5009 = vsub.s32 0, %v5008
        %v5010 = vrot.slane %v4973, %v5009
        %v5011 = vlaneseq
        %v5012 = vshrl.u32 %v5011, 7
        %v5013 = vsub.s32 0, %v5012
        %v5014 = vrot.slane %v4974, %v5013
        %5023 = vrot.lane.b32.xlu0 %v4927, 126
        %v5024 = vpop.permute.xlu0 %5023
        %5025 = vrot.lane.b32.xlu0 %v4926, 126
        %v5026 = vpop.permute.xlu0 %5025
        %v5029 = vmul.f32 %v4986, %v5024
        %v5030 = vmul.f32 %v4986, %v5026
        %v5031 = vmul.f32 %v4990, %v5024
        %v5032 = vmul.f32 %v4990, %v5026
        %v5033 = vmul.f32 %v4994, %v5024
        %v5034 = vmul.f32 %v4994, %v5026
        %v5035 = vmul.f32 %v4998, %v5024
        %v5036 = vmul.f32 %v4998, %v5026
        %v5037 = vmul.f32 %v5002, %v5024
        %v5038 = vmul.f32 %v5002, %v5026
        %v5039 = vmul.f32 %v5006, %v5024
        %v5040 = vmul.f32 %v5006, %v5026
        %v5041 = vmul.f32 %v5010, %v5024
        %v5042 = vmul.f32 %v5010, %v5026
        %v5043 = vmul.f32 %v5014, %v5024
        %v5044 = vmul.f32 %v5014, %v5026
        %v5045 = vadd.f32 %v4950, %v5029
        %v5046 = vadd.f32 %v4951, %v5030
        %v5047 = vadd.f32 %v4952, %v5031
        %v5048 = vadd.f32 %v4953, %v5032
        %v5049 = vadd.f32 %v4954, %v5033
        %v5050 = vadd.f32 %v4955, %v5034
        %v5051 = vadd.f32 %v4956, %v5035
        %v5052 = vadd.f32 %v4957, %v5036
        %v5053 = vadd.f32 %v4958, %v5037
        %v5054 = vadd.f32 %v4959, %v5038
        %v5055 = vadd.f32 %v4960, %v5039
        %v5056 = vadd.f32 %v4961, %v5040
        %v5057 = vadd.f32 %v4962, %v5041
        %v5058 = vadd.f32 %v4963, %v5042
        %v5059 = vadd.f32 %v4964, %v5043
        %v5060 = vadd.f32 %v4965, %v5044
        %s5061 = scalar_lea.vmem %s5, 216
        %v5062 = vld [vmem:[%s5061] sm:$0x1]
        %v5063 = vld [vmem:[%s5061 + $0x1] sm:$0x1]
        %v5064 = vld [vmem:[%s5061 + $0x2] sm:$0x1]
        %v5065 = vld [vmem:[%s5061 + $0x3] sm:$0x1]
        %v5066 = vld [vmem:[%s5061 + $0x4] sm:$0x1]
        %v5067 = vld [vmem:[%s5061 + $0x5] sm:$0x1]
        %v5068 = vld [vmem:[%s5061 + $0x6] sm:$0x1]
        %v5069 = vld [vmem:[%s5061 + $0x7] sm:$0x1]
        %v5078 = vlaneseq
        %v5079 = vshrl.u32 %v5078, 7
        %v5080 = vsub.s32 0, %v5079
        %v5081 = vrot.slane %v5062, %v5080
        %v5082 = vlaneseq
        %v5083 = vshrl.u32 %v5082, 7
        %v5084 = vsub.s32 0, %v5083
        %v5085 = vrot.slane %v5063, %v5084
        %v5086 = vlaneseq
        %v5087 = vshrl.u32 %v5086, 7
        %v5088 = vsub.s32 0, %v5087
        %v5089 = vrot.slane %v5064, %v5088
        %v5090 = vlaneseq
        %v5091 = vshrl.u32 %v5090, 7
        %v5092 = vsub.s32 0, %v5091
        %v5093 = vrot.slane %v5065, %v5092
        %v5094 = vlaneseq
        %v5095 = vshrl.u32 %v5094, 7
        %v5096 = vsub.s32 0, %v5095
        %v5097 = vrot.slane %v5066, %v5096
        %v5098 = vlaneseq
        %v5099 = vshrl.u32 %v5098, 7
        %v5100 = vsub.s32 0, %v5099
        %v5101 = vrot.slane %v5067, %v5100
        %v5102 = vlaneseq
        %v5103 = vshrl.u32 %v5102, 7
        %v5104 = vsub.s32 0, %v5103
        %v5105 = vrot.slane %v5068, %v5104
        %v5106 = vlaneseq
        %v5107 = vshrl.u32 %v5106, 7
        %v5108 = vsub.s32 0, %v5107
        %v5109 = vrot.slane %v5069, %v5108
        %v5118 = vmul.f32 %v5081, %v2183
        %v5119 = vmul.f32 %v5081, %v2188
        %v5120 = vmul.f32 %v5085, %v2183
        %v5121 = vmul.f32 %v5085, %v2188
        %v5122 = vmul.f32 %v5089, %v2183
        %v5123 = vmul.f32 %v5089, %v2188
        %v5124 = vmul.f32 %v5093, %v2183
        %v5125 = vmul.f32 %v5093, %v2188
        %v5126 = vmul.f32 %v5097, %v2183
        %v5127 = vmul.f32 %v5097, %v2188
        %v5128 = vmul.f32 %v5101, %v2183
        %v5129 = vmul.f32 %v5101, %v2188
        %v5130 = vmul.f32 %v5105, %v2183
        %v5131 = vmul.f32 %v5105, %v2188
        %v5132 = vmul.f32 %v5109, %v2183
        %v5133 = vmul.f32 %v5109, %v2188
        %v5134 = vadd.f32 %v5045, %v5118
        %v5135 = vadd.f32 %v5046, %v5119
        %v5136 = vadd.f32 %v5047, %v5120
        %v5137 = vadd.f32 %v5048, %v5121
        %v5138 = vadd.f32 %v5049, %v5122
        %v5139 = vadd.f32 %v5050, %v5123
        %v5140 = vadd.f32 %v5051, %v5124
        %v5141 = vadd.f32 %v5052, %v5125
        %v5142 = vadd.f32 %v5053, %v5126
        %v5143 = vadd.f32 %v5054, %v5127
        %v5144 = vadd.f32 %v5055, %v5128
        %v5145 = vadd.f32 %v5056, %v5129
        %v5146 = vadd.f32 %v5057, %v5130
        %v5147 = vadd.f32 %v5058, %v5131
        %v5148 = vadd.f32 %v5059, %v5132
        %v5149 = vadd.f32 %v5060, %v5133
        %s5150 = scalar_lea.vmem %s5, 224
        %v5151 = vld [vmem:[%s5150] sm:$0x1]
        %v5152 = vld [vmem:[%s5150 + $0x1] sm:$0x1]
        %v5153 = vld [vmem:[%s5150 + $0x2] sm:$0x1]
        %v5154 = vld [vmem:[%s5150 + $0x3] sm:$0x1]
        %v5155 = vld [vmem:[%s5150 + $0x4] sm:$0x1]
        %v5156 = vld [vmem:[%s5150 + $0x5] sm:$0x1]
        %v5157 = vld [vmem:[%s5150 + $0x6] sm:$0x1]
        %v5158 = vld [vmem:[%s5150 + $0x7] sm:$0x1]
        %v5167 = vlaneseq
        %v5168 = vshrl.u32 %v5167, 7
        %v5169 = vsub.s32 0, %v5168
        %v5170 = vrot.slane %v5151, %v5169
        %v5171 = vlaneseq
        %v5172 = vshrl.u32 %v5171, 7
        %v5173 = vsub.s32 0, %v5172
        %v5174 = vrot.slane %v5152, %v5173
        %v5175 = vlaneseq
        %v5176 = vshrl.u32 %v5175, 7
        %v5177 = vsub.s32 0, %v5176
        %v5178 = vrot.slane %v5153, %v5177
        %v5179 = vlaneseq
        %v5180 = vshrl.u32 %v5179, 7
        %v5181 = vsub.s32 0, %v5180
        %v5182 = vrot.slane %v5154, %v5181
        %v5183 = vlaneseq
        %v5184 = vshrl.u32 %v5183, 7
        %v5185 = vsub.s32 0, %v5184
        %v5186 = vrot.slane %v5155, %v5185
        %v5187 = vlaneseq
        %v5188 = vshrl.u32 %v5187, 7
        %v5189 = vsub.s32 0, %v5188
        %v5190 = vrot.slane %v5156, %v5189
        %v5191 = vlaneseq
        %v5192 = vshrl.u32 %v5191, 7
        %v5193 = vsub.s32 0, %v5192
        %v5194 = vrot.slane %v5157, %v5193
        %v5195 = vlaneseq
        %v5196 = vshrl.u32 %v5195, 7
        %v5197 = vsub.s32 0, %v5196
        %v5198 = vrot.slane %v5158, %v5197
        %5209 = vrot.lane.b32.xlu0 %v2183, 127
        %v5210 = vpop.permute.xlu0 %5209
        %5211 = vrot.lane.b32.xlu0 %v2188, 127
        %v5212 = vpop.permute.xlu0 %5211
        %v5215 = vmul.f32 %v5170, %v5210
        %v5216 = vmul.f32 %v5170, %v5212
        %v5217 = vmul.f32 %v5174, %v5210
        %v5218 = vmul.f32 %v5174, %v5212
        %v5219 = vmul.f32 %v5178, %v5210
        %v5220 = vmul.f32 %v5178, %v5212
        %v5221 = vmul.f32 %v5182, %v5210
        %v5222 = vmul.f32 %v5182, %v5212
        %v5223 = vmul.f32 %v5186, %v5210
        %v5224 = vmul.f32 %v5186, %v5212
        %v5225 = vmul.f32 %v5190, %v5210
        %v5226 = vmul.f32 %v5190, %v5212
        %v5227 = vmul.f32 %v5194, %v5210
        %v5228 = vmul.f32 %v5194, %v5212
        %v5229 = vmul.f32 %v5198, %v5210
        %v5230 = vmul.f32 %v5198, %v5212
        %v5231 = vadd.f32 %v5134, %v5215
        %v5232 = vadd.f32 %v5135, %v5216
        %v5233 = vadd.f32 %v5136, %v5217
        %v5234 = vadd.f32 %v5137, %v5218
        %v5235 = vadd.f32 %v5138, %v5219
        %v5236 = vadd.f32 %v5139, %v5220
        %v5237 = vadd.f32 %v5140, %v5221
        %v5238 = vadd.f32 %v5141, %v5222
        %v5239 = vadd.f32 %v5142, %v5223
        %v5240 = vadd.f32 %v5143, %v5224
        %v5241 = vadd.f32 %v5144, %v5225
        %v5242 = vadd.f32 %v5145, %v5226
        %v5243 = vadd.f32 %v5146, %v5227
        %v5244 = vadd.f32 %v5147, %v5228
        %v5245 = vadd.f32 %v5148, %v5229
        %v5246 = vadd.f32 %v5149, %v5230
        %s5247 = scalar_lea.vmem %s5, 232
        %v5248 = vld [vmem:[%s5247] sm:$0x1]
        %v5249 = vld [vmem:[%s5247 + $0x1] sm:$0x1]
        %v5250 = vld [vmem:[%s5247 + $0x2] sm:$0x1]
        %v5251 = vld [vmem:[%s5247 + $0x3] sm:$0x1]
        %v5252 = vld [vmem:[%s5247 + $0x4] sm:$0x1]
        %v5253 = vld [vmem:[%s5247 + $0x5] sm:$0x1]
        %v5254 = vld [vmem:[%s5247 + $0x6] sm:$0x1]
        %v5255 = vld [vmem:[%s5247 + $0x7] sm:$0x1]
        %v5264 = vlaneseq
        %v5265 = vshrl.u32 %v5264, 7
        %v5266 = vsub.s32 0, %v5265
        %v5267 = vrot.slane %v5248, %v5266
        %v5268 = vlaneseq
        %v5269 = vshrl.u32 %v5268, 7
        %v5270 = vsub.s32 0, %v5269
        %v5271 = vrot.slane %v5249, %v5270
        %v5272 = vlaneseq
        %v5273 = vshrl.u32 %v5272, 7
        %v5274 = vsub.s32 0, %v5273
        %v5275 = vrot.slane %v5250, %v5274
        %v5276 = vlaneseq
        %v5277 = vshrl.u32 %v5276, 7
        %v5278 = vsub.s32 0, %v5277
        %v5279 = vrot.slane %v5251, %v5278
        %v5280 = vlaneseq
        %v5281 = vshrl.u32 %v5280, 7
        %v5282 = vsub.s32 0, %v5281
        %v5283 = vrot.slane %v5252, %v5282
        %v5284 = vlaneseq
        %v5285 = vshrl.u32 %v5284, 7
        %v5286 = vsub.s32 0, %v5285
        %v5287 = vrot.slane %v5253, %v5286
        %v5288 = vlaneseq
        %v5289 = vshrl.u32 %v5288, 7
        %v5290 = vsub.s32 0, %v5289
        %v5291 = vrot.slane %v5254, %v5290
        %v5292 = vlaneseq
        %v5293 = vshrl.u32 %v5292, 7
        %v5294 = vsub.s32 0, %v5293
        %v5295 = vrot.slane %v5255, %v5294
        %5304 = vrot.lane.b32.xlu0 %v2183, 126
        %v5305 = vpop.permute.xlu0 %5304
        %5306 = vrot.lane.b32.xlu0 %v2188, 126
        %v5307 = vpop.permute.xlu0 %5306
        %v5310 = vmul.f32 %v5267, %v5305
        %v5311 = vmul.f32 %v5267, %v5307
        %v5312 = vmul.f32 %v5271, %v5305
        %v5313 = vmul.f32 %v5271, %v5307
        %v5314 = vmul.f32 %v5275, %v5305
        %v5315 = vmul.f32 %v5275, %v5307
        %v5316 = vmul.f32 %v5279, %v5305
        %v5317 = vmul.f32 %v5279, %v5307
        %v5318 = vmul.f32 %v5283, %v5305
        %v5319 = vmul.f32 %v5283, %v5307
        %v5320 = vmul.f32 %v5287, %v5305
        %v5321 = vmul.f32 %v5287, %v5307
        %v5322 = vmul.f32 %v5291, %v5305
        %v5323 = vmul.f32 %v5291, %v5307
        %v5324 = vmul.f32 %v5295, %v5305
        %v5325 = vmul.f32 %v5295, %v5307
        %v5326 = vadd.f32 %v5231, %v5310
        %v5327 = vadd.f32 %v5232, %v5311
        %v5328 = vadd.f32 %v5233, %v5312
        %v5329 = vadd.f32 %v5234, %v5313
        %v5330 = vadd.f32 %v5235, %v5314
        %v5331 = vadd.f32 %v5236, %v5315
        %v5332 = vadd.f32 %v5237, %v5316
        %v5333 = vadd.f32 %v5238, %v5317
        %v5334 = vadd.f32 %v5239, %v5318
        %v5335 = vadd.f32 %v5240, %v5319
        %v5336 = vadd.f32 %v5241, %v5320
        %v5337 = vadd.f32 %v5242, %v5321
        %v5338 = vadd.f32 %v5243, %v5322
        %v5339 = vadd.f32 %v5244, %v5323
        %v5340 = vadd.f32 %v5245, %v5324
        %v5341 = vadd.f32 %v5246, %v5325
        %s5342 = scalar_lea.vmem %s5, 240
        %v5343 = vld [vmem:[%s5342] sm:$0x1]
        %v5344 = vld [vmem:[%s5342 + $0x1] sm:$0x1]
        %v5345 = vld [vmem:[%s5342 + $0x2] sm:$0x1]
        %v5346 = vld [vmem:[%s5342 + $0x3] sm:$0x1]
        %v5347 = vld [vmem:[%s5342 + $0x4] sm:$0x1]
        %v5348 = vld [vmem:[%s5342 + $0x5] sm:$0x1]
        %v5349 = vld [vmem:[%s5342 + $0x6] sm:$0x1]
        %v5350 = vld [vmem:[%s5342 + $0x7] sm:$0x1]
        %v5359 = vlaneseq
        %v5360 = vshrl.u32 %v5359, 7
        %v5361 = vsub.s32 0, %v5360
        %v5362 = vrot.slane %v5343, %v5361
        %v5363 = vlaneseq
        %v5364 = vshrl.u32 %v5363, 7
        %v5365 = vsub.s32 0, %v5364
        %v5366 = vrot.slane %v5344, %v5365
        %v5367 = vlaneseq
        %v5368 = vshrl.u32 %v5367, 7
        %v5369 = vsub.s32 0, %v5368
        %v5370 = vrot.slane %v5345, %v5369
        %v5371 = vlaneseq
        %v5372 = vshrl.u32 %v5371, 7
        %v5373 = vsub.s32 0, %v5372
        %v5374 = vrot.slane %v5346, %v5373
        %v5375 = vlaneseq
        %v5376 = vshrl.u32 %v5375, 7
        %v5377 = vsub.s32 0, %v5376
        %v5378 = vrot.slane %v5347, %v5377
        %v5379 = vlaneseq
        %v5380 = vshrl.u32 %v5379, 7
        %v5381 = vsub.s32 0, %v5380
        %v5382 = vrot.slane %v5348, %v5381
        %v5383 = vlaneseq
        %v5384 = vshrl.u32 %v5383, 7
        %v5385 = vsub.s32 0, %v5384
        %v5386 = vrot.slane %v5349, %v5385
        %v5387 = vlaneseq
        %v5388 = vshrl.u32 %v5387, 7
        %v5389 = vsub.s32 0, %v5388
        %v5390 = vrot.slane %v5350, %v5389
        %v5399 = vmul.f32 %v5362, %v2183
        %v5400 = vmul.f32 %v5362, %v2188
        %v5401 = vmul.f32 %v5366, %v2183
        %v5402 = vmul.f32 %v5366, %v2188
        %v5403 = vmul.f32 %v5370, %v2183
        %v5404 = vmul.f32 %v5370, %v2188
        %v5405 = vmul.f32 %v5374, %v2183
        %v5406 = vmul.f32 %v5374, %v2188
        %v5407 = vmul.f32 %v5378, %v2183
        %v5408 = vmul.f32 %v5378, %v2188
        %v5409 = vmul.f32 %v5382, %v2183
        %v5410 = vmul.f32 %v5382, %v2188
        %v5411 = vmul.f32 %v5386, %v2183
        %v5412 = vmul.f32 %v5386, %v2188
        %v5413 = vmul.f32 %v5390, %v2183
        %v5414 = vmul.f32 %v5390, %v2188
        %v5431 = vrot.slane %v5399, 1
        %v5432 = vrot.slane %v5400, 1
        %v5433 = vsel %vm659, %v5431, %v5432
        %v5434 = vrot.slane %v5401, 1
        %v5435 = vrot.slane %v5402, 1
        %v5436 = vsel %vm659, %v5434, %v5435
        %v5437 = vrot.slane %v5403, 1
        %v5438 = vrot.slane %v5404, 1
        %v5439 = vsel %vm659, %v5437, %v5438
        %v5440 = vrot.slane %v5405, 1
        %v5441 = vrot.slane %v5406, 1
        %v5442 = vsel %vm659, %v5440, %v5441
        %v5443 = vrot.slane %v5407, 1
        %v5444 = vrot.slane %v5408, 1
        %v5445 = vsel %vm659, %v5443, %v5444
        %v5446 = vrot.slane %v5409, 1
        %v5447 = vrot.slane %v5410, 1
        %v5448 = vsel %vm659, %v5446, %v5447
        %v5449 = vrot.slane %v5411, 1
        %v5450 = vrot.slane %v5412, 1
        %v5451 = vsel %vm659, %v5449, %v5450
        %v5452 = vrot.slane %v5413, 1
        %v5453 = vrot.slane %v5414, 1
        %v5454 = vsel %vm659, %v5452, %v5453
        %v5471 = vadd.f32 %v5326, %v5433
        %v5472 = vadd.f32 %v5327, %v5432
        %v5473 = vadd.f32 %v5328, %v5436
        %v5474 = vadd.f32 %v5329, %v5435
        %v5475 = vadd.f32 %v5330, %v5439
        %v5476 = vadd.f32 %v5331, %v5438
        %v5477 = vadd.f32 %v5332, %v5442
        %v5478 = vadd.f32 %v5333, %v5441
        %v5479 = vadd.f32 %v5334, %v5445
        %v5480 = vadd.f32 %v5335, %v5444
        %v5481 = vadd.f32 %v5336, %v5448
        %v5482 = vadd.f32 %v5337, %v5447
        %v5483 = vadd.f32 %v5338, %v5451
        %v5484 = vadd.f32 %v5339, %v5450
        %v5485 = vadd.f32 %v5340, %v5454
        %v5486 = vadd.f32 %v5341, %v5453
        %s5487 = scalar_lea.vmem %s5, 248
        %v5488 = vld [vmem:[%s5487] sm:$0x1]
        %v5489 = vld [vmem:[%s5487 + $0x1] sm:$0x1]
        %v5490 = vld [vmem:[%s5487 + $0x2] sm:$0x1]
        %v5491 = vld [vmem:[%s5487 + $0x3] sm:$0x1]
        %v5492 = vld [vmem:[%s5487 + $0x4] sm:$0x1]
        %v5493 = vld [vmem:[%s5487 + $0x5] sm:$0x1]
        %v5494 = vld [vmem:[%s5487 + $0x6] sm:$0x1]
        %v5495 = vld [vmem:[%s5487 + $0x7] sm:$0x1]
        %v5504 = vlaneseq
        %v5505 = vshrl.u32 %v5504, 7
        %v5506 = vsub.s32 0, %v5505
        %v5507 = vrot.slane %v5488, %v5506
        %v5508 = vlaneseq
        %v5509 = vshrl.u32 %v5508, 7
        %v5510 = vsub.s32 0, %v5509
        %v5511 = vrot.slane %v5489, %v5510
        %v5512 = vlaneseq
        %v5513 = vshrl.u32 %v5512, 7
        %v5514 = vsub.s32 0, %v5513
        %v5515 = vrot.slane %v5490, %v5514
        %v5516 = vlaneseq
        %v5517 = vshrl.u32 %v5516, 7
        %v5518 = vsub.s32 0, %v5517
        %v5519 = vrot.slane %v5491, %v5518
        %v5520 = vlaneseq
        %v5521 = vshrl.u32 %v5520, 7
        %v5522 = vsub.s32 0, %v5521
        %v5523 = vrot.slane %v5492, %v5522
        %v5524 = vlaneseq
        %v5525 = vshrl.u32 %v5524, 7
        %v5526 = vsub.s32 0, %v5525
        %v5527 = vrot.slane %v5493, %v5526
        %v5528 = vlaneseq
        %v5529 = vshrl.u32 %v5528, 7
        %v5530 = vsub.s32 0, %v5529
        %v5531 = vrot.slane %v5494, %v5530
        %v5532 = vlaneseq
        %v5533 = vshrl.u32 %v5532, 7
        %v5534 = vsub.s32 0, %v5533
        %v5535 = vrot.slane %v5495, %v5534
        %v5544 = vrot.slane %v2183, 1
        %v5545 = vrot.slane %v2188, 1
        %v5546 = vsel %vm659, %v5544, %v5545
        %5547 = vrot.lane.b32.xlu0 %v5546, 127
        %v5548 = vpop.permute.xlu0 %5547
        %5549 = vrot.lane.b32.xlu0 %v5545, 127
        %v5550 = vpop.permute.xlu0 %5549
        %v5553 = vmul.f32 %v5507, %v5548
        %v5554 = vmul.f32 %v5507, %v5550
        %v5555 = vmul.f32 %v5511, %v5548
        %v5556 = vmul.f32 %v5511, %v5550
        %v5557 = vmul.f32 %v5515, %v5548
        %v5558 = vmul.f32 %v5515, %v5550
        %v5559 = vmul.f32 %v5519, %v5548
        %v5560 = vmul.f32 %v5519, %v5550
        %v5561 = vmul.f32 %v5523, %v5548
        %v5562 = vmul.f32 %v5523, %v5550
        %v5563 = vmul.f32 %v5527, %v5548
        %v5564 = vmul.f32 %v5527, %v5550
        %v5565 = vmul.f32 %v5531, %v5548
        %v5566 = vmul.f32 %v5531, %v5550
        %v5567 = vmul.f32 %v5535, %v5548
        %v5568 = vmul.f32 %v5535, %v5550
        %v5569 = vadd.f32 %v5471, %v5553
        %v5570 = vadd.f32 %v5472, %v5554
        %v5571 = vadd.f32 %v5473, %v5555
        %v5572 = vadd.f32 %v5474, %v5556
        %v5573 = vadd.f32 %v5475, %v5557
        %v5574 = vadd.f32 %v5476, %v5558
        %v5575 = vadd.f32 %v5477, %v5559
        %v5576 = vadd.f32 %v5478, %v5560
        %v5577 = vadd.f32 %v5479, %v5561
        %v5578 = vadd.f32 %v5480, %v5562
        %v5579 = vadd.f32 %v5481, %v5563
        %v5580 = vadd.f32 %v5482, %v5564
        %v5581 = vadd.f32 %v5483, %v5565
        %v5582 = vadd.f32 %v5484, %v5566
        %v5583 = vadd.f32 %v5485, %v5567
        %v5584 = vadd.f32 %v5486, %v5568
        %s5585 = scalar_lea.vmem %s5, 256
        %v5586 = vld [vmem:[%s5585] sm:$0x1]
        %v5587 = vld [vmem:[%s5585 + $0x1] sm:$0x1]
        %v5588 = vld [vmem:[%s5585 + $0x2] sm:$0x1]
        %v5589 = vld [vmem:[%s5585 + $0x3] sm:$0x1]
        %v5590 = vld [vmem:[%s5585 + $0x4] sm:$0x1]
        %v5591 = vld [vmem:[%s5585 + $0x5] sm:$0x1]
        %v5592 = vld [vmem:[%s5585 + $0x6] sm:$0x1]
        %v5593 = vld [vmem:[%s5585 + $0x7] sm:$0x1]
        %v5602 = vlaneseq
        %v5603 = vshrl.u32 %v5602, 7
        %v5604 = vsub.s32 0, %v5603
        %v5605 = vrot.slane %v5586, %v5604
        %v5606 = vlaneseq
        %v5607 = vshrl.u32 %v5606, 7
        %v5608 = vsub.s32 0, %v5607
        %v5609 = vrot.slane %v5587, %v5608
        %v5610 = vlaneseq
        %v5611 = vshrl.u32 %v5610, 7
        %v5612 = vsub.s32 0, %v5611
        %v5613 = vrot.slane %v5588, %v5612
        %v5614 = vlaneseq
        %v5615 = vshrl.u32 %v5614, 7
        %v5616 = vsub.s32 0, %v5615
        %v5617 = vrot.slane %v5589, %v5616
        %v5618 = vlaneseq
        %v5619 = vshrl.u32 %v5618, 7
        %v5620 = vsub.s32 0, %v5619
        %v5621 = vrot.slane %v5590, %v5620
        %v5622 = vlaneseq
        %v5623 = vshrl.u32 %v5622, 7
        %v5624 = vsub.s32 0, %v5623
        %v5625 = vrot.slane %v5591, %v5624
        %v5626 = vlaneseq
        %v5627 = vshrl.u32 %v5626, 7
        %v5628 = vsub.s32 0, %v5627
        %v5629 = vrot.slane %v5592, %v5628
        %v5630 = vlaneseq
        %v5631 = vshrl.u32 %v5630, 7
        %v5632 = vsub.s32 0, %v5631
        %v5633 = vrot.slane %v5593, %v5632
        %5642 = vrot.lane.b32.xlu0 %v5546, 126
        %v5643 = vpop.permute.xlu0 %5642
        %5644 = vrot.lane.b32.xlu0 %v5545, 126
        %v5645 = vpop.permute.xlu0 %5644
        %v5648 = vmul.f32 %v5605, %v5643
        %v5649 = vmul.f32 %v5605, %v5645
        %v5650 = vmul.f32 %v5609, %v5643
        %v5651 = vmul.f32 %v5609, %v5645
        %v5652 = vmul.f32 %v5613, %v5643
        %v5653 = vmul.f32 %v5613, %v5645
        %v5654 = vmul.f32 %v5617, %v5643
        %v5655 = vmul.f32 %v5617, %v5645
        %v5656 = vmul.f32 %v5621, %v5643
        %v5657 = vmul.f32 %v5621, %v5645
        %v5658 = vmul.f32 %v5625, %v5643
        %v5659 = vmul.f32 %v5625, %v5645
        %v5660 = vmul.f32 %v5629, %v5643
        %v5661 = vmul.f32 %v5629, %v5645
        %v5662 = vmul.f32 %v5633, %v5643
        %v5663 = vmul.f32 %v5633, %v5645
        %v5664 = vadd.f32 %v5569, %v5648
        %v5665 = vadd.f32 %v5570, %v5649
        %v5666 = vadd.f32 %v5571, %v5650
        %v5667 = vadd.f32 %v5572, %v5651
        %v5668 = vadd.f32 %v5573, %v5652
        %v5669 = vadd.f32 %v5574, %v5653
        %v5670 = vadd.f32 %v5575, %v5654
        %v5671 = vadd.f32 %v5576, %v5655
        %v5672 = vadd.f32 %v5577, %v5656
        %v5673 = vadd.f32 %v5578, %v5657
        %v5674 = vadd.f32 %v5579, %v5658
        %v5675 = vadd.f32 %v5580, %v5659
        %v5676 = vadd.f32 %v5581, %v5660
        %v5677 = vadd.f32 %v5582, %v5661
        %v5678 = vadd.f32 %v5583, %v5662
        %v5679 = vadd.f32 %v5584, %v5663
        %s5680 = scalar_lea.vmem %s5, 264
        %v5681 = vld [vmem:[%s5680] sm:$0x1]
        %v5682 = vld [vmem:[%s5680 + $0x1] sm:$0x1]
        %v5683 = vld [vmem:[%s5680 + $0x2] sm:$0x1]
        %v5684 = vld [vmem:[%s5680 + $0x3] sm:$0x1]
        %v5685 = vld [vmem:[%s5680 + $0x4] sm:$0x1]
        %v5686 = vld [vmem:[%s5680 + $0x5] sm:$0x1]
        %v5687 = vld [vmem:[%s5680 + $0x6] sm:$0x1]
        %v5688 = vld [vmem:[%s5680 + $0x7] sm:$0x1]
        %v5697 = vlaneseq
        %v5698 = vshrl.u32 %v5697, 7
        %v5699 = vsub.s32 0, %v5698
        %v5700 = vrot.slane %v5681, %v5699
        %v5701 = vlaneseq
        %v5702 = vshrl.u32 %v5701, 7
        %v5703 = vsub.s32 0, %v5702
        %v5704 = vrot.slane %v5682, %v5703
        %v5705 = vlaneseq
        %v5706 = vshrl.u32 %v5705, 7
        %v5707 = vsub.s32 0, %v5706
        %v5708 = vrot.slane %v5683, %v5707
        %v5709 = vlaneseq
        %v5710 = vshrl.u32 %v5709, 7
        %v5711 = vsub.s32 0, %v5710
        %v5712 = vrot.slane %v5684, %v5711
        %v5713 = vlaneseq
        %v5714 = vshrl.u32 %v5713, 7
        %v5715 = vsub.s32 0, %v5714
        %v5716 = vrot.slane %v5685, %v5715
        %v5717 = vlaneseq
        %v5718 = vshrl.u32 %v5717, 7
        %v5719 = vsub.s32 0, %v5718
        %v5720 = vrot.slane %v5686, %v5719
        %v5721 = vlaneseq
        %v5722 = vshrl.u32 %v5721, 7
        %v5723 = vsub.s32 0, %v5722
        %v5724 = vrot.slane %v5687, %v5723
        %v5725 = vlaneseq
        %v5726 = vshrl.u32 %v5725, 7
        %v5727 = vsub.s32 0, %v5726
        %v5728 = vrot.slane %v5688, %v5727
        %v5737 = vmul.f32 %v5700, %v2183
        %v5738 = vmul.f32 %v5700, %v2188
        %v5739 = vmul.f32 %v5704, %v2183
        %v5740 = vmul.f32 %v5704, %v2188
        %v5741 = vmul.f32 %v5708, %v2183
        %v5742 = vmul.f32 %v5708, %v2188
        %v5743 = vmul.f32 %v5712, %v2183
        %v5744 = vmul.f32 %v5712, %v2188
        %v5745 = vmul.f32 %v5716, %v2183
        %v5746 = vmul.f32 %v5716, %v2188
        %v5747 = vmul.f32 %v5720, %v2183
        %v5748 = vmul.f32 %v5720, %v2188
        %v5749 = vmul.f32 %v5724, %v2183
        %v5750 = vmul.f32 %v5724, %v2188
        %v5751 = vmul.f32 %v5728, %v2183
        %v5752 = vmul.f32 %v5728, %v2188
        %v5769 = vrot.slane %v5737, 2
        %v5770 = vrot.slane %v5738, 2
        %v5771 = vsel %vm934, %v5769, %v5770
        %v5772 = vrot.slane %v5739, 2
        %v5773 = vrot.slane %v5740, 2
        %v5774 = vsel %vm934, %v5772, %v5773
        %v5775 = vrot.slane %v5741, 2
        %v5776 = vrot.slane %v5742, 2
        %v5777 = vsel %vm934, %v5775, %v5776
        %v5778 = vrot.slane %v5743, 2
        %v5779 = vrot.slane %v5744, 2
        %v5780 = vsel %vm934, %v5778, %v5779
        %v5781 = vrot.slane %v5745, 2
        %v5782 = vrot.slane %v5746, 2
        %v5783 = vsel %vm934, %v5781, %v5782
        %v5784 = vrot.slane %v5747, 2
        %v5785 = vrot.slane %v5748, 2
        %v5786 = vsel %vm934, %v5784, %v5785
        %v5787 = vrot.slane %v5749, 2
        %v5788 = vrot.slane %v5750, 2
        %v5789 = vsel %vm934, %v5787, %v5788
        %v5790 = vrot.slane %v5751, 2
        %v5791 = vrot.slane %v5752, 2
        %v5792 = vsel %vm934, %v5790, %v5791
        %v5809 = vadd.f32 %v5664, %v5771
        %v5810 = vadd.f32 %v5665, %v5770
        %v5811 = vadd.f32 %v5666, %v5774
        %v5812 = vadd.f32 %v5667, %v5773
        %v5813 = vadd.f32 %v5668, %v5777
        %v5814 = vadd.f32 %v5669, %v5776
        %v5815 = vadd.f32 %v5670, %v5780
        %v5816 = vadd.f32 %v5671, %v5779
        %v5817 = vadd.f32 %v5672, %v5783
        %v5818 = vadd.f32 %v5673, %v5782
        %v5819 = vadd.f32 %v5674, %v5786
        %v5820 = vadd.f32 %v5675, %v5785
        %v5821 = vadd.f32 %v5676, %v5789
        %v5822 = vadd.f32 %v5677, %v5788
        %v5823 = vadd.f32 %v5678, %v5792
        %v5824 = vadd.f32 %v5679, %v5791
        %s5825 = scalar_lea.vmem %s5, 272
        %v5826 = vld [vmem:[%s5825] sm:$0x1]
        %v5827 = vld [vmem:[%s5825 + $0x1] sm:$0x1]
        %v5828 = vld [vmem:[%s5825 + $0x2] sm:$0x1]
        %v5829 = vld [vmem:[%s5825 + $0x3] sm:$0x1]
        %v5830 = vld [vmem:[%s5825 + $0x4] sm:$0x1]
        %v5831 = vld [vmem:[%s5825 + $0x5] sm:$0x1]
        %v5832 = vld [vmem:[%s5825 + $0x6] sm:$0x1]
        %v5833 = vld [vmem:[%s5825 + $0x7] sm:$0x1]
        %v5842 = vlaneseq
        %v5843 = vshrl.u32 %v5842, 7
        %v5844 = vsub.s32 0, %v5843
        %v5845 = vrot.slane %v5826, %v5844
        %v5846 = vlaneseq
        %v5847 = vshrl.u32 %v5846, 7
        %v5848 = vsub.s32 0, %v5847
        %v5849 = vrot.slane %v5827, %v5848
        %v5850 = vlaneseq
        %v5851 = vshrl.u32 %v5850, 7
        %v5852 = vsub.s32 0, %v5851
        %v5853 = vrot.slane %v5828, %v5852
        %v5854 = vlaneseq
        %v5855 = vshrl.u32 %v5854, 7
        %v5856 = vsub.s32 0, %v5855
        %v5857 = vrot.slane %v5829, %v5856
        %v5858 = vlaneseq
        %v5859 = vshrl.u32 %v5858, 7
        %v5860 = vsub.s32 0, %v5859
        %v5861 = vrot.slane %v5830, %v5860
        %v5862 = vlaneseq
        %v5863 = vshrl.u32 %v5862, 7
        %v5864 = vsub.s32 0, %v5863
        %v5865 = vrot.slane %v5831, %v5864
        %v5866 = vlaneseq
        %v5867 = vshrl.u32 %v5866, 7
        %v5868 = vsub.s32 0, %v5867
        %v5869 = vrot.slane %v5832, %v5868
        %v5870 = vlaneseq
        %v5871 = vshrl.u32 %v5870, 7
        %v5872 = vsub.s32 0, %v5871
        %v5873 = vrot.slane %v5833, %v5872
        %v5882 = vrot.slane %v2183, 2
        %v5883 = vrot.slane %v2188, 2
        %v5884 = vsel %vm934, %v5882, %v5883
        %5885 = vrot.lane.b32.xlu0 %v5884, 127
        %v5886 = vpop.permute.xlu0 %5885
        %5887 = vrot.lane.b32.xlu0 %v5883, 127
        %v5888 = vpop.permute.xlu0 %5887
        %v5891 = vmul.f32 %v5845, %v5886
        %v5892 = vmul.f32 %v5845, %v5888
        %v5893 = vmul.f32 %v5849, %v5886
        %v5894 = vmul.f32 %v5849, %v5888
        %v5895 = vmul.f32 %v5853, %v5886
        %v5896 = vmul.f32 %v5853, %v5888
        %v5897 = vmul.f32 %v5857, %v5886
        %v5898 = vmul.f32 %v5857, %v5888
        %v5899 = vmul.f32 %v5861, %v5886
        %v5900 = vmul.f32 %v5861, %v5888
        %v5901 = vmul.f32 %v5865, %v5886
        %v5902 = vmul.f32 %v5865, %v5888
        %v5903 = vmul.f32 %v5869, %v5886
        %v5904 = vmul.f32 %v5869, %v5888
        %v5905 = vmul.f32 %v5873, %v5886
        %v5906 = vmul.f32 %v5873, %v5888
        %v5907 = vadd.f32 %v5809, %v5891
        %v5908 = vadd.f32 %v5810, %v5892
        %v5909 = vadd.f32 %v5811, %v5893
        %v5910 = vadd.f32 %v5812, %v5894
        %v5911 = vadd.f32 %v5813, %v5895
        %v5912 = vadd.f32 %v5814, %v5896
        %v5913 = vadd.f32 %v5815, %v5897
        %v5914 = vadd.f32 %v5816, %v5898
        %v5915 = vadd.f32 %v5817, %v5899
        %v5916 = vadd.f32 %v5818, %v5900
        %v5917 = vadd.f32 %v5819, %v5901
        %v5918 = vadd.f32 %v5820, %v5902
        %v5919 = vadd.f32 %v5821, %v5903
        %v5920 = vadd.f32 %v5822, %v5904
        %v5921 = vadd.f32 %v5823, %v5905
        %v5922 = vadd.f32 %v5824, %v5906
        %s5923 = scalar_lea.vmem %s5, 280
        %v5924 = vld [vmem:[%s5923] sm:$0x1]
        %v5925 = vld [vmem:[%s5923 + $0x1] sm:$0x1]
        %v5926 = vld [vmem:[%s5923 + $0x2] sm:$0x1]
        %v5927 = vld [vmem:[%s5923 + $0x3] sm:$0x1]
        %v5928 = vld [vmem:[%s5923 + $0x4] sm:$0x1]
        %v5929 = vld [vmem:[%s5923 + $0x5] sm:$0x1]
        %v5930 = vld [vmem:[%s5923 + $0x6] sm:$0x1]
        %v5931 = vld [vmem:[%s5923 + $0x7] sm:$0x1]
        %v5940 = vlaneseq
        %v5941 = vshrl.u32 %v5940, 7
        %v5942 = vsub.s32 0, %v5941
        %v5943 = vrot.slane %v5924, %v5942
        %v5944 = vlaneseq
        %v5945 = vshrl.u32 %v5944, 7
        %v5946 = vsub.s32 0, %v5945
        %v5947 = vrot.slane %v5925, %v5946
        %v5948 = vlaneseq
        %v5949 = vshrl.u32 %v5948, 7
        %v5950 = vsub.s32 0, %v5949
        %v5951 = vrot.slane %v5926, %v5950
        %v5952 = vlaneseq
        %v5953 = vshrl.u32 %v5952, 7
        %v5954 = vsub.s32 0, %v5953
        %v5955 = vrot.slane %v5927, %v5954
        %v5956 = vlaneseq
        %v5957 = vshrl.u32 %v5956, 7
        %v5958 = vsub.s32 0, %v5957
        %v5959 = vrot.slane %v5928, %v5958
        %v5960 = vlaneseq
        %v5961 = vshrl.u32 %v5960, 7
        %v5962 = vsub.s32 0, %v5961
        %v5963 = vrot.slane %v5929, %v5962
        %v5964 = vlaneseq
        %v5965 = vshrl.u32 %v5964, 7
        %v5966 = vsub.s32 0, %v5965
        %v5967 = vrot.slane %v5930, %v5966
        %v5968 = vlaneseq
        %v5969 = vshrl.u32 %v5968, 7
        %v5970 = vsub.s32 0, %v5969
        %v5971 = vrot.slane %v5931, %v5970
        %5980 = vrot.lane.b32.xlu0 %v5884, 126
        %v5981 = vpop.permute.xlu0 %5980
        %5982 = vrot.lane.b32.xlu0 %v5883, 126
        %v5983 = vpop.permute.xlu0 %5982
        %v5986 = vmul.f32 %v5943, %v5981
        %v5987 = vmul.f32 %v5943, %v5983
        %v5988 = vmul.f32 %v5947, %v5981
        %v5989 = vmul.f32 %v5947, %v5983
        %v5990 = vmul.f32 %v5951, %v5981
        %v5991 = vmul.f32 %v5951, %v5983
        %v5992 = vmul.f32 %v5955, %v5981
        %v5993 = vmul.f32 %v5955, %v5983
        %v5994 = vmul.f32 %v5959, %v5981
        %v5995 = vmul.f32 %v5959, %v5983
        %v5996 = vmul.f32 %v5963, %v5981
        %v5997 = vmul.f32 %v5963, %v5983
        %v5998 = vmul.f32 %v5967, %v5981
        %v5999 = vmul.f32 %v5967, %v5983
        %v6000 = vmul.f32 %v5971, %v5981
        %v6001 = vmul.f32 %v5971, %v5983
        %v6002 = vadd.f32 %v5907, %v5986
        %v6003 = vadd.f32 %v5908, %v5987
        %v6004 = vadd.f32 %v5909, %v5988
        %v6005 = vadd.f32 %v5910, %v5989
        %v6006 = vadd.f32 %v5911, %v5990
        %v6007 = vadd.f32 %v5912, %v5991
        %v6008 = vadd.f32 %v5913, %v5992
        %v6009 = vadd.f32 %v5914, %v5993
        %v6010 = vadd.f32 %v5915, %v5994
        %v6011 = vadd.f32 %v5916, %v5995
        %v6012 = vadd.f32 %v5917, %v5996
        %v6013 = vadd.f32 %v5918, %v5997
        %v6014 = vadd.f32 %v5919, %v5998
        %v6015 = vadd.f32 %v5920, %v5999
        %v6016 = vadd.f32 %v5921, %v6000
        %v6017 = vadd.f32 %v5922, %v6001
        %v6018 = vld [vmem:[%s6] sm:$0x1]
        %v6019 = vld [vmem:[%s6 + $0x1] sm:$0x1]
        %v6020 = vld [vmem:[%s6 + $0x2] sm:$0x1]
        %v6021 = vld [vmem:[%s6 + $0x3] sm:$0x1]
        %v6022 = vld [vmem:[%s6 + $0x4] sm:$0x1]
        %v6023 = vld [vmem:[%s6 + $0x5] sm:$0x1]
        %v6024 = vld [vmem:[%s6 + $0x6] sm:$0x1]
        %v6025 = vld [vmem:[%s6 + $0x7] sm:$0x1]
        %v6034 = vlaneseq
        %v6035 = vshrl.u32 %v6034, 7
        %v6036 = vsub.s32 0, %v6035
        %v6037 = vrot.slane %v6018, %v6036
        %v6038 = vlaneseq
        %v6039 = vshrl.u32 %v6038, 7
        %v6040 = vsub.s32 0, %v6039
        %v6041 = vrot.slane %v6019, %v6040
        %v6042 = vlaneseq
        %v6043 = vshrl.u32 %v6042, 7
        %v6044 = vsub.s32 0, %v6043
        %v6045 = vrot.slane %v6020, %v6044
        %v6046 = vlaneseq
        %v6047 = vshrl.u32 %v6046, 7
        %v6048 = vsub.s32 0, %v6047
        %v6049 = vrot.slane %v6021, %v6048
        %v6050 = vlaneseq
        %v6051 = vshrl.u32 %v6050, 7
        %v6052 = vsub.s32 0, %v6051
        %v6053 = vrot.slane %v6022, %v6052
        %v6054 = vlaneseq
        %v6055 = vshrl.u32 %v6054, 7
        %v6056 = vsub.s32 0, %v6055
        %v6057 = vrot.slane %v6023, %v6056
        %v6058 = vlaneseq
        %v6059 = vshrl.u32 %v6058, 7
        %v6060 = vsub.s32 0, %v6059
        %v6061 = vrot.slane %v6024, %v6060
        %v6062 = vlaneseq
        %v6063 = vshrl.u32 %v6062, 7
        %v6064 = vsub.s32 0, %v6063
        %v6065 = vrot.slane %v6025, %v6064
        %v6074 = vadd.f32 %v6002, %v6037
        %v6075 = vadd.f32 %v6003, %v6037
        %v6076 = vadd.f32 %v6004, %v6041
        %v6077 = vadd.f32 %v6005, %v6041
        %v6078 = vadd.f32 %v6006, %v6045
        %v6079 = vadd.f32 %v6007, %v6045
        %v6080 = vadd.f32 %v6008, %v6049
        %v6081 = vadd.f32 %v6009, %v6049
        %v6082 = vadd.f32 %v6010, %v6053
        %v6083 = vadd.f32 %v6011, %v6053
        %v6084 = vadd.f32 %v6012, %v6057
        %v6085 = vadd.f32 %v6013, %v6057
        %v6086 = vadd.f32 %v6014, %v6061
        %v6087 = vadd.f32 %v6015, %v6061
        %v6088 = vadd.f32 %v6016, %v6065
        %v6089 = vadd.f32 %v6017, %v6065
        %v6090 = vmax.f32 %v6074, 0.0
        %v6091 = vmax.f32 %v6075, 0.0
        %v6092 = vmax.f32 %v6076, 0.0
        %v6093 = vmax.f32 %v6077, 0.0
        %v6094 = vmax.f32 %v6078, 0.0
        %v6095 = vmax.f32 %v6079, 0.0
        %v6096 = vmax.f32 %v6080, 0.0
        %v6097 = vmax.f32 %v6081, 0.0
        %v6098 = vmax.f32 %v6082, 0.0
        %v6099 = vmax.f32 %v6083, 0.0
        %v6100 = vmax.f32 %v6084, 0.0
        %v6101 = vmax.f32 %v6085, 0.0
        %v6102 = vmax.f32 %v6086, 0.0
        %v6103 = vmax.f32 %v6087, 0.0
        %v6104 = vmax.f32 %v6088, 0.0
        %v6105 = vmax.f32 %v6089, 0.0
        %v6106 = vld [vmem:[%s7] sm:$0x1]
        %v6107 = vld [vmem:[%s7 + $0x1] sm:$0x1]
        %v6108 = vld [vmem:[%s7 + $0x2] sm:$0x1]
        %v6109 = vld [vmem:[%s7 + $0x3] sm:$0x1]
        %v6110 = vld [vmem:[%s7 + $0x4] sm:$0x1]
        %v6111 = vld [vmem:[%s7 + $0x5] sm:$0x1]
        %v6112 = vld [vmem:[%s7 + $0x6] sm:$0x1]
        %v6113 = vld [vmem:[%s7 + $0x7] sm:$0x1]
        %v6122 = vlaneseq
        %v6123 = vshrl.u32 %v6122, 7
        %v6124 = vsub.s32 0, %v6123
        %v6125 = vrot.slane %v6106, %v6124
        %v6126 = vlaneseq
        %v6127 = vshrl.u32 %v6126, 7
        %v6128 = vsub.s32 0, %v6127
        %v6129 = vrot.slane %v6107, %v6128
        %v6130 = vlaneseq
        %v6131 = vshrl.u32 %v6130, 7
        %v6132 = vsub.s32 0, %v6131
        %v6133 = vrot.slane %v6108, %v6132
        %v6134 = vlaneseq
        %v6135 = vshrl.u32 %v6134, 7
        %v6136 = vsub.s32 0, %v6135
        %v6137 = vrot.slane %v6109, %v6136
        %v6138 = vlaneseq
        %v6139 = vshrl.u32 %v6138, 7
        %v6140 = vsub.s32 0, %v6139
        %v6141 = vrot.slane %v6110, %v6140
        %v6142 = vlaneseq
        %v6143 = vshrl.u32 %v6142, 7
        %v6144 = vsub.s32 0, %v6143
        %v6145 = vrot.slane %v6111, %v6144
        %v6146 = vlaneseq
        %v6147 = vshrl.u32 %v6146, 7
        %v6148 = vsub.s32 0, %v6147
        %v6149 = vrot.slane %v6112, %v6148
        %v6150 = vlaneseq
        %v6151 = vshrl.u32 %v6150, 7
        %v6152 = vsub.s32 0, %v6151
        %v6153 = vrot.slane %v6113, %v6152
        %v6162 = vmul.f32 %v6090, %v6125
        %v6163 = vmul.f32 %v6091, %v6125
        %v6164 = vmul.f32 %v6092, %v6129
        %v6165 = vmul.f32 %v6093, %v6129
        %v6166 = vmul.f32 %v6094, %v6133
        %v6167 = vmul.f32 %v6095, %v6133
        %v6168 = vmul.f32 %v6096, %v6137
        %v6169 = vmul.f32 %v6097, %v6137
        %v6170 = vmul.f32 %v6098, %v6141
        %v6171 = vmul.f32 %v6099, %v6141
        %v6172 = vmul.f32 %v6100, %v6145
        %v6173 = vmul.f32 %v6101, %v6145
        %v6174 = vmul.f32 %v6102, %v6149
        %v6175 = vmul.f32 %v6103, %v6149
        %v6176 = vmul.f32 %v6104, %v6153
        %v6177 = vmul.f32 %v6105, %v6153
        %v6178 = vld [vmem:[%s8] sm:$0x1]
        %v6179 = vld [vmem:[%s8 + $0x1] sm:$0x1]
        %v6180 = vld [vmem:[%s8 + $0x2] sm:$0x1]
        %v6181 = vld [vmem:[%s8 + $0x3] sm:$0x1]
        %v6182 = vld [vmem:[%s8 + $0x4] sm:$0x1]
        %v6183 = vld [vmem:[%s8 + $0x5] sm:$0x1]
        %v6184 = vld [vmem:[%s8 + $0x6] sm:$0x1]
        %v6185 = vld [vmem:[%s8 + $0x7] sm:$0x1]
        %v6194 = vlaneseq
        %v6195 = vshrl.u32 %v6194, 7
        %v6196 = vsub.s32 0, %v6195
        %v6197 = vrot.slane %v6178, %v6196
        %v6198 = vlaneseq
        %v6199 = vshrl.u32 %v6198, 7
        %v6200 = vsub.s32 0, %v6199
        %v6201 = vrot.slane %v6179, %v6200
        %v6202 = vlaneseq
        %v6203 = vshrl.u32 %v6202, 7
        %v6204 = vsub.s32 0, %v6203
        %v6205 = vrot.slane %v6180, %v6204
        %v6206 = vlaneseq
        %v6207 = vshrl.u32 %v6206, 7
        %v6208 = vsub.s32 0, %v6207
        %v6209 = vrot.slane %v6181, %v6208
        %v6210 = vlaneseq
        %v6211 = vshrl.u32 %v6210, 7
        %v6212 = vsub.s32 0, %v6211
        %v6213 = vrot.slane %v6182, %v6212
        %v6214 = vlaneseq
        %v6215 = vshrl.u32 %v6214, 7
        %v6216 = vsub.s32 0, %v6215
        %v6217 = vrot.slane %v6183, %v6216
        %v6218 = vlaneseq
        %v6219 = vshrl.u32 %v6218, 7
        %v6220 = vsub.s32 0, %v6219
        %v6221 = vrot.slane %v6184, %v6220
        %v6222 = vlaneseq
        %v6223 = vshrl.u32 %v6222, 7
        %v6224 = vsub.s32 0, %v6223
        %v6225 = vrot.slane %v6185, %v6224
        %v6234 = vadd.f32 %v6162, %v6197
        %v6235 = vadd.f32 %v6163, %v6197
        %v6236 = vadd.f32 %v6164, %v6201
        %v6237 = vadd.f32 %v6165, %v6201
        %v6238 = vadd.f32 %v6166, %v6205
        %v6239 = vadd.f32 %v6167, %v6205
        %v6240 = vadd.f32 %v6168, %v6209
        %v6241 = vadd.f32 %v6169, %v6209
        %v6242 = vadd.f32 %v6170, %v6213
        %v6243 = vadd.f32 %v6171, %v6213
        %v6244 = vadd.f32 %v6172, %v6217
        %v6245 = vadd.f32 %v6173, %v6217
        %v6246 = vadd.f32 %v6174, %v6221
        %v6247 = vadd.f32 %v6175, %v6221
        %v6248 = vadd.f32 %v6176, %v6225
        %v6249 = vadd.f32 %v6177, %v6225
        %v6250 = vlaneseq
        %vm6251 = vcmp.ge.s32.totalorder %v6250, 0
        %vm6252 = vcmp.lt.s32.totalorder %v6250, 11
        %vm6253 = vmand %vm6251, %vm6252
        %6254 = vst.msk [vmem:[#allocation2] sm:$0x1] %vm6253, %v6234
        %v6257 = vunpack.c.l.s4 1966171168
        %v6258 = vunpack.c.0.s8 %v6257
        %v6259 = vlaneseq
        %v6260 = vshrl.u32 %v6259, 7
        %v6261 = vsub.s32 %v6258, %v6260
        %v6262 = vrot.slane %v6234, %v6261
        %v6263 = vcombine.high %v6262, %v6262
        %v6265 = vunpack.c.l.s4 1966171168
        %v6266 = vunpack.c.0.s8 %v6265
        %v6267 = vlaneseq
        %v6268 = vshrl.u32 %v6267, 7
        %v6269 = vsub.s32 %v6266, %v6268
        %v6270 = vrot.slane %v6262, %v6269
        %v6272 = vunpack.c.l.s4 1966171168
        %v6273 = vunpack.c.0.s8 %v6272
        %v6274 = vlaneseq
        %v6275 = vshrl.u32 %v6274, 7
        %v6276 = vsub.s32 %v6273, %v6275
        %v6277 = vrot.slane %v6263, %v6276
        %6278 = vrot.lane.b32.xlu0 %v6277, 11
        %v6279 = vpop.permute.xlu0 %6278
        %vm6281 = vcmp.ge.s32.totalorder %v6250, 11
        %vm6282 = vcmp.lt.s32.totalorder %v6250, 22
        %vm6283 = vmand %vm6281, %vm6282
        %6284 = vst.msk [vmem:[#allocation2] sm:$0x1] %vm6283, %v6279
        %v6285 = vcombine.high %v6270, %v6270
        %6286 = vrot.lane.b32.xlu0 %v6285, 22
        %v6287 = vpop.permute.xlu0 %6286
        %vm6289 = vcmp.ge.s32.totalorder %v6250, 22
        %vm6290 = vcmp.lt.s32.totalorder %v6250, 33
        %vm6291 = vmand %vm6289, %vm6290
        %6292 = vst.msk [vmem:[#allocation2] sm:$0x1] %vm6291, %v6287
        %v6293 = vcombine.high %v6277, %v6277
        %6294 = vrot.lane.b32.xlu0 %v6293, 33
        %v6295 = vpop.permute.xlu0 %6294
        %vm6297 = vcmp.ge.s32.totalorder %v6250, 33
        %vm6298 = vcmp.lt.s32.totalorder %v6250, 44
        %vm6299 = vmand %vm6297, %vm6298
        %6300 = vst.msk [vmem:[#allocation2] sm:$0x1] %vm6299, %v6295
        %v6301 = vcombine.high %v6234, %v6234
        %v6303 = vunpack.c.l.s4 1966171168
        %v6304 = vunpack.c.0.s8 %v6303
        %v6305 = vlaneseq
        %v6306 = vshrl.u32 %v6305, 7
        %v6307 = vsub.s32 %v6304, %v6306
        %v6308 = vrot.slane %v6301, %v6307
        %v6310 = vunpack.c.l.s4 1966171168
        %v6311 = vunpack.c.0.s8 %v6310
        %v6312 = vlaneseq
        %v6313 = vshrl.u32 %v6312, 7
        %v6314 = vsub.s32 %v6311, %v6313
        %v6315 = vrot.slane %v6308, %v6314
        %6316 = vrot.lane.b32.xlu0 %v6315, 44
        %v6317 = vpop.permute.xlu0 %6316
        %vm6319 = vcmp.ge.s32.totalorder %v6250, 44
        %vm6320 = vcmp.lt.s32.totalorder %v6250, 55
        %vm6321 = vmand %vm6319, %vm6320
        %6322 = vst.msk [vmem:[#allocation2] sm:$0x1] %vm6321, %v6317
        %v6323 = vcombine.high %v6308, %v6308
        %v6325 = vunpack.c.l.s4 1966171168
        %v6326 = vunpack.c.0.s8 %v6325
        %v6327 = vlaneseq
        %v6328 = vshrl.u32 %v6327, 7
        %v6329 = vsub.s32 %v6326, %v6328
        %v6330 = vrot.slane %v6323, %v6329
        %6331 = vrot.lane.b32.xlu0 %v6330, 55
        %v6332 = vpop.permute.xlu0 %6331
        %vm6334 = vcmp.ge.s32.totalorder %v6250, 55
        %vm6335 = vcmp.lt.s32.totalorder %v6250, 66
        %vm6336 = vmand %vm6334, %vm6335
        %6337 = vst.msk [vmem:[#allocation2] sm:$0x1] %vm6336, %v6332
        %v6338 = vcombine.high %v6315, %v6315
        %6339 = vrot.lane.b32.xlu0 %v6338, 66
        %v6340 = vpop.permute.xlu0 %6339
        %vm6342 = vcmp.ge.s32.totalorder %v6250, 66
        %vm6343 = vcmp.lt.s32.totalorder %v6250, 77
        %vm6344 = vmand %vm6342, %vm6343
        %6345 = vst.msk [vmem:[#allocation2] sm:$0x1] %vm6344, %v6340
        %v6346 = vcombine.high %v6330, %v6330
        %6347 = vrot.lane.b32.xlu0 %v6346, 77
        %v6348 = vpop.permute.xlu0 %6347
        %vm6350 = vcmp.ge.s32.totalorder %v6250, 77
        %vm6351 = vcmp.lt.s32.totalorder %v6250, 88
        %vm6352 = vmand %vm6350, %vm6351
        %6353 = vst.msk [vmem:[#allocation2] sm:$0x1] %vm6352, %v6348
        %v6356 = vunpack.c.l.s4 1966171168
        %v6357 = vunpack.c.0.s8 %v6356
        %v6358 = vlaneseq
        %v6359 = vshrl.u32 %v6358, 7
        %v6360 = vsub.s32 %v6357, %v6359
        %v6361 = vrot.slane %v6235, %v6360
        %v6363 = vunpack.c.l.s4 1966171168
        %v6364 = vunpack.c.0.s8 %v6363
        %v6365 = vlaneseq
        %v6366 = vshrl.u32 %v6365, 7
        %v6367 = vsub.s32 %v6364, %v6366
        %v6368 = vrot.slane %v6361, %v6367
        %6369 = vrot.lane.b32.xlu0 %v6368, 88
        %v6370 = vpop.permute.xlu0 %6369
        %vm6372 = vcmp.ge.s32.totalorder %v6250, 88
        %vm6373 = vcmp.lt.s32.totalorder %v6250, 99
        %vm6374 = vmand %vm6372, %vm6373
        %6375 = vst.msk [vmem:[#allocation2] sm:$0x1] %vm6374, %v6370
        %v6376 = vcombine.high %v6361, %v6361
        %v6378 = vunpack.c.l.s4 1966171168
        %v6379 = vunpack.c.0.s8 %v6378
        %v6380 = vlaneseq
        %v6381 = vshrl.u32 %v6380, 7
        %v6382 = vsub.s32 %v6379, %v6381
        %v6383 = vrot.slane %v6376, %v6382
        %6384 = vrot.lane.b32.xlu0 %v6383, 99
        %v6385 = vpop.permute.xlu0 %6384
        %vm6387 = vcmp.ge.s32.totalorder %v6250, 99
        %vm6388 = vcmp.lt.s32.totalorder %v6250, 110
        %vm6389 = vmand %vm6387, %vm6388
        %6390 = vst.msk [vmem:[#allocation2] sm:$0x1] %vm6389, %v6385
        %v6391 = vcombine.high %v6368, %v6368
        %6392 = vrot.lane.b32.xlu0 %v6391, 110
        %v6393 = vpop.permute.xlu0 %6392
        %vm6395 = vcmp.ge.s32.totalorder %v6250, 110
        %vm6396 = vcmp.lt.s32.totalorder %v6250, 121
        %vm6397 = vmand %vm6395, %vm6396
        %6398 = vst.msk [vmem:[#allocation2] sm:$0x1] %vm6397, %v6393
        %v6401 = vunpack.c.l.s4 1966171168
        %v6402 = vunpack.c.0.s8 %v6401
        %v6403 = vlaneseq
        %v6404 = vshrl.u32 %v6403, 7
        %v6405 = vsub.s32 %v6402, %v6404
        %v6406 = vrot.slane %v6236, %v6405
        %v6408 = vunpack.c.l.s4 1966171168
        %v6409 = vunpack.c.0.s8 %v6408
        %v6410 = vlaneseq
        %v6411 = vshrl.u32 %v6410, 7
        %v6412 = vsub.s32 %v6409, %v6411
        %v6413 = vrot.slane %v6406, %v6412
        %6414 = vrot.lane.b32.xlu0 %v6413, 121
        %v6415 = vpop.permute.xlu0 %6414
        %v6416 = vrot.slane %v6415, 7
        %vm6417 = vcmask 990208
        %v6418 = vsel %vm6417, %v6416, %v6415
        %vm6420 = vcmp.ge.s32.totalorder %v6250, 121
        %vm6421 = vcmp.lt.s32.totalorder %v6250, 132
        %vm6422 = vmand %vm6420, %vm6421
        %6423 = vst.msk [vmem:[#allocation2] sm:$0x3] %vm6422, %v6418
        %v6424 = vcombine.high %v6406, %v6406
        %v6426 = vunpack.c.l.s4 1966171168
        %v6427 = vunpack.c.0.s8 %v6426
        %v6428 = vlaneseq
        %v6429 = vshrl.u32 %v6428, 7
        %v6430 = vsub.s32 %v6427, %v6429
        %v6431 = vrot.slane %v6424, %v6430
        %6432 = vrot.lane.b32.xlu0 %v6431, 4
        %v6433 = vpop.permute.xlu0 %6432
        %vm6435 = vcmp.ge.s32.totalorder %v6250, 4
        %vm6436 = vcmp.lt.s32.totalorder %v6250, 15
        %vm6437 = vmand %vm6435, %vm6436
        %6438 = vst.msk [vmem:[#allocation2 + $0x1] sm:$0x1] %vm6437, %v6433
        %v6439 = vcombine.high %v6413, %v6413
        %6440 = vrot.lane.b32.xlu0 %v6439, 15
        %v6441 = vpop.permute.xlu0 %6440
        %vm6443 = vcmp.ge.s32.totalorder %v6250, 15
        %vm6444 = vcmp.lt.s32.totalorder %v6250, 26
        %vm6445 = vmand %vm6443, %vm6444
        %6446 = vst.msk [vmem:[#allocation2 + $0x1] sm:$0x1] %vm6445, %v6441
        %v6447 = vcombine.high %v6431, %v6431
        %6448 = vrot.lane.b32.xlu0 %v6447, 26
        %v6449 = vpop.permute.xlu0 %6448
        %vm6451 = vcmp.ge.s32.totalorder %v6250, 26
        %vm6452 = vcmp.lt.s32.totalorder %v6250, 37
        %vm6453 = vmand %vm6451, %vm6452
        %6454 = vst.msk [vmem:[#allocation2 + $0x1] sm:$0x1] %vm6453, %v6449
        %v6455 = vcombine.high %v6236, %v6236
        %v6457 = vunpack.c.l.s4 1966171168
        %v6458 = vunpack.c.0.s8 %v6457
        %v6459 = vlaneseq
        %v6460 = vshrl.u32 %v6459, 7
        %v6461 = vsub.s32 %v6458, %v6460
        %v6462 = vrot.slane %v6455, %v6461
        %v6464 = vunpack.c.l.s4 1966171168
        %v6465 = vunpack.c.0.s8 %v6464
        %v6466 = vlaneseq
        %v6467 = vshrl.u32 %v6466, 7
        %v6468 = vsub.s32 %v6465, %v6467
        %v6469 = vrot.slane %v6462, %v6468
        %6470 = vrot.lane.b32.xlu0 %v6469, 37
        %v6471 = vpop.permute.xlu0 %6470
        %vm6473 = vcmp.ge.s32.totalorder %v6250, 37
        %vm6474 = vcmp.lt.s32.totalorder %v6250, 48
        %vm6475 = vmand %vm6473, %vm6474
        %6476 = vst.msk [vmem:[#allocation2 + $0x1] sm:$0x1] %vm6475, %v6471
        %v6477 = vcombine.high %v6462, %v6462
        %v6479 = vunpack.c.l.s4 1966171168
        %v6480 = vunpack.c.0.s8 %v6479
        %v6481 = vlaneseq
        %v6482 = vshrl.u32 %v6481, 7
        %v6483 = vsub.s32 %v6480, %v6482
        %v6484 = vrot.slane %v6477, %v6483
        %6485 = vrot.lane.b32.xlu0 %v6484, 48
        %v6486 = vpop.permute.xlu0 %6485
        %vm6488 = vcmp.ge.s32.totalorder %v6250, 48
        %vm6489 = vcmp.lt.s32.totalorder %v6250, 59
        %vm6490 = vmand %vm6488, %vm6489
        %6491 = vst.msk [vmem:[#allocation2 + $0x1] sm:$0x1] %vm6490, %v6486
        %v6492 = vcombine.high %v6469, %v6469
        %6493 = vrot.lane.b32.xlu0 %v6492, 59
        %v6494 = vpop.permute.xlu0 %6493
        %vm6496 = vcmp.ge.s32.totalorder %v6250, 59
        %vm6497 = vcmp.lt.s32.totalorder %v6250, 70
        %vm6498 = vmand %vm6496, %vm6497
        %6499 = vst.msk [vmem:[#allocation2 + $0x1] sm:$0x1] %vm6498, %v6494
        %v6500 = vcombine.high %v6484, %v6484
        %6501 = vrot.lane.b32.xlu0 %v6500, 70
        %v6502 = vpop.permute.xlu0 %6501
        %vm6504 = vcmp.ge.s32.totalorder %v6250, 70
        %vm6505 = vcmp.lt.s32.totalorder %v6250, 81
        %vm6506 = vmand %vm6504, %vm6505
        %6507 = vst.msk [vmem:[#allocation2 + $0x1] sm:$0x1] %vm6506, %v6502
        %v6510 = vunpack.c.l.s4 1966171168
        %v6511 = vunpack.c.0.s8 %v6510
        %v6512 = vlaneseq
        %v6513 = vshrl.u32 %v6512, 7
        %v6514 = vsub.s32 %v6511, %v6513
        %v6515 = vrot.slane %v6237, %v6514
        %v6517 = vunpack.c.l.s4 1966171168
        %v6518 = vunpack.c.0.s8 %v6517
        %v6519 = vlaneseq
        %v6520 = vshrl.u32 %v6519, 7
        %v6521 = vsub.s32 %v6518, %v6520
        %v6522 = vrot.slane %v6515, %v6521
        %6523 = vrot.lane.b32.xlu0 %v6522, 81
        %v6524 = vpop.permute.xlu0 %6523
        %vm6526 = vcmp.ge.s32.totalorder %v6250, 81
        %vm6527 = vcmp.lt.s32.totalorder %v6250, 92
        %vm6528 = vmand %vm6526, %vm6527
        %6529 = vst.msk [vmem:[#allocation2 + $0x1] sm:$0x1] %vm6528, %v6524
        %v6530 = vcombine.high %v6515, %v6515
        %v6532 = vunpack.c.l.s4 1966171168
        %v6533 = vunpack.c.0.s8 %v6532
        %v6534 = vlaneseq
        %v6535 = vshrl.u32 %v6534, 7
        %v6536 = vsub.s32 %v6533, %v6535
        %v6537 = vrot.slane %v6530, %v6536
        %6538 = vrot.lane.b32.xlu0 %v6537, 92
        %v6539 = vpop.permute.xlu0 %6538
        %vm6541 = vcmp.ge.s32.totalorder %v6250, 92
        %vm6542 = vcmp.lt.s32.totalorder %v6250, 103
        %vm6543 = vmand %vm6541, %vm6542
        %6544 = vst.msk [vmem:[#allocation2 + $0x1] sm:$0x1] %vm6543, %v6539
        %v6545 = vcombine.high %v6522, %v6522
        %6546 = vrot.lane.b32.xlu0 %v6545, 103
        %v6547 = vpop.permute.xlu0 %6546
        %vm6549 = vcmp.ge.s32.totalorder %v6250, 103
        %vm6550 = vcmp.lt.s32.totalorder %v6250, 114
        %vm6551 = vmand %vm6549, %vm6550
        %6552 = vst.msk [vmem:[#allocation2 + $0x1] sm:$0x1] %vm6551, %v6547
        %v6555 = vunpack.c.l.s4 1966171168
        %v6556 = vunpack.c.0.s8 %v6555
        %v6557 = vlaneseq
        %v6558 = vshrl.u32 %v6557, 7
        %v6559 = vsub.s32 %v6556, %v6558
        %v6560 = vrot.slane %v6238, %v6559
        %v6562 = vunpack.c.l.s4 1966171168
        %v6563 = vunpack.c.0.s8 %v6562
        %v6564 = vlaneseq
        %v6565 = vshrl.u32 %v6564, 7
        %v6566 = vsub.s32 %v6563, %v6565
        %v6567 = vrot.slane %v6560, %v6566
        %6568 = vrot.lane.b32.xlu0 %v6567, 114
        %v6569 = vpop.permute.xlu0 %6568
        %vm6571 = vcmp.ge.s32.totalorder %v6250, 114
        %vm6572 = vcmp.lt.s32.totalorder %v6250, 125
        %vm6573 = vmand %vm6571, %vm6572
        %6574 = vst.msk [vmem:[#allocation2 + $0x1] sm:$0x1] %vm6573, %v6569
        %v6575 = vcombine.high %v6560, %v6560
        %v6577 = vunpack.c.l.s4 1966171168
        %v6578 = vunpack.c.0.s8 %v6577
        %v6579 = vlaneseq
        %v6580 = vshrl.u32 %v6579, 7
        %v6581 = vsub.s32 %v6578, %v6580
        %v6582 = vrot.slane %v6575, %v6581
        %6583 = vrot.lane.b32.xlu0 %v6582, 125
        %v6584 = vpop.permute.xlu0 %6583
        %v6585 = vrot.slane %v6584, 7
        %vm6586 = vcmask 1022976
        %v6587 = vsel %vm6586, %v6585, %v6584
        %vm6589 = vcmp.ge.s32.totalorder %v6250, 125
        %vm6590 = vcmp.lt.s32.totalorder %v6250, 136
        %vm6591 = vmand %vm6589, %vm6590
        %6592 = vst.msk [vmem:[#allocation2 + $0x1] sm:$0x3] %vm6591, %v6587
        %v6593 = vcombine.high %v6567, %v6567
        %6594 = vrot.lane.b32.xlu0 %v6593, 8
        %v6595 = vpop.permute.xlu0 %6594
        %vm6597 = vcmp.ge.s32.totalorder %v6250, 8
        %vm6598 = vcmp.lt.s32.totalorder %v6250, 19
        %vm6599 = vmand %vm6597, %vm6598
        %6600 = vst.msk [vmem:[#allocation2 + $0x2] sm:$0x1] %vm6599, %v6595
        %v6601 = vcombine.high %v6582, %v6582
        %6602 = vrot.lane.b32.xlu0 %v6601, 19
        %v6603 = vpop.permute.xlu0 %6602
        %vm6605 = vcmp.ge.s32.totalorder %v6250, 19
        %vm6606 = vcmp.lt.s32.totalorder %v6250, 30
        %vm6607 = vmand %vm6605, %vm6606
        %6608 = vst.msk [vmem:[#allocation2 + $0x2] sm:$0x1] %vm6607, %v6603
        %v6609 = vcombine.high %v6238, %v6238
        %v6611 = vunpack.c.l.s4 1966171168
        %v6612 = vunpack.c.0.s8 %v6611
        %v6613 = vlaneseq
        %v6614 = vshrl.u32 %v6613, 7
        %v6615 = vsub.s32 %v6612, %v6614
        %v6616 = vrot.slane %v6609, %v6615
        %v6618 = vunpack.c.l.s4 1966171168
        %v6619 = vunpack.c.0.s8 %v6618
        %v6620 = vlaneseq
        %v6621 = vshrl.u32 %v6620, 7
        %v6622 = vsub.s32 %v6619, %v6621
        %v6623 = vrot.slane %v6616, %v6622
        %6624 = vrot.lane.b32.xlu0 %v6623, 30
        %v6625 = vpop.permute.xlu0 %6624
        %vm6627 = vcmp.ge.s32.totalorder %v6250, 30
        %vm6628 = vcmp.lt.s32.totalorder %v6250, 41
        %vm6629 = vmand %vm6627, %vm6628
        %6630 = vst.msk [vmem:[#allocation2 + $0x2] sm:$0x1] %vm6629, %v6625
        %v6631 = vcombine.high %v6616, %v6616
        %v6633 = vunpack.c.l.s4 1966171168
        %v6634 = vunpack.c.0.s8 %v6633
        %v6635 = vlaneseq
        %v6636 = vshrl.u32 %v6635, 7
        %v6637 = vsub.s32 %v6634, %v6636
        %v6638 = vrot.slane %v6631, %v6637
        %6639 = vrot.lane.b32.xlu0 %v6638, 41
        %v6640 = vpop.permute.xlu0 %6639
        %vm6642 = vcmp.ge.s32.totalorder %v6250, 41
        %vm6643 = vcmp.lt.s32.totalorder %v6250, 52
        %vm6644 = vmand %vm6642, %vm6643
        %6645 = vst.msk [vmem:[#allocation2 + $0x2] sm:$0x1] %vm6644, %v6640
        %v6646 = vcombine.high %v6623, %v6623
        %6647 = vrot.lane.b32.xlu0 %v6646, 52
        %v6648 = vpop.permute.xlu0 %6647
        %vm6650 = vcmp.ge.s32.totalorder %v6250, 52
        %vm6651 = vcmp.lt.s32.totalorder %v6250, 63
        %vm6652 = vmand %vm6650, %vm6651
        %6653 = vst.msk [vmem:[#allocation2 + $0x2] sm:$0x1] %vm6652, %v6648
        %v6654 = vcombine.high %v6638, %v6638
        %6655 = vrot.lane.b32.xlu0 %v6654, 63
        %v6656 = vpop.permute.xlu0 %6655
        %vm6658 = vcmp.ge.s32.totalorder %v6250, 63
        %vm6659 = vcmp.lt.s32.totalorder %v6250, 74
        %vm6660 = vmand %vm6658, %vm6659
        %6661 = vst.msk [vmem:[#allocation2 + $0x2] sm:$0x1] %vm6660, %v6656
        %v6664 = vunpack.c.l.s4 1966171168
        %v6665 = vunpack.c.0.s8 %v6664
        %v6666 = vlaneseq
        %v6667 = vshrl.u32 %v6666, 7
        %v6668 = vsub.s32 %v6665, %v6667
        %v6669 = vrot.slane %v6239, %v6668
        %v6671 = vunpack.c.l.s4 1966171168
        %v6672 = vunpack.c.0.s8 %v6671
        %v6673 = vlaneseq
        %v6674 = vshrl.u32 %v6673, 7
        %v6675 = vsub.s32 %v6672, %v6674
        %v6676 = vrot.slane %v6669, %v6675
        %6677 = vrot.lane.b32.xlu0 %v6676, 74
        %v6678 = vpop.permute.xlu0 %6677
        %vm6680 = vcmp.ge.s32.totalorder %v6250, 74
        %vm6681 = vcmp.lt.s32.totalorder %v6250, 85
        %vm6682 = vmand %vm6680, %vm6681
        %6683 = vst.msk [vmem:[#allocation2 + $0x2] sm:$0x1] %vm6682, %v6678
        %v6684 = vcombine.high %v6669, %v6669
        %v6686 = vunpack.c.l.s4 1966171168
        %v6687 = vunpack.c.0.s8 %v6686
        %v6688 = vlaneseq
        %v6689 = vshrl.u32 %v6688, 7
        %v6690 = vsub.s32 %v6687, %v6689
        %v6691 = vrot.slane %v6684, %v6690
        %6692 = vrot.lane.b32.xlu0 %v6691, 85
        %v6693 = vpop.permute.xlu0 %6692
        %vm6695 = vcmp.ge.s32.totalorder %v6250, 85
        %vm6696 = vcmp.lt.s32.totalorder %v6250, 96
        %vm6697 = vmand %vm6695, %vm6696
        %6698 = vst.msk [vmem:[#allocation2 + $0x2] sm:$0x1] %vm6697, %v6693
        %v6699 = vcombine.high %v6676, %v6676
        %6700 = vrot.lane.b32.xlu0 %v6699, 96
        %v6701 = vpop.permute.xlu0 %6700
        %vm6703 = vcmp.ge.s32.totalorder %v6250, 96
        %vm6704 = vcmp.lt.s32.totalorder %v6250, 107
        %vm6705 = vmand %vm6703, %vm6704
        %6706 = vst.msk [vmem:[#allocation2 + $0x2] sm:$0x1] %vm6705, %v6701
        %v6709 = vunpack.c.l.s4 1966171168
        %v6710 = vunpack.c.0.s8 %v6709
        %v6711 = vlaneseq
        %v6712 = vshrl.u32 %v6711, 7
        %v6713 = vsub.s32 %v6710, %v6712
        %v6714 = vrot.slane %v6240, %v6713
        %v6716 = vunpack.c.l.s4 1966171168
        %v6717 = vunpack.c.0.s8 %v6716
        %v6718 = vlaneseq
        %v6719 = vshrl.u32 %v6718, 7
        %v6720 = vsub.s32 %v6717, %v6719
        %v6721 = vrot.slane %v6714, %v6720
        %6722 = vrot.lane.b32.xlu0 %v6721, 107
        %v6723 = vpop.permute.xlu0 %6722
        %vm6725 = vcmp.ge.s32.totalorder %v6250, 107
        %vm6726 = vcmp.lt.s32.totalorder %v6250, 118
        %vm6727 = vmand %vm6725, %vm6726
        %6728 = vst.msk [vmem:[#allocation2 + $0x2] sm:$0x1] %vm6727, %v6723
        %v6729 = vcombine.high %v6714, %v6714
        %v6731 = vunpack.c.l.s4 1966171168
        %v6732 = vunpack.c.0.s8 %v6731
        %v6733 = vlaneseq
        %v6734 = vshrl.u32 %v6733, 7
        %v6735 = vsub.s32 %v6732, %v6734
        %v6736 = vrot.slane %v6729, %v6735
        %6737 = vrot.lane.b32.xlu0 %v6736, 118
        %v6738 = vpop.permute.xlu0 %6737
        %v6739 = vrot.slane %v6738, 7
        %vm6740 = vcmask 965632
        %v6741 = vsel %vm6740, %v6739, %v6738
        %vm6743 = vcmp.ge.s32.totalorder %v6250, 118
        %vm6744 = vcmp.lt.s32.totalorder %v6250, 129
        %vm6745 = vmand %vm6743, %vm6744
        %6746 = vst.msk [vmem:[#allocation2 + $0x2] sm:$0x3] %vm6745, %v6741
        %v6747 = vcombine.high %v6721, %v6721
        %6748 = vrot.lane.b32.xlu0 %v6747, 1
        %v6749 = vpop.permute.xlu0 %6748
        %vm6751 = vcmp.ge.s32.totalorder %v6250, 1
        %vm6752 = vcmp.lt.s32.totalorder %v6250, 12
        %vm6753 = vmand %vm6751, %vm6752
        %6754 = vst.msk [vmem:[#allocation2 + $0x3] sm:$0x1] %vm6753, %v6749
        %v6755 = vcombine.high %v6736, %v6736
        %6756 = vrot.lane.b32.xlu0 %v6755, 12
        %v6757 = vpop.permute.xlu0 %6756
        %vm6759 = vcmp.ge.s32.totalorder %v6250, 12
        %vm6760 = vcmp.lt.s32.totalorder %v6250, 23
        %vm6761 = vmand %vm6759, %vm6760
        %6762 = vst.msk [vmem:[#allocation2 + $0x3] sm:$0x1] %vm6761, %v6757
        %v6763 = vcombine.high %v6240, %v6240
        %v6765 = vunpack.c.l.s4 1966171168
        %v6766 = vunpack.c.0.s8 %v6765
        %v6767 = vlaneseq
        %v6768 = vshrl.u32 %v6767, 7
        %v6769 = vsub.s32 %v6766, %v6768
        %v6770 = vrot.slane %v6763, %v6769
        %v6772 = vunpack.c.l.s4 1966171168
        %v6773 = vunpack.c.0.s8 %v6772
        %v6774 = vlaneseq
        %v6775 = vshrl.u32 %v6774, 7
        %v6776 = vsub.s32 %v6773, %v6775
        %v6777 = vrot.slane %v6770, %v6776
        %6778 = vrot.lane.b32.xlu0 %v6777, 23
        %v6779 = vpop.permute.xlu0 %6778
        %vm6781 = vcmp.ge.s32.totalorder %v6250, 23
        %vm6782 = vcmp.lt.s32.totalorder %v6250, 34
        %vm6783 = vmand %vm6781, %vm6782
        %6784 = vst.msk [vmem:[#allocation2 + $0x3] sm:$0x1] %vm6783, %v6779
        %v6785 = vcombine.high %v6770, %v6770
        %v6787 = vunpack.c.l.s4 1966171168
        %v6788 = vunpack.c.0.s8 %v6787
        %v6789 = vlaneseq
        %v6790 = vshrl.u32 %v6789, 7
        %v6791 = vsub.s32 %v6788, %v6790
        %v6792 = vrot.slane %v6785, %v6791
        %6793 = vrot.lane.b32.xlu0 %v6792, 34
        %v6794 = vpop.permute.xlu0 %6793
        %vm6796 = vcmp.ge.s32.totalorder %v6250, 34
        %vm6797 = vcmp.lt.s32.totalorder %v6250, 45
        %vm6798 = vmand %vm6796, %vm6797
        %6799 = vst.msk [vmem:[#allocation2 + $0x3] sm:$0x1] %vm6798, %v6794
        %v6800 = vcombine.high %v6777, %v6777
        %6801 = vrot.lane.b32.xlu0 %v6800, 45
        %v6802 = vpop.permute.xlu0 %6801
        %vm6804 = vcmp.ge.s32.totalorder %v6250, 45
        %vm6805 = vcmp.lt.s32.totalorder %v6250, 56
        %vm6806 = vmand %vm6804, %vm6805
        %6807 = vst.msk [vmem:[#allocation2 + $0x3] sm:$0x1] %vm6806, %v6802
        %v6808 = vcombine.high %v6792, %v6792
        %6809 = vrot.lane.b32.xlu0 %v6808, 56
        %v6810 = vpop.permute.xlu0 %6809
        %vm6812 = vcmp.ge.s32.totalorder %v6250, 56
        %vm6813 = vcmp.lt.s32.totalorder %v6250, 67
        %vm6814 = vmand %vm6812, %vm6813
        %6815 = vst.msk [vmem:[#allocation2 + $0x3] sm:$0x1] %vm6814, %v6810
        %v6818 = vunpack.c.l.s4 1966171168
        %v6819 = vunpack.c.0.s8 %v6818
        %v6820 = vlaneseq
        %v6821 = vshrl.u32 %v6820, 7
        %v6822 = vsub.s32 %v6819, %v6821
        %v6823 = vrot.slane %v6241, %v6822
        %v6825 = vunpack.c.l.s4 1966171168
        %v6826 = vunpack.c.0.s8 %v6825
        %v6827 = vlaneseq
        %v6828 = vshrl.u32 %v6827, 7
        %v6829 = vsub.s32 %v6826, %v6828
        %v6830 = vrot.slane %v6823, %v6829
        %6831 = vrot.lane.b32.xlu0 %v6830, 67
        %v6832 = vpop.permute.xlu0 %6831
        %vm6834 = vcmp.ge.s32.totalorder %v6250, 67
        %vm6835 = vcmp.lt.s32.totalorder %v6250, 78
        %vm6836 = vmand %vm6834, %vm6835
        %6837 = vst.msk [vmem:[#allocation2 + $0x3] sm:$0x1] %vm6836, %v6832
        %v6838 = vcombine.high %v6823, %v6823
        %v6840 = vunpack.c.l.s4 1966171168
        %v6841 = vunpack.c.0.s8 %v6840
        %v6842 = vlaneseq
        %v6843 = vshrl.u32 %v6842, 7
        %v6844 = vsub.s32 %v6841, %v6843
        %v6845 = vrot.slane %v6838, %v6844
        %6846 = vrot.lane.b32.xlu0 %v6845, 78
        %v6847 = vpop.permute.xlu0 %6846
        %vm6849 = vcmp.ge.s32.totalorder %v6250, 78
        %vm6850 = vcmp.lt.s32.totalorder %v6250, 89
        %vm6851 = vmand %vm6849, %vm6850
        %6852 = vst.msk [vmem:[#allocation2 + $0x3] sm:$0x1] %vm6851, %v6847
        %v6853 = vcombine.high %v6830, %v6830
        %6854 = vrot.lane.b32.xlu0 %v6853, 89
        %v6855 = vpop.permute.xlu0 %6854
        %vm6857 = vcmp.ge.s32.totalorder %v6250, 89
        %vm6858 = vcmp.lt.s32.totalorder %v6250, 100
        %vm6859 = vmand %vm6857, %vm6858
        %6860 = vst.msk [vmem:[#allocation2 + $0x3] sm:$0x1] %vm6859, %v6855
        %v6863 = vunpack.c.l.s4 1966171168
        %v6864 = vunpack.c.0.s8 %v6863
        %v6865 = vlaneseq
        %v6866 = vshrl.u32 %v6865, 7
        %v6867 = vsub.s32 %v6864, %v6866
        %v6868 = vrot.slane %v6242, %v6867
        %v6870 = vunpack.c.l.s4 1966171168
        %v6871 = vunpack.c.0.s8 %v6870
        %v6872 = vlaneseq
        %v6873 = vshrl.u32 %v6872, 7
        %v6874 = vsub.s32 %v6871, %v6873
        %v6875 = vrot.slane %v6868, %v6874
        %6876 = vrot.lane.b32.xlu0 %v6875, 100
        %v6877 = vpop.permute.xlu0 %6876
        %vm6879 = vcmp.ge.s32.totalorder %v6250, 100
        %vm6880 = vcmp.lt.s32.totalorder %v6250, 111
        %vm6881 = vmand %vm6879, %vm6880
        %6882 = vst.msk [vmem:[#allocation2 + $0x3] sm:$0x1] %vm6881, %v6877
        %v6883 = vcombine.high %v6868, %v6868
        %v6885 = vunpack.c.l.s4 1966171168
        %v6886 = vunpack.c.0.s8 %v6885
        %v6887 = vlaneseq
        %v6888 = vshrl.u32 %v6887, 7
        %v6889 = vsub.s32 %v6886, %v6888
        %v6890 = vrot.slane %v6883, %v6889
        %6891 = vrot.lane.b32.xlu0 %v6890, 111
        %v6892 = vpop.permute.xlu0 %6891
        %vm6894 = vcmp.ge.s32.totalorder %v6250, 111
        %vm6895 = vcmp.lt.s32.totalorder %v6250, 122
        %vm6896 = vmand %vm6894, %vm6895
        %6897 = vst.msk [vmem:[#allocation2 + $0x3] sm:$0x1] %vm6896, %v6892
        %v6898 = vcombine.high %v6875, %v6875
        %6899 = vrot.lane.b32.xlu0 %v6898, 122
        %v6900 = vpop.permute.xlu0 %6899
        %v6901 = vrot.slane %v6900, 7
        %vm6902 = vcmask 998400
        %v6903 = vsel %vm6902, %v6901, %v6900
        %vm6905 = vcmp.ge.s32.totalorder %v6250, 122
        %vm6906 = vcmp.lt.s32.totalorder %v6250, 133
        %vm6907 = vmand %vm6905, %vm6906
        %6908 = vst.msk [vmem:[#allocation2 + $0x3] sm:$0x3] %vm6907, %v6903
        %v6909 = vcombine.high %v6890, %v6890
        %6910 = vrot.lane.b32.xlu0 %v6909, 5
        %v6911 = vpop.permute.xlu0 %6910
        %vm6913 = vcmp.ge.s32.totalorder %v6250, 5
        %vm6914 = vcmp.lt.s32.totalorder %v6250, 16
        %vm6915 = vmand %vm6913, %vm6914
        %6916 = vst.msk [vmem:[#allocation2 + $0x4] sm:$0x1] %vm6915, %v6911
        %v6917 = vcombine.high %v6242, %v6242
        %v6919 = vunpack.c.l.s4 1966171168
        %v6920 = vunpack.c.0.s8 %v6919
        %v6921 = vlaneseq
        %v6922 = vshrl.u32 %v6921, 7
        %v6923 = vsub.s32 %v6920, %v6922
        %v6924 = vrot.slane %v6917, %v6923
        %v6926 = vunpack.c.l.s4 1966171168
        %v6927 = vunpack.c.0.s8 %v6926
        %v6928 = vlaneseq
        %v6929 = vshrl.u32 %v6928, 7
        %v6930 = vsub.s32 %v6927, %v6929
        %v6931 = vrot.slane %v6924, %v6930
        %6932 = vrot.lane.b32.xlu0 %v6931, 16
        %v6933 = vpop.permute.xlu0 %6932
        %vm6935 = vcmp.ge.s32.totalorder %v6250, 16
        %vm6936 = vcmp.lt.s32.totalorder %v6250, 27
        %vm6937 = vmand %vm6935, %vm6936
        %6938 = vst.msk [vmem:[#allocation2 + $0x4] sm:$0x1] %vm6937, %v6933
        %v6939 = vcombine.high %v6924, %v6924
        %v6941 = vunpack.c.l.s4 1966171168
        %v6942 = vunpack.c.0.s8 %v6941
        %v6943 = vlaneseq
        %v6944 = vshrl.u32 %v6943, 7
        %v6945 = vsub.s32 %v6942, %v6944
        %v6946 = vrot.slane %v6939, %v6945
        %6947 = vrot.lane.b32.xlu0 %v6946, 27
        %v6948 = vpop.permute.xlu0 %6947
        %vm6950 = vcmp.ge.s32.totalorder %v6250, 27
        %vm6951 = vcmp.lt.s32.totalorder %v6250, 38
        %vm6952 = vmand %vm6950, %vm6951
        %6953 = vst.msk [vmem:[#allocation2 + $0x4] sm:$0x1] %vm6952, %v6948
        %v6954 = vcombine.high %v6931, %v6931
        %6955 = vrot.lane.b32.xlu0 %v6954, 38
        %v6956 = vpop.permute.xlu0 %6955
        %vm6958 = vcmp.ge.s32.totalorder %v6250, 38
        %vm6959 = vcmp.lt.s32.totalorder %v6250, 49
        %vm6960 = vmand %vm6958, %vm6959
        %6961 = vst.msk [vmem:[#allocation2 + $0x4] sm:$0x1] %vm6960, %v6956
        %v6962 = vcombine.high %v6946, %v6946
        %6963 = vrot.lane.b32.xlu0 %v6962, 49
        %v6964 = vpop.permute.xlu0 %6963
        %vm6966 = vcmp.ge.s32.totalorder %v6250, 49
        %vm6967 = vcmp.lt.s32.totalorder %v6250, 60
        %vm6968 = vmand %vm6966, %vm6967
        %6969 = vst.msk [vmem:[#allocation2 + $0x4] sm:$0x1] %vm6968, %v6964
        %v6972 = vunpack.c.l.s4 1966171168
        %v6973 = vunpack.c.0.s8 %v6972
        %v6974 = vlaneseq
        %v6975 = vshrl.u32 %v6974, 7
        %v6976 = vsub.s32 %v6973, %v6975
        %v6977 = vrot.slane %v6243, %v6976
        %v6979 = vunpack.c.l.s4 1966171168
        %v6980 = vunpack.c.0.s8 %v6979
        %v6981 = vlaneseq
        %v6982 = vshrl.u32 %v6981, 7
        %v6983 = vsub.s32 %v6980, %v6982
        %v6984 = vrot.slane %v6977, %v6983
        %6985 = vrot.lane.b32.xlu0 %v6984, 60
        %v6986 = vpop.permute.xlu0 %6985
        %vm6988 = vcmp.ge.s32.totalorder %v6250, 60
        %vm6989 = vcmp.lt.s32.totalorder %v6250, 71
        %vm6990 = vmand %vm6988, %vm6989
        %6991 = vst.msk [vmem:[#allocation2 + $0x4] sm:$0x1] %vm6990, %v6986
        %v6992 = vcombine.high %v6977, %v6977
        %v6994 = vunpack.c.l.s4 1966171168
        %v6995 = vunpack.c.0.s8 %v6994
        %v6996 = vlaneseq
        %v6997 = vshrl.u32 %v6996, 7
        %v6998 = vsub.s32 %v6995, %v6997
        %v6999 = vrot.slane %v6992, %v6998
        %7000 = vrot.lane.b32.xlu0 %v6999, 71
        %v7001 = vpop.permute.xlu0 %7000
        %vm7003 = vcmp.ge.s32.totalorder %v6250, 71
        %vm7004 = vcmp.lt.s32.totalorder %v6250, 82
        %vm7005 = vmand %vm7003, %vm7004
        %7006 = vst.msk [vmem:[#allocation2 + $0x4] sm:$0x1] %vm7005, %v7001
        %v7007 = vcombine.high %v6984, %v6984
        %7008 = vrot.lane.b32.xlu0 %v7007, 82
        %v7009 = vpop.permute.xlu0 %7008
        %vm7011 = vcmp.ge.s32.totalorder %v6250, 82
        %vm7012 = vcmp.lt.s32.totalorder %v6250, 93
        %vm7013 = vmand %vm7011, %vm7012
        %7014 = vst.msk [vmem:[#allocation2 + $0x4] sm:$0x1] %vm7013, %v7009
        %v7017 = vunpack.c.l.s4 1966171168
        %v7018 = vunpack.c.0.s8 %v7017
        %v7019 = vlaneseq
        %v7020 = vshrl.u32 %v7019, 7
        %v7021 = vsub.s32 %v7018, %v7020
        %v7022 = vrot.slane %v6244, %v7021
        %v7024 = vunpack.c.l.s4 1966171168
        %v7025 = vunpack.c.0.s8 %v7024
        %v7026 = vlaneseq
        %v7027 = vshrl.u32 %v7026, 7
        %v7028 = vsub.s32 %v7025, %v7027
        %v7029 = vrot.slane %v7022, %v7028
        %7030 = vrot.lane.b32.xlu0 %v7029, 93
        %v7031 = vpop.permute.xlu0 %7030
        %vm7033 = vcmp.ge.s32.totalorder %v6250, 93
        %vm7034 = vcmp.lt.s32.totalorder %v6250, 104
        %vm7035 = vmand %vm7033, %vm7034
        %7036 = vst.msk [vmem:[#allocation2 + $0x4] sm:$0x1] %vm7035, %v7031
        %v7037 = vcombine.high %v7022, %v7022
        %v7039 = vunpack.c.l.s4 1966171168
        %v7040 = vunpack.c.0.s8 %v7039
        %v7041 = vlaneseq
        %v7042 = vshrl.u32 %v7041, 7
        %v7043 = vsub.s32 %v7040, %v7042
        %v7044 = vrot.slane %v7037, %v7043
        %7045 = vrot.lane.b32.xlu0 %v7044, 104
        %v7046 = vpop.permute.xlu0 %7045
        %vm7048 = vcmp.ge.s32.totalorder %v6250, 104
        %vm7049 = vcmp.lt.s32.totalorder %v6250, 115
        %vm7050 = vmand %vm7048, %vm7049
        %7051 = vst.msk [vmem:[#allocation2 + $0x4] sm:$0x1] %vm7050, %v7046
        %v7052 = vcombine.high %v7029, %v7029
        %7053 = vrot.lane.b32.xlu0 %v7052, 115
        %v7054 = vpop.permute.xlu0 %7053
        %vm7056 = vcmp.ge.s32.totalorder %v6250, 115
        %vm7057 = vcmp.lt.s32.totalorder %v6250, 126
        %vm7058 = vmand %vm7056, %vm7057
        %7059 = vst.msk [vmem:[#allocation2 + $0x4] sm:$0x1] %vm7058, %v7054
        %v7060 = vcombine.high %v7044, %v7044
        %7061 = vrot.lane.b32.xlu0 %v7060, 126
        %v7062 = vpop.permute.xlu0 %7061
        %v7063 = vrot.slane %v7062, 7
        %vm7064 = vcmask 1031168
        %v7065 = vsel %vm7064, %v7063, %v7062
        %vm7067 = vcmp.ge.s32.totalorder %v6250, 126
        %vm7068 = vcmp.lt.s32.totalorder %v6250, 137
        %vm7069 = vmand %vm7067, %vm7068
        %7070 = vst.msk [vmem:[#allocation2 + $0x4] sm:$0x3] %vm7069, %v7065
        %v7071 = vcombine.high %v6244, %v6244
        %v7073 = vunpack.c.l.s4 1966171168
        %v7074 = vunpack.c.0.s8 %v7073
        %v7075 = vlaneseq
        %v7076 = vshrl.u32 %v7075, 7
        %v7077 = vsub.s32 %v7074, %v7076
        %v7078 = vrot.slane %v7071, %v7077
        %v7080 = vunpack.c.l.s4 1966171168
        %v7081 = vunpack.c.0.s8 %v7080
        %v7082 = vlaneseq
        %v7083 = vshrl.u32 %v7082, 7
        %v7084 = vsub.s32 %v7081, %v7083
        %v7085 = vrot.slane %v7078, %v7084
        %7086 = vrot.lane.b32.xlu0 %v7085, 9
        %v7087 = vpop.permute.xlu0 %7086
        %vm7089 = vcmp.ge.s32.totalorder %v6250, 9
        %vm7090 = vcmp.lt.s32.totalorder %v6250, 20
        %vm7091 = vmand %vm7089, %vm7090
        %7092 = vst.msk [vmem:[#allocation2 + $0x5] sm:$0x1] %vm7091, %v7087
        %v7093 = vcombine.high %v7078, %v7078
        %v7095 = vunpack.c.l.s4 1966171168
        %v7096 = vunpack.c.0.s8 %v7095
        %v7097 = vlaneseq
        %v7098 = vshrl.u32 %v7097, 7
        %v7099 = vsub.s32 %v7096, %v7098
        %v7100 = vrot.slane %v7093, %v7099
        %7101 = vrot.lane.b32.xlu0 %v7100, 20
        %v7102 = vpop.permute.xlu0 %7101
        %vm7104 = vcmp.ge.s32.totalorder %v6250, 20
        %vm7105 = vcmp.lt.s32.totalorder %v6250, 31
        %vm7106 = vmand %vm7104, %vm7105
        %7107 = vst.msk [vmem:[#allocation2 + $0x5] sm:$0x1] %vm7106, %v7102
        %v7108 = vcombine.high %v7085, %v7085
        %7109 = vrot.lane.b32.xlu0 %v7108, 31
        %v7110 = vpop.permute.xlu0 %7109
        %vm7112 = vcmp.ge.s32.totalorder %v6250, 31
        %vm7113 = vcmp.lt.s32.totalorder %v6250, 42
        %vm7114 = vmand %vm7112, %vm7113
        %7115 = vst.msk [vmem:[#allocation2 + $0x5] sm:$0x1] %vm7114, %v7110
        %v7116 = vcombine.high %v7100, %v7100
        %7117 = vrot.lane.b32.xlu0 %v7116, 42
        %v7118 = vpop.permute.xlu0 %7117
        %vm7120 = vcmp.ge.s32.totalorder %v6250, 42
        %vm7121 = vcmp.lt.s32.totalorder %v6250, 53
        %vm7122 = vmand %vm7120, %vm7121
        %7123 = vst.msk [vmem:[#allocation2 + $0x5] sm:$0x1] %vm7122, %v7118
        %v7126 = vunpack.c.l.s4 1966171168
        %v7127 = vunpack.c.0.s8 %v7126
        %v7128 = vlaneseq
        %v7129 = vshrl.u32 %v7128, 7
        %v7130 = vsub.s32 %v7127, %v7129
        %v7131 = vrot.slane %v6245, %v7130
        %v7133 = vunpack.c.l.s4 1966171168
        %v7134 = vunpack.c.0.s8 %v7133
        %v7135 = vlaneseq
        %v7136 = vshrl.u32 %v7135, 7
        %v7137 = vsub.s32 %v7134, %v7136
        %v7138 = vrot.slane %v7131, %v7137
        %7139 = vrot.lane.b32.xlu0 %v7138, 53
        %v7140 = vpop.permute.xlu0 %7139
        %vm7142 = vcmp.ge.s32.totalorder %v6250, 53
        %vm7143 = vcmp.lt.s32.totalorder %v6250, 64
        %vm7144 = vmand %vm7142, %vm7143
        %7145 = vst.msk [vmem:[#allocation2 + $0x5] sm:$0x1] %vm7144, %v7140
        %v7146 = vcombine.high %v7131, %v7131
        %v7148 = vunpack.c.l.s4 1966171168
        %v7149 = vunpack.c.0.s8 %v7148
        %v7150 = vlaneseq
        %v7151 = vshrl.u32 %v7150, 7
        %v7152 = vsub.s32 %v7149, %v7151
        %v7153 = vrot.slane %v7146, %v7152
        %7154 = vrot.lane.b32.xlu0 %v7153, 64
        %v7155 = vpop.permute.xlu0 %7154
        %vm7157 = vcmp.ge.s32.totalorder %v6250, 64
        %vm7158 = vcmp.lt.s32.totalorder %v6250, 75
        %vm7159 = vmand %vm7157, %vm7158
        %7160 = vst.msk [vmem:[#allocation2 + $0x5] sm:$0x1] %vm7159, %v7155
        %v7161 = vcombine.high %v7138, %v7138
        %7162 = vrot.lane.b32.xlu0 %v7161, 75
        %v7163 = vpop.permute.xlu0 %7162
        %vm7165 = vcmp.ge.s32.totalorder %v6250, 75
        %vm7166 = vcmp.lt.s32.totalorder %v6250, 86
        %vm7167 = vmand %vm7165, %vm7166
        %7168 = vst.msk [vmem:[#allocation2 + $0x5] sm:$0x1] %vm7167, %v7163
        %v7171 = vunpack.c.l.s4 1966171168
        %v7172 = vunpack.c.0.s8 %v7171
        %v7173 = vlaneseq
        %v7174 = vshrl.u32 %v7173, 7
        %v7175 = vsub.s32 %v7172, %v7174
        %v7176 = vrot.slane %v6246, %v7175
        %v7178 = vunpack.c.l.s4 1966171168
        %v7179 = vunpack.c.0.s8 %v7178
        %v7180 = vlaneseq
        %v7181 = vshrl.u32 %v7180, 7
        %v7182 = vsub.s32 %v7179, %v7181
        %v7183 = vrot.slane %v7176, %v7182
        %7184 = vrot.lane.b32.xlu0 %v7183, 86
        %v7185 = vpop.permute.xlu0 %7184
        %vm7187 = vcmp.ge.s32.totalorder %v6250, 86
        %vm7188 = vcmp.lt.s32.totalorder %v6250, 97
        %vm7189 = vmand %vm7187, %vm7188
        %7190 = vst.msk [vmem:[#allocation2 + $0x5] sm:$0x1] %vm7189, %v7185
        %v7191 = vcombine.high %v7176, %v7176
        %v7193 = vunpack.c.l.s4 1966171168
        %v7194 = vunpack.c.0.s8 %v7193
        %v7195 = vlaneseq
        %v7196 = vshrl.u32 %v7195, 7
        %v7197 = vsub.s32 %v7194, %v7196
        %v7198 = vrot.slane %v7191, %v7197
        %7199 = vrot.lane.b32.xlu0 %v7198, 97
        %v7200 = vpop.permute.xlu0 %7199
        %vm7202 = vcmp.ge.s32.totalorder %v6250, 97
        %vm7203 = vcmp.lt.s32.totalorder %v6250, 108
        %vm7204 = vmand %vm7202, %vm7203
        %7205 = vst.msk [vmem:[#allocation2 + $0x5] sm:$0x1] %vm7204, %v7200
        %v7206 = vcombine.high %v7183, %v7183
        %7207 = vrot.lane.b32.xlu0 %v7206, 108
        %v7208 = vpop.permute.xlu0 %7207
        %vm7210 = vcmp.ge.s32.totalorder %v6250, 108
        %vm7211 = vcmp.lt.s32.totalorder %v6250, 119
        %vm7212 = vmand %vm7210, %vm7211
        %7213 = vst.msk [vmem:[#allocation2 + $0x5] sm:$0x1] %vm7212, %v7208
        %v7214 = vcombine.high %v7198, %v7198
        %7215 = vrot.lane.b32.xlu0 %v7214, 119
        %v7216 = vpop.permute.xlu0 %7215
        %v7217 = vrot.slane %v7216, 7
        %vm7218 = vcmask 973824
        %v7219 = vsel %vm7218, %v7217, %v7216
        %vm7221 = vcmp.ge.s32.totalorder %v6250, 119
        %vm7222 = vcmp.lt.s32.totalorder %v6250, 130
        %vm7223 = vmand %vm7221, %vm7222
        %7224 = vst.msk [vmem:[#allocation2 + $0x5] sm:$0x3] %vm7223, %v7219
        %v7225 = vcombine.high %v6246, %v6246
        %v7227 = vunpack.c.l.s4 1966171168
        %v7228 = vunpack.c.0.s8 %v7227
        %v7229 = vlaneseq
        %v7230 = vshrl.u32 %v7229, 7
        %v7231 = vsub.s32 %v7228, %v7230
        %v7232 = vrot.slane %v7225, %v7231
        %v7234 = vunpack.c.l.s4 1966171168
        %v7235 = vunpack.c.0.s8 %v7234
        %v7236 = vlaneseq
        %v7237 = vshrl.u32 %v7236, 7
        %v7238 = vsub.s32 %v7235, %v7237
        %v7239 = vrot.slane %v7232, %v7238
        %7240 = vrot.lane.b32.xlu0 %v7239, 2
        %v7241 = vpop.permute.xlu0 %7240
        %vm7243 = vcmp.ge.s32.totalorder %v6250, 2
        %vm7244 = vcmp.lt.s32.totalorder %v6250, 13
        %vm7245 = vmand %vm7243, %vm7244
        %7246 = vst.msk [vmem:[#allocation2 + $0x6] sm:$0x1] %vm7245, %v7241
        %v7247 = vcombine.high %v7232, %v7232
        %v7249 = vunpack.c.l.s4 1966171168
        %v7250 = vunpack.c.0.s8 %v7249
        %v7251 = vlaneseq
        %v7252 = vshrl.u32 %v7251, 7
        %v7253 = vsub.s32 %v7250, %v7252
        %v7254 = vrot.slane %v7247, %v7253
        %7255 = vrot.lane.b32.xlu0 %v7254, 13
        %v7256 = vpop.permute.xlu0 %7255
        %vm7258 = vcmp.ge.s32.totalorder %v6250, 13
        %vm7259 = vcmp.lt.s32.totalorder %v6250, 24
        %vm7260 = vmand %vm7258, %vm7259
        %7261 = vst.msk [vmem:[#allocation2 + $0x6] sm:$0x1] %vm7260, %v7256
        %v7262 = vcombine.high %v7239, %v7239
        %7263 = vrot.lane.b32.xlu0 %v7262, 24
        %v7264 = vpop.permute.xlu0 %7263
        %vm7266 = vcmp.ge.s32.totalorder %v6250, 24
        %vm7267 = vcmp.lt.s32.totalorder %v6250, 35
        %vm7268 = vmand %vm7266, %vm7267
        %7269 = vst.msk [vmem:[#allocation2 + $0x6] sm:$0x1] %vm7268, %v7264
        %v7270 = vcombine.high %v7254, %v7254
        %7271 = vrot.lane.b32.xlu0 %v7270, 35
        %v7272 = vpop.permute.xlu0 %7271
        %vm7274 = vcmp.ge.s32.totalorder %v6250, 35
        %vm7275 = vcmp.lt.s32.totalorder %v6250, 46
        %vm7276 = vmand %vm7274, %vm7275
        %7277 = vst.msk [vmem:[#allocation2 + $0x6] sm:$0x1] %vm7276, %v7272
        %v7280 = vunpack.c.l.s4 1966171168
        %v7281 = vunpack.c.0.s8 %v7280
        %v7282 = vlaneseq
        %v7283 = vshrl.u32 %v7282, 7
        %v7284 = vsub.s32 %v7281, %v7283
        %v7285 = vrot.slane %v6247, %v7284
        %v7287 = vunpack.c.l.s4 1966171168
        %v7288 = vunpack.c.0.s8 %v7287
        %v7289 = vlaneseq
        %v7290 = vshrl.u32 %v7289, 7
        %v7291 = vsub.s32 %v7288, %v7290
        %v7292 = vrot.slane %v7285, %v7291
        %7293 = vrot.lane.b32.xlu0 %v7292, 46
        %v7294 = vpop.permute.xlu0 %7293
        %vm7296 = vcmp.ge.s32.totalorder %v6250, 46
        %vm7297 = vcmp.lt.s32.totalorder %v6250, 57
        %vm7298 = vmand %vm7296, %vm7297
        %7299 = vst.msk [vmem:[#allocation2 + $0x6] sm:$0x1] %vm7298, %v7294
        %v7300 = vcombine.high %v7285, %v7285
        %v7302 = vunpack.c.l.s4 1966171168
        %v7303 = vunpack.c.0.s8 %v7302
        %v7304 = vlaneseq
        %v7305 = vshrl.u32 %v7304, 7
        %v7306 = vsub.s32 %v7303, %v7305
        %v7307 = vrot.slane %v7300, %v7306
        %7308 = vrot.lane.b32.xlu0 %v7307, 57
        %v7309 = vpop.permute.xlu0 %7308
        %vm7311 = vcmp.ge.s32.totalorder %v6250, 57
        %vm7312 = vcmp.lt.s32.totalorder %v6250, 68
        %vm7313 = vmand %vm7311, %vm7312
        %7314 = vst.msk [vmem:[#allocation2 + $0x6] sm:$0x1] %vm7313, %v7309
        %v7315 = vcombine.high %v7292, %v7292
        %7316 = vrot.lane.b32.xlu0 %v7315, 68
        %v7317 = vpop.permute.xlu0 %7316
        %vm7319 = vcmp.ge.s32.totalorder %v6250, 68
        %vm7320 = vcmp.lt.s32.totalorder %v6250, 79
        %vm7321 = vmand %vm7319, %vm7320
        %7322 = vst.msk [vmem:[#allocation2 + $0x6] sm:$0x1] %vm7321, %v7317
        %v7325 = vunpack.c.l.s4 1966171168
        %v7326 = vunpack.c.0.s8 %v7325
        %v7327 = vlaneseq
        %v7328 = vshrl.u32 %v7327, 7
        %v7329 = vsub.s32 %v7326, %v7328
        %v7330 = vrot.slane %v6248, %v7329
        %v7332 = vunpack.c.l.s4 1966171168
        %v7333 = vunpack.c.0.s8 %v7332
        %v7334 = vlaneseq
        %v7335 = vshrl.u32 %v7334, 7
        %v7336 = vsub.s32 %v7333, %v7335
        %v7337 = vrot.slane %v7330, %v7336
        %7338 = vrot.lane.b32.xlu0 %v7337, 79
        %v7339 = vpop.permute.xlu0 %7338
        %vm7341 = vcmp.ge.s32.totalorder %v6250, 79
        %vm7342 = vcmp.lt.s32.totalorder %v6250, 90
        %vm7343 = vmand %vm7341, %vm7342
        %7344 = vst.msk [vmem:[#allocation2 + $0x6] sm:$0x1] %vm7343, %v7339
        %v7345 = vcombine.high %v7330, %v7330
        %v7347 = vunpack.c.l.s4 1966171168
        %v7348 = vunpack.c.0.s8 %v7347
        %v7349 = vlaneseq
        %v7350 = vshrl.u32 %v7349, 7
        %v7351 = vsub.s32 %v7348, %v7350
        %v7352 = vrot.slane %v7345, %v7351
        %7353 = vrot.lane.b32.xlu0 %v7352, 90
        %v7354 = vpop.permute.xlu0 %7353
        %vm7356 = vcmp.ge.s32.totalorder %v6250, 90
        %vm7357 = vcmp.lt.s32.totalorder %v6250, 101
        %vm7358 = vmand %vm7356, %vm7357
        %7359 = vst.msk [vmem:[#allocation2 + $0x6] sm:$0x1] %vm7358, %v7354
        %v7360 = vcombine.high %v7337, %v7337
        %7361 = vrot.lane.b32.xlu0 %v7360, 101
        %v7362 = vpop.permute.xlu0 %7361
        %vm7364 = vcmp.ge.s32.totalorder %v6250, 101
        %vm7365 = vcmp.lt.s32.totalorder %v6250, 112
        %vm7366 = vmand %vm7364, %vm7365
        %7367 = vst.msk [vmem:[#allocation2 + $0x6] sm:$0x1] %vm7366, %v7362
        %v7368 = vcombine.high %v7352, %v7352
        %7369 = vrot.lane.b32.xlu0 %v7368, 112
        %v7370 = vpop.permute.xlu0 %7369
        %vm7372 = vcmp.ge.s32.totalorder %v6250, 112
        %vm7373 = vcmp.lt.s32.totalorder %v6250, 123
        %vm7374 = vmand %vm7372, %vm7373
        %7375 = vst.msk [vmem:[#allocation2 + $0x6] sm:$0x1] %vm7374, %v7370
        %v7376 = vcombine.high %v6248, %v6248
        %v7378 = vunpack.c.l.s4 1966171168
        %v7379 = vunpack.c.0.s8 %v7378
        %v7380 = vlaneseq
        %v7381 = vshrl.u32 %v7380, 7
        %v7382 = vsub.s32 %v7379, %v7381
        %v7383 = vrot.slane %v7376, %v7382
        %v7385 = vunpack.c.l.s4 1966171168
        %v7386 = vunpack.c.0.s8 %v7385
        %v7387 = vlaneseq
        %v7388 = vshrl.u32 %v7387, 7
        %v7389 = vsub.s32 %v7386, %v7388
        %v7390 = vrot.slane %v7383, %v7389
        %7391 = vrot.lane.b32.xlu0 %v7390, 123
        %v7392 = vpop.permute.xlu0 %7391
        %v7393 = vrot.slane %v7392, 7
        %vm7394 = vcmask 1006592
        %v7395 = vsel %vm7394, %v7393, %v7392
        %vm7397 = vcmp.ge.s32.totalorder %v6250, 123
        %vm7398 = vcmp.lt.s32.totalorder %v6250, 134
        %vm7399 = vmand %vm7397, %vm7398
        %7400 = vst.msk [vmem:[#allocation2 + $0x6] sm:$0x3] %vm7399, %v7395
        %v7401 = vcombine.high %v7383, %v7383
        %v7403 = vunpack.c.l.s4 1966171168
        %v7404 = vunpack.c.0.s8 %v7403
        %v7405 = vlaneseq
        %v7406 = vshrl.u32 %v7405, 7
        %v7407 = vsub.s32 %v7404, %v7406
        %v7408 = vrot.slane %v7401, %v7407
        %7409 = vrot.lane.b32.xlu0 %v7408, 6
        %v7410 = vpop.permute.xlu0 %7409
        %vm7412 = vcmp.ge.s32.totalorder %v6250, 6
        %vm7413 = vcmp.lt.s32.totalorder %v6250, 17
        %vm7414 = vmand %vm7412, %vm7413
        %7415 = vst.msk [vmem:[#allocation2 + $0x7] sm:$0x1] %vm7414, %v7410
        %v7416 = vcombine.high %v7390, %v7390
        %7417 = vrot.lane.b32.xlu0 %v7416, 17
        %v7418 = vpop.permute.xlu0 %7417
        %vm7420 = vcmp.ge.s32.totalorder %v6250, 17
        %vm7421 = vcmp.lt.s32.totalorder %v6250, 28
        %vm7422 = vmand %vm7420, %vm7421
        %7423 = vst.msk [vmem:[#allocation2 + $0x7] sm:$0x1] %vm7422, %v7418
        %v7424 = vcombine.high %v7408, %v7408
        %7425 = vrot.lane.b32.xlu0 %v7424, 28
        %v7426 = vpop.permute.xlu0 %7425
        %vm7428 = vcmp.ge.s32.totalorder %v6250, 28
        %vm7429 = vcmp.lt.s32.totalorder %v6250, 39
        %vm7430 = vmand %vm7428, %vm7429
        %7431 = vst.msk [vmem:[#allocation2 + $0x7] sm:$0x1] %vm7430, %v7426
        %v7434 = vunpack.c.l.s4 1966171168
        %v7435 = vunpack.c.0.s8 %v7434
        %v7436 = vlaneseq
        %v7437 = vshrl.u32 %v7436, 7
        %v7438 = vsub.s32 %v7435, %v7437
        %v7439 = vrot.slane %v6249, %v7438
        %v7441 = vunpack.c.l.s4 1966171168
        %v7442 = vunpack.c.0.s8 %v7441
        %v7443 = vlaneseq
        %v7444 = vshrl.u32 %v7443, 7
        %v7445 = vsub.s32 %v7442, %v7444
        %v7446 = vrot.slane %v7439, %v7445
        %7447 = vrot.lane.b32.xlu0 %v7446, 39
        %v7448 = vpop.permute.xlu0 %7447
        %vm7450 = vcmp.ge.s32.totalorder %v6250, 39
        %vm7451 = vcmp.lt.s32.totalorder %v6250, 50
        %vm7452 = vmand %vm7450, %vm7451
        %7453 = vst.msk [vmem:[#allocation2 + $0x7] sm:$0x1] %vm7452, %v7448
        %v7454 = vcombine.high %v7439, %v7439
        %v7456 = vunpack.c.l.s4 1966171168
        %v7457 = vunpack.c.0.s8 %v7456
        %v7458 = vlaneseq
        %v7459 = vshrl.u32 %v7458, 7
        %v7460 = vsub.s32 %v7457, %v7459
        %v7461 = vrot.slane %v7454, %v7460
        %7462 = vrot.lane.b32.xlu0 %v7461, 50
        %v7463 = vpop.permute.xlu0 %7462
        %vm7465 = vcmp.ge.s32.totalorder %v6250, 50
        %vm7466 = vcmp.lt.s32.totalorder %v6250, 61
        %vm7467 = vmand %vm7465, %vm7466
        %7468 = vst.msk [vmem:[#allocation2 + $0x7] sm:$0x1] %vm7467, %v7463
        %v7469 = vcombine.high %v7446, %v7446
        %7470 = vrot.lane.b32.xlu0 %v7469, 61
        %v7471 = vpop.permute.xlu0 %7470
        %vm7473 = vcmp.ge.s32.totalorder %v6250, 61
        %vm7474 = vcmp.lt.s32.totalorder %v6250, 72
        %vm7475 = vmand %vm7473, %vm7474
        %7476 = vst.msk [vmem:[#allocation2 + $0x7] sm:$0x1] %vm7475, %v7471
        %v7477 = vld [vmem:[#allocation2] sm:$0xff]
        %v7478 = vld [vmem:[%s9] sm:$0xff]
        %v7479 = vld [vmem:[%s9 + $0x8] sm:$0xff]
        %v7480 = vld [vmem:[%s9 + $0x10] sm:$0xff]
        %v7481 = vld [vmem:[%s9 + $0x18] sm:$0xff]
        %v7482 = vld [vmem:[%s9 + $0x20] sm:$0xff]
        %v7483 = vld [vmem:[%s9 + $0x28] sm:$0xff]
        %v7484 = vld [vmem:[%s9 + $0x30] sm:$0xff]
        %v7485 = vld [vmem:[%s9 + $0x38] sm:$0xff]
        %v7486 = vld [vmem:[%s9 + $0x40] sm:$0xff]
        %v7487 = vld [vmem:[%s9 + $0x48] sm:$0xff]
        %v7488 = vld [vmem:[%s9 + $0x50] sm:$0xff]
        %v7489 = vld [vmem:[%s9 + $0x58] sm:$0xff]
        %v7490 = vld [vmem:[%s9 + $0x60] sm:$0xff]
        %v7491 = vld [vmem:[%s9 + $0x68] sm:$0xff]
        %v7492 = vld [vmem:[%s9 + $0x70] sm:$0xff]
        %v7493 = vld [vmem:[%s9 + $0x78] sm:$0xff]
        %v7494 = vld [vmem:[%s9 + $0x80] sm:$0xff]
        %v7495 = vld [vmem:[%s9 + $0x88] sm:$0xff]
        %v7496 = vld [vmem:[%s9 + $0x90] sm:$0xff]
        %v7497 = vld [vmem:[%s9 + $0x98] sm:$0xff]
        %v7498 = vld [vmem:[%s9 + $0xa0] sm:$0xff]
        %v7499 = vld [vmem:[%s9 + $0xa8] sm:$0xff]
        %v7500 = vld [vmem:[%s9 + $0xb0] sm:$0xff]
        %v7501 = vld [vmem:[%s9 + $0xb8] sm:$0xff]
        %v7502 = vld [vmem:[%s9 + $0xc0] sm:$0xff]
        %v7503 = vld [vmem:[%s9 + $0xc8] sm:$0xff]
        %v7504 = vld [vmem:[%s9 + $0xd0] sm:$0xff]
        %v7505 = vld [vmem:[%s9 + $0xd8] sm:$0xff]
        %v7506 = vld [vmem:[%s9 + $0xe0] sm:$0xff]
        %v7507 = vld [vmem:[%s9 + $0xe8] sm:$0xff]
        %v7508 = vld [vmem:[%s9 + $0xf0] sm:$0xff]
        %v7509 = vld [vmem:[%s9 + $0xf8] sm:$0xff]
        %v7510 = vld [vmem:[%s9 + $0x100] sm:$0xff]
        %v7511 = vld [vmem:[%s9 + $0x108] sm:$0xff]
        %v7512 = vld [vmem:[%s9 + $0x110] sm:$0xff]
        %v7513 = vld [vmem:[%s9 + $0x118] sm:$0xff]
        %v7514 = vld [vmem:[%s9 + $0x120] sm:$0xff]
        %v7515 = vld [vmem:[%s9 + $0x128] sm:$0xff]
        %v7516 = vld [vmem:[%s9 + $0x130] sm:$0xff]
        %v7517 = vld [vmem:[%s9 + $0x138] sm:$0xff]
        %v7518 = vld [vmem:[%s9 + $0x140] sm:$0xff]
        %v7519 = vld [vmem:[%s9 + $0x148] sm:$0xff]
        %v7520 = vld [vmem:[%s9 + $0x150] sm:$0xff]
        %v7521 = vld [vmem:[%s9 + $0x158] sm:$0xff]
        %v7522 = vld [vmem:[%s9 + $0x160] sm:$0xff]
        %v7523 = vld [vmem:[%s9 + $0x168] sm:$0xff]
        %v7524 = vld [vmem:[%s9 + $0x170] sm:$0xff]
        %v7525 = vld [vmem:[%s9 + $0x178] sm:$0xff]
        %v7526 = vld [vmem:[%s9 + $0x180] sm:$0xff]
        %v7527 = vld [vmem:[%s9 + $0x188] sm:$0xff]
        %v7528 = vld [vmem:[%s9 + $0x190] sm:$0xff]
        %v7529 = vld [vmem:[%s9 + $0x198] sm:$0xff]
        %v7530 = vld [vmem:[%s9 + $0x1a0] sm:$0xff]
        %v7531 = vld [vmem:[%s9 + $0x1a8] sm:$0xff]
        %v7532 = vld [vmem:[%s9 + $0x1b0] sm:$0xff]
        %v7533 = vld [vmem:[%s9 + $0x1b8] sm:$0xff]
        %v7534 = vld [vmem:[%s9 + $0x1c0] sm:$0xff]
        %v7535 = vld [vmem:[%s9 + $0x1c8] sm:$0xff]
        %v7536 = vld [vmem:[%s9 + $0x1d0] sm:$0xff]
        %v7537 = vld [vmem:[%s9 + $0x1d8] sm:$0xff]
        %v7538 = vld [vmem:[%s9 + $0x1e0] sm:$0xff]
        %v7539 = vld [vmem:[%s9 + $0x1e8] sm:$0xff]
        %v7540 = vld [vmem:[%s9 + $0x1f0] sm:$0xff]
        %v7541 = vld [vmem:[%s9 + $0x1f8] sm:$0xff]
        %v7542 = vld [vmem:[%s9 + $0x200] sm:$0xff]
        %v7543 = vld [vmem:[%s9 + $0x208] sm:$0xff]
        %v7544 = vld [vmem:[%s9 + $0x210] sm:$0xff]
        %v7545 = vld [vmem:[%s9 + $0x218] sm:$0xff]
        %v7546 = vld [vmem:[%s9 + $0x220] sm:$0xff]
        %v7547 = vld [vmem:[%s9 + $0x228] sm:$0xff]
        %v7548 = vld [vmem:[%s9 + $0x230] sm:$0xff]
        %v7549 = vld [vmem:[%s9 + $0x238] sm:$0xff]
        %v7550 = vld [vmem:[%s9 + $0x240] sm:$0xff]
        %v7551 = vld [vmem:[%s9 + $0x248] sm:$0xff]
        %v7552 = vld [vmem:[%s9 + $0x250] sm:$0xff]
        %v7553 = vld [vmem:[%s9 + $0x258] sm:$0xff]
        %v7554 = vld [vmem:[%s9 + $0x260] sm:$0xff]
        %v7555 = vld [vmem:[%s9 + $0x268] sm:$0xff]
        %v7556 = vld [vmem:[%s9 + $0x270] sm:$0xff]
        %v7557 = vld [vmem:[%s9 + $0x278] sm:$0xff]
        %v7558 = vld [vmem:[%s9 + $0x280] sm:$0xff]
        %v7559 = vld [vmem:[%s9 + $0x288] sm:$0xff]
        %v7560 = vld [vmem:[%s9 + $0x290] sm:$0xff]
        %v7561 = vld [vmem:[%s9 + $0x298] sm:$0xff]
        %v7562 = vld [vmem:[%s9 + $0x2a0] sm:$0xff]
        %v7563 = vld [vmem:[%s9 + $0x2a8] sm:$0xff]
        %v7564 = vld [vmem:[%s9 + $0x2b0] sm:$0xff]
        %v7565 = vld [vmem:[%s9 + $0x2b8] sm:$0xff]
        %v7566 = vld [vmem:[%s9 + $0x2c0] sm:$0xff]
        %v7567 = vld [vmem:[%s9 + $0x2c8] sm:$0xff]
        %v7568 = vld [vmem:[%s9 + $0x2d0] sm:$0xff]
        %v7569 = vld [vmem:[%s9 + $0x2d8] sm:$0xff]
        %v7570 = vld [vmem:[%s9 + $0x2e0] sm:$0xff]
        %v7571 = vld [vmem:[%s9 + $0x2e8] sm:$0xff]
        %v7572 = vld [vmem:[%s9 + $0x2f0] sm:$0xff]
        %v7573 = vld [vmem:[%s9 + $0x2f8] sm:$0xff]
        %v7574 = vld [vmem:[%s9 + $0x300] sm:$0xff]
        %v7575 = vld [vmem:[%s9 + $0x308] sm:$0xff]
        %v7576 = vld [vmem:[%s9 + $0x310] sm:$0xff]
        %v7577 = vld [vmem:[%s9 + $0x318] sm:$0xff]
        %v7578 = vld [vmem:[%s9 + $0x320] sm:$0xff]
        %v7579 = vld [vmem:[%s9 + $0x328] sm:$0xff]
        %v7580 = vld [vmem:[%s9 + $0x330] sm:$0xff]
        %v7581 = vld [vmem:[%s9 + $0x338] sm:$0xff]
        %v7582 = vld [vmem:[%s9 + $0x340] sm:$0xff]
        %v7583 = vld [vmem:[%s9 + $0x348] sm:$0xff]
        %v7584 = vld [vmem:[%s9 + $0x350] sm:$0xff]
        %v7585 = vld [vmem:[%s9 + $0x358] sm:$0xff]
        %v7586 = vld [vmem:[%s9 + $0x360] sm:$0xff]
        %v7587 = vld [vmem:[%s9 + $0x368] sm:$0xff]
        %v7588 = vld [vmem:[%s9 + $0x370] sm:$0xff]
        %v7589 = vld [vmem:[%s9 + $0x378] sm:$0xff]
        %v7590 = vld [vmem:[%s9 + $0x380] sm:$0xff]
        %v7591 = vld [vmem:[%s9 + $0x388] sm:$0xff]
        %v7592 = vld [vmem:[%s9 + $0x390] sm:$0xff]
        %v7593 = vld [vmem:[%s9 + $0x398] sm:$0xff]
        %v7594 = vld [vmem:[%s9 + $0x3a0] sm:$0xff]
        %v7595 = vld [vmem:[%s9 + $0x3a8] sm:$0xff]
        %v7596 = vld [vmem:[%s9 + $0x3b0] sm:$0xff]
        %v7597 = vld [vmem:[%s9 + $0x3b8] sm:$0xff]
        %v7598 = vld [vmem:[%s9 + $0x3c0] sm:$0xff]
        %v7599 = vld [vmem:[%s10] sm:$0x1]
        %v7601 = vlaneseq
        %v7602 = vshrl.u32 %v7601, 7
        %v7603 = vsub.s32 0, %v7602
        %v7604 = vrot.slane %v7477, %v7603
        %v7605 = vlaneseq
        %v7606 = vshrl.u32 %v7605, 7
        %v7607 = vsub.s32 1, %v7606
        %v7608 = vrot.slane %v7477, %v7607
        %v7609 = vlaneseq
        %v7610 = vshrl.u32 %v7609, 7
        %v7611 = vsub.s32 2, %v7610
        %v7612 = vrot.slane %v7477, %v7611
        %v7613 = vlaneseq
        %v7614 = vshrl.u32 %v7613, 7
        %v7615 = vsub.s32 3, %v7614
        %v7616 = vrot.slane %v7477, %v7615
        %v7617 = vlaneseq
        %v7618 = vshrl.u32 %v7617, 7
        %v7619 = vsub.s32 4, %v7618
        %v7620 = vrot.slane %v7477, %v7619
        %v7621 = vlaneseq
        %v7622 = vshrl.u32 %v7621, 7
        %v7623 = vsub.s32 5, %v7622
        %v7624 = vrot.slane %v7477, %v7623
        %v7625 = vlaneseq
        %v7626 = vshrl.u32 %v7625, 7
        %v7627 = vsub.s32 6, %v7626
        %v7628 = vrot.slane %v7477, %v7627
        %v7629 = vlaneseq
        %v7630 = vshrl.u32 %v7629, 7
        %v7631 = vsub.s32 7, %v7630
        %v7632 = vrot.slane %v7477, %v7631
        %vm7640 = vcmask 588800
        %v7641 = vsel %vm7640, %v7632, 0
        %7643 = vmatprep.subr.mxu0 0.0
        %7644 = vmatpush1.msra.mxu0 %v7493
        %7645 = vmatprep.subr.mxu0 0.0
        %7646 = vmatpush1.msra.mxu0 %v7492
        %7647 = vmatprep.subr.mxu0 0.0
        %7648 = vmatpush1.msra.mxu0 %v7491
        %7649 = vmatprep.subr.mxu0 0.0
        %7650 = vmatpush1.msra.mxu0 %v7490
        %7651 = vmatprep.subr.mxu0 0.0
        %7652 = vmatpush1.msra.mxu0 %v7489
        %7653 = vmatprep.subr.mxu0 0.0
        %7654 = vmatpush1.msra.mxu0 %v7488
        %7655 = vmatprep.subr.mxu0 0.0
        %7656 = vmatpush1.msra.mxu0 %v7487
        %7657 = vmatprep.subr.mxu0 0.0
        %7658 = vmatpush1.msra.mxu0 %v7486
        %7659 = vmatprep.subr.mxu0 0.0
        %7660 = vmatpush1.msra.mxu0 %v7485
        %7661 = vmatprep.subr.mxu0 0.0
        %7662 = vmatpush1.msra.mxu0 %v7484
        %7663 = vmatprep.subr.mxu0 0.0
        %7664 = vmatpush1.msra.mxu0 %v7483
        %7665 = vmatprep.subr.mxu0 0.0
        %7666 = vmatpush1.msra.mxu0 %v7482
        %7667 = vmatprep.subr.mxu0 0.0
        %7668 = vmatpush1.msra.mxu0 %v7481
        %7669 = vmatprep.subr.mxu0 0.0
        %7670 = vmatpush1.msra.mxu0 %v7480
        %7671 = vmatprep.subr.mxu0 0.0
        %7672 = vmatpush1.msra.mxu0 %v7479
        %7673 = vmatprep.subr.mxu0 0.0
        %7674 = vmatpush1.msra.mxu0 %v7478
        %7675 = vmatprep.subr.mxu0 0.0
        %7676 = vmatpush2.msra.mxu0 %v7509
        %7677 = vmatprep.subr.mxu0 0.0
        %7678 = vmatpush2.msra.mxu0 %v7508
        %7679 = vmatprep.subr.mxu0 0.0
        %7680 = vmatpush2.msra.mxu0 %v7507
        %7681 = vmatprep.subr.mxu0 0.0
        %7682 = vmatpush2.msra.mxu0 %v7506
        %7683 = vmatprep.subr.mxu0 0.0
        %7684 = vmatpush2.msra.mxu0 %v7505
        %7685 = vmatprep.subr.mxu0 0.0
        %7686 = vmatpush2.msra.mxu0 %v7504
        %7687 = vmatprep.subr.mxu0 0.0
        %7688 = vmatpush2.msra.mxu0 %v7503
        %7689 = vmatprep.subr.mxu0 0.0
        %7690 = vmatpush2.msra.mxu0 %v7502
        %7691 = vmatprep.subr.mxu0 0.0
        %7692 = vmatpush2.msra.mxu0 %v7501
        %7693 = vmatprep.subr.mxu0 0.0
        %7694 = vmatpush2.msra.mxu0 %v7500
        %7695 = vmatprep.subr.mxu0 0.0
        %7696 = vmatpush2.msra.mxu0 %v7499
        %7697 = vmatprep.subr.mxu0 0.0
        %7698 = vmatpush2.msra.mxu0 %v7498
        %7699 = vmatprep.subr.mxu0 0.0
        %7700 = vmatpush2.msra.mxu0 %v7497
        %7701 = vmatprep.subr.mxu0 0.0
        %7702 = vmatpush2.msra.mxu0 %v7496
        %7703 = vmatprep.subr.mxu0 0.0
        %7704 = vmatpush2.msra.mxu0 %v7495
        %7705 = vmatprep.subr.mxu0 0.0
        %7706 = vmatpush2.msra.mxu0 %v7494
        %7707 = vmatprep.mubr.f32.mxu0 %v7608
        %7708 = vmatmul.mubr.f32.gmra.mxu0 %v7604
        %v7709 = vpop.f32.mrf.mxu0
        %v7710 = vadd.f32 %v7599, %v7709
        %v7711 = vpop.f32.mrf.mxu0
        %7712 = vdwg.mxu0
        %7713 = vmatprep.subr.mxu0 0.0
        %7714 = vmatpush1.msra.mxu0 %v7525
        %7715 = vmatprep.subr.mxu0 0.0
        %7716 = vmatpush1.msra.mxu0 %v7524
        %7717 = vmatprep.subr.mxu0 0.0
        %7718 = vmatpush1.msra.mxu0 %v7523
        %7719 = vmatprep.subr.mxu0 0.0
        %7720 = vmatpush1.msra.mxu0 %v7522
        %7721 = vmatprep.subr.mxu0 0.0
        %7722 = vmatpush1.msra.mxu0 %v7521
        %7723 = vmatprep.subr.mxu0 0.0
        %7724 = vmatpush1.msra.mxu0 %v7520
        %7725 = vmatprep.subr.mxu0 0.0
        %7726 = vmatpush1.msra.mxu0 %v7519
        %7727 = vmatprep.subr.mxu0 0.0
        %7728 = vmatpush1.msra.mxu0 %v7518
        %7729 = vmatprep.subr.mxu0 0.0
        %7730 = vmatpush1.msra.mxu0 %v7517
        %7731 = vmatprep.subr.mxu0 0.0
        %7732 = vmatpush1.msra.mxu0 %v7516
        %7733 = vmatprep.subr.mxu0 0.0
        %7734 = vmatpush1.msra.mxu0 %v7515
        %7735 = vmatprep.subr.mxu0 0.0
        %7736 = vmatpush1.msra.mxu0 %v7514
        %7737 = vmatprep.subr.mxu0 0.0
        %7738 = vmatpush1.msra.mxu0 %v7513
        %7739 = vmatprep.subr.mxu0 0.0
        %7740 = vmatpush1.msra.mxu0 %v7512
        %7741 = vmatprep.subr.mxu0 0.0
        %7742 = vmatpush1.msra.mxu0 %v7511
        %7743 = vmatprep.subr.mxu0 0.0
        %7744 = vmatpush1.msra.mxu0 %v7510
        %7745 = vmatprep.subr.mxu0 0.0
        %7746 = vmatpush2.msra.mxu0 %v7541
        %7747 = vmatprep.subr.mxu0 0.0
        %7748 = vmatpush2.msra.mxu0 %v7540
        %7749 = vmatprep.subr.mxu0 0.0
        %7750 = vmatpush2.msra.mxu0 %v7539
        %7751 = vmatprep.subr.mxu0 0.0
        %7752 = vmatpush2.msra.mxu0 %v7538
        %7753 = vmatprep.subr.mxu0 0.0
        %7754 = vmatpush2.msra.mxu0 %v7537
        %7755 = vmatprep.subr.mxu0 0.0
        %7756 = vmatpush2.msra.mxu0 %v7536
        %7757 = vmatprep.subr.mxu0 0.0
        %7758 = vmatpush2.msra.mxu0 %v7535
        %7759 = vmatprep.subr.mxu0 0.0
        %7760 = vmatpush2.msra.mxu0 %v7534
        %7761 = vmatprep.subr.mxu0 0.0
        %7762 = vmatpush2.msra.mxu0 %v7533
        %7763 = vmatprep.subr.mxu0 0.0
        %7764 = vmatpush2.msra.mxu0 %v7532
        %7765 = vmatprep.subr.mxu0 0.0
        %7766 = vmatpush2.msra.mxu0 %v7531
        %7767 = vmatprep.subr.mxu0 0.0
        %7768 = vmatpush2.msra.mxu0 %v7530
        %7769 = vmatprep.subr.mxu0 0.0
        %7770 = vmatpush2.msra.mxu0 %v7529
        %7771 = vmatprep.subr.mxu0 0.0
        %7772 = vmatpush2.msra.mxu0 %v7528
        %7773 = vmatprep.subr.mxu0 0.0
        %7774 = vmatpush2.msra.mxu0 %v7527
        %7775 = vmatprep.subr.mxu0 0.0
        %7776 = vmatpush2.msra.mxu0 %v7526
        %7777 = vmatprep.mubr.f32.mxu0 %v7616
        %7778 = vmatmul.mubr.f32.gmra.mxu0 %v7612
        %v7779 = vpop.f32.mrf.mxu0
        %v7780 = vadd.f32 %v7710, %v7779
        %v7781 = vpop.f32.mrf.mxu0
        %7782 = vdwg.mxu0
        %7783 = vmatprep.subr.mxu0 0.0
        %7784 = vmatpush1.msra.mxu0 %v7557
        %7785 = vmatprep.subr.mxu0 0.0
        %7786 = vmatpush1.msra.mxu0 %v7556
        %7787 = vmatprep.subr.mxu0 0.0
        %7788 = vmatpush1.msra.mxu0 %v7555
        %7789 = vmatprep.subr.mxu0 0.0
        %7790 = vmatpush1.msra.mxu0 %v7554
        %7791 = vmatprep.subr.mxu0 0.0
        %7792 = vmatpush1.msra.mxu0 %v7553
        %7793 = vmatprep.subr.mxu0 0.0
        %7794 = vmatpush1.msra.mxu0 %v7552
        %7795 = vmatprep.subr.mxu0 0.0
        %7796 = vmatpush1.msra.mxu0 %v7551
        %7797 = vmatprep.subr.mxu0 0.0
        %7798 = vmatpush1.msra.mxu0 %v7550
        %7799 = vmatprep.subr.mxu0 0.0
        %7800 = vmatpush1.msra.mxu0 %v7549
        %7801 = vmatprep.subr.mxu0 0.0
        %7802 = vmatpush1.msra.mxu0 %v7548
        %7803 = vmatprep.subr.mxu0 0.0
        %7804 = vmatpush1.msra.mxu0 %v7547
        %7805 = vmatprep.subr.mxu0 0.0
        %7806 = vmatpush1.msra.mxu0 %v7546
        %7807 = vmatprep.subr.mxu0 0.0
        %7808 = vmatpush1.msra.mxu0 %v7545
        %7809 = vmatprep.subr.mxu0 0.0
        %7810 = vmatpush1.msra.mxu0 %v7544
        %7811 = vmatprep.subr.mxu0 0.0
        %7812 = vmatpush1.msra.mxu0 %v7543
        %7813 = vmatprep.subr.mxu0 0.0
        %7814 = vmatpush1.msra.mxu0 %v7542
        %7815 = vmatprep.subr.mxu0 0.0
        %7816 = vmatpush2.msra.mxu0 %v7573
        %7817 = vmatprep.subr.mxu0 0.0
        %7818 = vmatpush2.msra.mxu0 %v7572
        %7819 = vmatprep.subr.mxu0 0.0
        %7820 = vmatpush2.msra.mxu0 %v7571
        %7821 = vmatprep.subr.mxu0 0.0
        %7822 = vmatpush2.msra.mxu0 %v7570
        %7823 = vmatprep.subr.mxu0 0.0
        %7824 = vmatpush2.msra.mxu0 %v7569
        %7825 = vmatprep.subr.mxu0 0.0
        %7826 = vmatpush2.msra.mxu0 %v7568
        %7827 = vmatprep.subr.mxu0 0.0
        %7828 = vmatpush2.msra.mxu0 %v7567
        %7829 = vmatprep.subr.mxu0 0.0
        %7830 = vmatpush2.msra.mxu0 %v7566
        %7831 = vmatprep.subr.mxu0 0.0
        %7832 = vmatpush2.msra.mxu0 %v7565
        %7833 = vmatprep.subr.mxu0 0.0
        %7834 = vmatpush2.msra.mxu0 %v7564
        %7835 = vmatprep.subr.mxu0 0.0
        %7836 = vmatpush2.msra.mxu0 %v7563
        %7837 = vmatprep.subr.mxu0 0.0
        %7838 = vmatpush2.msra.mxu0 %v7562
        %7839 = vmatprep.subr.mxu0 0.0
        %7840 = vmatpush2.msra.mxu0 %v7561
        %7841 = vmatprep.subr.mxu0 0.0
        %7842 = vmatpush2.msra.mxu0 %v7560
        %7843 = vmatprep.subr.mxu0 0.0
        %7844 = vmatpush2.msra.mxu0 %v7559
        %7845 = vmatprep.subr.mxu0 0.0
        %7846 = vmatpush2.msra.mxu0 %v7558
        %7847 = vmatprep.mubr.f32.mxu0 %v7624
        %7848 = vmatmul.mubr.f32.gmra.mxu0 %v7620
        %v7849 = vpop.f32.mrf.mxu0
        %v7850 = vadd.f32 %v7780, %v7849
        %v7851 = vpop.f32.mrf.mxu0
        %7852 = vdwg.mxu0
        %7853 = vmatprep.subr.mxu0 0.0
        %7854 = vmatpush1.msra.mxu0 %v7589
        %7855 = vmatprep.subr.mxu0 0.0
        %7856 = vmatpush1.msra.mxu0 %v7588
        %7857 = vmatprep.subr.mxu0 0.0
        %7858 = vmatpush1.msra.mxu0 %v7587
        %7859 = vmatprep.subr.mxu0 0.0
        %7860 = vmatpush1.msra.mxu0 %v7586
        %7861 = vmatprep.subr.mxu0 0.0
        %7862 = vmatpush1.msra.mxu0 %v7585
        %7863 = vmatprep.subr.mxu0 0.0
        %7864 = vmatpush1.msra.mxu0 %v7584
        %7865 = vmatprep.subr.mxu0 0.0
        %7866 = vmatpush1.msra.mxu0 %v7583
        %7867 = vmatprep.subr.mxu0 0.0
        %7868 = vmatpush1.msra.mxu0 %v7582
        %7869 = vmatprep.subr.mxu0 0.0
        %7870 = vmatpush1.msra.mxu0 %v7581
        %7871 = vmatprep.subr.mxu0 0.0
        %7872 = vmatpush1.msra.mxu0 %v7580
        %7873 = vmatprep.subr.mxu0 0.0
        %7874 = vmatpush1.msra.mxu0 %v7579
        %7875 = vmatprep.subr.mxu0 0.0
        %7876 = vmatpush1.msra.mxu0 %v7578
        %7877 = vmatprep.subr.mxu0 0.0
        %7878 = vmatpush1.msra.mxu0 %v7577
        %7879 = vmatprep.subr.mxu0 0.0
        %7880 = vmatpush1.msra.mxu0 %v7576
        %7881 = vmatprep.subr.mxu0 0.0
        %7882 = vmatpush1.msra.mxu0 %v7575
        %7883 = vmatprep.subr.mxu0 0.0
        %7884 = vmatpush1.msra.mxu0 %v7574
        %7885 = vmatprep.subr.mxu0 0.0
        %7886 = vmatpush2.msra.mxu0 0.0
        %7887 = vmatprep.subr.mxu0 0.0
        %7888 = vmatpush2.msra.mxu0 0.0
        %7889 = vmatprep.subr.mxu0 0.0
        %7890 = vmatpush2.msra.mxu0 0.0
        %7891 = vmatprep.subr.mxu0 0.0
        %7892 = vmatpush2.msra.mxu0 0.0
        %7893 = vmatprep.subr.mxu0 0.0
        %7894 = vmatpush2.msra.mxu0 0.0
        %7895 = vmatprep.subr.mxu0 0.0
        %7896 = vmatpush2.msra.mxu0 0.0
        %7897 = vmatprep.subr.mxu0 0.0
        %7898 = vmatpush2.msra.mxu0 0.0
        %7899 = vmatprep.subr.mxu0 0.0
        %7900 = vmatpush2.msra.mxu0 %v7598
        %7901 = vmatprep.subr.mxu0 0.0
        %7902 = vmatpush2.msra.mxu0 %v7597
        %7903 = vmatprep.subr.mxu0 0.0
        %7904 = vmatpush2.msra.mxu0 %v7596
        %7905 = vmatprep.subr.mxu0 0.0
        %7906 = vmatpush2.msra.mxu0 %v7595
        %7907 = vmatprep.subr.mxu0 0.0
        %7908 = vmatpush2.msra.mxu0 %v7594
        %7909 = vmatprep.subr.mxu0 0.0
        %7910 = vmatpush2.msra.mxu0 %v7593
        %7911 = vmatprep.subr.mxu0 0.0
        %7912 = vmatpush2.msra.mxu0 %v7592
        %7913 = vmatprep.subr.mxu0 0.0
        %7914 = vmatpush2.msra.mxu0 %v7591
        %7915 = vmatprep.subr.mxu0 0.0
        %7916 = vmatpush2.msra.mxu0 %v7590
        %7917 = vmatprep.mubr.f32.mxu0 %v7641
        %7918 = vmatmul.mubr.f32.gmra.mxu0 %v7628
        %v7919 = vpop.f32.mrf.mxu0
        %v7920 = vadd.f32 %v7850, %v7919
        %v7921 = vpop.f32.mrf.mxu0
        %7922 = vdwg.mxu0
        %vm7923 = vcmask 73728
        %7924 = vst.msk [vmem:[%s378] sm:$0x1] %vm7923, %v7920
        %s7925 = sand.u32 %s269, 1
        %s7926 = scalar_lea.sflag [#allocation4], %s7925
        %s7927 = sand.u32 %s269, 1
        %s7928 = scalar_lea.vmem [#allocation3], %s7927
        // Predicated region
        $region65: #{network_forward.1} parent=63 // pred_check
          %p7929 = pneg %p279
        $region66: #{network_forward.1} parent=63 // pred_check_branch
          %7931 = sbr.rel (%p7929) target = $region68
        $region67: #{network_forward.1} parent=63 // pred_region
          %s7933 = ssub.s32 16, 16
          %7934 = vsyncadd %s7926, %s7933
          %s7935 = smul.addr %s25, 16
          %s7936 = scalar_lea.hbm %s11, %s7935
          %s7938 = sshll.u32 %s7928, 4
          %s7939 = int_to_ptr.vmem [resolvable:$true] %s7938
          %7941 = dma.vmem_to_hbm [thread:$0]  %s7939, 16, %s7936, %s7926
        $region68: #{network_forward.1} parent=63 // pred_fallthru
          _
      $region64: #{network_forward.1} parent=5 // pred_fallthru
        _
      %p7942 = scmp.le.s32.totalorder 2, %s20
      // Predicated region
      $region69: #{network_forward.1} parent=5 // pred_check
        %p7943 = pneg %p7942
      $region70: #{network_forward.1} parent=5 // pred_check_branch
        %7945 = sbr.rel (%p7943) target = $region72
      $region71: #{network_forward.1} parent=5 // pred_region
        %s7946 = ssub.s32 %s20, 2
        // Predicated region
        $region73: #{network_forward.1} parent=71 // pred_check
          %p7947 = pneg %p285
        $region74: #{network_forward.1} parent=71 // pred_check_branch
          %7949 = sbr.rel (%p7947) target = $region76
        $region75: #{network_forward.1} parent=71 // pred_region
          %s7950 = sand.u32 %s270, 1
          %s7951 = scalar_lea.sflag [#allocation4], %s7950
          %s7952 = sand.u32 %s270, 1
          %s7953 = scalar_lea.vmem [#allocation3], %s7952
          %7954 = dma.done %s7951, 16
        $region76: #{network_forward.1} parent=71 // pred_fallthru
          _
      $region72: #{network_forward.1} parent=5 // pred_fallthru
        _
    $region6: #{network_forward.1} parent=1 // loop_footer
      %s24 = sadd.s32 1, %s20
    $region7: #{network_forward.1} parent=1 // loop_footer_branch
      %19 = sbr.rel target = $region3
    $region8: #{network_forward.1} parent=1 // loop_exit
      _
    %7955 = vsyncpa [#allocation4], 1
    %s7956 = scalar_lea.sflag [#allocation4], 1
    %7957 = vsyncpa %s7956, 1

</llo_original>
